<compile_context>
chip_gen: v7x
topology: tpu7x:2x2x1
jax: 0.10.0
libtpu: 0.0.40
codegen_flags: <defaults>
</compile_context>

<pallas_src>
import functools

import jax
import jax.numpy as jnp
from jax.experimental import pallas as pl
from jax.experimental.pallas import tpu as pltpu


_TILE_ROWS = 128          # target-node rows per grid step (safe on v5e/v6e/v7x)
_NEG_INF = -1e30
_LEAKY_SLOPE = 0.2        # GATv2Conv default negative_slope


def _round_up(x, m):
    return ((x + m - 1) // m) * m


def _elu(x):
    # exact ELU; exp only evaluated on the clamped negative part
    return jnp.where(x > 0, x, jnp.exp(jnp.minimum(x, 0.0)) - 1.0)


# ----------------------------------------------------------------------------
# Fused per-layer kernel: dual GATv2 + ELU + alpha/beta information exchange
# ----------------------------------------------------------------------------
def dual_gat_layer_kernel(att1_ref, att2_ref, ab_ref,            # SMEM scalars
                          adj1_ref, x1_ref, x1t_ref,
                          wr1_ref, br1_ref, wlt1_ref, blt1_ref, bias1_ref,
                          adj2_ref, x2_ref, x2t_ref,
                          wr2_ref, br2_ref, wlt2_ref, blt2_ref, bias2_ref,
                          o1_ref, o2_ref, *, heads, out_ch):
    def one_stream(adj_ref, x_ref, xt_ref, wr_ref, br_ref, wlt_ref, blt_ref,
                   bias_ref, att_ref):
        # lin_r (target side) for this tile's rows: [TILE, H*C]
        xr = jnp.dot(x_ref[...], wr_ref[...],
                     preferred_element_type=jnp.float32) + br_ref[...]
        # lin_l (source side / messages) for ALL nodes, transposed & lane-dense:
        # [H*C, N_pad]  (one MXU matmul with a 128-wide output lane dim)
        xlt = jnp.dot(wlt_ref[...], xt_ref[...],
                      preferred_element_type=jnp.float32) + blt_ref[...]

        mask = adj_ref[...] > 0                      # [TILE, N_pad] (bf16 adj)

        head_outs = []
        for h in range(heads):                       # static unroll over heads
            c0 = h * out_ch
            # e[t, s] = sum_c att[h,c] * LeakyReLU(x_l[s,c] + x_r[t,c]),
            # accumulated with N_src on the 128-wide lane axis.
            e = None
            for c in range(out_ch):                  # static unroll over C
                src = xlt[c0 + c:c0 + c + 1, :]      # [1, N_pad]
                tgt = xr[:, c0 + c:c0 + c + 1]       # [TILE, 1]
                s = tgt + src                        # [TILE, N_pad]
                s = jnp.maximum(s, _LEAKY_SLOPE * s)  # LeakyReLU(0.2)
                term = att_ref[h, c] * s             # scalar from SMEM
                e = term if e is None else e + term

            # masked softmax over incoming edges (self-loops keep rows valid)
            e = jnp.where(mask, e, _NEG_INF)
            m = jnp.max(e, axis=-1, keepdims=True)   # XLU cross-lane reduce
            p = jnp.exp(e - m)                       # masked entries -> 0
            denom = jnp.sum(p, axis=-1, keepdims=True)

            # aggregate messages (normalization deferred to the small result)
            xlt_h = xlt[c0:c0 + out_ch, :]           # [C, N_pad]
            agg = jax.lax.dot_general(               # p @ x_l_h  ([TILE, C])
                p, xlt_h, (((1,), (1,)), ((), ())),
                preferred_element_type=jnp.float32)
            head_outs.append(agg * pl.reciprocal(denom, approx=True))

        # single full-width result (no per-head column-stripe stores) + bias
        return jnp.concatenate(head_outs, axis=-1) + bias_ref[...]

    y1 = one_stream(adj1_ref, x1_ref, x1t_ref, wr1_ref, br1_ref,
                    wlt1_ref, blt1_ref, bias1_ref, att1_ref)
    y2 = one_stream(adj2_ref, x2_ref, x2t_ref, wr2_ref, br2_ref,
                    wlt2_ref, blt2_ref, bias2_ref, att2_ref)

    # TODO(synk): F.dropout is identity here (eval mode / p=0.0); training-mode
    #             stochastic dropout is not implemented.
    x1_new = _elu(y1)
    x2_new = _elu(y2)
    alpha = ab_ref[0, 0]
    beta = ab_ref[0, 1]
    # Simultaneous update: matches torch (both lines use the pre-mix *_new).
    o1_ref[...] = alpha * x1_new + beta * x2_new
    o2_ref[...] = alpha * x2_new + beta * x1_new


def dual_gat_layer(x1, adj1, p1, x2, adj2, p2, ab, heads, out_ch, tm):
    n_pad, fin = x1.shape
    hc = heads * out_ch
    n_tiles = n_pad // tm

    # layout-only glue: lane-dense transposed feature copies for lin_l
    x1t = jnp.transpose(x1)
    x2t = jnp.transpose(x2)

    kernel = functools.partial(dual_gat_layer_kernel, heads=heads, out_ch=out_ch)

    smem = pl.BlockSpec(memory_space=pltpu.MemorySpace.SMEM)

    def full(shape):
        return pl.BlockSpec(shape, lambda i: (0, 0))

    def row_tile(cols):
        return pl.BlockSpec((tm, cols), lambda i: (i, 0))

    def stream_specs():
        return [row_tile(n_pad),        # adjacency tile        [tm, n_pad] bf16
                row_tile(fin),          # x tile (lin_r input)  [tm, fin]
                full((fin, n_pad)),     # x^T (lin_l input, resident)
                full((fin, hc)),        # wr
                full((1, hc)),          # br
                full((hc, fin)),        # wl^T
                full((hc, 1)),          # bl^T
                full((1, hc))]          # per-layer output bias

    in_specs = [smem, smem, smem] + stream_specs() + stream_specs()

    # rough per-call cost hint for the XLA scheduler
    flops = int(2 * heads * n_pad * n_pad * (6 * out_ch + 8)
                + 8 * n_pad * fin * hc)
    transc = int(2 * heads * n_pad * n_pad + 2 * n_pad * hc)
    bytes_acc = int(2 * n_pad * n_pad * 2
                    + (6 * n_pad * fin + 8 * n_pad * hc) * 4)

    # double-buffered bf16 adjacency tiles (both streams) + f32 temporaries
    vmem_need = 2 * (2 * tm * n_pad * 2) + 10 * tm * n_pad * 4
    vmem_limit = int(min(max(2 * vmem_need, 16 * 1024 * 1024),
                         56 * 1024 * 1024))

    return pl.pallas_call(
        kernel,
        grid=(n_tiles,),
        in_specs=in_specs,
        out_specs=(row_tile(hc), row_tile(hc)),
        out_shape=(jax.ShapeDtypeStruct((n_pad, hc), jnp.float32),
                   jax.ShapeDtypeStruct((n_pad, hc), jnp.float32)),
        compiler_params=pltpu.CompilerParams(
            dimension_semantics=("parallel",),
            vmem_limit_bytes=vmem_limit),
        cost_estimate=pl.CostEstimate(flops=flops, transcendentals=transc,
                                      bytes_accessed=bytes_acc),
    )(p1["att"], p2["att"], ab,
      adj1, x1, x1t, p1["wr"], p1["br"], p1["wlt"], p1["blt"], p1["bias"],
      adj2, x2, x2t, p2["wr"], p2["br"], p2["wlt"], p2["blt"], p2["bias"])


# ----------------------------------------------------------------------------
# Head: concat -> linear_merge -> linear_final_end -> sigmoid
# ----------------------------------------------------------------------------
def head_kernel(x1_ref, x2_ref, wm1_ref, wm2_ref, bm_ref, wf_ref, bf_ref,
                emb_ref, out_ref):
    # cat([x1, x2], dim=1) @ Wm^T  ==  x1 @ Wm1 + x2 @ Wm2
    merged = (jnp.dot(x1_ref[...], wm1_ref[...], preferred_element_type=jnp.float32)
              + jnp.dot(x2_ref[...], wm2_ref[...], preferred_element_type=jnp.float32)
              + bm_ref[...])
    emb_ref[...] = merged
    logits = jnp.dot(merged, wf_ref[...],
                     preferred_element_type=jnp.float32) + bf_ref[...]
    out_ref[...] = jax.nn.sigmoid(logits)


def head(x1, x2, wm, bm, wf, bf, tm):
    n_pad, d = x1.shape
    num_labels = wf.shape[1]
    n_tiles = n_pad // tm
    wm1, wm2 = wm[:d], wm[d:]

    def full(shape):
        return pl.BlockSpec(shape, lambda i: (0, 0))

    def row_tile(cols):
        return pl.BlockSpec((tm, cols), lambda i: (i, 0))

    return pl.pallas_call(
        head_kernel,
        grid=(n_tiles,),
        in_specs=[row_tile(d), row_tile(d),
                  full((d, d)), full((d, d)), full((1, d)),
                  full((d, num_labels)), full((1, num_labels))],
        out_specs=(row_tile(d), row_tile(num_labels)),
        out_shape=(jax.ShapeDtypeStruct((n_pad, d), jnp.float32),
                   jax.ShapeDtypeStruct((n_pad, num_labels), jnp.float32)),
        compiler_params=pltpu.CompilerParams(dimension_semantics=("parallel",)),
    )(x1, x2, wm1, wm2, bm, wf, bf)


# ----------------------------------------------------------------------------
# Model glue (adjacency build, padding, parameters)
# ----------------------------------------------------------------------------
def build_adj(edge_index, n, n_pad):
    """edge_index [2, E] -> dense bf16 adjacency [N_pad, N_pad] with self-loops."""
    src, dst = edge_index[0], edge_index[1]
    adj = jnp.zeros((n_pad, n_pad), jnp.float32).at[dst, src].set(1.0)
    idx = jnp.arange(n)
    adj = adj.at[idx, idx].set(1.0)          # self-loops on real nodes only
    return adj.astype(jnp.bfloat16)


def _pad_rows(x, n_pad):
    n = x.shape[0]
    if n == n_pad:
        return x
    return jnp.pad(x, ((0, n_pad - n), (0, 0)))


def _glorot(key, shape):
    fan_in, fan_out = shape[0], shape[1]
    limit = (6.0 / (fan_in + fan_out)) ** 0.5
    return jax.random.uniform(key, shape, jnp.float32, -limit, limit)


def make_gat_layer_params(key, in_ch, out_ch, heads):
    ks = jax.random.split(key, 4)
    hc = heads * out_ch
    wl = _glorot(ks[0], (in_ch, hc))          # lin_l (source side / messages)
    wr = _glorot(ks[1], (in_ch, hc))          # lin_r (target side)
    return {
        "wlt":  jnp.transpose(wl),            # [HC, Fin] for lane-dense matmul
        "blt":  jnp.zeros((hc, 1), jnp.float32),
        "wr":   wr,                           # [Fin, HC]
        "br":   jnp.zeros((1, hc), jnp.float32),
        "att":  _glorot(ks[2], (heads, out_ch)),
        "bias": 0.01 * jax.random.normal(ks[3], (1, hc), jnp.float32),
    }


def make_params(key, hidden, emb, num_features, num_labels, num_layers, heads):
    if num_layers > 1:
        dims = [(num_features, hidden)]
        dims += [(heads * hidden, hidden)] * (num_layers - 2)
        dims += [(heads * hidden, emb)]
    else:
        dims = [(num_features, emb)]

    keys = jax.random.split(key, 2 * num_layers + 2)
    convs_1 = [make_gat_layer_params(keys[i], fi, fo, heads)
               for i, (fi, fo) in enumerate(dims)]
    convs_2 = [make_gat_layer_params(keys[num_layers + i], fi, fo, heads)
               for i, (fi, fo) in enumerate(dims)]

    d = emb * heads
    return {
        "convs_1": convs_1,
        "convs_2": convs_2,
        "wm": _glorot(keys[-2], (2 * d, d)),        # linear_merge weight^T
        "bm": jnp.zeros((1, d), jnp.float32),
        "wf": _glorot(keys[-1], (d, num_labels)),   # linear_final_end weight^T
        "bf": jnp.zeros((1, num_labels), jnp.float32),
        "ab": jnp.array([[0.5, 0.5]], jnp.float32), # alpha, beta
    }


def dual_gat_forward(x_1, edge_index_1, x_2, edge_index_2, params, heads,
                     return_embeddings=False):
    n = x_1.shape[0]
    tm = _TILE_ROWS
    n_pad = max(_round_up(n, tm), tm)

    adj1 = build_adj(edge_index_1, n, n_pad)
    adj2 = build_adj(edge_index_2, n, n_pad)
    x1 = _pad_rows(x_1.astype(jnp.float32), n_pad)
    x2 = _pad_rows(x_2.astype(jnp.float32), n_pad)

    for p1, p2 in zip(params["convs_1"], params["convs_2"]):
        out_ch = p1["att"].shape[1]
        x1, x2 = dual_gat_layer(x1, adj1, p1, x2, adj2, p2,
                                params["ab"], heads, out_ch, tm)

    emb, probs = head(x1, x2, params["wm"], params["bm"],
                      params["wf"], params["bf"], tm)
    if return_embeddings:
        return emb[:n]
    return probs[:n]


# ----------------------------------------------------------------------------
# Demo
# ----------------------------------------------------------------------------
if __name__ == "__main__":
    N = 16                 # nodes per graph
    NUM_FEATURES = 8
    HIDDEN = 8
    EMBEDDING = 8
    HEADS = 2
    NUM_LABELS = 4
    NUM_LAYERS = 2
    E = 48                 # edges per graph

    root = jax.random.PRNGKey(0)
    k_par, k_x1, k_x2, k_e1, k_e2 = jax.random.split(root, 5)

    params = make_params(k_par, HIDDEN, EMBEDDING, NUM_FEATURES, NUM_LABELS,
                         NUM_LAYERS, HEADS)

    x_1 = jax.random.normal(k_x1, (N, NUM_FEATURES), jnp.float32)
    x_2 = jax.random.normal(k_x2, (N, NUM_FEATURES), jnp.float32)
    edge_index_1 = jax.random.randint(k_e1, (2, E), 0, N, jnp.int32)
    edge_index_2 = jax.random.randint(k_e2, (2, E), 0, N, jnp.int32)

    probs = dual_gat_forward(x_1, edge_index_1, x_2, edge_index_2, params, HEADS)
    probs = jax.block_until_ready(probs)

    assert probs.shape == (N, NUM_LABELS)
    assert bool(jnp.all(jnp.isfinite(probs)))
    assert bool(jnp.all((probs >= 0.0) & (probs <= 1.0)))
    print("KERNEL_OK")
</pallas_src>

<mosaic_0001>
module attributes {stable_mosaic.version = 11 : i64} {
  func.func @dual_gat_layer_kernel(%arg0: i32, %arg1: memref<2x8xf32, #tpu.memory_space<smem>>, %arg2: memref<2x8xf32, #tpu.memory_space<smem>>, %arg3: memref<1x2xf32, #tpu.memory_space<smem>>, %arg4: memref<128x128xbf16, #tpu.memory_space<vmem>>, %arg5: memref<128x8xf32, #tpu.memory_space<vmem>>, %arg6: memref<8x128xf32, #tpu.memory_space<vmem>>, %arg7: memref<8x16xf32, #tpu.memory_space<vmem>>, %arg8: memref<1x16xf32, #tpu.memory_space<vmem>>, %arg9: memref<16x8xf32, #tpu.memory_space<vmem>>, %arg10: memref<16x1xf32, #tpu.memory_space<vmem>>, %arg11: memref<1x16xf32, #tpu.memory_space<vmem>>, %arg12: memref<128x128xbf16, #tpu.memory_space<vmem>>, %arg13: memref<128x8xf32, #tpu.memory_space<vmem>>, %arg14: memref<8x128xf32, #tpu.memory_space<vmem>>, %arg15: memref<8x16xf32, #tpu.memory_space<vmem>>, %arg16: memref<1x16xf32, #tpu.memory_space<vmem>>, %arg17: memref<16x8xf32, #tpu.memory_space<vmem>>, %arg18: memref<16x1xf32, #tpu.memory_space<vmem>>, %arg19: memref<1x16xf32, #tpu.memory_space<vmem>>, %arg20: memref<128x16xf32, #tpu.memory_space<vmem>>, %arg21: memref<128x16xf32, #tpu.memory_space<vmem>>) attributes {dimension_semantics = [#tpu.dimension_semantics<parallel>], iteration_bounds = array<i64: 1>, scalar_prefetch = 0 : i64, scratch_operands = 0 : i64, tpu.core_type = #tpu.core_type<tc>, window_params = [{transform_indices = @transform_0, window_bounds = array<i64: 2, 8>}, {transform_indices = @transform_1, window_bounds = array<i64: 2, 8>}, {transform_indices = @transform_2, window_bounds = array<i64: 1, 2>}, {transform_indices = @transform_3, window_bounds = array<i64: 128, 128>}, {transform_indices = @transform_4, window_bounds = array<i64: 128, 8>}, {pipeline_mode = #tpu.pipeline_mode<synchronous>, transform_indices = @transform_5, window_bounds = array<i64: 8, 128>}, {pipeline_mode = #tpu.pipeline_mode<synchronous>, transform_indices = @transform_6, window_bounds = array<i64: 8, 16>}, {pipeline_mode = #tpu.pipeline_mode<synchronous>, transform_indices = @transform_7, window_bounds = array<i64: 1, 16>}, {pipeline_mode = #tpu.pipeline_mode<synchronous>, transform_indices = @transform_8, window_bounds = array<i64: 16, 8>}, {pipeline_mode = #tpu.pipeline_mode<synchronous>, transform_indices = @transform_9, window_bounds = array<i64: 16, 1>}, {pipeline_mode = #tpu.pipeline_mode<synchronous>, transform_indices = @transform_10, window_bounds = array<i64: 1, 16>}, {transform_indices = @transform_11, window_bounds = array<i64: 128, 128>}, {transform_indices = @transform_12, window_bounds = array<i64: 128, 8>}, {pipeline_mode = #tpu.pipeline_mode<synchronous>, transform_indices = @transform_13, window_bounds = array<i64: 8, 128>}, {pipeline_mode = #tpu.pipeline_mode<synchronous>, transform_indices = @transform_14, window_bounds = array<i64: 8, 16>}, {pipeline_mode = #tpu.pipeline_mode<synchronous>, transform_indices = @transform_15, window_bounds = array<i64: 1, 16>}, {pipeline_mode = #tpu.pipeline_mode<synchronous>, transform_indices = @transform_16, window_bounds = array<i64: 16, 8>}, {pipeline_mode = #tpu.pipeline_mode<synchronous>, transform_indices = @transform_17, window_bounds = array<i64: 16, 1>}, {pipeline_mode = #tpu.pipeline_mode<synchronous>, transform_indices = @transform_18, window_bounds = array<i64: 1, 16>}, {transform_indices = @transform_19, window_bounds = array<i64: 128, 16>}, {transform_indices = @transform_20, window_bounds = array<i64: 128, 16>}]} {
    %c0 = arith.constant 0 : index
    %c0_0 = arith.constant 0 : index
    %0 = vector.load %arg5[%c0, %c0_0] : memref<128x8xf32, #tpu.memory_space<vmem>>, vector<128x8xf32>
    %c0_1 = arith.constant 0 : index
    %c0_2 = arith.constant 0 : index
    %1 = vector.load %arg7[%c0_1, %c0_2] : memref<8x16xf32, #tpu.memory_space<vmem>>, vector<8x16xf32>
    %cst = arith.constant dense<0.000000e+00> : vector<128x16xf32>
    %2 = tpu.matmul %0, %1, %cst {dimension_numbers = #tpu.dot_dimension_numbers<[1], [0], [0], [1], [0, 0, 1, 1], [], []>} : vector<128x8xf32>, vector<8x16xf32>, vector<128x16xf32> -> vector<128x16xf32>
    %c0_3 = arith.constant 0 : index
    %c0_4 = arith.constant 0 : index
    %3 = vector.load %arg8[%c0_3, %c0_4] : memref<1x16xf32, #tpu.memory_space<vmem>>, vector<1x16xf32>
    %4 = vector.broadcast %3 : vector<1x16xf32> to vector<128x16xf32>
    %5 = arith.addf %2, %4 : vector<128x16xf32>
    %c0_5 = arith.constant 0 : index
    %c0_6 = arith.constant 0 : index
    %6 = vector.load %arg9[%c0_5, %c0_6] : memref<16x8xf32, #tpu.memory_space<vmem>>, vector<16x8xf32>
    %c0_7 = arith.constant 0 : index
    %c0_8 = arith.constant 0 : index
    %7 = vector.load %arg6[%c0_7, %c0_8] : memref<8x128xf32, #tpu.memory_space<vmem>>, vector<8x128xf32>
    %cst_9 = arith.constant dense<0.000000e+00> : vector<16x128xf32>
    %8 = tpu.matmul %6, %7, %cst_9 {dimension_numbers = #tpu.dot_dimension_numbers<[1], [0], [0], [1], [0, 0, 1, 1], [], []>} : vector<16x8xf32>, vector<8x128xf32>, vector<16x128xf32> -> vector<16x128xf32>
    %c0_10 = arith.constant 0 : index
    %c0_11 = arith.constant 0 : index
    %9 = vector.load %arg10[%c0_10, %c0_11] : memref<16x1xf32, #tpu.memory_space<vmem>>, vector<16x1xf32>
    %10 = vector.broadcast %9 : vector<16x1xf32> to vector<16x128xf32>
    %11 = arith.addf %8, %10 : vector<16x128xf32>
    %c0_12 = arith.constant 0 : index
    %c0_13 = arith.constant 0 : index
    %12 = vector.load %arg4[%c0_12, %c0_13] : memref<128x128xbf16, #tpu.memory_space<vmem>>, vector<128x128xbf16>
    %cst_14 = arith.constant 0.000000e+00 : bf16
    %13 = vector.broadcast %cst_14 : bf16 to vector<128x128xbf16>
    %14 = arith.cmpf ogt, %12, %13 : vector<128x128xbf16>
    %15 = vector.extract_strided_slice %11 {offsets = [0, 0], sizes = [1, 128], strides = [1, 1]} : vector<16x128xf32> to vector<1x128xf32>
    %16 = vector.extract_strided_slice %5 {offsets = [0, 0], sizes = [128, 1], strides = [1, 1]} : vector<128x16xf32> to vector<128x1xf32>
    %17 = vector.broadcast %16 : vector<128x1xf32> to vector<128x128xf32>
    %18 = vector.broadcast %15 : vector<1x128xf32> to vector<128x128xf32>
    %19 = arith.addf %17, %18 : vector<128x128xf32>
    %cst_15 = arith.constant 2.000000e-01 : f32
    %20 = vector.broadcast %cst_15 : f32 to vector<128x128xf32>
    %21 = arith.mulf %20, %19 : vector<128x128xf32>
    %22 = arith.maximumf %19, %21 : vector<128x128xf32>
    %c0_16 = arith.constant 0 : index
    %c0_17 = arith.constant 0 : index
    %23 = memref.load %arg1[%c0_16, %c0_17] : memref<2x8xf32, #tpu.memory_space<smem>>
    %24 = vector.broadcast %23 : f32 to vector<128x128xf32>
    %25 = arith.mulf %24, %22 : vector<128x128xf32>
    %26 = vector.extract_strided_slice %11 {offsets = [1, 0], sizes = [1, 128], strides = [1, 1]} : vector<16x128xf32> to vector<1x128xf32>
    %27 = vector.extract_strided_slice %5 {offsets = [0, 1], sizes = [128, 1], strides = [1, 1]} : vector<128x16xf32> to vector<128x1xf32>
    %28 = vector.broadcast %27 : vector<128x1xf32> to vector<128x128xf32>
    %29 = vector.broadcast %26 : vector<1x128xf32> to vector<128x128xf32>
    %30 = arith.addf %28, %29 : vector<128x128xf32>
    %cst_18 = arith.constant 2.000000e-01 : f32
    %31 = vector.broadcast %cst_18 : f32 to vector<128x128xf32>
    %32 = arith.mulf %31, %30 : vector<128x128xf32>
    %33 = arith.maximumf %30, %32 : vector<128x128xf32>
    %c0_19 = arith.constant 0 : index
    %c1 = arith.constant 1 : index
    %34 = memref.load %arg1[%c0_19, %c1] : memref<2x8xf32, #tpu.memory_space<smem>>
    %35 = vector.broadcast %34 : f32 to vector<128x128xf32>
    %36 = arith.mulf %35, %33 : vector<128x128xf32>
    %37 = arith.addf %25, %36 : vector<128x128xf32>
    %38 = vector.extract_strided_slice %11 {offsets = [2, 0], sizes = [1, 128], strides = [1, 1]} : vector<16x128xf32> to vector<1x128xf32>
    %39 = vector.extract_strided_slice %5 {offsets = [0, 2], sizes = [128, 1], strides = [1, 1]} : vector<128x16xf32> to vector<128x1xf32>
    %40 = vector.broadcast %39 : vector<128x1xf32> to vector<128x128xf32>
    %41 = vector.broadcast %38 : vector<1x128xf32> to vector<128x128xf32>
    %42 = arith.addf %40, %41 : vector<128x128xf32>
    %cst_20 = arith.constant 2.000000e-01 : f32
    %43 = vector.broadcast %cst_20 : f32 to vector<128x128xf32>
    %44 = arith.mulf %43, %42 : vector<128x128xf32>
    %45 = arith.maximumf %42, %44 : vector<128x128xf32>
    %c0_21 = arith.constant 0 : index
    %c2 = arith.constant 2 : index
    %46 = memref.load %arg1[%c0_21, %c2] : memref<2x8xf32, #tpu.memory_space<smem>>
    %47 = vector.broadcast %46 : f32 to vector<128x128xf32>
    %48 = arith.mulf %47, %45 : vector<128x128xf32>
    %49 = arith.addf %37, %48 : vector<128x128xf32>
    %50 = vector.extract_strided_slice %11 {offsets = [3, 0], sizes = [1, 128], strides = [1, 1]} : vector<16x128xf32> to vector<1x128xf32>
    %51 = vector.extract_strided_slice %5 {offsets = [0, 3], sizes = [128, 1], strides = [1, 1]} : vector<128x16xf32> to vector<128x1xf32>
    %52 = vector.broadcast %51 : vector<128x1xf32> to vector<128x128xf32>
    %53 = vector.broadcast %50 : vector<1x128xf32> to vector<128x128xf32>
    %54 = arith.addf %52, %53 : vector<128x128xf32>
    %cst_22 = arith.constant 2.000000e-01 : f32
    %55 = vector.broadcast %cst_22 : f32 to vector<128x128xf32>
    %56 = arith.mulf %55, %54 : vector<128x128xf32>
    %57 = arith.maximumf %54, %56 : vector<128x128xf32>
    %c0_23 = arith.constant 0 : index
    %c3 = arith.constant 3 : index
    %58 = memref.load %arg1[%c0_23, %c3] : memref<2x8xf32, #tpu.memory_space<smem>>
    %59 = vector.broadcast %58 : f32 to vector<128x128xf32>
    %60 = arith.mulf %59, %57 : vector<128x128xf32>
    %61 = arith.addf %49, %60 : vector<128x128xf32>
    %62 = vector.extract_strided_slice %11 {offsets = [4, 0], sizes = [1, 128], strides = [1, 1]} : vector<16x128xf32> to vector<1x128xf32>
    %63 = vector.extract_strided_slice %5 {offsets = [0, 4], sizes = [128, 1], strides = [1, 1]} : vector<128x16xf32> to vector<128x1xf32>
    %64 = vector.broadcast %63 : vector<128x1xf32> to vector<128x128xf32>
    %65 = vector.broadcast %62 : vector<1x128xf32> to vector<128x128xf32>
    %66 = arith.addf %64, %65 : vector<128x128xf32>
    %cst_24 = arith.constant 2.000000e-01 : f32
    %67 = vector.broadcast %cst_24 : f32 to vector<128x128xf32>
    %68 = arith.mulf %67, %66 : vector<128x128xf32>
    %69 = arith.maximumf %66, %68 : vector<128x128xf32>
    %c0_25 = arith.constant 0 : index
    %c4 = arith.constant 4 : index
    %70 = memref.load %arg1[%c0_25, %c4] : memref<2x8xf32, #tpu.memory_space<smem>>
    %71 = vector.broadcast %70 : f32 to vector<128x128xf32>
    %72 = arith.mulf %71, %69 : vector<128x128xf32>
    %73 = arith.addf %61, %72 : vector<128x128xf32>
    %74 = vector.extract_strided_slice %11 {offsets = [5, 0], sizes = [1, 128], strides = [1, 1]} : vector<16x128xf32> to vector<1x128xf32>
    %75 = vector.extract_strided_slice %5 {offsets = [0, 5], sizes = [128, 1], strides = [1, 1]} : vector<128x16xf32> to vector<128x1xf32>
    %76 = vector.broadcast %75 : vector<128x1xf32> to vector<128x128xf32>
    %77 = vector.broadcast %74 : vector<1x128xf32> to vector<128x128xf32>
    %78 = arith.addf %76, %77 : vector<128x128xf32>
    %cst_26 = arith.constant 2.000000e-01 : f32
    %79 = vector.broadcast %cst_26 : f32 to vector<128x128xf32>
    %80 = arith.mulf %79, %78 : vector<128x128xf32>
    %81 = arith.maximumf %78, %80 : vector<128x128xf32>
    %c0_27 = arith.constant 0 : index
    %c5 = arith.constant 5 : index
    %82 = memref.load %arg1[%c0_27, %c5] : memref<2x8xf32, #tpu.memory_space<smem>>
    %83 = vector.broadcast %82 : f32 to vector<128x128xf32>
    %84 = arith.mulf %83, %81 : vector<128x128xf32>
    %85 = arith.addf %73, %84 : vector<128x128xf32>
    %86 = vector.extract_strided_slice %11 {offsets = [6, 0], sizes = [1, 128], strides = [1, 1]} : vector<16x128xf32> to vector<1x128xf32>
    %87 = vector.extract_strided_slice %5 {offsets = [0, 6], sizes = [128, 1], strides = [1, 1]} : vector<128x16xf32> to vector<128x1xf32>
    %88 = vector.broadcast %87 : vector<128x1xf32> to vector<128x128xf32>
    %89 = vector.broadcast %86 : vector<1x128xf32> to vector<128x128xf32>
    %90 = arith.addf %88, %89 : vector<128x128xf32>
    %cst_28 = arith.constant 2.000000e-01 : f32
    %91 = vector.broadcast %cst_28 : f32 to vector<128x128xf32>
    %92 = arith.mulf %91, %90 : vector<128x128xf32>
    %93 = arith.maximumf %90, %92 : vector<128x128xf32>
    %c0_29 = arith.constant 0 : index
    %c6 = arith.constant 6 : index
    %94 = memref.load %arg1[%c0_29, %c6] : memref<2x8xf32, #tpu.memory_space<smem>>
    %95 = vector.broadcast %94 : f32 to vector<128x128xf32>
    %96 = arith.mulf %95, %93 : vector<128x128xf32>
    %97 = arith.addf %85, %96 : vector<128x128xf32>
    %98 = vector.extract_strided_slice %11 {offsets = [7, 0], sizes = [1, 128], strides = [1, 1]} : vector<16x128xf32> to vector<1x128xf32>
    %99 = vector.extract_strided_slice %5 {offsets = [0, 7], sizes = [128, 1], strides = [1, 1]} : vector<128x16xf32> to vector<128x1xf32>
    %100 = vector.broadcast %99 : vector<128x1xf32> to vector<128x128xf32>
    %101 = vector.broadcast %98 : vector<1x128xf32> to vector<128x128xf32>
    %102 = arith.addf %100, %101 : vector<128x128xf32>
    %cst_30 = arith.constant 2.000000e-01 : f32
    %103 = vector.broadcast %cst_30 : f32 to vector<128x128xf32>
    %104 = arith.mulf %103, %102 : vector<128x128xf32>
    %105 = arith.maximumf %102, %104 : vector<128x128xf32>
    %c0_31 = arith.constant 0 : index
    %c7 = arith.constant 7 : index
    %106 = memref.load %arg1[%c0_31, %c7] : memref<2x8xf32, #tpu.memory_space<smem>>
    %107 = vector.broadcast %106 : f32 to vector<128x128xf32>
    %108 = arith.mulf %107, %105 : vector<128x128xf32>
    %109 = arith.addf %97, %108 : vector<128x128xf32>
    %cst_32 = arith.constant -1.000000e+30 : f32
    %110 = vector.broadcast %cst_32 : f32 to vector<128x128xf32>
    %111 = arith.select %14, %109, %110 : vector<128x128xi1>, vector<128x128xf32>
    %cst_33 = arith.constant dense<0xFF800000> : vector<128xf32>
    %112 = vector.multi_reduction <maximumf>, %111, %cst_33 [1] : vector<128x128xf32> to vector<128xf32>
    %113 = vector.shape_cast %112 : vector<128xf32> to vector<128x1xf32>
    %114 = vector.broadcast %113 : vector<128x1xf32> to vector<128x128xf32>
    %115 = arith.subf %111, %114 : vector<128x128xf32>
    %116 = math.exp %115 : vector<128x128xf32>
    %cst_34 = arith.constant dense<0.000000e+00> : vector<128xf32>
    %117 = vector.multi_reduction <add>, %116, %cst_34 [1] : vector<128x128xf32> to vector<128xf32>
    %118 = vector.shape_cast %117 : vector<128xf32> to vector<128x1xf32>
    %119 = vector.extract_strided_slice %11 {offsets = [0, 0], sizes = [8, 128], strides = [1, 1]} : vector<16x128xf32> to vector<8x128xf32>
    %cst_35 = arith.constant dense<0.000000e+00> : vector<128x8xf32>
    %120 = tpu.matmul %116, %119, %cst_35 {dimension_numbers = #tpu.dot_dimension_numbers<[1], [1], [0], [0], [0, 0, 1, 0], [], []>} : vector<128x128xf32>, vector<8x128xf32>, vector<128x8xf32> -> vector<128x8xf32>
    %121 = tpu.reciprocal %118 {approx = true} : vector<128x1xf32> -> vector<128x1xf32>
    %122 = vector.broadcast %121 : vector<128x1xf32> to vector<128x8xf32>
    %123 = arith.mulf %120, %122 : vector<128x8xf32>
    %124 = vector.extract_strided_slice %11 {offsets = [8, 0], sizes = [1, 128], strides = [1, 1]} : vector<16x128xf32> to vector<1x128xf32>
    %125 = vector.extract_strided_slice %5 {offsets = [0, 8], sizes = [128, 1], strides = [1, 1]} : vector<128x16xf32> to vector<128x1xf32>
    %126 = vector.broadcast %125 : vector<128x1xf32> to vector<128x128xf32>
    %127 = vector.broadcast %124 : vector<1x128xf32> to vector<128x128xf32>
    %128 = arith.addf %126, %127 : vector<128x128xf32>
    %cst_36 = arith.constant 2.000000e-01 : f32
    %129 = vector.broadcast %cst_36 : f32 to vector<128x128xf32>
    %130 = arith.mulf %129, %128 : vector<128x128xf32>
    %131 = arith.maximumf %128, %130 : vector<128x128xf32>
    %c1_37 = arith.constant 1 : index
    %c0_38 = arith.constant 0 : index
    %132 = memref.load %arg1[%c1_37, %c0_38] : memref<2x8xf32, #tpu.memory_space<smem>>
    %133 = vector.broadcast %132 : f32 to vector<128x128xf32>
    %134 = arith.mulf %133, %131 : vector<128x128xf32>
    %135 = vector.extract_strided_slice %11 {offsets = [9, 0], sizes = [1, 128], strides = [1, 1]} : vector<16x128xf32> to vector<1x128xf32>
    %136 = vector.extract_strided_slice %5 {offsets = [0, 9], sizes = [128, 1], strides = [1, 1]} : vector<128x16xf32> to vector<128x1xf32>
    %137 = vector.broadcast %136 : vector<128x1xf32> to vector<128x128xf32>
    %138 = vector.broadcast %135 : vector<1x128xf32> to vector<128x128xf32>
    %139 = arith.addf %137, %138 : vector<128x128xf32>
    %cst_39 = arith.constant 2.000000e-01 : f32
    %140 = vector.broadcast %cst_39 : f32 to vector<128x128xf32>
    %141 = arith.mulf %140, %139 : vector<128x128xf32>
    %142 = arith.maximumf %139, %141 : vector<128x128xf32>
    %c1_40 = arith.constant 1 : index
    %c1_41 = arith.constant 1 : index
    %143 = memref.load %arg1[%c1_40, %c1_41] : memref<2x8xf32, #tpu.memory_space<smem>>
    %144 = vector.broadcast %143 : f32 to vector<128x128xf32>
    %145 = arith.mulf %144, %142 : vector<128x128xf32>
    %146 = arith.addf %134, %145 : vector<128x128xf32>
    %147 = vector.extract_strided_slice %11 {offsets = [10, 0], sizes = [1, 128], strides = [1, 1]} : vector<16x128xf32> to vector<1x128xf32>
    %148 = vector.extract_strided_slice %5 {offsets = [0, 10], sizes = [128, 1], strides = [1, 1]} : vector<128x16xf32> to vector<128x1xf32>
    %149 = vector.broadcast %148 : vector<128x1xf32> to vector<128x128xf32>
    %150 = vector.broadcast %147 : vector<1x128xf32> to vector<128x128xf32>
    %151 = arith.addf %149, %150 : vector<128x128xf32>
    %cst_42 = arith.constant 2.000000e-01 : f32
    %152 = vector.broadcast %cst_42 : f32 to vector<128x128xf32>
    %153 = arith.mulf %152, %151 : vector<128x128xf32>
    %154 = arith.maximumf %151, %153 : vector<128x128xf32>
    %c1_43 = arith.constant 1 : index
    %c2_44 = arith.constant 2 : index
    %155 = memref.load %arg1[%c1_43, %c2_44] : memref<2x8xf32, #tpu.memory_space<smem>>
    %156 = vector.broadcast %155 : f32 to vector<128x128xf32>
    %157 = arith.mulf %156, %154 : vector<128x128xf32>
    %158 = arith.addf %146, %157 : vector<128x128xf32>
    %159 = vector.extract_strided_slice %11 {offsets = [11, 0], sizes = [1, 128], strides = [1, 1]} : vector<16x128xf32> to vector<1x128xf32>
    %160 = vector.extract_strided_slice %5 {offsets = [0, 11], sizes = [128, 1], strides = [1, 1]} : vector<128x16xf32> to vector<128x1xf32>
    %161 = vector.broadcast %160 : vector<128x1xf32> to vector<128x128xf32>
    %162 = vector.broadcast %159 : vector<1x128xf32> to vector<128x128xf32>
    %163 = arith.addf %161, %162 : vector<128x128xf32>
    %cst_45 = arith.constant 2.000000e-01 : f32
    %164 = vector.broadcast %cst_45 : f32 to vector<128x128xf32>
    %165 = arith.mulf %164, %163 : vector<128x128xf32>
    %166 = arith.maximumf %163, %165 : vector<128x128xf32>
    %c1_46 = arith.constant 1 : index
    %c3_47 = arith.constant 3 : index
    %167 = memref.load %arg1[%c1_46, %c3_47] : memref<2x8xf32, #tpu.memory_space<smem>>
    %168 = vector.broadcast %167 : f32 to vector<128x128xf32>
    %169 = arith.mulf %168, %166 : vector<128x128xf32>
    %170 = arith.addf %158, %169 : vector<128x128xf32>
    %171 = vector.extract_strided_slice %11 {offsets = [12, 0], sizes = [1, 128], strides = [1, 1]} : vector<16x128xf32> to vector<1x128xf32>
    %172 = vector.extract_strided_slice %5 {offsets = [0, 12], sizes = [128, 1], strides = [1, 1]} : vector<128x16xf32> to vector<128x1xf32>
    %173 = vector.broadcast %172 : vector<128x1xf32> to vector<128x128xf32>
    %174 = vector.broadcast %171 : vector<1x128xf32> to vector<128x128xf32>
    %175 = arith.addf %173, %174 : vector<128x128xf32>
    %cst_48 = arith.constant 2.000000e-01 : f32
    %176 = vector.broadcast %cst_48 : f32 to vector<128x128xf32>
    %177 = arith.mulf %176, %175 : vector<128x128xf32>
    %178 = arith.maximumf %175, %177 : vector<128x128xf32>
    %c1_49 = arith.constant 1 : index
    %c4_50 = arith.constant 4 : index
    %179 = memref.load %arg1[%c1_49, %c4_50] : memref<2x8xf32, #tpu.memory_space<smem>>
    %180 = vector.broadcast %179 : f32 to vector<128x128xf32>
    %181 = arith.mulf %180, %178 : vector<128x128xf32>
    %182 = arith.addf %170, %181 : vector<128x128xf32>
    %183 = vector.extract_strided_slice %11 {offsets = [13, 0], sizes = [1, 128], strides = [1, 1]} : vector<16x128xf32> to vector<1x128xf32>
    %184 = vector.extract_strided_slice %5 {offsets = [0, 13], sizes = [128, 1], strides = [1, 1]} : vector<128x16xf32> to vector<128x1xf32>
    %185 = vector.broadcast %184 : vector<128x1xf32> to vector<128x128xf32>
    %186 = vector.broadcast %183 : vector<1x128xf32> to vector<128x128xf32>
    %187 = arith.addf %185, %186 : vector<128x128xf32>
    %cst_51 = arith.constant 2.000000e-01 : f32
    %188 = vector.broadcast %cst_51 : f32 to vector<128x128xf32>
    %189 = arith.mulf %188, %187 : vector<128x128xf32>
    %190 = arith.maximumf %187, %189 : vector<128x128xf32>
    %c1_52 = arith.constant 1 : index
    %c5_53 = arith.constant 5 : index
    %191 = memref.load %arg1[%c1_52, %c5_53] : memref<2x8xf32, #tpu.memory_space<smem>>
    %192 = vector.broadcast %191 : f32 to vector<128x128xf32>
    %193 = arith.mulf %192, %190 : vector<128x128xf32>
    %194 = arith.addf %182, %193 : vector<128x128xf32>
    %195 = vector.extract_strided_slice %11 {offsets = [14, 0], sizes = [1, 128], strides = [1, 1]} : vector<16x128xf32> to vector<1x128xf32>
    %196 = vector.extract_strided_slice %5 {offsets = [0, 14], sizes = [128, 1], strides = [1, 1]} : vector<128x16xf32> to vector<128x1xf32>
    %197 = vector.broadcast %196 : vector<128x1xf32> to vector<128x128xf32>
    %198 = vector.broadcast %195 : vector<1x128xf32> to vector<128x128xf32>
    %199 = arith.addf %197, %198 : vector<128x128xf32>
    %cst_54 = arith.constant 2.000000e-01 : f32
    %200 = vector.broadcast %cst_54 : f32 to vector<128x128xf32>
    %201 = arith.mulf %200, %199 : vector<128x128xf32>
    %202 = arith.maximumf %199, %201 : vector<128x128xf32>
    %c1_55 = arith.constant 1 : index
    %c6_56 = arith.constant 6 : index
    %203 = memref.load %arg1[%c1_55, %c6_56] : memref<2x8xf32, #tpu.memory_space<smem>>
    %204 = vector.broadcast %203 : f32 to vector<128x128xf32>
    %205 = arith.mulf %204, %202 : vector<128x128xf32>
    %206 = arith.addf %194, %205 : vector<128x128xf32>
    %207 = vector.extract_strided_slice %11 {offsets = [15, 0], sizes = [1, 128], strides = [1, 1]} : vector<16x128xf32> to vector<1x128xf32>
    %208 = vector.extract_strided_slice %5 {offsets = [0, 15], sizes = [128, 1], strides = [1, 1]} : vector<128x16xf32> to vector<128x1xf32>
    %209 = vector.broadcast %208 : vector<128x1xf32> to vector<128x128xf32>
    %210 = vector.broadcast %207 : vector<1x128xf32> to vector<128x128xf32>
    %211 = arith.addf %209, %210 : vector<128x128xf32>
    %cst_57 = arith.constant 2.000000e-01 : f32
    %212 = vector.broadcast %cst_57 : f32 to vector<128x128xf32>
    %213 = arith.mulf %212, %211 : vector<128x128xf32>
    %214 = arith.maximumf %211, %213 : vector<128x128xf32>
    %c1_58 = arith.constant 1 : index
    %c7_59 = arith.constant 7 : index
    %215 = memref.load %arg1[%c1_58, %c7_59] : memref<2x8xf32, #tpu.memory_space<smem>>
    %216 = vector.broadcast %215 : f32 to vector<128x128xf32>
    %217 = arith.mulf %216, %214 : vector<128x128xf32>
    %218 = arith.addf %206, %217 : vector<128x128xf32>
    %cst_60 = arith.constant -1.000000e+30 : f32
    %219 = vector.broadcast %cst_60 : f32 to vector<128x128xf32>
    %220 = arith.select %14, %218, %219 : vector<128x128xi1>, vector<128x128xf32>
    %cst_61 = arith.constant dense<0xFF800000> : vector<128xf32>
    %221 = vector.multi_reduction <maximumf>, %220, %cst_61 [1] : vector<128x128xf32> to vector<128xf32>
    %222 = vector.shape_cast %221 : vector<128xf32> to vector<128x1xf32>
    %223 = vector.broadcast %222 : vector<128x1xf32> to vector<128x128xf32>
    %224 = arith.subf %220, %223 : vector<128x128xf32>
    %225 = math.exp %224 : vector<128x128xf32>
    %cst_62 = arith.constant dense<0.000000e+00> : vector<128xf32>
    %226 = vector.multi_reduction <add>, %225, %cst_62 [1] : vector<128x128xf32> to vector<128xf32>
    %227 = vector.shape_cast %226 : vector<128xf32> to vector<128x1xf32>
    %228 = vector.extract_strided_slice %11 {offsets = [8, 0], sizes = [8, 128], strides = [1, 1]} : vector<16x128xf32> to vector<8x128xf32>
    %cst_63 = arith.constant dense<0.000000e+00> : vector<128x8xf32>
    %229 = tpu.matmul %225, %228, %cst_63 {dimension_numbers = #tpu.dot_dimension_numbers<[1], [1], [0], [0], [0, 0, 1, 0], [], []>} : vector<128x128xf32>, vector<8x128xf32>, vector<128x8xf32> -> vector<128x8xf32>
    %230 = tpu.reciprocal %227 {approx = true} : vector<128x1xf32> -> vector<128x1xf32>
    %231 = vector.broadcast %230 : vector<128x1xf32> to vector<128x8xf32>
    %232 = arith.mulf %229, %231 : vector<128x8xf32>
    %233 = tpu.concatenate %123, %232 in 1 : vector<128x8xf32>, vector<128x8xf32> -> vector<128x16xf32>
    %c0_64 = arith.constant 0 : index
    %c0_65 = arith.constant 0 : index
    %234 = vector.load %arg11[%c0_64, %c0_65] : memref<1x16xf32, #tpu.memory_space<vmem>>, vector<1x16xf32>
    %235 = vector.broadcast %234 : vector<1x16xf32> to vector<128x16xf32>
    %236 = arith.addf %233, %235 : vector<128x16xf32>
    %c0_66 = arith.constant 0 : index
    %c0_67 = arith.constant 0 : index
    %237 = vector.load %arg13[%c0_66, %c0_67] : memref<128x8xf32, #tpu.memory_space<vmem>>, vector<128x8xf32>
    %c0_68 = arith.constant 0 : index
    %c0_69 = arith.constant 0 : index
    %238 = vector.load %arg15[%c0_68, %c0_69] : memref<8x16xf32, #tpu.memory_space<vmem>>, vector<8x16xf32>
    %cst_70 = arith.constant dense<0.000000e+00> : vector<128x16xf32>
    %239 = tpu.matmul %237, %238, %cst_70 {dimension_numbers = #tpu.dot_dimension_numbers<[1], [0], [0], [1], [0, 0, 1, 1], [], []>} : vector<128x8xf32>, vector<8x16xf32>, vector<128x16xf32> -> vector<128x16xf32>
    %c0_71 = arith.constant 0 : index
    %c0_72 = arith.constant 0 : index
    %240 = vector.load %arg16[%c0_71, %c0_72] : memref<1x16xf32, #tpu.memory_space<vmem>>, vector<1x16xf32>
    %241 = vector.broadcast %240 : vector<1x16xf32> to vector<128x16xf32>
    %242 = arith.addf %239, %241 : vector<128x16xf32>
    %c0_73 = arith.constant 0 : index
    %c0_74 = arith.constant 0 : index
    %243 = vector.load %arg17[%c0_73, %c0_74] : memref<16x8xf32, #tpu.memory_space<vmem>>, vector<16x8xf32>
    %c0_75 = arith.constant 0 : index
    %c0_76 = arith.constant 0 : index
    %244 = vector.load %arg14[%c0_75, %c0_76] : memref<8x128xf32, #tpu.memory_space<vmem>>, vector<8x128xf32>
    %cst_77 = arith.constant dense<0.000000e+00> : vector<16x128xf32>
    %245 = tpu.matmul %243, %244, %cst_77 {dimension_numbers = #tpu.dot_dimension_numbers<[1], [0], [0], [1], [0, 0, 1, 1], [], []>} : vector<16x8xf32>, vector<8x128xf32>, vector<16x128xf32> -> vector<16x128xf32>
    %c0_78 = arith.constant 0 : index
    %c0_79 = arith.constant 0 : index
    %246 = vector.load %arg18[%c0_78, %c0_79] : memref<16x1xf32, #tpu.memory_space<vmem>>, vector<16x1xf32>
    %247 = vector.broadcast %246 : vector<16x1xf32> to vector<16x128xf32>
    %248 = arith.addf %245, %247 : vector<16x128xf32>
    %c0_80 = arith.constant 0 : index
    %c0_81 = arith.constant 0 : index
    %249 = vector.load %arg12[%c0_80, %c0_81] : memref<128x128xbf16, #tpu.memory_space<vmem>>, vector<128x128xbf16>
    %cst_82 = arith.constant 0.000000e+00 : bf16
    %250 = vector.broadcast %cst_82 : bf16 to vector<128x128xbf16>
    %251 = arith.cmpf ogt, %249, %250 : vector<128x128xbf16>
    %252 = vector.extract_strided_slice %248 {offsets = [0, 0], sizes = [1, 128], strides = [1, 1]} : vector<16x128xf32> to vector<1x128xf32>
    %253 = vector.extract_strided_slice %242 {offsets = [0, 0], sizes = [128, 1], strides = [1, 1]} : vector<128x16xf32> to vector<128x1xf32>
    %254 = vector.broadcast %253 : vector<128x1xf32> to vector<128x128xf32>
    %255 = vector.broadcast %252 : vector<1x128xf32> to vector<128x128xf32>
    %256 = arith.addf %254, %255 : vector<128x128xf32>
    %cst_83 = arith.constant 2.000000e-01 : f32
    %257 = vector.broadcast %cst_83 : f32 to vector<128x128xf32>
    %258 = arith.mulf %257, %256 : vector<128x128xf32>
    %259 = arith.maximumf %256, %258 : vector<128x128xf32>
    %c0_84 = arith.constant 0 : index
    %c0_85 = arith.constant 0 : index
    %260 = memref.load %arg2[%c0_84, %c0_85] : memref<2x8xf32, #tpu.memory_space<smem>>
    %261 = vector.broadcast %260 : f32 to vector<128x128xf32>
    %262 = arith.mulf %261, %259 : vector<128x128xf32>
    %263 = vector.extract_strided_slice %248 {offsets = [1, 0], sizes = [1, 128], strides = [1, 1]} : vector<16x128xf32> to vector<1x128xf32>
    %264 = vector.extract_strided_slice %242 {offsets = [0, 1], sizes = [128, 1], strides = [1, 1]} : vector<128x16xf32> to vector<128x1xf32>
    %265 = vector.broadcast %264 : vector<128x1xf32> to vector<128x128xf32>
    %266 = vector.broadcast %263 : vector<1x128xf32> to vector<128x128xf32>
    %267 = arith.addf %265, %266 : vector<128x128xf32>
    %cst_86 = arith.constant 2.000000e-01 : f32
    %268 = vector.broadcast %cst_86 : f32 to vector<128x128xf32>
    %269 = arith.mulf %268, %267 : vector<128x128xf32>
    %270 = arith.maximumf %267, %269 : vector<128x128xf32>
    %c0_87 = arith.constant 0 : index
    %c1_88 = arith.constant 1 : index
    %271 = memref.load %arg2[%c0_87, %c1_88] : memref<2x8xf32, #tpu.memory_space<smem>>
    %272 = vector.broadcast %271 : f32 to vector<128x128xf32>
    %273 = arith.mulf %272, %270 : vector<128x128xf32>
    %274 = arith.addf %262, %273 : vector<128x128xf32>
    %275 = vector.extract_strided_slice %248 {offsets = [2, 0], sizes = [1, 128], strides = [1, 1]} : vector<16x128xf32> to vector<1x128xf32>
    %276 = vector.extract_strided_slice %242 {offsets = [0, 2], sizes = [128, 1], strides = [1, 1]} : vector<128x16xf32> to vector<128x1xf32>
    %277 = vector.broadcast %276 : vector<128x1xf32> to vector<128x128xf32>
    %278 = vector.broadcast %275 : vector<1x128xf32> to vector<128x128xf32>
    %279 = arith.addf %277, %278 : vector<128x128xf32>
    %cst_89 = arith.constant 2.000000e-01 : f32
    %280 = vector.broadcast %cst_89 : f32 to vector<128x128xf32>
    %281 = arith.mulf %280, %279 : vector<128x128xf32>
    %282 = arith.maximumf %279, %281 : vector<128x128xf32>
    %c0_90 = arith.constant 0 : index
    %c2_91 = arith.constant 2 : index
    %283 = memref.load %arg2[%c0_90, %c2_91] : memref<2x8xf32, #tpu.memory_space<smem>>
    %284 = vector.broadcast %283 : f32 to vector<128x128xf32>
    %285 = arith.mulf %284, %282 : vector<128x128xf32>
    %286 = arith.addf %274, %285 : vector<128x128xf32>
    %287 = vector.extract_strided_slice %248 {offsets = [3, 0], sizes = [1, 128], strides = [1, 1]} : vector<16x128xf32> to vector<1x128xf32>
    %288 = vector.extract_strided_slice %242 {offsets = [0, 3], sizes = [128, 1], strides = [1, 1]} : vector<128x16xf32> to vector<128x1xf32>
    %289 = vector.broadcast %288 : vector<128x1xf32> to vector<128x128xf32>
    %290 = vector.broadcast %287 : vector<1x128xf32> to vector<128x128xf32>
    %291 = arith.addf %289, %290 : vector<128x128xf32>
    %cst_92 = arith.constant 2.000000e-01 : f32
    %292 = vector.broadcast %cst_92 : f32 to vector<128x128xf32>
    %293 = arith.mulf %292, %291 : vector<128x128xf32>
    %294 = arith.maximumf %291, %293 : vector<128x128xf32>
    %c0_93 = arith.constant 0 : index
    %c3_94 = arith.constant 3 : index
    %295 = memref.load %arg2[%c0_93, %c3_94] : memref<2x8xf32, #tpu.memory_space<smem>>
    %296 = vector.broadcast %295 : f32 to vector<128x128xf32>
    %297 = arith.mulf %296, %294 : vector<128x128xf32>
    %298 = arith.addf %286, %297 : vector<128x128xf32>
    %299 = vector.extract_strided_slice %248 {offsets = [4, 0], sizes = [1, 128], strides = [1, 1]} : vector<16x128xf32> to vector<1x128xf32>
    %300 = vector.extract_strided_slice %242 {offsets = [0, 4], sizes = [128, 1], strides = [1, 1]} : vector<128x16xf32> to vector<128x1xf32>
    %301 = vector.broadcast %300 : vector<128x1xf32> to vector<128x128xf32>
    %302 = vector.broadcast %299 : vector<1x128xf32> to vector<128x128xf32>
    %303 = arith.addf %301, %302 : vector<128x128xf32>
    %cst_95 = arith.constant 2.000000e-01 : f32
    %304 = vector.broadcast %cst_95 : f32 to vector<128x128xf32>
    %305 = arith.mulf %304, %303 : vector<128x128xf32>
    %306 = arith.maximumf %303, %305 : vector<128x128xf32>
    %c0_96 = arith.constant 0 : index
    %c4_97 = arith.constant 4 : index
    %307 = memref.load %arg2[%c0_96, %c4_97] : memref<2x8xf32, #tpu.memory_space<smem>>
    %308 = vector.broadcast %307 : f32 to vector<128x128xf32>
    %309 = arith.mulf %308, %306 : vector<128x128xf32>
    %310 = arith.addf %298, %309 : vector<128x128xf32>
    %311 = vector.extract_strided_slice %248 {offsets = [5, 0], sizes = [1, 128], strides = [1, 1]} : vector<16x128xf32> to vector<1x128xf32>
    %312 = vector.extract_strided_slice %242 {offsets = [0, 5], sizes = [128, 1], strides = [1, 1]} : vector<128x16xf32> to vector<128x1xf32>
    %313 = vector.broadcast %312 : vector<128x1xf32> to vector<128x128xf32>
    %314 = vector.broadcast %311 : vector<1x128xf32> to vector<128x128xf32>
    %315 = arith.addf %313, %314 : vector<128x128xf32>
    %cst_98 = arith.constant 2.000000e-01 : f32
    %316 = vector.broadcast %cst_98 : f32 to vector<128x128xf32>
    %317 = arith.mulf %316, %315 : vector<128x128xf32>
    %318 = arith.maximumf %315, %317 : vector<128x128xf32>
    %c0_99 = arith.constant 0 : index
    %c5_100 = arith.constant 5 : index
    %319 = memref.load %arg2[%c0_99, %c5_100] : memref<2x8xf32, #tpu.memory_space<smem>>
    %320 = vector.broadcast %319 : f32 to vector<128x128xf32>
    %321 = arith.mulf %320, %318 : vector<128x128xf32>
    %322 = arith.addf %310, %321 : vector<128x128xf32>
    %323 = vector.extract_strided_slice %248 {offsets = [6, 0], sizes = [1, 128], strides = [1, 1]} : vector<16x128xf32> to vector<1x128xf32>
    %324 = vector.extract_strided_slice %242 {offsets = [0, 6], sizes = [128, 1], strides = [1, 1]} : vector<128x16xf32> to vector<128x1xf32>
    %325 = vector.broadcast %324 : vector<128x1xf32> to vector<128x128xf32>
    %326 = vector.broadcast %323 : vector<1x128xf32> to vector<128x128xf32>
    %327 = arith.addf %325, %326 : vector<128x128xf32>
    %cst_101 = arith.constant 2.000000e-01 : f32
    %328 = vector.broadcast %cst_101 : f32 to vector<128x128xf32>
    %329 = arith.mulf %328, %327 : vector<128x128xf32>
    %330 = arith.maximumf %327, %329 : vector<128x128xf32>
    %c0_102 = arith.constant 0 : index
    %c6_103 = arith.constant 6 : index
    %331 = memref.load %arg2[%c0_102, %c6_103] : memref<2x8xf32, #tpu.memory_space<smem>>
    %332 = vector.broadcast %331 : f32 to vector<128x128xf32>
    %333 = arith.mulf %332, %330 : vector<128x128xf32>
    %334 = arith.addf %322, %333 : vector<128x128xf32>
    %335 = vector.extract_strided_slice %248 {offsets = [7, 0], sizes = [1, 128], strides = [1, 1]} : vector<16x128xf32> to vector<1x128xf32>
    %336 = vector.extract_strided_slice %242 {offsets = [0, 7], sizes = [128, 1], strides = [1, 1]} : vector<128x16xf32> to vector<128x1xf32>
    %337 = vector.broadcast %336 : vector<128x1xf32> to vector<128x128xf32>
    %338 = vector.broadcast %335 : vector<1x128xf32> to vector<128x128xf32>
    %339 = arith.addf %337, %338 : vector<128x128xf32>
    %cst_104 = arith.constant 2.000000e-01 : f32
    %340 = vector.broadcast %cst_104 : f32 to vector<128x128xf32>
    %341 = arith.mulf %340, %339 : vector<128x128xf32>
    %342 = arith.maximumf %339, %341 : vector<128x128xf32>
    %c0_105 = arith.constant 0 : index
    %c7_106 = arith.constant 7 : index
    %343 = memref.load %arg2[%c0_105, %c7_106] : memref<2x8xf32, #tpu.memory_space<smem>>
    %344 = vector.broadcast %343 : f32 to vector<128x128xf32>
    %345 = arith.mulf %344, %342 : vector<128x128xf32>
    %346 = arith.addf %334, %345 : vector<128x128xf32>
    %cst_107 = arith.constant -1.000000e+30 : f32
    %347 = vector.broadcast %cst_107 : f32 to vector<128x128xf32>
    %348 = arith.select %251, %346, %347 : vector<128x128xi1>, vector<128x128xf32>
    %cst_108 = arith.constant dense<0xFF800000> : vector<128xf32>
    %349 = vector.multi_reduction <maximumf>, %348, %cst_108 [1] : vector<128x128xf32> to vector<128xf32>
    %350 = vector.shape_cast %349 : vector<128xf32> to vector<128x1xf32>
    %351 = vector.broadcast %350 : vector<128x1xf32> to vector<128x128xf32>
    %352 = arith.subf %348, %351 : vector<128x128xf32>
    %353 = math.exp %352 : vector<128x128xf32>
    %cst_109 = arith.constant dense<0.000000e+00> : vector<128xf32>
    %354 = vector.multi_reduction <add>, %353, %cst_109 [1] : vector<128x128xf32> to vector<128xf32>
    %355 = vector.shape_cast %354 : vector<128xf32> to vector<128x1xf32>
    %356 = vector.extract_strided_slice %248 {offsets = [0, 0], sizes = [8, 128], strides = [1, 1]} : vector<16x128xf32> to vector<8x128xf32>
    %cst_110 = arith.constant dense<0.000000e+00> : vector<128x8xf32>
    %357 = tpu.matmul %353, %356, %cst_110 {dimension_numbers = #tpu.dot_dimension_numbers<[1], [1], [0], [0], [0, 0, 1, 0], [], []>} : vector<128x128xf32>, vector<8x128xf32>, vector<128x8xf32> -> vector<128x8xf32>
    %358 = tpu.reciprocal %355 {approx = true} : vector<128x1xf32> -> vector<128x1xf32>
    %359 = vector.broadcast %358 : vector<128x1xf32> to vector<128x8xf32>
    %360 = arith.mulf %357, %359 : vector<128x8xf32>
    %361 = vector.extract_strided_slice %248 {offsets = [8, 0], sizes = [1, 128], strides = [1, 1]} : vector<16x128xf32> to vector<1x128xf32>
    %362 = vector.extract_strided_slice %242 {offsets = [0, 8], sizes = [128, 1], strides = [1, 1]} : vector<128x16xf32> to vector<128x1xf32>
    %363 = vector.broadcast %362 : vector<128x1xf32> to vector<128x128xf32>
    %364 = vector.broadcast %361 : vector<1x128xf32> to vector<128x128xf32>
    %365 = arith.addf %363, %364 : vector<128x128xf32>
    %cst_111 = arith.constant 2.000000e-01 : f32
    %366 = vector.broadcast %cst_111 : f32 to vector<128x128xf32>
    %367 = arith.mulf %366, %365 : vector<128x128xf32>
    %368 = arith.maximumf %365, %367 : vector<128x128xf32>
    %c1_112 = arith.constant 1 : index
    %c0_113 = arith.constant 0 : index
    %369 = memref.load %arg2[%c1_112, %c0_113] : memref<2x8xf32, #tpu.memory_space<smem>>
    %370 = vector.broadcast %369 : f32 to vector<128x128xf32>
    %371 = arith.mulf %370, %368 : vector<128x128xf32>
    %372 = vector.extract_strided_slice %248 {offsets = [9, 0], sizes = [1, 128], strides = [1, 1]} : vector<16x128xf32> to vector<1x128xf32>
    %373 = vector.extract_strided_slice %242 {offsets = [0, 9], sizes = [128, 1], strides = [1, 1]} : vector<128x16xf32> to vector<128x1xf32>
    %374 = vector.broadcast %373 : vector<128x1xf32> to vector<128x128xf32>
    %375 = vector.broadcast %372 : vector<1x128xf32> to vector<128x128xf32>
    %376 = arith.addf %374, %375 : vector<128x128xf32>
    %cst_114 = arith.constant 2.000000e-01 : f32
    %377 = vector.broadcast %cst_114 : f32 to vector<128x128xf32>
    %378 = arith.mulf %377, %376 : vector<128x128xf32>
    %379 = arith.maximumf %376, %378 : vector<128x128xf32>
    %c1_115 = arith.constant 1 : index
    %c1_116 = arith.constant 1 : index
    %380 = memref.load %arg2[%c1_115, %c1_116] : memref<2x8xf32, #tpu.memory_space<smem>>
    %381 = vector.broadcast %380 : f32 to vector<128x128xf32>
    %382 = arith.mulf %381, %379 : vector<128x128xf32>
    %383 = arith.addf %371, %382 : vector<128x128xf32>
    %384 = vector.extract_strided_slice %248 {offsets = [10, 0], sizes = [1, 128], strides = [1, 1]} : vector<16x128xf32> to vector<1x128xf32>
    %385 = vector.extract_strided_slice %242 {offsets = [0, 10], sizes = [128, 1], strides = [1, 1]} : vector<128x16xf32> to vector<128x1xf32>
    %386 = vector.broadcast %385 : vector<128x1xf32> to vector<128x128xf32>
    %387 = vector.broadcast %384 : vector<1x128xf32> to vector<128x128xf32>
    %388 = arith.addf %386, %387 : vector<128x128xf32>
    %cst_117 = arith.constant 2.000000e-01 : f32
    %389 = vector.broadcast %cst_117 : f32 to vector<128x128xf32>
    %390 = arith.mulf %389, %388 : vector<128x128xf32>
    %391 = arith.maximumf %388, %390 : vector<128x128xf32>
    %c1_118 = arith.constant 1 : index
    %c2_119 = arith.constant 2 : index
    %392 = memref.load %arg2[%c1_118, %c2_119] : memref<2x8xf32, #tpu.memory_space<smem>>
    %393 = vector.broadcast %392 : f32 to vector<128x128xf32>
    %394 = arith.mulf %393, %391 : vector<128x128xf32>
    %395 = arith.addf %383, %394 : vector<128x128xf32>
    %396 = vector.extract_strided_slice %248 {offsets = [11, 0], sizes = [1, 128], strides = [1, 1]} : vector<16x128xf32> to vector<1x128xf32>
    %397 = vector.extract_strided_slice %242 {offsets = [0, 11], sizes = [128, 1], strides = [1, 1]} : vector<128x16xf32> to vector<128x1xf32>
    %398 = vector.broadcast %397 : vector<128x1xf32> to vector<128x128xf32>
    %399 = vector.broadcast %396 : vector<1x128xf32> to vector<128x128xf32>
    %400 = arith.addf %398, %399 : vector<128x128xf32>
    %cst_120 = arith.constant 2.000000e-01 : f32
    %401 = vector.broadcast %cst_120 : f32 to vector<128x128xf32>
    %402 = arith.mulf %401, %400 : vector<128x128xf32>
    %403 = arith.maximumf %400, %402 : vector<128x128xf32>
    %c1_121 = arith.constant 1 : index
    %c3_122 = arith.constant 3 : index
    %404 = memref.load %arg2[%c1_121, %c3_122] : memref<2x8xf32, #tpu.memory_space<smem>>
    %405 = vector.broadcast %404 : f32 to vector<128x128xf32>
    %406 = arith.mulf %405, %403 : vector<128x128xf32>
    %407 = arith.addf %395, %406 : vector<128x128xf32>
    %408 = vector.extract_strided_slice %248 {offsets = [12, 0], sizes = [1, 128], strides = [1, 1]} : vector<16x128xf32> to vector<1x128xf32>
    %409 = vector.extract_strided_slice %242 {offsets = [0, 12], sizes = [128, 1], strides = [1, 1]} : vector<128x16xf32> to vector<128x1xf32>
    %410 = vector.broadcast %409 : vector<128x1xf32> to vector<128x128xf32>
    %411 = vector.broadcast %408 : vector<1x128xf32> to vector<128x128xf32>
    %412 = arith.addf %410, %411 : vector<128x128xf32>
    %cst_123 = arith.constant 2.000000e-01 : f32
    %413 = vector.broadcast %cst_123 : f32 to vector<128x128xf32>
    %414 = arith.mulf %413, %412 : vector<128x128xf32>
    %415 = arith.maximumf %412, %414 : vector<128x128xf32>
    %c1_124 = arith.constant 1 : index
    %c4_125 = arith.constant 4 : index
    %416 = memref.load %arg2[%c1_124, %c4_125] : memref<2x8xf32, #tpu.memory_space<smem>>
    %417 = vector.broadcast %416 : f32 to vector<128x128xf32>
    %418 = arith.mulf %417, %415 : vector<128x128xf32>
    %419 = arith.addf %407, %418 : vector<128x128xf32>
    %420 = vector.extract_strided_slice %248 {offsets = [13, 0], sizes = [1, 128], strides = [1, 1]} : vector<16x128xf32> to vector<1x128xf32>
    %421 = vector.extract_strided_slice %242 {offsets = [0, 13], sizes = [128, 1], strides = [1, 1]} : vector<128x16xf32> to vector<128x1xf32>
    %422 = vector.broadcast %421 : vector<128x1xf32> to vector<128x128xf32>
    %423 = vector.broadcast %420 : vector<1x128xf32> to vector<128x128xf32>
    %424 = arith.addf %422, %423 : vector<128x128xf32>
    %cst_126 = arith.constant 2.000000e-01 : f32
    %425 = vector.broadcast %cst_126 : f32 to vector<128x128xf32>
    %426 = arith.mulf %425, %424 : vector<128x128xf32>
    %427 = arith.maximumf %424, %426 : vector<128x128xf32>
    %c1_127 = arith.constant 1 : index
    %c5_128 = arith.constant 5 : index
    %428 = memref.load %arg2[%c1_127, %c5_128] : memref<2x8xf32, #tpu.memory_space<smem>>
    %429 = vector.broadcast %428 : f32 to vector<128x128xf32>
    %430 = arith.mulf %429, %427 : vector<128x128xf32>
    %431 = arith.addf %419, %430 : vector<128x128xf32>
    %432 = vector.extract_strided_slice %248 {offsets = [14, 0], sizes = [1, 128], strides = [1, 1]} : vector<16x128xf32> to vector<1x128xf32>
    %433 = vector.extract_strided_slice %242 {offsets = [0, 14], sizes = [128, 1], strides = [1, 1]} : vector<128x16xf32> to vector<128x1xf32>
    %434 = vector.broadcast %433 : vector<128x1xf32> to vector<128x128xf32>
    %435 = vector.broadcast %432 : vector<1x128xf32> to vector<128x128xf32>
    %436 = arith.addf %434, %435 : vector<128x128xf32>
    %cst_129 = arith.constant 2.000000e-01 : f32
    %437 = vector.broadcast %cst_129 : f32 to vector<128x128xf32>
    %438 = arith.mulf %437, %436 : vector<128x128xf32>
    %439 = arith.maximumf %436, %438 : vector<128x128xf32>
    %c1_130 = arith.constant 1 : index
    %c6_131 = arith.constant 6 : index
    %440 = memref.load %arg2[%c1_130, %c6_131] : memref<2x8xf32, #tpu.memory_space<smem>>
    %441 = vector.broadcast %440 : f32 to vector<128x128xf32>
    %442 = arith.mulf %441, %439 : vector<128x128xf32>
    %443 = arith.addf %431, %442 : vector<128x128xf32>
    %444 = vector.extract_strided_slice %248 {offsets = [15, 0], sizes = [1, 128], strides = [1, 1]} : vector<16x128xf32> to vector<1x128xf32>
    %445 = vector.extract_strided_slice %242 {offsets = [0, 15], sizes = [128, 1], strides = [1, 1]} : vector<128x16xf32> to vector<128x1xf32>
    %446 = vector.broadcast %445 : vector<128x1xf32> to vector<128x128xf32>
    %447 = vector.broadcast %444 : vector<1x128xf32> to vector<128x128xf32>
    %448 = arith.addf %446, %447 : vector<128x128xf32>
    %cst_132 = arith.constant 2.000000e-01 : f32
    %449 = vector.broadcast %cst_132 : f32 to vector<128x128xf32>
    %450 = arith.mulf %449, %448 : vector<128x128xf32>
    %451 = arith.maximumf %448, %450 : vector<128x128xf32>
    %c1_133 = arith.constant 1 : index
    %c7_134 = arith.constant 7 : index
    %452 = memref.load %arg2[%c1_133, %c7_134] : memref<2x8xf32, #tpu.memory_space<smem>>
    %453 = vector.broadcast %452 : f32 to vector<128x128xf32>
    %454 = arith.mulf %453, %451 : vector<128x128xf32>
    %455 = arith.addf %443, %454 : vector<128x128xf32>
    %cst_135 = arith.constant -1.000000e+30 : f32
    %456 = vector.broadcast %cst_135 : f32 to vector<128x128xf32>
    %457 = arith.select %251, %455, %456 : vector<128x128xi1>, vector<128x128xf32>
    %cst_136 = arith.constant dense<0xFF800000> : vector<128xf32>
    %458 = vector.multi_reduction <maximumf>, %457, %cst_136 [1] : vector<128x128xf32> to vector<128xf32>
    %459 = vector.shape_cast %458 : vector<128xf32> to vector<128x1xf32>
    %460 = vector.broadcast %459 : vector<128x1xf32> to vector<128x128xf32>
    %461 = arith.subf %457, %460 : vector<128x128xf32>
    %462 = math.exp %461 : vector<128x128xf32>
    %cst_137 = arith.constant dense<0.000000e+00> : vector<128xf32>
    %463 = vector.multi_reduction <add>, %462, %cst_137 [1] : vector<128x128xf32> to vector<128xf32>
    %464 = vector.shape_cast %463 : vector<128xf32> to vector<128x1xf32>
    %465 = vector.extract_strided_slice %248 {offsets = [8, 0], sizes = [8, 128], strides = [1, 1]} : vector<16x128xf32> to vector<8x128xf32>
    %cst_138 = arith.constant dense<0.000000e+00> : vector<128x8xf32>
    %466 = tpu.matmul %462, %465, %cst_138 {dimension_numbers = #tpu.dot_dimension_numbers<[1], [1], [0], [0], [0, 0, 1, 0], [], []>} : vector<128x128xf32>, vector<8x128xf32>, vector<128x8xf32> -> vector<128x8xf32>
    %467 = tpu.reciprocal %464 {approx = true} : vector<128x1xf32> -> vector<128x1xf32>
    %468 = vector.broadcast %467 : vector<128x1xf32> to vector<128x8xf32>
    %469 = arith.mulf %466, %468 : vector<128x8xf32>
    %470 = tpu.concatenate %360, %469 in 1 : vector<128x8xf32>, vector<128x8xf32> -> vector<128x16xf32>
    %c0_139 = arith.constant 0 : index
    %c0_140 = arith.constant 0 : index
    %471 = vector.load %arg19[%c0_139, %c0_140] : memref<1x16xf32, #tpu.memory_space<vmem>>, vector<1x16xf32>
    %472 = vector.broadcast %471 : vector<1x16xf32> to vector<128x16xf32>
    %473 = arith.addf %470, %472 : vector<128x16xf32>
    %cst_141 = arith.constant 0.000000e+00 : f32
    %474 = vector.broadcast %cst_141 : f32 to vector<128x16xf32>
    %475 = arith.cmpf ogt, %236, %474 : vector<128x16xf32>
    %cst_142 = arith.constant 0.000000e+00 : f32
    %476 = vector.broadcast %cst_142 : f32 to vector<128x16xf32>
    %477 = arith.minimumf %236, %476 : vector<128x16xf32>
    %478 = math.exp %477 : vector<128x16xf32>
    %cst_143 = arith.constant 1.000000e+00 : f32
    %479 = vector.broadcast %cst_143 : f32 to vector<128x16xf32>
    %480 = arith.subf %478, %479 : vector<128x16xf32>
    %481 = arith.select %475, %236, %480 : vector<128x16xi1>, vector<128x16xf32>
    %cst_144 = arith.constant 0.000000e+00 : f32
    %482 = vector.broadcast %cst_144 : f32 to vector<128x16xf32>
    %483 = arith.cmpf ogt, %473, %482 : vector<128x16xf32>
    %cst_145 = arith.constant 0.000000e+00 : f32
    %484 = vector.broadcast %cst_145 : f32 to vector<128x16xf32>
    %485 = arith.minimumf %473, %484 : vector<128x16xf32>
    %486 = math.exp %485 : vector<128x16xf32>
    %cst_146 = arith.constant 1.000000e+00 : f32
    %487 = vector.broadcast %cst_146 : f32 to vector<128x16xf32>
    %488 = arith.subf %486, %487 : vector<128x16xf32>
    %489 = arith.select %483, %473, %488 : vector<128x16xi1>, vector<128x16xf32>
    %c0_147 = arith.constant 0 : index
    %c0_148 = arith.constant 0 : index
    %490 = memref.load %arg3[%c0_147, %c0_148] : memref<1x2xf32, #tpu.memory_space<smem>>
    %c0_149 = arith.constant 0 : index
    %c1_150 = arith.constant 1 : index
    %491 = memref.load %arg3[%c0_149, %c1_150] : memref<1x2xf32, #tpu.memory_space<smem>>
    %492 = vector.broadcast %490 : f32 to vector<128x16xf32>
    %493 = arith.mulf %492, %481 : vector<128x16xf32>
    %494 = vector.broadcast %491 : f32 to vector<128x16xf32>
    %495 = arith.mulf %494, %489 : vector<128x16xf32>
    %496 = arith.addf %493, %495 : vector<128x16xf32>
    %c0_151 = arith.constant 0 : index
    %c0_152 = arith.constant 0 : index
    %497 = vector.load %arg20[%c0_151, %c0_152] : memref<128x16xf32, #tpu.memory_space<vmem>>, vector<128x16xf32>
    tpu.vector_store %arg20[%c0_151, %c0_152], %496 {strides = array<i32>} : memref<128x16xf32, #tpu.memory_space<vmem>>, vector<128x16xf32>,
    %498 = vector.broadcast %490 : f32 to vector<128x16xf32>
    %499 = arith.mulf %498, %489 : vector<128x16xf32>
    %500 = vector.broadcast %491 : f32 to vector<128x16xf32>
    %501 = arith.mulf %500, %481 : vector<128x16xf32>
    %502 = arith.addf %499, %501 : vector<128x16xf32>
    %c0_153 = arith.constant 0 : index
    %c0_154 = arith.constant 0 : index
    %503 = vector.load %arg21[%c0_153, %c0_154] : memref<128x16xf32, #tpu.memory_space<vmem>>, vector<128x16xf32>
    tpu.vector_store %arg21[%c0_153, %c0_154], %502 {strides = array<i32>} : memref<128x16xf32, #tpu.memory_space<vmem>>, vector<128x16xf32>,
    return
  }
  func.func @transform_0(%arg0: i32) -> (i32, i32) {
    %c0_i32 = arith.constant 0 : i32
    %c0_i32_0 = arith.constant 0 : i32
    %c0_i32_1 = arith.constant 0 : i32
    return %c0_i32, %c0_i32_0 : i32, i32
  }
  func.func @transform_1(%arg0: i32) -> (i32, i32) {
    %c0_i32 = arith.constant 0 : i32
    %c0_i32_0 = arith.constant 0 : i32
    %c0_i32_1 = arith.constant 0 : i32
    return %c0_i32, %c0_i32_0 : i32, i32
  }
  func.func @transform_2(%arg0: i32) -> (i32, i32) {
    %c0_i32 = arith.constant 0 : i32
    %c0_i32_0 = arith.constant 0 : i32
    %c0_i32_1 = arith.constant 0 : i32
    return %c0_i32, %c0_i32_0 : i32, i32
  }
  func.func @transform_3(%arg0: i32) -> (i32, i32) {
    %c0_i32 = arith.constant 0 : i32
    %c0_i32_0 = arith.constant 0 : i32
    return %arg0, %c0_i32 : i32, i32
  }
  func.func @transform_4(%arg0: i32) -> (i32, i32) {
    %c0_i32 = arith.constant 0 : i32
    %c0_i32_0 = arith.constant 0 : i32
    return %arg0, %c0_i32 : i32, i32
  }
  func.func @transform_5(%arg0: i32) -> (i32, i32) {
    %c0_i32 = arith.constant 0 : i32
    %c0_i32_0 = arith.constant 0 : i32
    %c0_i32_1 = arith.constant 0 : i32
    return %c0_i32, %c0_i32_0 : i32, i32
  }
  func.func @transform_6(%arg0: i32) -> (i32, i32) {
    %c0_i32 = arith.constant 0 : i32
    %c0_i32_0 = arith.constant 0 : i32
    %c0_i32_1 = arith.constant 0 : i32
    return %c0_i32, %c0_i32_0 : i32, i32
  }
  func.func @transform_7(%arg0: i32) -> (i32, i32) {
    %c0_i32 = arith.constant 0 : i32
    %c0_i32_0 = arith.constant 0 : i32
    %c0_i32_1 = arith.constant 0 : i32
    return %c0_i32, %c0_i32_0 : i32, i32
  }
  func.func @transform_8(%arg0: i32) -> (i32, i32) {
    %c0_i32 = arith.constant 0 : i32
    %c0_i32_0 = arith.constant 0 : i32
    %c0_i32_1 = arith.constant 0 : i32
    return %c0_i32, %c0_i32_0 : i32, i32
  }
  func.func @transform_9(%arg0: i32) -> (i32, i32) {
    %c0_i32 = arith.constant 0 : i32
    %c0_i32_0 = arith.constant 0 : i32
    %c0_i32_1 = arith.constant 0 : i32
    return %c0_i32, %c0_i32_0 : i32, i32
  }
  func.func @transform_10(%arg0: i32) -> (i32, i32) {
    %c0_i32 = arith.constant 0 : i32
    %c0_i32_0 = arith.constant 0 : i32
    %c0_i32_1 = arith.constant 0 : i32
    return %c0_i32, %c0_i32_0 : i32, i32
  }
  func.func @transform_11(%arg0: i32) -> (i32, i32) {
    %c0_i32 = arith.constant 0 : i32
    %c0_i32_0 = arith.constant 0 : i32
    return %arg0, %c0_i32 : i32, i32
  }
  func.func @transform_12(%arg0: i32) -> (i32, i32) {
    %c0_i32 = arith.constant 0 : i32
    %c0_i32_0 = arith.constant 0 : i32
    return %arg0, %c0_i32 : i32, i32
  }
  func.func @transform_13(%arg0: i32) -> (i32, i32) {
    %c0_i32 = arith.constant 0 : i32
    %c0_i32_0 = arith.constant 0 : i32
    %c0_i32_1 = arith.constant 0 : i32
    return %c0_i32, %c0_i32_0 : i32, i32
  }
  func.func @transform_14(%arg0: i32) -> (i32, i32) {
    %c0_i32 = arith.constant 0 : i32
    %c0_i32_0 = arith.constant 0 : i32
    %c0_i32_1 = arith.constant 0 : i32
    return %c0_i32, %c0_i32_0 : i32, i32
  }
  func.func @transform_15(%arg0: i32) -> (i32, i32) {
    %c0_i32 = arith.constant 0 : i32
    %c0_i32_0 = arith.constant 0 : i32
    %c0_i32_1 = arith.constant 0 : i32
    return %c0_i32, %c0_i32_0 : i32, i32
  }
  func.func @transform_16(%arg0: i32) -> (i32, i32) {
    %c0_i32 = arith.constant 0 : i32
    %c0_i32_0 = arith.constant 0 : i32
    %c0_i32_1 = arith.constant 0 : i32
    return %c0_i32, %c0_i32_0 : i32, i32
  }
  func.func @transform_17(%arg0: i32) -> (i32, i32) {
    %c0_i32 = arith.constant 0 : i32
    %c0_i32_0 = arith.constant 0 : i32
    %c0_i32_1 = arith.constant 0 : i32
    return %c0_i32, %c0_i32_0 : i32, i32
  }
  func.func @transform_18(%arg0: i32) -> (i32, i32) {
    %c0_i32 = arith.constant 0 : i32
    %c0_i32_0 = arith.constant 0 : i32
    %c0_i32_1 = arith.constant 0 : i32
    return %c0_i32, %c0_i32_0 : i32, i32
  }
  func.func @transform_19(%arg0: i32) -> (i32, i32) {
    %c0_i32 = arith.constant 0 : i32
    %c0_i32_0 = arith.constant 0 : i32
    return %arg0, %c0_i32 : i32, i32
  }
  func.func @transform_20(%arg0: i32) -> (i32, i32) {
    %c0_i32 = arith.constant 0 : i32
    %c0_i32_0 = arith.constant 0 : i32
    return %arg0, %c0_i32 : i32, i32
  }
}

</mosaic_0001>

<llo_original>
// kernel: tpu_custom_call.1
$region0: #{tpu_custom_call.1}
  #allocation0 [shape = 'u32[]', space=smem, size = 0x4, offset = 0x4, fixed_abs, tag = 'smem constant byte address 0x4 - core index']
  #allocation1 [shape = 'u32[144,128]{1,0:T(1,128)}', space=vmem, size = 0x12000, scoped, tag = 'internal scratch']
  %s0 = inlined_call_operand.vmem [shape: f32[2,8], index: 0, kind: input, shape index: {}]
  %s1 = inlined_call_operand.vmem [shape: f32[2,8], index: 1, kind: input, shape index: {}]
  %s2 = inlined_call_operand.vmem [shape: f32[1,2], index: 2, kind: input, shape index: {}]
  %s3 = inlined_call_operand.vmem [shape: bf16[128,128], index: 3, kind: input, shape index: {}]
  %s4 = inlined_call_operand.vmem [shape: f32[128,8], index: 4, kind: input, shape index: {}]
  %s5 = inlined_call_operand.vmem [shape: f32[8,128], index: 5, kind: input, shape index: {}]
  %s6 = inlined_call_operand.vmem [shape: f32[8,16], index: 6, kind: input, shape index: {}]
  %s7 = inlined_call_operand.vmem [shape: f32[1,16], index: 7, kind: input, shape index: {}]
  %s8 = inlined_call_operand.vmem [shape: f32[16,8], index: 8, kind: input, shape index: {}]
  %s9 = inlined_call_operand.vmem [shape: f32[16,1], index: 9, kind: input, shape index: {}]
  %s10 = inlined_call_operand.vmem [shape: f32[1,16], index: 10, kind: input, shape index: {}]
  %s11 = inlined_call_operand.vmem [shape: bf16[128,128], index: 11, kind: input, shape index: {}]
  %s12 = inlined_call_operand.vmem [shape: f32[128,8], index: 12, kind: input, shape index: {}]
  %s13 = inlined_call_operand.vmem [shape: f32[8,128], index: 13, kind: input, shape index: {}]
  %s14 = inlined_call_operand.vmem [shape: f32[8,16], index: 14, kind: input, shape index: {}]
  %s15 = inlined_call_operand.vmem [shape: f32[1,16], index: 15, kind: input, shape index: {}]
  %s16 = inlined_call_operand.vmem [shape: f32[16,8], index: 16, kind: input, shape index: {}]
  %s17 = inlined_call_operand.vmem [shape: f32[16,1], index: 17, kind: input, shape index: {}]
  %s18 = inlined_call_operand.vmem [shape: f32[1,16], index: 18, kind: input, shape index: {}]
  %s19 = inlined_call_operand.vmem [shape: f32[128,16], index: 19, kind: output, shape index: {0}]
  %s20 = inlined_call_operand.vmem [shape: f32[128,16], index: 20, kind: output, shape index: {1}]
  %21 = xla_tuple %s19, %s20
  %s22 = sld [smem:[#allocation0]]
  $region106: #{tpu_custom_call.1} parent=0
    _
  %s24 = ssub.s32 1, %s22
  %s25 = scalar_select 0, %s24, %s22
  $region1: #{tpu_custom_call.1} parent=0
    #allocation2 [shape = 'u8[1024]{0}', space=smem, size = 0x400, scoped, tag = 'input window, operand 0, single buffered']
    #allocation3 [shape = 's32[1]{0}', space=sflag, size = 0x4, scoped, tag = 'scoped memory for tpu_custom_call.1']
    #allocation4 [shape = 'u8[1024]{0}', space=smem, size = 0x400, scoped, tag = 'input window, operand 1, single buffered']
    #allocation5 [shape = 's32[1]{0}', space=sflag, size = 0x4, scoped, tag = 'scoped memory for tpu_custom_call.1']
    #allocation6 [shape = 'u8[512]{0}', space=smem, size = 0x200, scoped, tag = 'input window, operand 2, single buffered']
    %26 = vsyncpa [#allocation3], 0
    %27 = vsyncpa [#allocation5], 0
    // Predicated region
    $region2: #{tpu_custom_call.1} parent=1 // pred_check
      _
    $region3: #{tpu_custom_call.1} parent=1 // pred_check_branch
      %29 = sbr.rel (0) target = $region5
    $region4: #{tpu_custom_call.1} parent=1 // pred_region
      %s31 = ssub.s32 32, 32
      %32 = vsyncadd [#allocation3], %s31
      %s34 = sshll.u32 %s0, 4
      %s35 = int_to_ptr.vmem [resolvable:$true] %s34
      %37 = dma.vmem_to_smem %s35, 32, [#allocation2], [#allocation3]
    $region5: #{tpu_custom_call.1} parent=1 // pred_fallthru
      _
    // Predicated region
    $region6: #{tpu_custom_call.1} parent=1 // pred_check
      _
    $region7: #{tpu_custom_call.1} parent=1 // pred_check_branch
      %39 = sbr.rel (0) target = $region9
    $region8: #{tpu_custom_call.1} parent=1 // pred_region
      %s41 = ssub.s32 32, 32
      %42 = vsyncadd [#allocation5], %s41
      %s44 = sshll.u32 %s1, 4
      %s45 = int_to_ptr.vmem [resolvable:$true] %s44
      %47 = dma.vmem_to_smem %s45, 32, [#allocation4], [#allocation5]
    $region9: #{tpu_custom_call.1} parent=1 // pred_fallthru
      _
    // Predicated region
    $region10: #{tpu_custom_call.1} parent=1 // pred_check
      _
    $region11: #{tpu_custom_call.1} parent=1 // pred_check_branch
      %49 = sbr.rel (0) target = $region13
    $region12: #{tpu_custom_call.1} parent=1 // pred_region
      %s51 = ssub.s32 16, 16
      %52 = vsyncadd [#allocation5], %s51
      %s54 = sshll.u32 %s2, 4
      %s55 = int_to_ptr.vmem [resolvable:$true] %s54
      %57 = dma.vmem_to_smem %s55, 16, [#allocation6], [#allocation5]
    $region13: #{tpu_custom_call.1} parent=1 // pred_fallthru
      _
    // Predicated region
    $region14: #{tpu_custom_call.1} parent=1 // pred_check
      _
    $region15: #{tpu_custom_call.1} parent=1 // pred_check_branch
      %59 = sbr.rel (0) target = $region17
    $region16: #{tpu_custom_call.1} parent=1 // pred_region
      _
    $region17: #{tpu_custom_call.1} parent=1 // pred_fallthru
      _
    // Predicated region
    $region18: #{tpu_custom_call.1} parent=1 // pred_check
      _
    $region19: #{tpu_custom_call.1} parent=1 // pred_check_branch
      %61 = sbr.rel (0) target = $region21
    $region20: #{tpu_custom_call.1} parent=1 // pred_region
      _
    $region21: #{tpu_custom_call.1} parent=1 // pred_fallthru
      _
    // Predicated region
    $region22: #{tpu_custom_call.1} parent=1 // pred_check
      _
    $region23: #{tpu_custom_call.1} parent=1 // pred_check_branch
      %63 = sbr.rel (0) target = $region25
    $region24: #{tpu_custom_call.1} parent=1 // pred_region
      _
    $region25: #{tpu_custom_call.1} parent=1 // pred_fallthru
      _
    // Predicated region
    $region26: #{tpu_custom_call.1} parent=1 // pred_check
      _
    $region27: #{tpu_custom_call.1} parent=1 // pred_check_branch
      %65 = sbr.rel (0) target = $region29
    $region28: #{tpu_custom_call.1} parent=1 // pred_region
      _
    $region29: #{tpu_custom_call.1} parent=1 // pred_fallthru
      _
    // Predicated region
    $region30: #{tpu_custom_call.1} parent=1 // pred_check
      _
    $region31: #{tpu_custom_call.1} parent=1 // pred_check_branch
      %67 = sbr.rel (0) target = $region33
    $region32: #{tpu_custom_call.1} parent=1 // pred_region
      _
    $region33: #{tpu_custom_call.1} parent=1 // pred_fallthru
      _
    // Predicated region
    $region34: #{tpu_custom_call.1} parent=1 // pred_check
      _
    $region35: #{tpu_custom_call.1} parent=1 // pred_check_branch
      %69 = sbr.rel (0) target = $region37
    $region36: #{tpu_custom_call.1} parent=1 // pred_region
      _
    $region37: #{tpu_custom_call.1} parent=1 // pred_fallthru
      _
    // Predicated region
    $region38: #{tpu_custom_call.1} parent=1 // pred_check
      _
    $region39: #{tpu_custom_call.1} parent=1 // pred_check_branch
      %71 = sbr.rel (0) target = $region41
    $region40: #{tpu_custom_call.1} parent=1 // pred_region
      _
    $region41: #{tpu_custom_call.1} parent=1 // pred_fallthru
      _
    // Predicated region
    $region42: #{tpu_custom_call.1} parent=1 // pred_check
      _
    $region43: #{tpu_custom_call.1} parent=1 // pred_check_branch
      %73 = sbr.rel (0) target = $region45
    $region44: #{tpu_custom_call.1} parent=1 // pred_region
      _
    $region45: #{tpu_custom_call.1} parent=1 // pred_fallthru
      _
    // Predicated region
    $region46: #{tpu_custom_call.1} parent=1 // pred_check
      _
    $region47: #{tpu_custom_call.1} parent=1 // pred_check_branch
      %75 = sbr.rel (0) target = $region49
    $region48: #{tpu_custom_call.1} parent=1 // pred_region
      _
    $region49: #{tpu_custom_call.1} parent=1 // pred_fallthru
      _
    // Predicated region
    $region50: #{tpu_custom_call.1} parent=1 // pred_check
      _
    $region51: #{tpu_custom_call.1} parent=1 // pred_check_branch
      %77 = sbr.rel (0) target = $region53
    $region52: #{tpu_custom_call.1} parent=1 // pred_region
      _
    $region53: #{tpu_custom_call.1} parent=1 // pred_fallthru
      _
    // Predicated region
    $region54: #{tpu_custom_call.1} parent=1 // pred_check
      _
    $region55: #{tpu_custom_call.1} parent=1 // pred_check_branch
      %79 = sbr.rel (0) target = $region57
    $region56: #{tpu_custom_call.1} parent=1 // pred_region
      _
    $region57: #{tpu_custom_call.1} parent=1 // pred_fallthru
      _
    // Predicated region
    $region58: #{tpu_custom_call.1} parent=1 // pred_check
      _
    $region59: #{tpu_custom_call.1} parent=1 // pred_check_branch
      %81 = sbr.rel (0) target = $region61
    $region60: #{tpu_custom_call.1} parent=1 // pred_region
      _
    $region61: #{tpu_custom_call.1} parent=1 // pred_fallthru
      _
    // Predicated region
    $region62: #{tpu_custom_call.1} parent=1 // pred_check
      _
    $region63: #{tpu_custom_call.1} parent=1 // pred_check_branch
      %83 = sbr.rel (0) target = $region65
    $region64: #{tpu_custom_call.1} parent=1 // pred_region
      _
    $region65: #{tpu_custom_call.1} parent=1 // pred_fallthru
      _
    // Predicated region
    $region66: #{tpu_custom_call.1} parent=1 // pred_check
      _
    $region67: #{tpu_custom_call.1} parent=1 // pred_check_branch
      %85 = sbr.rel (0) target = $region69
    $region68: #{tpu_custom_call.1} parent=1 // pred_region
      _
    $region69: #{tpu_custom_call.1} parent=1 // pred_fallthru
      _
    // Predicated region
    $region70: #{tpu_custom_call.1} parent=1 // pred_check
      _
    $region71: #{tpu_custom_call.1} parent=1 // pred_check_branch
      %87 = sbr.rel (0) target = $region73
    $region72: #{tpu_custom_call.1} parent=1 // pred_region
      _
    $region73: #{tpu_custom_call.1} parent=1 // pred_fallthru
      _
    // Predicated region
    $region74: #{tpu_custom_call.1} parent=1 // pred_check
      _
    $region75: #{tpu_custom_call.1} parent=1 // pred_check_branch
      %89 = sbr.rel (0) target = $region77
    $region76: #{tpu_custom_call.1} parent=1 // pred_region
      _
    $region77: #{tpu_custom_call.1} parent=1 // pred_fallthru
      _
    // Predicated region
    $region78: #{tpu_custom_call.1} parent=1 // pred_check
      _
    $region79: #{tpu_custom_call.1} parent=1 // pred_check_branch
      %91 = sbr.rel (0) target = $region81
    $region80: #{tpu_custom_call.1} parent=1 // pred_region
      %92 = dma.done [#allocation3], 32
    $region81: #{tpu_custom_call.1} parent=1 // pred_fallthru
      _
    // Predicated region
    $region82: #{tpu_custom_call.1} parent=1 // pred_check
      _
    $region83: #{tpu_custom_call.1} parent=1 // pred_check_branch
      %94 = sbr.rel (0) target = $region85
    $region84: #{tpu_custom_call.1} parent=1 // pred_region
      %95 = dma.done [#allocation5], 32
    $region85: #{tpu_custom_call.1} parent=1 // pred_fallthru
      _
    // Predicated region
    $region86: #{tpu_custom_call.1} parent=1 // pred_check
      _
    $region87: #{tpu_custom_call.1} parent=1 // pred_check_branch
      %97 = sbr.rel (0) target = $region89
    $region88: #{tpu_custom_call.1} parent=1 // pred_region
      %98 = dma.done [#allocation5], 16
    $region89: #{tpu_custom_call.1} parent=1 // pred_fallthru
      _
    %99 = sfence
    %v103 = vld [vmem:[%s4] sm:$0xff]
    %v104 = vld [vmem:[%s4 + $0x8] sm:$0xff]
    %v105 = vld [vmem:[%s4 + $0x10] sm:$0xff]
    %v106 = vld [vmem:[%s4 + $0x18] sm:$0xff]
    %v107 = vld [vmem:[%s4 + $0x20] sm:$0xff]
    %v108 = vld [vmem:[%s4 + $0x28] sm:$0xff]
    %v109 = vld [vmem:[%s4 + $0x30] sm:$0xff]
    %v110 = vld [vmem:[%s4 + $0x38] sm:$0xff]
    %v111 = vld [vmem:[%s4 + $0x40] sm:$0xff]
    %v112 = vld [vmem:[%s4 + $0x48] sm:$0xff]
    %v113 = vld [vmem:[%s4 + $0x50] sm:$0xff]
    %v114 = vld [vmem:[%s4 + $0x58] sm:$0xff]
    %v115 = vld [vmem:[%s4 + $0x60] sm:$0xff]
    %v116 = vld [vmem:[%s4 + $0x68] sm:$0xff]
    %v117 = vld [vmem:[%s4 + $0x70] sm:$0xff]
    %v118 = vld [vmem:[%s4 + $0x78] sm:$0xff]
    %v119 = vld [vmem:[%s6] sm:$0xff]
    %v120 = vld [vmem:[%s7] sm:$0x1]
    %v122 = vlaneseq
    %v123 = vshrl.u32 %v122, 7
    %v124 = vsub.s32 0, %v123
    %v125 = vrot.slane %v120, %v124
    %vm127 = vcmask 64512
    %v129 = vsel %vm127, %v103, 0
    %v132 = vsel %vm127, %v104, 0
    %v135 = vsel %vm127, %v105, 0
    %v138 = vsel %vm127, %v106, 0
    %v141 = vsel %vm127, %v107, 0
    %v144 = vsel %vm127, %v108, 0
    %v147 = vsel %vm127, %v109, 0
    %v150 = vsel %vm127, %v110, 0
    %v153 = vsel %vm127, %v111, 0
    %v156 = vsel %vm127, %v112, 0
    %v159 = vsel %vm127, %v113, 0
    %v162 = vsel %vm127, %v114, 0
    %v165 = vsel %vm127, %v115, 0
    %v168 = vsel %vm127, %v116, 0
    %v171 = vsel %vm127, %v117, 0
    %v174 = vsel %vm127, %v118, 0
    %176 = vmatprep.subr.mxu0 0.0
    %177 = vmatpush1.msra.mxu0 %v119
    %178 = vmatprep.subr.mxu0 0.0
    %179 = vmatpush1.msra.mxu0 0.0
    %180 = vmatprep.subr.mxu0 0.0
    %181 = vmatpush1.msra.mxu0 0.0
    %182 = vmatprep.subr.mxu0 0.0
    %183 = vmatpush1.msra.mxu0 0.0
    %184 = vmatprep.subr.mxu0 0.0
    %185 = vmatpush1.msra.mxu0 0.0
    %186 = vmatprep.subr.mxu0 0.0
    %187 = vmatpush1.msra.mxu0 0.0
    %188 = vmatprep.subr.mxu0 0.0
    %189 = vmatpush1.msra.mxu0 0.0
    %190 = vmatprep.subr.mxu0 0.0
    %191 = vmatpush1.msra.mxu0 0.0
    %192 = vmatprep.subr.mxu0 0.0
    %193 = vmatpush1.msra.mxu0 0.0
    %194 = vmatprep.subr.mxu0 0.0
    %195 = vmatpush1.msra.mxu0 0.0
    %196 = vmatprep.subr.mxu0 0.0
    %197 = vmatpush1.msra.mxu0 0.0
    %198 = vmatprep.subr.mxu0 0.0
    %199 = vmatpush1.msra.mxu0 0.0
    %200 = vmatprep.subr.mxu0 0.0
    %201 = vmatpush1.msra.mxu0 0.0
    %202 = vmatprep.subr.mxu0 0.0
    %203 = vmatpush1.msra.mxu0 0.0
    %204 = vmatprep.subr.mxu0 0.0
    %205 = vmatpush1.msra.mxu0 0.0
    %206 = vmatprep.subr.mxu0 0.0
    %207 = vmatpush1.msra.mxu0 0.0
    %208 = vmatprep.subr.mxu0 0.0
    %209 = vmatpush1.msra.mxu0 0.0
    %210 = vmatprep.subr.mxu0 0.0
    %211 = vmatpush1.msra.mxu0 0.0
    %212 = vmatprep.subr.mxu0 0.0
    %213 = vmatpush1.msra.mxu0 0.0
    %214 = vmatprep.subr.mxu0 0.0
    %215 = vmatpush1.msra.mxu0 0.0
    %216 = vmatprep.subr.mxu0 0.0
    %217 = vmatpush1.msra.mxu0 0.0
    %218 = vmatprep.subr.mxu0 0.0
    %219 = vmatpush1.msra.mxu0 0.0
    %220 = vmatprep.subr.mxu0 0.0
    %221 = vmatpush1.msra.mxu0 0.0
    %222 = vmatprep.subr.mxu0 0.0
    %223 = vmatpush1.msra.mxu0 0.0
    %224 = vmatprep.subr.mxu0 0.0
    %225 = vmatpush1.msra.mxu0 0.0
    %226 = vmatprep.subr.mxu0 0.0
    %227 = vmatpush1.msra.mxu0 0.0
    %228 = vmatprep.subr.mxu0 0.0
    %229 = vmatpush1.msra.mxu0 0.0
    %230 = vmatprep.subr.mxu0 0.0
    %231 = vmatpush1.msra.mxu0 0.0
    %232 = vmatprep.subr.mxu0 0.0
    %233 = vmatpush1.msra.mxu0 0.0
    %234 = vmatprep.subr.mxu0 0.0
    %235 = vmatpush1.msra.mxu0 0.0
    %236 = vmatprep.subr.mxu0 0.0
    %237 = vmatpush1.msra.mxu0 0.0
    %238 = vmatprep.subr.mxu0 0.0
    %239 = vmatpush1.msra.mxu0 0.0
    %240 = vmatprep.mubr.f32.mxu0 0.0
    %241 = vmatmul.mubr.f32.gmra.mrb[0].mxu0 %v129
    %v242 = vpop.f32.mrb[0].mxu0
    %v243 = vadd.f32 %v125, %v242
    %v244 = vpop.f32.mrb[0].mxu0
    %245 = vmatprep.mubr.f32.mxu0 0.0
    %246 = vmatmul.mubr.f32.gmra.mrb[0].mxu0 %v132
    %v247 = vpop.f32.mrb[0].mxu0
    %v248 = vadd.f32 %v125, %v247
    %v249 = vpop.f32.mrb[0].mxu0
    %250 = vmatprep.mubr.f32.mxu0 0.0
    %251 = vmatmul.mubr.f32.gmra.mrb[0].mxu0 %v135
    %v252 = vpop.f32.mrb[0].mxu0
    %v253 = vadd.f32 %v125, %v252
    %v254 = vpop.f32.mrb[0].mxu0
    %255 = vmatprep.mubr.f32.mxu0 0.0
    %256 = vmatmul.mubr.f32.gmra.mrb[0].mxu0 %v138
    %v257 = vpop.f32.mrb[0].mxu0
    %v258 = vadd.f32 %v125, %v257
    %v259 = vpop.f32.mrb[0].mxu0
    %260 = vmatprep.mubr.f32.mxu0 0.0
    %261 = vmatmul.mubr.f32.gmra.mrb[0].mxu0 %v141
    %v262 = vpop.f32.mrb[0].mxu0
    %v263 = vadd.f32 %v125, %v262
    %v264 = vpop.f32.mrb[0].mxu0
    %265 = vmatprep.mubr.f32.mxu0 0.0
    %266 = vmatmul.mubr.f32.gmra.mrb[0].mxu0 %v144
    %v267 = vpop.f32.mrb[0].mxu0
    %v268 = vadd.f32 %v125, %v267
    %v269 = vpop.f32.mrb[0].mxu0
    %270 = vmatprep.mubr.f32.mxu0 0.0
    %271 = vmatmul.mubr.f32.gmra.mrb[0].mxu0 %v147
    %v272 = vpop.f32.mrb[0].mxu0
    %v273 = vadd.f32 %v125, %v272
    %v274 = vpop.f32.mrb[0].mxu0
    %275 = vmatprep.mubr.f32.mxu0 0.0
    %276 = vmatmul.mubr.f32.gmra.mrb[0].mxu0 %v150
    %v277 = vpop.f32.mrb[0].mxu0
    %v278 = vadd.f32 %v125, %v277
    %v279 = vpop.f32.mrb[0].mxu0
    %280 = vmatprep.mubr.f32.mxu0 0.0
    %281 = vmatmul.mubr.f32.gmra.mrb[0].mxu0 %v153
    %v282 = vpop.f32.mrb[0].mxu0
    %v283 = vadd.f32 %v125, %v282
    %v284 = vpop.f32.mrb[0].mxu0
    %285 = vmatprep.mubr.f32.mxu0 0.0
    %286 = vmatmul.mubr.f32.gmra.mrb[0].mxu0 %v156
    %v287 = vpop.f32.mrb[0].mxu0
    %v288 = vadd.f32 %v125, %v287
    %v289 = vpop.f32.mrb[0].mxu0
    %290 = vmatprep.mubr.f32.mxu0 0.0
    %291 = vmatmul.mubr.f32.gmra.mrb[0].mxu0 %v159
    %v292 = vpop.f32.mrb[0].mxu0
    %v293 = vadd.f32 %v125, %v292
    %v294 = vpop.f32.mrb[0].mxu0
    %295 = vmatprep.mubr.f32.mxu0 0.0
    %296 = vmatmul.mubr.f32.gmra.mrb[0].mxu0 %v162
    %v297 = vpop.f32.mrb[0].mxu0
    %v298 = vadd.f32 %v125, %v297
    %v299 = vpop.f32.mrb[0].mxu0
    %300 = vmatprep.mubr.f32.mxu0 0.0
    %301 = vmatmul.mubr.f32.gmra.mrb[0].mxu0 %v165
    %v302 = vpop.f32.mrb[0].mxu0
    %v303 = vadd.f32 %v125, %v302
    %v304 = vpop.f32.mrb[0].mxu0
    %305 = vmatprep.mubr.f32.mxu0 0.0
    %306 = vmatmul.mubr.f32.gmra.mrb[0].mxu0 %v168
    %v307 = vpop.f32.mrb[0].mxu0
    %v308 = vadd.f32 %v125, %v307
    %v309 = vpop.f32.mrb[0].mxu0
    %310 = vmatprep.mubr.f32.mxu0 0.0
    %311 = vmatmul.mubr.f32.gmra.mrb[0].mxu0 %v171
    %v312 = vpop.f32.mrb[0].mxu0
    %v313 = vadd.f32 %v125, %v312
    %v314 = vpop.f32.mrb[0].mxu0
    %315 = vmatprep.mubr.f32.mxu0 0.0
    %316 = vmatmul.mubr.f32.gmra.mrb[0].mxu0 %v174
    %v317 = vpop.f32.mrb[0].mxu0
    %v318 = vadd.f32 %v125, %v317
    %v319 = vpop.f32.mrb[0].mxu0
    %320 = vdwg.mxu0
    %v321 = vld [vmem:[%s8] sm:$0xff]
    %v322 = vld [vmem:[%s8 + $0x8] sm:$0xff]
    %v323 = vld [vmem:[%s5] sm:$0xff]
    %v324 = vld [vmem:[%s9] sm:$0xff]
    %v325 = vld [vmem:[%s9 + $0x8] sm:$0xff]
    %327 = vset.pattern.permute.xlu0 0
    %328 = vperm.xlu0 %327, %v324
    %v329 = vpop.permute.xlu0 %328
    %332 = vset.pattern.permute.xlu0 0
    %333 = vperm.xlu0 %332, %v325
    %v334 = vpop.permute.xlu0 %333
    %v337 = vsel %vm127, %v321, 0
    %v340 = vsel %vm127, %v322, 0
    %342 = vmatprep.subr.mxu0 0.0
    %343 = vmatpush1.msra.mxu0 %v323
    %344 = vmatprep.subr.mxu0 0.0
    %345 = vmatpush1.msra.mxu0 0.0
    %346 = vmatprep.subr.mxu0 0.0
    %347 = vmatpush1.msra.mxu0 0.0
    %348 = vmatprep.subr.mxu0 0.0
    %349 = vmatpush1.msra.mxu0 0.0
    %350 = vmatprep.subr.mxu0 0.0
    %351 = vmatpush1.msra.mxu0 0.0
    %352 = vmatprep.subr.mxu0 0.0
    %353 = vmatpush1.msra.mxu0 0.0
    %354 = vmatprep.subr.mxu0 0.0
    %355 = vmatpush1.msra.mxu0 0.0
    %356 = vmatprep.subr.mxu0 0.0
    %357 = vmatpush1.msra.mxu0 0.0
    %358 = vmatprep.subr.mxu0 0.0
    %359 = vmatpush1.msra.mxu0 0.0
    %360 = vmatprep.subr.mxu0 0.0
    %361 = vmatpush1.msra.mxu0 0.0
    %362 = vmatprep.subr.mxu0 0.0
    %363 = vmatpush1.msra.mxu0 0.0
    %364 = vmatprep.subr.mxu0 0.0
    %365 = vmatpush1.msra.mxu0 0.0
    %366 = vmatprep.subr.mxu0 0.0
    %367 = vmatpush1.msra.mxu0 0.0
    %368 = vmatprep.subr.mxu0 0.0
    %369 = vmatpush1.msra.mxu0 0.0
    %370 = vmatprep.subr.mxu0 0.0
    %371 = vmatpush1.msra.mxu0 0.0
    %372 = vmatprep.subr.mxu0 0.0
    %373 = vmatpush1.msra.mxu0 0.0
    %374 = vmatprep.subr.mxu0 0.0
    %375 = vmatpush1.msra.mxu0 0.0
    %376 = vmatprep.subr.mxu0 0.0
    %377 = vmatpush1.msra.mxu0 0.0
    %378 = vmatprep.subr.mxu0 0.0
    %379 = vmatpush1.msra.mxu0 0.0
    %380 = vmatprep.subr.mxu0 0.0
    %381 = vmatpush1.msra.mxu0 0.0
    %382 = vmatprep.subr.mxu0 0.0
    %383 = vmatpush1.msra.mxu0 0.0
    %384 = vmatprep.subr.mxu0 0.0
    %385 = vmatpush1.msra.mxu0 0.0
    %386 = vmatprep.subr.mxu0 0.0
    %387 = vmatpush1.msra.mxu0 0.0
    %388 = vmatprep.subr.mxu0 0.0
    %389 = vmatpush1.msra.mxu0 0.0
    %390 = vmatprep.subr.mxu0 0.0
    %391 = vmatpush1.msra.mxu0 0.0
    %392 = vmatprep.subr.mxu0 0.0
    %393 = vmatpush1.msra.mxu0 0.0
    %394 = vmatprep.subr.mxu0 0.0
    %395 = vmatpush1.msra.mxu0 0.0
    %396 = vmatprep.subr.mxu0 0.0
    %397 = vmatpush1.msra.mxu0 0.0
    %398 = vmatprep.subr.mxu0 0.0
    %399 = vmatpush1.msra.mxu0 0.0
    %400 = vmatprep.subr.mxu0 0.0
    %401 = vmatpush1.msra.mxu0 0.0
    %402 = vmatprep.subr.mxu0 0.0
    %403 = vmatpush1.msra.mxu0 0.0
    %404 = vmatprep.subr.mxu0 0.0
    %405 = vmatpush1.msra.mxu0 0.0
    %406 = vmatprep.mubr.f32.mxu0 0.0
    %407 = vmatmul.mubr.f32.gmra.mrb[0].mxu0 %v337
    %v408 = vpop.f32.mrb[0].mxu0
    %v409 = vadd.f32 %v329, %v408
    %v410 = vpop.f32.mrb[0].mxu0
    %411 = vmatprep.mubr.f32.mxu0 0.0
    %412 = vmatmul.mubr.f32.gmra.mrb[0].mxu0 %v340
    %v413 = vpop.f32.mrb[0].mxu0
    %v414 = vadd.f32 %v334, %v413
    %v415 = vpop.f32.mrb[0].mxu0
    %416 = vdwg.mxu0
    %v417 = vld [vmem:[%s3] sm:$0xf]
    %v418 = vld [vmem:[%s3 + $0x4] sm:$0xf]
    %v419 = vld [vmem:[%s3 + $0x8] sm:$0xf]
    %v420 = vld [vmem:[%s3 + $0xc] sm:$0xf]
    %v421 = vld [vmem:[%s3 + $0x10] sm:$0xf]
    %v422 = vld [vmem:[%s3 + $0x14] sm:$0xf]
    %v423 = vld [vmem:[%s3 + $0x18] sm:$0xf]
    %v424 = vld [vmem:[%s3 + $0x1c] sm:$0xf]
    %v425 = vld [vmem:[%s3 + $0x20] sm:$0xf]
    %v426 = vld [vmem:[%s3 + $0x24] sm:$0xf]
    %v427 = vld [vmem:[%s3 + $0x28] sm:$0xf]
    %v428 = vld [vmem:[%s3 + $0x2c] sm:$0xf]
    %v429 = vld [vmem:[%s3 + $0x30] sm:$0xf]
    %v430 = vld [vmem:[%s3 + $0x34] sm:$0xf]
    %v431 = vld [vmem:[%s3 + $0x38] sm:$0xf]
    %v432 = vld [vmem:[%s3 + $0x3c] sm:$0xf]
    %vm433 = vcmp.gt.bf16.partialorder %v417, 0
    %vm434 = vcmp.gt.bf16.partialorder %v418, 0
    %vm435 = vcmp.gt.bf16.partialorder %v419, 0
    %vm436 = vcmp.gt.bf16.partialorder %v420, 0
    %vm437 = vcmp.gt.bf16.partialorder %v421, 0
    %vm438 = vcmp.gt.bf16.partialorder %v422, 0
    %vm439 = vcmp.gt.bf16.partialorder %v423, 0
    %vm440 = vcmp.gt.bf16.partialorder %v424, 0
    %vm441 = vcmp.gt.bf16.partialorder %v425, 0
    %vm442 = vcmp.gt.bf16.partialorder %v426, 0
    %vm443 = vcmp.gt.bf16.partialorder %v427, 0
    %vm444 = vcmp.gt.bf16.partialorder %v428, 0
    %vm445 = vcmp.gt.bf16.partialorder %v429, 0
    %vm446 = vcmp.gt.bf16.partialorder %v430, 0
    %vm447 = vcmp.gt.bf16.partialorder %v431, 0
    %vm448 = vcmp.gt.bf16.partialorder %v432, 0
    %450 = vset.pattern.permute.xlu0 0
    %451 = vperm.xlu0 %450, %v243
    %v452 = vpop.permute.xlu0 %451
    %455 = vset.pattern.permute.xlu0 0
    %456 = vperm.xlu0 %455, %v248
    %v457 = vpop.permute.xlu0 %456
    %460 = vset.pattern.permute.xlu0 0
    %461 = vperm.xlu0 %460, %v253
    %v462 = vpop.permute.xlu0 %461
    %465 = vset.pattern.permute.xlu0 0
    %466 = vperm.xlu0 %465, %v258
    %v467 = vpop.permute.xlu0 %466
    %470 = vset.pattern.permute.xlu0 0
    %471 = vperm.xlu0 %470, %v263
    %v472 = vpop.permute.xlu0 %471
    %475 = vset.pattern.permute.xlu0 0
    %476 = vperm.xlu0 %475, %v268
    %v477 = vpop.permute.xlu0 %476
    %480 = vset.pattern.permute.xlu0 0
    %481 = vperm.xlu0 %480, %v273
    %v482 = vpop.permute.xlu0 %481
    %485 = vset.pattern.permute.xlu0 0
    %486 = vperm.xlu0 %485, %v278
    %v487 = vpop.permute.xlu0 %486
    %490 = vset.pattern.permute.xlu0 0
    %491 = vperm.xlu0 %490, %v283
    %v492 = vpop.permute.xlu0 %491
    %495 = vset.pattern.permute.xlu0 0
    %496 = vperm.xlu0 %495, %v288
    %v497 = vpop.permute.xlu0 %496
    %500 = vset.pattern.permute.xlu0 0
    %501 = vperm.xlu0 %500, %v293
    %v502 = vpop.permute.xlu0 %501
    %505 = vset.pattern.permute.xlu0 0
    %506 = vperm.xlu0 %505, %v298
    %v507 = vpop.permute.xlu0 %506
    %510 = vset.pattern.permute.xlu0 0
    %511 = vperm.xlu0 %510, %v303
    %v512 = vpop.permute.xlu0 %511
    %515 = vset.pattern.permute.xlu0 0
    %516 = vperm.xlu0 %515, %v308
    %v517 = vpop.permute.xlu0 %516
    %520 = vset.pattern.permute.xlu0 0
    %521 = vperm.xlu0 %520, %v313
    %v522 = vpop.permute.xlu0 %521
    %525 = vset.pattern.permute.xlu0 0
    %526 = vperm.xlu0 %525, %v318
    %v527 = vpop.permute.xlu0 %526
    %v529 = vlaneseq
    %v530 = vshrl.u32 %v529, 7
    %v531 = vsub.s32 0, %v530
    %v532 = vrot.slane %v409, %v531
    %v533 = vadd.f32 %v452, %v532
    %v534 = vadd.f32 %v457, %v532
    %v535 = vadd.f32 %v462, %v532
    %v536 = vadd.f32 %v467, %v532
    %v537 = vadd.f32 %v472, %v532
    %v538 = vadd.f32 %v477, %v532
    %v539 = vadd.f32 %v482, %v532
    %v540 = vadd.f32 %v487, %v532
    %v541 = vadd.f32 %v492, %v532
    %v542 = vadd.f32 %v497, %v532
    %v543 = vadd.f32 %v502, %v532
    %v544 = vadd.f32 %v507, %v532
    %v545 = vadd.f32 %v512, %v532
    %v546 = vadd.f32 %v517, %v532
    %v547 = vadd.f32 %v522, %v532
    %v548 = vadd.f32 %v527, %v532
    %v549 = vmul.f32 %v533, 0.2
    %v550 = vmul.f32 %v534, 0.2
    %v551 = vmul.f32 %v535, 0.2
    %v552 = vmul.f32 %v536, 0.2
    %v553 = vmul.f32 %v537, 0.2
    %v554 = vmul.f32 %v538, 0.2
    %v555 = vmul.f32 %v539, 0.2
    %v556 = vmul.f32 %v540, 0.2
    %v557 = vmul.f32 %v541, 0.2
    %v558 = vmul.f32 %v542, 0.2
    %v559 = vmul.f32 %v543, 0.2
    %v560 = vmul.f32 %v544, 0.2
    %v561 = vmul.f32 %v545, 0.2
    %v562 = vmul.f32 %v546, 0.2
    %v563 = vmul.f32 %v547, 0.2
    %v564 = vmul.f32 %v548, 0.2
    %v565 = vmax.f32 %v533, %v549
    %v566 = vmax.f32 %v534, %v550
    %v567 = vmax.f32 %v535, %v551
    %v568 = vmax.f32 %v536, %v552
    %v569 = vmax.f32 %v537, %v553
    %v570 = vmax.f32 %v538, %v554
    %v571 = vmax.f32 %v539, %v555
    %v572 = vmax.f32 %v540, %v556
    %v573 = vmax.f32 %v541, %v557
    %v574 = vmax.f32 %v542, %v558
    %v575 = vmax.f32 %v543, %v559
    %v576 = vmax.f32 %v544, %v560
    %v577 = vmax.f32 %v545, %v561
    %v578 = vmax.f32 %v546, %v562
    %v579 = vmax.f32 %v547, %v563
    %v580 = vmax.f32 %v548, %v564
    %s581 = sld [smem:[#allocation2]]
    %v582 = vstv %s581
    %v583 = vmul.f32 %v582, %v565
    %v584 = vmul.f32 %v582, %v566
    %v585 = vmul.f32 %v582, %v567
    %v586 = vmul.f32 %v582, %v568
    %v587 = vmul.f32 %v582, %v569
    %v588 = vmul.f32 %v582, %v570
    %v589 = vmul.f32 %v582, %v571
    %v590 = vmul.f32 %v582, %v572
    %v591 = vmul.f32 %v582, %v573
    %v592 = vmul.f32 %v582, %v574
    %v593 = vmul.f32 %v582, %v575
    %v594 = vmul.f32 %v582, %v576
    %v595 = vmul.f32 %v582, %v577
    %v596 = vmul.f32 %v582, %v578
    %v597 = vmul.f32 %v582, %v579
    %v598 = vmul.f32 %v582, %v580
    %599 = vset.pattern.permute.xlu0 1
    %600 = vperm.xlu0 %599, %v243
    %v601 = vpop.permute.xlu0 %600
    %603 = vset.pattern.permute.xlu0 1
    %604 = vperm.xlu0 %603, %v248
    %v605 = vpop.permute.xlu0 %604
    %607 = vset.pattern.permute.xlu0 1
    %608 = vperm.xlu0 %607, %v253
    %v609 = vpop.permute.xlu0 %608
    %611 = vset.pattern.permute.xlu0 1
    %612 = vperm.xlu0 %611, %v258
    %v613 = vpop.permute.xlu0 %612
    %615 = vset.pattern.permute.xlu0 1
    %616 = vperm.xlu0 %615, %v263
    %v617 = vpop.permute.xlu0 %616
    %619 = vset.pattern.permute.xlu0 1
    %620 = vperm.xlu0 %619, %v268
    %v621 = vpop.permute.xlu0 %620
    %623 = vset.pattern.permute.xlu0 1
    %624 = vperm.xlu0 %623, %v273
    %v625 = vpop.permute.xlu0 %624
    %627 = vset.pattern.permute.xlu0 1
    %628 = vperm.xlu0 %627, %v278
    %v629 = vpop.permute.xlu0 %628
    %631 = vset.pattern.permute.xlu0 1
    %632 = vperm.xlu0 %631, %v283
    %v633 = vpop.permute.xlu0 %632
    %635 = vset.pattern.permute.xlu0 1
    %636 = vperm.xlu0 %635, %v288
    %v637 = vpop.permute.xlu0 %636
    %639 = vset.pattern.permute.xlu0 1
    %640 = vperm.xlu0 %639, %v293
    %v641 = vpop.permute.xlu0 %640
    %643 = vset.pattern.permute.xlu0 1
    %644 = vperm.xlu0 %643, %v298
    %v645 = vpop.permute.xlu0 %644
    %647 = vset.pattern.permute.xlu0 1
    %648 = vperm.xlu0 %647, %v303
    %v649 = vpop.permute.xlu0 %648
    %651 = vset.pattern.permute.xlu0 1
    %652 = vperm.xlu0 %651, %v308
    %v653 = vpop.permute.xlu0 %652
    %655 = vset.pattern.permute.xlu0 1
    %656 = vperm.xlu0 %655, %v313
    %v657 = vpop.permute.xlu0 %656
    %659 = vset.pattern.permute.xlu0 1
    %660 = vperm.xlu0 %659, %v318
    %v661 = vpop.permute.xlu0 %660
    %v663 = vlaneseq
    %v664 = vshrl.u32 %v663, 7
    %v665 = vsub.s32 1, %v664
    %v666 = vrot.slane %v409, %v665
    %v667 = vadd.f32 %v601, %v666
    %v668 = vadd.f32 %v605, %v666
    %v669 = vadd.f32 %v609, %v666
    %v670 = vadd.f32 %v613, %v666
    %v671 = vadd.f32 %v617, %v666
    %v672 = vadd.f32 %v621, %v666
    %v673 = vadd.f32 %v625, %v666
    %v674 = vadd.f32 %v629, %v666
    %v675 = vadd.f32 %v633, %v666
    %v676 = vadd.f32 %v637, %v666
    %v677 = vadd.f32 %v641, %v666
    %v678 = vadd.f32 %v645, %v666
    %v679 = vadd.f32 %v649, %v666
    %v680 = vadd.f32 %v653, %v666
    %v681 = vadd.f32 %v657, %v666
    %v682 = vadd.f32 %v661, %v666
    %v683 = vmul.f32 %v667, 0.2
    %v684 = vmul.f32 %v668, 0.2
    %v685 = vmul.f32 %v669, 0.2
    %v686 = vmul.f32 %v670, 0.2
    %v687 = vmul.f32 %v671, 0.2
    %v688 = vmul.f32 %v672, 0.2
    %v689 = vmul.f32 %v673, 0.2
    %v690 = vmul.f32 %v674, 0.2
    %v691 = vmul.f32 %v675, 0.2
    %v692 = vmul.f32 %v676, 0.2
    %v693 = vmul.f32 %v677, 0.2
    %v694 = vmul.f32 %v678, 0.2
    %v695 = vmul.f32 %v679, 0.2
    %v696 = vmul.f32 %v680, 0.2
    %v697 = vmul.f32 %v681, 0.2
    %v698 = vmul.f32 %v682, 0.2
    %v699 = vmax.f32 %v667, %v683
    %v700 = vmax.f32 %v668, %v684
    %v701 = vmax.f32 %v669, %v685
    %v702 = vmax.f32 %v670, %v686
    %v703 = vmax.f32 %v671, %v687
    %v704 = vmax.f32 %v672, %v688
    %v705 = vmax.f32 %v673, %v689
    %v706 = vmax.f32 %v674, %v690
    %v707 = vmax.f32 %v675, %v691
    %v708 = vmax.f32 %v676, %v692
    %v709 = vmax.f32 %v677, %v693
    %v710 = vmax.f32 %v678, %v694
    %v711 = vmax.f32 %v679, %v695
    %v712 = vmax.f32 %v680, %v696
    %v713 = vmax.f32 %v681, %v697
    %v714 = vmax.f32 %v682, %v698
    %s715 = sld [smem:[#allocation2 + $0x1]]
    %v716 = vstv %s715
    %v717 = vmul.f32 %v716, %v699
    %v718 = vmul.f32 %v716, %v700
    %v719 = vmul.f32 %v716, %v701
    %v720 = vmul.f32 %v716, %v702
    %v721 = vmul.f32 %v716, %v703
    %v722 = vmul.f32 %v716, %v704
    %v723 = vmul.f32 %v716, %v705
    %v724 = vmul.f32 %v716, %v706
    %v725 = vmul.f32 %v716, %v707
    %v726 = vmul.f32 %v716, %v708
    %v727 = vmul.f32 %v716, %v709
    %v728 = vmul.f32 %v716, %v710
    %v729 = vmul.f32 %v716, %v711
    %v730 = vmul.f32 %v716, %v712
    %v731 = vmul.f32 %v716, %v713
    %v732 = vmul.f32 %v716, %v714
    %v733 = vadd.f32 %v583, %v717
    %v734 = vadd.f32 %v584, %v718
    %v735 = vadd.f32 %v585, %v719
    %v736 = vadd.f32 %v586, %v720
    %v737 = vadd.f32 %v587, %v721
    %v738 = vadd.f32 %v588, %v722
    %v739 = vadd.f32 %v589, %v723
    %v740 = vadd.f32 %v590, %v724
    %v741 = vadd.f32 %v591, %v725
    %v742 = vadd.f32 %v592, %v726
    %v743 = vadd.f32 %v593, %v727
    %v744 = vadd.f32 %v594, %v728
    %v745 = vadd.f32 %v595, %v729
    %v746 = vadd.f32 %v596, %v730
    %v747 = vadd.f32 %v597, %v731
    %v748 = vadd.f32 %v598, %v732
    %749 = vset.pattern.permute.xlu0 2
    %750 = vperm.xlu0 %749, %v243
    %v751 = vpop.permute.xlu0 %750
    %753 = vset.pattern.permute.xlu0 2
    %754 = vperm.xlu0 %753, %v248
    %v755 = vpop.permute.xlu0 %754
    %757 = vset.pattern.permute.xlu0 2
    %758 = vperm.xlu0 %757, %v253
    %v759 = vpop.permute.xlu0 %758
    %761 = vset.pattern.permute.xlu0 2
    %762 = vperm.xlu0 %761, %v258
    %v763 = vpop.permute.xlu0 %762
    %765 = vset.pattern.permute.xlu0 2
    %766 = vperm.xlu0 %765, %v263
    %v767 = vpop.permute.xlu0 %766
    %769 = vset.pattern.permute.xlu0 2
    %770 = vperm.xlu0 %769, %v268
    %v771 = vpop.permute.xlu0 %770
    %773 = vset.pattern.permute.xlu0 2
    %774 = vperm.xlu0 %773, %v273
    %v775 = vpop.permute.xlu0 %774
    %777 = vset.pattern.permute.xlu0 2
    %778 = vperm.xlu0 %777, %v278
    %v779 = vpop.permute.xlu0 %778
    %781 = vset.pattern.permute.xlu0 2
    %782 = vperm.xlu0 %781, %v283
    %v783 = vpop.permute.xlu0 %782
    %785 = vset.pattern.permute.xlu0 2
    %786 = vperm.xlu0 %785, %v288
    %v787 = vpop.permute.xlu0 %786
    %789 = vset.pattern.permute.xlu0 2
    %790 = vperm.xlu0 %789, %v293
    %v791 = vpop.permute.xlu0 %790
    %793 = vset.pattern.permute.xlu0 2
    %794 = vperm.xlu0 %793, %v298
    %v795 = vpop.permute.xlu0 %794
    %797 = vset.pattern.permute.xlu0 2
    %798 = vperm.xlu0 %797, %v303
    %v799 = vpop.permute.xlu0 %798
    %801 = vset.pattern.permute.xlu0 2
    %802 = vperm.xlu0 %801, %v308
    %v803 = vpop.permute.xlu0 %802
    %805 = vset.pattern.permute.xlu0 2
    %806 = vperm.xlu0 %805, %v313
    %v807 = vpop.permute.xlu0 %806
    %809 = vset.pattern.permute.xlu0 2
    %810 = vperm.xlu0 %809, %v318
    %v811 = vpop.permute.xlu0 %810
    %v813 = vlaneseq
    %v814 = vshrl.u32 %v813, 7
    %v815 = vsub.s32 2, %v814
    %v816 = vrot.slane %v409, %v815
    %v817 = vadd.f32 %v751, %v816
    %v818 = vadd.f32 %v755, %v816
    %v819 = vadd.f32 %v759, %v816
    %v820 = vadd.f32 %v763, %v816
    %v821 = vadd.f32 %v767, %v816
    %v822 = vadd.f32 %v771, %v816
    %v823 = vadd.f32 %v775, %v816
    %v824 = vadd.f32 %v779, %v816
    %v825 = vadd.f32 %v783, %v816
    %v826 = vadd.f32 %v787, %v816
    %v827 = vadd.f32 %v791, %v816
    %v828 = vadd.f32 %v795, %v816
    %v829 = vadd.f32 %v799, %v816
    %v830 = vadd.f32 %v803, %v816
    %v831 = vadd.f32 %v807, %v816
    %v832 = vadd.f32 %v811, %v816
    %v833 = vmul.f32 %v817, 0.2
    %v834 = vmul.f32 %v818, 0.2
    %v835 = vmul.f32 %v819, 0.2
    %v836 = vmul.f32 %v820, 0.2
    %v837 = vmul.f32 %v821, 0.2
    %v838 = vmul.f32 %v822, 0.2
    %v839 = vmul.f32 %v823, 0.2
    %v840 = vmul.f32 %v824, 0.2
    %v841 = vmul.f32 %v825, 0.2
    %v842 = vmul.f32 %v826, 0.2
    %v843 = vmul.f32 %v827, 0.2
    %v844 = vmul.f32 %v828, 0.2
    %v845 = vmul.f32 %v829, 0.2
    %v846 = vmul.f32 %v830, 0.2
    %v847 = vmul.f32 %v831, 0.2
    %v848 = vmul.f32 %v832, 0.2
    %v849 = vmax.f32 %v817, %v833
    %v850 = vmax.f32 %v818, %v834
    %v851 = vmax.f32 %v819, %v835
    %v852 = vmax.f32 %v820, %v836
    %v853 = vmax.f32 %v821, %v837
    %v854 = vmax.f32 %v822, %v838
    %v855 = vmax.f32 %v823, %v839
    %v856 = vmax.f32 %v824, %v840
    %v857 = vmax.f32 %v825, %v841
    %v858 = vmax.f32 %v826, %v842
    %v859 = vmax.f32 %v827, %v843
    %v860 = vmax.f32 %v828, %v844
    %v861 = vmax.f32 %v829, %v845
    %v862 = vmax.f32 %v830, %v846
    %v863 = vmax.f32 %v831, %v847
    %v864 = vmax.f32 %v832, %v848
    %s865 = sld [smem:[#allocation2 + $0x2]]
    %v866 = vstv %s865
    %v867 = vmul.f32 %v866, %v849
    %v868 = vmul.f32 %v866, %v850
    %v869 = vmul.f32 %v866, %v851
    %v870 = vmul.f32 %v866, %v852
    %v871 = vmul.f32 %v866, %v853
    %v872 = vmul.f32 %v866, %v854
    %v873 = vmul.f32 %v866, %v855
    %v874 = vmul.f32 %v866, %v856
    %v875 = vmul.f32 %v866, %v857
    %v876 = vmul.f32 %v866, %v858
    %v877 = vmul.f32 %v866, %v859
    %v878 = vmul.f32 %v866, %v860
    %v879 = vmul.f32 %v866, %v861
    %v880 = vmul.f32 %v866, %v862
    %v881 = vmul.f32 %v866, %v863
    %v882 = vmul.f32 %v866, %v864
    %v883 = vadd.f32 %v733, %v867
    %v884 = vadd.f32 %v734, %v868
    %v885 = vadd.f32 %v735, %v869
    %v886 = vadd.f32 %v736, %v870
    %v887 = vadd.f32 %v737, %v871
    %v888 = vadd.f32 %v738, %v872
    %v889 = vadd.f32 %v739, %v873
    %v890 = vadd.f32 %v740, %v874
    %v891 = vadd.f32 %v741, %v875
    %v892 = vadd.f32 %v742, %v876
    %v893 = vadd.f32 %v743, %v877
    %v894 = vadd.f32 %v744, %v878
    %v895 = vadd.f32 %v745, %v879
    %v896 = vadd.f32 %v746, %v880
    %v897 = vadd.f32 %v747, %v881
    %v898 = vadd.f32 %v748, %v882
    %899 = vset.pattern.permute.xlu0 3
    %900 = vperm.xlu0 %899, %v243
    %v901 = vpop.permute.xlu0 %900
    %903 = vset.pattern.permute.xlu0 3
    %904 = vperm.xlu0 %903, %v248
    %v905 = vpop.permute.xlu0 %904
    %907 = vset.pattern.permute.xlu0 3
    %908 = vperm.xlu0 %907, %v253
    %v909 = vpop.permute.xlu0 %908
    %911 = vset.pattern.permute.xlu0 3
    %912 = vperm.xlu0 %911, %v258
    %v913 = vpop.permute.xlu0 %912
    %915 = vset.pattern.permute.xlu0 3
    %916 = vperm.xlu0 %915, %v263
    %v917 = vpop.permute.xlu0 %916
    %919 = vset.pattern.permute.xlu0 3
    %920 = vperm.xlu0 %919, %v268
    %v921 = vpop.permute.xlu0 %920
    %923 = vset.pattern.permute.xlu0 3
    %924 = vperm.xlu0 %923, %v273
    %v925 = vpop.permute.xlu0 %924
    %927 = vset.pattern.permute.xlu0 3
    %928 = vperm.xlu0 %927, %v278
    %v929 = vpop.permute.xlu0 %928
    %931 = vset.pattern.permute.xlu0 3
    %932 = vperm.xlu0 %931, %v283
    %v933 = vpop.permute.xlu0 %932
    %935 = vset.pattern.permute.xlu0 3
    %936 = vperm.xlu0 %935, %v288
    %v937 = vpop.permute.xlu0 %936
    %939 = vset.pattern.permute.xlu0 3
    %940 = vperm.xlu0 %939, %v293
    %v941 = vpop.permute.xlu0 %940
    %943 = vset.pattern.permute.xlu0 3
    %944 = vperm.xlu0 %943, %v298
    %v945 = vpop.permute.xlu0 %944
    %947 = vset.pattern.permute.xlu0 3
    %948 = vperm.xlu0 %947, %v303
    %v949 = vpop.permute.xlu0 %948
    %951 = vset.pattern.permute.xlu0 3
    %952 = vperm.xlu0 %951, %v308
    %v953 = vpop.permute.xlu0 %952
    %955 = vset.pattern.permute.xlu0 3
    %956 = vperm.xlu0 %955, %v313
    %v957 = vpop.permute.xlu0 %956
    %959 = vset.pattern.permute.xlu0 3
    %960 = vperm.xlu0 %959, %v318
    %v961 = vpop.permute.xlu0 %960
    %v963 = vlaneseq
    %v964 = vshrl.u32 %v963, 7
    %v965 = vsub.s32 3, %v964
    %v966 = vrot.slane %v409, %v965
    %v967 = vadd.f32 %v901, %v966
    %v968 = vadd.f32 %v905, %v966
    %v969 = vadd.f32 %v909, %v966
    %v970 = vadd.f32 %v913, %v966
    %v971 = vadd.f32 %v917, %v966
    %v972 = vadd.f32 %v921, %v966
    %v973 = vadd.f32 %v925, %v966
    %v974 = vadd.f32 %v929, %v966
    %v975 = vadd.f32 %v933, %v966
    %v976 = vadd.f32 %v937, %v966
    %v977 = vadd.f32 %v941, %v966
    %v978 = vadd.f32 %v945, %v966
    %v979 = vadd.f32 %v949, %v966
    %v980 = vadd.f32 %v953, %v966
    %v981 = vadd.f32 %v957, %v966
    %v982 = vadd.f32 %v961, %v966
    %v983 = vmul.f32 %v967, 0.2
    %v984 = vmul.f32 %v968, 0.2
    %v985 = vmul.f32 %v969, 0.2
    %v986 = vmul.f32 %v970, 0.2
    %v987 = vmul.f32 %v971, 0.2
    %v988 = vmul.f32 %v972, 0.2
    %v989 = vmul.f32 %v973, 0.2
    %v990 = vmul.f32 %v974, 0.2
    %v991 = vmul.f32 %v975, 0.2
    %v992 = vmul.f32 %v976, 0.2
    %v993 = vmul.f32 %v977, 0.2
    %v994 = vmul.f32 %v978, 0.2
    %v995 = vmul.f32 %v979, 0.2
    %v996 = vmul.f32 %v980, 0.2
    %v997 = vmul.f32 %v981, 0.2
    %v998 = vmul.f32 %v982, 0.2
    %v999 = vmax.f32 %v967, %v983
    %v1000 = vmax.f32 %v968, %v984
    %v1001 = vmax.f32 %v969, %v985
    %v1002 = vmax.f32 %v970, %v986
    %v1003 = vmax.f32 %v971, %v987
    %v1004 = vmax.f32 %v972, %v988
    %v1005 = vmax.f32 %v973, %v989
    %v1006 = vmax.f32 %v974, %v990
    %v1007 = vmax.f32 %v975, %v991
    %v1008 = vmax.f32 %v976, %v992
    %v1009 = vmax.f32 %v977, %v993
    %v1010 = vmax.f32 %v978, %v994
    %v1011 = vmax.f32 %v979, %v995
    %v1012 = vmax.f32 %v980, %v996
    %v1013 = vmax.f32 %v981, %v997
    %v1014 = vmax.f32 %v982, %v998
    %s1015 = sld [smem:[#allocation2 + $0x3]]
    %v1016 = vstv %s1015
    %v1017 = vmul.f32 %v1016, %v999
    %v1018 = vmul.f32 %v1016, %v1000
    %v1019 = vmul.f32 %v1016, %v1001
    %v1020 = vmul.f32 %v1016, %v1002
    %v1021 = vmul.f32 %v1016, %v1003
    %v1022 = vmul.f32 %v1016, %v1004
    %v1023 = vmul.f32 %v1016, %v1005
    %v1024 = vmul.f32 %v1016, %v1006
    %v1025 = vmul.f32 %v1016, %v1007
    %v1026 = vmul.f32 %v1016, %v1008
    %v1027 = vmul.f32 %v1016, %v1009
    %v1028 = vmul.f32 %v1016, %v1010
    %v1029 = vmul.f32 %v1016, %v1011
    %v1030 = vmul.f32 %v1016, %v1012
    %v1031 = vmul.f32 %v1016, %v1013
    %v1032 = vmul.f32 %v1016, %v1014
    %v1033 = vadd.f32 %v883, %v1017
    %v1034 = vadd.f32 %v884, %v1018
    %v1035 = vadd.f32 %v885, %v1019
    %v1036 = vadd.f32 %v886, %v1020
    %v1037 = vadd.f32 %v887, %v1021
    %v1038 = vadd.f32 %v888, %v1022
    %v1039 = vadd.f32 %v889, %v1023
    %v1040 = vadd.f32 %v890, %v1024
    %v1041 = vadd.f32 %v891, %v1025
    %v1042 = vadd.f32 %v892, %v1026
    %v1043 = vadd.f32 %v893, %v1027
    %v1044 = vadd.f32 %v894, %v1028
    %v1045 = vadd.f32 %v895, %v1029
    %v1046 = vadd.f32 %v896, %v1030
    %v1047 = vadd.f32 %v897, %v1031
    %v1048 = vadd.f32 %v898, %v1032
    %1049 = vset.pattern.permute.xlu0 4
    %1050 = vperm.xlu0 %1049, %v243
    %v1051 = vpop.permute.xlu0 %1050
    %1053 = vset.pattern.permute.xlu0 4
    %1054 = vperm.xlu0 %1053, %v248
    %v1055 = vpop.permute.xlu0 %1054
    %1057 = vset.pattern.permute.xlu0 4
    %1058 = vperm.xlu0 %1057, %v253
    %v1059 = vpop.permute.xlu0 %1058
    %1061 = vset.pattern.permute.xlu0 4
    %1062 = vperm.xlu0 %1061, %v258
    %v1063 = vpop.permute.xlu0 %1062
    %1065 = vset.pattern.permute.xlu0 4
    %1066 = vperm.xlu0 %1065, %v263
    %v1067 = vpop.permute.xlu0 %1066
    %1069 = vset.pattern.permute.xlu0 4
    %1070 = vperm.xlu0 %1069, %v268
    %v1071 = vpop.permute.xlu0 %1070
    %1073 = vset.pattern.permute.xlu0 4
    %1074 = vperm.xlu0 %1073, %v273
    %v1075 = vpop.permute.xlu0 %1074
    %1077 = vset.pattern.permute.xlu0 4
    %1078 = vperm.xlu0 %1077, %v278
    %v1079 = vpop.permute.xlu0 %1078
    %1081 = vset.pattern.permute.xlu0 4
    %1082 = vperm.xlu0 %1081, %v283
    %v1083 = vpop.permute.xlu0 %1082
    %1085 = vset.pattern.permute.xlu0 4
    %1086 = vperm.xlu0 %1085, %v288
    %v1087 = vpop.permute.xlu0 %1086
    %1089 = vset.pattern.permute.xlu0 4
    %1090 = vperm.xlu0 %1089, %v293
    %v1091 = vpop.permute.xlu0 %1090
    %1093 = vset.pattern.permute.xlu0 4
    %1094 = vperm.xlu0 %1093, %v298
    %v1095 = vpop.permute.xlu0 %1094
    %1097 = vset.pattern.permute.xlu0 4
    %1098 = vperm.xlu0 %1097, %v303
    %v1099 = vpop.permute.xlu0 %1098
    %1101 = vset.pattern.permute.xlu0 4
    %1102 = vperm.xlu0 %1101, %v308
    %v1103 = vpop.permute.xlu0 %1102
    %1105 = vset.pattern.permute.xlu0 4
    %1106 = vperm.xlu0 %1105, %v313
    %v1107 = vpop.permute.xlu0 %1106
    %1109 = vset.pattern.permute.xlu0 4
    %1110 = vperm.xlu0 %1109, %v318
    %v1111 = vpop.permute.xlu0 %1110
    %v1113 = vlaneseq
    %v1114 = vshrl.u32 %v1113, 7
    %v1115 = vsub.s32 4, %v1114
    %v1116 = vrot.slane %v409, %v1115
    %v1117 = vadd.f32 %v1051, %v1116
    %v1118 = vadd.f32 %v1055, %v1116
    %v1119 = vadd.f32 %v1059, %v1116
    %v1120 = vadd.f32 %v1063, %v1116
    %v1121 = vadd.f32 %v1067, %v1116
    %v1122 = vadd.f32 %v1071, %v1116
    %v1123 = vadd.f32 %v1075, %v1116
    %v1124 = vadd.f32 %v1079, %v1116
    %v1125 = vadd.f32 %v1083, %v1116
    %v1126 = vadd.f32 %v1087, %v1116
    %v1127 = vadd.f32 %v1091, %v1116
    %v1128 = vadd.f32 %v1095, %v1116
    %v1129 = vadd.f32 %v1099, %v1116
    %v1130 = vadd.f32 %v1103, %v1116
    %v1131 = vadd.f32 %v1107, %v1116
    %v1132 = vadd.f32 %v1111, %v1116
    %v1133 = vmul.f32 %v1117, 0.2
    %v1134 = vmul.f32 %v1118, 0.2
    %v1135 = vmul.f32 %v1119, 0.2
    %v1136 = vmul.f32 %v1120, 0.2
    %v1137 = vmul.f32 %v1121, 0.2
    %v1138 = vmul.f32 %v1122, 0.2
    %v1139 = vmul.f32 %v1123, 0.2
    %v1140 = vmul.f32 %v1124, 0.2
    %v1141 = vmul.f32 %v1125, 0.2
    %v1142 = vmul.f32 %v1126, 0.2
    %v1143 = vmul.f32 %v1127, 0.2
    %v1144 = vmul.f32 %v1128, 0.2
    %v1145 = vmul.f32 %v1129, 0.2
    %v1146 = vmul.f32 %v1130, 0.2
    %v1147 = vmul.f32 %v1131, 0.2
    %v1148 = vmul.f32 %v1132, 0.2
    %v1149 = vmax.f32 %v1117, %v1133
    %v1150 = vmax.f32 %v1118, %v1134
    %v1151 = vmax.f32 %v1119, %v1135
    %v1152 = vmax.f32 %v1120, %v1136
    %v1153 = vmax.f32 %v1121, %v1137
    %v1154 = vmax.f32 %v1122, %v1138
    %v1155 = vmax.f32 %v1123, %v1139
    %v1156 = vmax.f32 %v1124, %v1140
    %v1157 = vmax.f32 %v1125, %v1141
    %v1158 = vmax.f32 %v1126, %v1142
    %v1159 = vmax.f32 %v1127, %v1143
    %v1160 = vmax.f32 %v1128, %v1144
    %v1161 = vmax.f32 %v1129, %v1145
    %v1162 = vmax.f32 %v1130, %v1146
    %v1163 = vmax.f32 %v1131, %v1147
    %v1164 = vmax.f32 %v1132, %v1148
    %s1165 = sld [smem:[#allocation2 + $0x4]]
    %v1166 = vstv %s1165
    %v1167 = vmul.f32 %v1166, %v1149
    %v1168 = vmul.f32 %v1166, %v1150
    %v1169 = vmul.f32 %v1166, %v1151
    %v1170 = vmul.f32 %v1166, %v1152
    %v1171 = vmul.f32 %v1166, %v1153
    %v1172 = vmul.f32 %v1166, %v1154
    %v1173 = vmul.f32 %v1166, %v1155
    %v1174 = vmul.f32 %v1166, %v1156
    %v1175 = vmul.f32 %v1166, %v1157
    %v1176 = vmul.f32 %v1166, %v1158
    %v1177 = vmul.f32 %v1166, %v1159
    %v1178 = vmul.f32 %v1166, %v1160
    %v1179 = vmul.f32 %v1166, %v1161
    %v1180 = vmul.f32 %v1166, %v1162
    %v1181 = vmul.f32 %v1166, %v1163
    %v1182 = vmul.f32 %v1166, %v1164
    %v1183 = vadd.f32 %v1033, %v1167
    %v1184 = vadd.f32 %v1034, %v1168
    %v1185 = vadd.f32 %v1035, %v1169
    %v1186 = vadd.f32 %v1036, %v1170
    %v1187 = vadd.f32 %v1037, %v1171
    %v1188 = vadd.f32 %v1038, %v1172
    %v1189 = vadd.f32 %v1039, %v1173
    %v1190 = vadd.f32 %v1040, %v1174
    %v1191 = vadd.f32 %v1041, %v1175
    %v1192 = vadd.f32 %v1042, %v1176
    %v1193 = vadd.f32 %v1043, %v1177
    %v1194 = vadd.f32 %v1044, %v1178
    %v1195 = vadd.f32 %v1045, %v1179
    %v1196 = vadd.f32 %v1046, %v1180
    %v1197 = vadd.f32 %v1047, %v1181
    %v1198 = vadd.f32 %v1048, %v1182
    %1199 = vset.pattern.permute.xlu0 5
    %1200 = vperm.xlu0 %1199, %v243
    %v1201 = vpop.permute.xlu0 %1200
    %1203 = vset.pattern.permute.xlu0 5
    %1204 = vperm.xlu0 %1203, %v248
    %v1205 = vpop.permute.xlu0 %1204
    %1207 = vset.pattern.permute.xlu0 5
    %1208 = vperm.xlu0 %1207, %v253
    %v1209 = vpop.permute.xlu0 %1208
    %1211 = vset.pattern.permute.xlu0 5
    %1212 = vperm.xlu0 %1211, %v258
    %v1213 = vpop.permute.xlu0 %1212
    %1215 = vset.pattern.permute.xlu0 5
    %1216 = vperm.xlu0 %1215, %v263
    %v1217 = vpop.permute.xlu0 %1216
    %1219 = vset.pattern.permute.xlu0 5
    %1220 = vperm.xlu0 %1219, %v268
    %v1221 = vpop.permute.xlu0 %1220
    %1223 = vset.pattern.permute.xlu0 5
    %1224 = vperm.xlu0 %1223, %v273
    %v1225 = vpop.permute.xlu0 %1224
    %1227 = vset.pattern.permute.xlu0 5
    %1228 = vperm.xlu0 %1227, %v278
    %v1229 = vpop.permute.xlu0 %1228
    %1231 = vset.pattern.permute.xlu0 5
    %1232 = vperm.xlu0 %1231, %v283
    %v1233 = vpop.permute.xlu0 %1232
    %1235 = vset.pattern.permute.xlu0 5
    %1236 = vperm.xlu0 %1235, %v288
    %v1237 = vpop.permute.xlu0 %1236
    %1239 = vset.pattern.permute.xlu0 5
    %1240 = vperm.xlu0 %1239, %v293
    %v1241 = vpop.permute.xlu0 %1240
    %1243 = vset.pattern.permute.xlu0 5
    %1244 = vperm.xlu0 %1243, %v298
    %v1245 = vpop.permute.xlu0 %1244
    %1247 = vset.pattern.permute.xlu0 5
    %1248 = vperm.xlu0 %1247, %v303
    %v1249 = vpop.permute.xlu0 %1248
    %1251 = vset.pattern.permute.xlu0 5
    %1252 = vperm.xlu0 %1251, %v308
    %v1253 = vpop.permute.xlu0 %1252
    %1255 = vset.pattern.permute.xlu0 5
    %1256 = vperm.xlu0 %1255, %v313
    %v1257 = vpop.permute.xlu0 %1256
    %1259 = vset.pattern.permute.xlu0 5
    %1260 = vperm.xlu0 %1259, %v318
    %v1261 = vpop.permute.xlu0 %1260
    %v1263 = vlaneseq
    %v1264 = vshrl.u32 %v1263, 7
    %v1265 = vsub.s32 5, %v1264
    %v1266 = vrot.slane %v409, %v1265
    %v1267 = vadd.f32 %v1201, %v1266
    %v1268 = vadd.f32 %v1205, %v1266
    %v1269 = vadd.f32 %v1209, %v1266
    %v1270 = vadd.f32 %v1213, %v1266
    %v1271 = vadd.f32 %v1217, %v1266
    %v1272 = vadd.f32 %v1221, %v1266
    %v1273 = vadd.f32 %v1225, %v1266
    %v1274 = vadd.f32 %v1229, %v1266
    %v1275 = vadd.f32 %v1233, %v1266
    %v1276 = vadd.f32 %v1237, %v1266
    %v1277 = vadd.f32 %v1241, %v1266
    %v1278 = vadd.f32 %v1245, %v1266
    %v1279 = vadd.f32 %v1249, %v1266
    %v1280 = vadd.f32 %v1253, %v1266
    %v1281 = vadd.f32 %v1257, %v1266
    %v1282 = vadd.f32 %v1261, %v1266
    %v1283 = vmul.f32 %v1267, 0.2
    %v1284 = vmul.f32 %v1268, 0.2
    %v1285 = vmul.f32 %v1269, 0.2
    %v1286 = vmul.f32 %v1270, 0.2
    %v1287 = vmul.f32 %v1271, 0.2
    %v1288 = vmul.f32 %v1272, 0.2
    %v1289 = vmul.f32 %v1273, 0.2
    %v1290 = vmul.f32 %v1274, 0.2
    %v1291 = vmul.f32 %v1275, 0.2
    %v1292 = vmul.f32 %v1276, 0.2
    %v1293 = vmul.f32 %v1277, 0.2
    %v1294 = vmul.f32 %v1278, 0.2
    %v1295 = vmul.f32 %v1279, 0.2
    %v1296 = vmul.f32 %v1280, 0.2
    %v1297 = vmul.f32 %v1281, 0.2
    %v1298 = vmul.f32 %v1282, 0.2
    %v1299 = vmax.f32 %v1267, %v1283
    %v1300 = vmax.f32 %v1268, %v1284
    %v1301 = vmax.f32 %v1269, %v1285
    %v1302 = vmax.f32 %v1270, %v1286
    %v1303 = vmax.f32 %v1271, %v1287
    %v1304 = vmax.f32 %v1272, %v1288
    %v1305 = vmax.f32 %v1273, %v1289
    %v1306 = vmax.f32 %v1274, %v1290
    %v1307 = vmax.f32 %v1275, %v1291
    %v1308 = vmax.f32 %v1276, %v1292
    %v1309 = vmax.f32 %v1277, %v1293
    %v1310 = vmax.f32 %v1278, %v1294
    %v1311 = vmax.f32 %v1279, %v1295
    %v1312 = vmax.f32 %v1280, %v1296
    %v1313 = vmax.f32 %v1281, %v1297
    %v1314 = vmax.f32 %v1282, %v1298
    %s1315 = sld [smem:[#allocation2 + $0x5]]
    %v1316 = vstv %s1315
    %v1317 = vmul.f32 %v1316, %v1299
    %v1318 = vmul.f32 %v1316, %v1300
    %v1319 = vmul.f32 %v1316, %v1301
    %v1320 = vmul.f32 %v1316, %v1302
    %v1321 = vmul.f32 %v1316, %v1303
    %v1322 = vmul.f32 %v1316, %v1304
    %v1323 = vmul.f32 %v1316, %v1305
    %v1324 = vmul.f32 %v1316, %v1306
    %v1325 = vmul.f32 %v1316, %v1307
    %v1326 = vmul.f32 %v1316, %v1308
    %v1327 = vmul.f32 %v1316, %v1309
    %v1328 = vmul.f32 %v1316, %v1310
    %v1329 = vmul.f32 %v1316, %v1311
    %v1330 = vmul.f32 %v1316, %v1312
    %v1331 = vmul.f32 %v1316, %v1313
    %v1332 = vmul.f32 %v1316, %v1314
    %v1333 = vadd.f32 %v1183, %v1317
    %v1334 = vadd.f32 %v1184, %v1318
    %v1335 = vadd.f32 %v1185, %v1319
    %v1336 = vadd.f32 %v1186, %v1320
    %v1337 = vadd.f32 %v1187, %v1321
    %v1338 = vadd.f32 %v1188, %v1322
    %v1339 = vadd.f32 %v1189, %v1323
    %v1340 = vadd.f32 %v1190, %v1324
    %v1341 = vadd.f32 %v1191, %v1325
    %v1342 = vadd.f32 %v1192, %v1326
    %v1343 = vadd.f32 %v1193, %v1327
    %v1344 = vadd.f32 %v1194, %v1328
    %v1345 = vadd.f32 %v1195, %v1329
    %v1346 = vadd.f32 %v1196, %v1330
    %v1347 = vadd.f32 %v1197, %v1331
    %v1348 = vadd.f32 %v1198, %v1332
    %1349 = vset.pattern.permute.xlu0 6
    %1350 = vperm.xlu0 %1349, %v243
    %v1351 = vpop.permute.xlu0 %1350
    %1353 = vset.pattern.permute.xlu0 6
    %1354 = vperm.xlu0 %1353, %v248
    %v1355 = vpop.permute.xlu0 %1354
    %1357 = vset.pattern.permute.xlu0 6
    %1358 = vperm.xlu0 %1357, %v253
    %v1359 = vpop.permute.xlu0 %1358
    %1361 = vset.pattern.permute.xlu0 6
    %1362 = vperm.xlu0 %1361, %v258
    %v1363 = vpop.permute.xlu0 %1362
    %1365 = vset.pattern.permute.xlu0 6
    %1366 = vperm.xlu0 %1365, %v263
    %v1367 = vpop.permute.xlu0 %1366
    %1369 = vset.pattern.permute.xlu0 6
    %1370 = vperm.xlu0 %1369, %v268
    %v1371 = vpop.permute.xlu0 %1370
    %1373 = vset.pattern.permute.xlu0 6
    %1374 = vperm.xlu0 %1373, %v273
    %v1375 = vpop.permute.xlu0 %1374
    %1377 = vset.pattern.permute.xlu0 6
    %1378 = vperm.xlu0 %1377, %v278
    %v1379 = vpop.permute.xlu0 %1378
    %1381 = vset.pattern.permute.xlu0 6
    %1382 = vperm.xlu0 %1381, %v283
    %v1383 = vpop.permute.xlu0 %1382
    %1385 = vset.pattern.permute.xlu0 6
    %1386 = vperm.xlu0 %1385, %v288
    %v1387 = vpop.permute.xlu0 %1386
    %1389 = vset.pattern.permute.xlu0 6
    %1390 = vperm.xlu0 %1389, %v293
    %v1391 = vpop.permute.xlu0 %1390
    %1393 = vset.pattern.permute.xlu0 6
    %1394 = vperm.xlu0 %1393, %v298
    %v1395 = vpop.permute.xlu0 %1394
    %1397 = vset.pattern.permute.xlu0 6
    %1398 = vperm.xlu0 %1397, %v303
    %v1399 = vpop.permute.xlu0 %1398
    %1401 = vset.pattern.permute.xlu0 6
    %1402 = vperm.xlu0 %1401, %v308
    %v1403 = vpop.permute.xlu0 %1402
    %1405 = vset.pattern.permute.xlu0 6
    %1406 = vperm.xlu0 %1405, %v313
    %v1407 = vpop.permute.xlu0 %1406
    %1409 = vset.pattern.permute.xlu0 6
    %1410 = vperm.xlu0 %1409, %v318
    %v1411 = vpop.permute.xlu0 %1410
    %v1413 = vlaneseq
    %v1414 = vshrl.u32 %v1413, 7
    %v1415 = vsub.s32 6, %v1414
    %v1416 = vrot.slane %v409, %v1415
    %v1417 = vadd.f32 %v1351, %v1416
    %v1418 = vadd.f32 %v1355, %v1416
    %v1419 = vadd.f32 %v1359, %v1416
    %v1420 = vadd.f32 %v1363, %v1416
    %v1421 = vadd.f32 %v1367, %v1416
    %v1422 = vadd.f32 %v1371, %v1416
    %v1423 = vadd.f32 %v1375, %v1416
    %v1424 = vadd.f32 %v1379, %v1416
    %v1425 = vadd.f32 %v1383, %v1416
    %v1426 = vadd.f32 %v1387, %v1416
    %v1427 = vadd.f32 %v1391, %v1416
    %v1428 = vadd.f32 %v1395, %v1416
    %v1429 = vadd.f32 %v1399, %v1416
    %v1430 = vadd.f32 %v1403, %v1416
    %v1431 = vadd.f32 %v1407, %v1416
    %v1432 = vadd.f32 %v1411, %v1416
    %v1433 = vmul.f32 %v1417, 0.2
    %v1434 = vmul.f32 %v1418, 0.2
    %v1435 = vmul.f32 %v1419, 0.2
    %v1436 = vmul.f32 %v1420, 0.2
    %v1437 = vmul.f32 %v1421, 0.2
    %v1438 = vmul.f32 %v1422, 0.2
    %v1439 = vmul.f32 %v1423, 0.2
    %v1440 = vmul.f32 %v1424, 0.2
    %v1441 = vmul.f32 %v1425, 0.2
    %v1442 = vmul.f32 %v1426, 0.2
    %v1443 = vmul.f32 %v1427, 0.2
    %v1444 = vmul.f32 %v1428, 0.2
    %v1445 = vmul.f32 %v1429, 0.2
    %v1446 = vmul.f32 %v1430, 0.2
    %v1447 = vmul.f32 %v1431, 0.2
    %v1448 = vmul.f32 %v1432, 0.2
    %v1449 = vmax.f32 %v1417, %v1433
    %v1450 = vmax.f32 %v1418, %v1434
    %v1451 = vmax.f32 %v1419, %v1435
    %v1452 = vmax.f32 %v1420, %v1436
    %v1453 = vmax.f32 %v1421, %v1437
    %v1454 = vmax.f32 %v1422, %v1438
    %v1455 = vmax.f32 %v1423, %v1439
    %v1456 = vmax.f32 %v1424, %v1440
    %v1457 = vmax.f32 %v1425, %v1441
    %v1458 = vmax.f32 %v1426, %v1442
    %v1459 = vmax.f32 %v1427, %v1443
    %v1460 = vmax.f32 %v1428, %v1444
    %v1461 = vmax.f32 %v1429, %v1445
    %v1462 = vmax.f32 %v1430, %v1446
    %v1463 = vmax.f32 %v1431, %v1447
    %v1464 = vmax.f32 %v1432, %v1448
    %s1465 = sld [smem:[#allocation2 + $0x6]]
    %v1466 = vstv %s1465
    %v1467 = vmul.f32 %v1466, %v1449
    %v1468 = vmul.f32 %v1466, %v1450
    %v1469 = vmul.f32 %v1466, %v1451
    %v1470 = vmul.f32 %v1466, %v1452
    %v1471 = vmul.f32 %v1466, %v1453
    %v1472 = vmul.f32 %v1466, %v1454
    %v1473 = vmul.f32 %v1466, %v1455
    %v1474 = vmul.f32 %v1466, %v1456
    %v1475 = vmul.f32 %v1466, %v1457
    %v1476 = vmul.f32 %v1466, %v1458
    %v1477 = vmul.f32 %v1466, %v1459
    %v1478 = vmul.f32 %v1466, %v1460
    %v1479 = vmul.f32 %v1466, %v1461
    %v1480 = vmul.f32 %v1466, %v1462
    %v1481 = vmul.f32 %v1466, %v1463
    %v1482 = vmul.f32 %v1466, %v1464
    %v1483 = vadd.f32 %v1333, %v1467
    %v1484 = vadd.f32 %v1334, %v1468
    %v1485 = vadd.f32 %v1335, %v1469
    %v1486 = vadd.f32 %v1336, %v1470
    %v1487 = vadd.f32 %v1337, %v1471
    %v1488 = vadd.f32 %v1338, %v1472
    %v1489 = vadd.f32 %v1339, %v1473
    %v1490 = vadd.f32 %v1340, %v1474
    %v1491 = vadd.f32 %v1341, %v1475
    %v1492 = vadd.f32 %v1342, %v1476
    %v1493 = vadd.f32 %v1343, %v1477
    %v1494 = vadd.f32 %v1344, %v1478
    %v1495 = vadd.f32 %v1345, %v1479
    %v1496 = vadd.f32 %v1346, %v1480
    %v1497 = vadd.f32 %v1347, %v1481
    %v1498 = vadd.f32 %v1348, %v1482
    %1499 = vset.pattern.permute.xlu0 7
    %1500 = vperm.xlu0 %1499, %v243
    %v1501 = vpop.permute.xlu0 %1500
    %1503 = vset.pattern.permute.xlu0 7
    %1504 = vperm.xlu0 %1503, %v248
    %v1505 = vpop.permute.xlu0 %1504
    %1507 = vset.pattern.permute.xlu0 7
    %1508 = vperm.xlu0 %1507, %v253
    %v1509 = vpop.permute.xlu0 %1508
    %1511 = vset.pattern.permute.xlu0 7
    %1512 = vperm.xlu0 %1511, %v258
    %v1513 = vpop.permute.xlu0 %1512
    %1515 = vset.pattern.permute.xlu0 7
    %1516 = vperm.xlu0 %1515, %v263
    %v1517 = vpop.permute.xlu0 %1516
    %1519 = vset.pattern.permute.xlu0 7
    %1520 = vperm.xlu0 %1519, %v268
    %v1521 = vpop.permute.xlu0 %1520
    %1523 = vset.pattern.permute.xlu0 7
    %1524 = vperm.xlu0 %1523, %v273
    %v1525 = vpop.permute.xlu0 %1524
    %1527 = vset.pattern.permute.xlu0 7
    %1528 = vperm.xlu0 %1527, %v278
    %v1529 = vpop.permute.xlu0 %1528
    %1531 = vset.pattern.permute.xlu0 7
    %1532 = vperm.xlu0 %1531, %v283
    %v1533 = vpop.permute.xlu0 %1532
    %1535 = vset.pattern.permute.xlu0 7
    %1536 = vperm.xlu0 %1535, %v288
    %v1537 = vpop.permute.xlu0 %1536
    %1539 = vset.pattern.permute.xlu0 7
    %1540 = vperm.xlu0 %1539, %v293
    %v1541 = vpop.permute.xlu0 %1540
    %1543 = vset.pattern.permute.xlu0 7
    %1544 = vperm.xlu0 %1543, %v298
    %v1545 = vpop.permute.xlu0 %1544
    %1547 = vset.pattern.permute.xlu0 7
    %1548 = vperm.xlu0 %1547, %v303
    %v1549 = vpop.permute.xlu0 %1548
    %1551 = vset.pattern.permute.xlu0 7
    %1552 = vperm.xlu0 %1551, %v308
    %v1553 = vpop.permute.xlu0 %1552
    %1555 = vset.pattern.permute.xlu0 7
    %1556 = vperm.xlu0 %1555, %v313
    %v1557 = vpop.permute.xlu0 %1556
    %1559 = vset.pattern.permute.xlu0 7
    %1560 = vperm.xlu0 %1559, %v318
    %v1561 = vpop.permute.xlu0 %1560
    %v1563 = vlaneseq
    %v1564 = vshrl.u32 %v1563, 7
    %v1565 = vsub.s32 7, %v1564
    %v1566 = vrot.slane %v409, %v1565
    %v1567 = vadd.f32 %v1501, %v1566
    %v1568 = vadd.f32 %v1505, %v1566
    %v1569 = vadd.f32 %v1509, %v1566
    %v1570 = vadd.f32 %v1513, %v1566
    %v1571 = vadd.f32 %v1517, %v1566
    %v1572 = vadd.f32 %v1521, %v1566
    %v1573 = vadd.f32 %v1525, %v1566
    %v1574 = vadd.f32 %v1529, %v1566
    %v1575 = vadd.f32 %v1533, %v1566
    %v1576 = vadd.f32 %v1537, %v1566
    %v1577 = vadd.f32 %v1541, %v1566
    %v1578 = vadd.f32 %v1545, %v1566
    %v1579 = vadd.f32 %v1549, %v1566
    %v1580 = vadd.f32 %v1553, %v1566
    %v1581 = vadd.f32 %v1557, %v1566
    %v1582 = vadd.f32 %v1561, %v1566
    %v1583 = vmul.f32 %v1567, 0.2
    %v1584 = vmul.f32 %v1568, 0.2
    %v1585 = vmul.f32 %v1569, 0.2
    %v1586 = vmul.f32 %v1570, 0.2
    %v1587 = vmul.f32 %v1571, 0.2
    %v1588 = vmul.f32 %v1572, 0.2
    %v1589 = vmul.f32 %v1573, 0.2
    %v1590 = vmul.f32 %v1574, 0.2
    %v1591 = vmul.f32 %v1575, 0.2
    %v1592 = vmul.f32 %v1576, 0.2
    %v1593 = vmul.f32 %v1577, 0.2
    %v1594 = vmul.f32 %v1578, 0.2
    %v1595 = vmul.f32 %v1579, 0.2
    %v1596 = vmul.f32 %v1580, 0.2
    %v1597 = vmul.f32 %v1581, 0.2
    %v1598 = vmul.f32 %v1582, 0.2
    %v1599 = vmax.f32 %v1567, %v1583
    %v1600 = vmax.f32 %v1568, %v1584
    %v1601 = vmax.f32 %v1569, %v1585
    %v1602 = vmax.f32 %v1570, %v1586
    %v1603 = vmax.f32 %v1571, %v1587
    %v1604 = vmax.f32 %v1572, %v1588
    %v1605 = vmax.f32 %v1573, %v1589
    %v1606 = vmax.f32 %v1574, %v1590
    %v1607 = vmax.f32 %v1575, %v1591
    %v1608 = vmax.f32 %v1576, %v1592
    %v1609 = vmax.f32 %v1577, %v1593
    %v1610 = vmax.f32 %v1578, %v1594
    %v1611 = vmax.f32 %v1579, %v1595
    %v1612 = vmax.f32 %v1580, %v1596
    %v1613 = vmax.f32 %v1581, %v1597
    %v1614 = vmax.f32 %v1582, %v1598
    %s1615 = sld [smem:[#allocation2 + $0x7]]
    %v1616 = vstv %s1615
    %v1617 = vmul.f32 %v1616, %v1599
    %v1618 = vmul.f32 %v1616, %v1600
    %v1619 = vmul.f32 %v1616, %v1601
    %v1620 = vmul.f32 %v1616, %v1602
    %v1621 = vmul.f32 %v1616, %v1603
    %v1622 = vmul.f32 %v1616, %v1604
    %v1623 = vmul.f32 %v1616, %v1605
    %v1624 = vmul.f32 %v1616, %v1606
    %v1625 = vmul.f32 %v1616, %v1607
    %v1626 = vmul.f32 %v1616, %v1608
    %v1627 = vmul.f32 %v1616, %v1609
    %v1628 = vmul.f32 %v1616, %v1610
    %v1629 = vmul.f32 %v1616, %v1611
    %v1630 = vmul.f32 %v1616, %v1612
    %v1631 = vmul.f32 %v1616, %v1613
    %v1632 = vmul.f32 %v1616, %v1614
    %v1633 = vadd.f32 %v1483, %v1617
    %v1634 = vadd.f32 %v1484, %v1618
    %v1635 = vadd.f32 %v1485, %v1619
    %v1636 = vadd.f32 %v1486, %v1620
    %v1637 = vadd.f32 %v1487, %v1621
    %v1638 = vadd.f32 %v1488, %v1622
    %v1639 = vadd.f32 %v1489, %v1623
    %v1640 = vadd.f32 %v1490, %v1624
    %v1641 = vadd.f32 %v1491, %v1625
    %v1642 = vadd.f32 %v1492, %v1626
    %v1643 = vadd.f32 %v1493, %v1627
    %v1644 = vadd.f32 %v1494, %v1628
    %v1645 = vadd.f32 %v1495, %v1629
    %v1646 = vadd.f32 %v1496, %v1630
    %v1647 = vadd.f32 %v1497, %v1631
    %v1648 = vadd.f32 %v1498, %v1632
    %v1649 = vsel %vm433, 65537, 0
    %v1650 = vsel %vm434, 65537, 0
    %v1651 = vsel %vm435, 65537, 0
    %v1652 = vsel %vm436, 65537, 0
    %v1653 = vsel %vm437, 65537, 0
    %v1654 = vsel %vm438, 65537, 0
    %v1655 = vsel %vm439, 65537, 0
    %v1656 = vsel %vm440, 65537, 0
    %v1657 = vsel %vm441, 65537, 0
    %v1658 = vsel %vm442, 65537, 0
    %v1659 = vsel %vm443, 65537, 0
    %v1660 = vsel %vm444, 65537, 0
    %v1661 = vsel %vm445, 65537, 0
    %v1662 = vsel %vm446, 65537, 0
    %v1663 = vsel %vm447, 65537, 0
    %v1664 = vsel %vm448, 65537, 0
    %v1665 = vunpack.c.l.b16 %v1649
    %v1666 = vunpack.c.l.b16 %v1650
    %v1667 = vunpack.c.l.b16 %v1651
    %v1668 = vunpack.c.l.b16 %v1652
    %v1669 = vunpack.c.l.b16 %v1653
    %v1670 = vunpack.c.l.b16 %v1654
    %v1671 = vunpack.c.l.b16 %v1655
    %v1672 = vunpack.c.l.b16 %v1656
    %v1673 = vunpack.c.l.b16 %v1657
    %v1674 = vunpack.c.l.b16 %v1658
    %v1675 = vunpack.c.l.b16 %v1659
    %v1676 = vunpack.c.l.b16 %v1660
    %v1677 = vunpack.c.l.b16 %v1661
    %v1678 = vunpack.c.l.b16 %v1662
    %v1679 = vunpack.c.l.b16 %v1663
    %v1680 = vunpack.c.l.b16 %v1664
    %vm1681 = vcmp.ne.s32.totalorder %v1665, 0
    %vm1682 = vcmp.ne.s32.totalorder %v1666, 0
    %vm1683 = vcmp.ne.s32.totalorder %v1667, 0
    %vm1684 = vcmp.ne.s32.totalorder %v1668, 0
    %vm1685 = vcmp.ne.s32.totalorder %v1669, 0
    %vm1686 = vcmp.ne.s32.totalorder %v1670, 0
    %vm1687 = vcmp.ne.s32.totalorder %v1671, 0
    %vm1688 = vcmp.ne.s32.totalorder %v1672, 0
    %vm1689 = vcmp.ne.s32.totalorder %v1673, 0
    %vm1690 = vcmp.ne.s32.totalorder %v1674, 0
    %vm1691 = vcmp.ne.s32.totalorder %v1675, 0
    %vm1692 = vcmp.ne.s32.totalorder %v1676, 0
    %vm1693 = vcmp.ne.s32.totalorder %v1677, 0
    %vm1694 = vcmp.ne.s32.totalorder %v1678, 0
    %vm1695 = vcmp.ne.s32.totalorder %v1679, 0
    %vm1696 = vcmp.ne.s32.totalorder %v1680, 0
    %v1697 = vsel %vm1681, %v1633, -1e+30
    %v1698 = vsel %vm1682, %v1634, -1e+30
    %v1699 = vsel %vm1683, %v1635, -1e+30
    %v1700 = vsel %vm1684, %v1636, -1e+30
    %v1701 = vsel %vm1685, %v1637, -1e+30
    %v1702 = vsel %vm1686, %v1638, -1e+30
    %v1703 = vsel %vm1687, %v1639, -1e+30
    %v1704 = vsel %vm1688, %v1640, -1e+30
    %v1705 = vsel %vm1689, %v1641, -1e+30
    %v1706 = vsel %vm1690, %v1642, -1e+30
    %v1707 = vsel %vm1691, %v1643, -1e+30
    %v1708 = vsel %vm1692, %v1644, -1e+30
    %v1709 = vsel %vm1693, %v1645, -1e+30
    %v1710 = vsel %vm1694, %v1646, -1e+30
    %v1711 = vsel %vm1695, %v1647, -1e+30
    %v1712 = vsel %vm1696, %v1648, -1e+30
    %1713 = vmax.xlane.f32.xlu0 %v1697
    %v1714 = vpop.xlane.xlu0 %1713
    %1715 = vmax.xlane.f32.xlu0 %v1698
    %v1716 = vpop.xlane.xlu0 %1715
    %1717 = vmax.xlane.f32.xlu0 %v1699
    %v1718 = vpop.xlane.xlu0 %1717
    %1719 = vmax.xlane.f32.xlu0 %v1700
    %v1720 = vpop.xlane.xlu0 %1719
    %1721 = vmax.xlane.f32.xlu0 %v1701
    %v1722 = vpop.xlane.xlu0 %1721
    %1723 = vmax.xlane.f32.xlu0 %v1702
    %v1724 = vpop.xlane.xlu0 %1723
    %1725 = vmax.xlane.f32.xlu0 %v1703
    %v1726 = vpop.xlane.xlu0 %1725
    %1727 = vmax.xlane.f32.xlu0 %v1704
    %v1728 = vpop.xlane.xlu0 %1727
    %1729 = vmax.xlane.f32.xlu0 %v1705
    %v1730 = vpop.xlane.xlu0 %1729
    %1731 = vmax.xlane.f32.xlu0 %v1706
    %v1732 = vpop.xlane.xlu0 %1731
    %1733 = vmax.xlane.f32.xlu0 %v1707
    %v1734 = vpop.xlane.xlu0 %1733
    %1735 = vmax.xlane.f32.xlu0 %v1708
    %v1736 = vpop.xlane.xlu0 %1735
    %1737 = vmax.xlane.f32.xlu0 %v1709
    %v1738 = vpop.xlane.xlu0 %1737
    %1739 = vmax.xlane.f32.xlu0 %v1710
    %v1740 = vpop.xlane.xlu0 %1739
    %1741 = vmax.xlane.f32.xlu0 %v1711
    %v1742 = vpop.xlane.xlu0 %1741
    %1743 = vmax.xlane.f32.xlu0 %v1712
    %v1744 = vpop.xlane.xlu0 %1743
    %v1745 = vsub.f32 %v1697, %v1714
    %v1746 = vsub.f32 %v1698, %v1716
    %v1747 = vsub.f32 %v1699, %v1718
    %v1748 = vsub.f32 %v1700, %v1720
    %v1749 = vsub.f32 %v1701, %v1722
    %v1750 = vsub.f32 %v1702, %v1724
    %v1751 = vsub.f32 %v1703, %v1726
    %v1752 = vsub.f32 %v1704, %v1728
    %v1753 = vsub.f32 %v1705, %v1730
    %v1754 = vsub.f32 %v1706, %v1732
    %v1755 = vsub.f32 %v1707, %v1734
    %v1756 = vsub.f32 %v1708, %v1736
    %v1757 = vsub.f32 %v1709, %v1738
    %v1758 = vsub.f32 %v1710, %v1740
    %v1759 = vsub.f32 %v1711, %v1742
    %v1760 = vsub.f32 %v1712, %v1744
    %v1761 = vmul.f32 %v1745, 1.442695
    %v1762 = vpow.pop %v1761
    %v1763 = vmul.f32 %v1746, 1.442695
    %v1764 = vpow.pop %v1763
    %v1765 = vmul.f32 %v1747, 1.442695
    %v1766 = vpow.pop %v1765
    %v1767 = vmul.f32 %v1748, 1.442695
    %v1768 = vpow.pop %v1767
    %v1769 = vmul.f32 %v1749, 1.442695
    %v1770 = vpow.pop %v1769
    %v1771 = vmul.f32 %v1750, 1.442695
    %v1772 = vpow.pop %v1771
    %v1773 = vmul.f32 %v1751, 1.442695
    %v1774 = vpow.pop %v1773
    %v1775 = vmul.f32 %v1752, 1.442695
    %v1776 = vpow.pop %v1775
    %v1777 = vmul.f32 %v1753, 1.442695
    %v1778 = vpow.pop %v1777
    %v1779 = vmul.f32 %v1754, 1.442695
    %v1780 = vpow.pop %v1779
    %v1781 = vmul.f32 %v1755, 1.442695
    %v1782 = vpow.pop %v1781
    %v1783 = vmul.f32 %v1756, 1.442695
    %v1784 = vpow.pop %v1783
    %v1785 = vmul.f32 %v1757, 1.442695
    %v1786 = vpow.pop %v1785
    %v1787 = vmul.f32 %v1758, 1.442695
    %v1788 = vpow.pop %v1787
    %v1789 = vmul.f32 %v1759, 1.442695
    %v1790 = vpow.pop %v1789
    %v1791 = vmul.f32 %v1760, 1.442695
    %v1792 = vpow.pop %v1791
    %1793 = vadd.xlane.f32.xlu0 %v1762
    %v1794 = vpop.xlane.xlu0 %1793
    %1795 = vadd.xlane.f32.xlu0 %v1764
    %v1796 = vpop.xlane.xlu0 %1795
    %1797 = vadd.xlane.f32.xlu0 %v1766
    %v1798 = vpop.xlane.xlu0 %1797
    %1799 = vadd.xlane.f32.xlu0 %v1768
    %v1800 = vpop.xlane.xlu0 %1799
    %1801 = vadd.xlane.f32.xlu0 %v1770
    %v1802 = vpop.xlane.xlu0 %1801
    %1803 = vadd.xlane.f32.xlu0 %v1772
    %v1804 = vpop.xlane.xlu0 %1803
    %1805 = vadd.xlane.f32.xlu0 %v1774
    %v1806 = vpop.xlane.xlu0 %1805
    %1807 = vadd.xlane.f32.xlu0 %v1776
    %v1808 = vpop.xlane.xlu0 %1807
    %1809 = vadd.xlane.f32.xlu0 %v1778
    %v1810 = vpop.xlane.xlu0 %1809
    %1811 = vadd.xlane.f32.xlu0 %v1780
    %v1812 = vpop.xlane.xlu0 %1811
    %1813 = vadd.xlane.f32.xlu0 %v1782
    %v1814 = vpop.xlane.xlu0 %1813
    %1815 = vadd.xlane.f32.xlu0 %v1784
    %v1816 = vpop.xlane.xlu0 %1815
    %1817 = vadd.xlane.f32.xlu0 %v1786
    %v1818 = vpop.xlane.xlu0 %1817
    %1819 = vadd.xlane.f32.xlu0 %v1788
    %v1820 = vpop.xlane.xlu0 %1819
    %1821 = vadd.xlane.f32.xlu0 %v1790
    %v1822 = vpop.xlane.xlu0 %1821
    %1823 = vadd.xlane.f32.xlu0 %v1792
    %v1824 = vpop.xlane.xlu0 %1823
    %1825 = vmatprep.subr.mxu0 0.0
    %1826 = vmatpush1.xpose.msra.mxu0 %v409
    %1827 = vmatprep.subr.mxu0 0.0
    %1828 = vmatpush1.xpose.msra.mxu0 0.0
    %1829 = vmatprep.subr.mxu0 0.0
    %1830 = vmatpush1.xpose.msra.mxu0 0.0
    %1831 = vmatprep.subr.mxu0 0.0
    %1832 = vmatpush1.xpose.msra.mxu0 0.0
    %1833 = vmatprep.subr.mxu0 0.0
    %1834 = vmatpush1.xpose.msra.mxu0 0.0
    %1835 = vmatprep.subr.mxu0 0.0
    %1836 = vmatpush1.xpose.msra.mxu0 0.0
    %1837 = vmatprep.subr.mxu0 0.0
    %1838 = vmatpush1.xpose.msra.mxu0 0.0
    %1839 = vmatprep.subr.mxu0 0.0
    %1840 = vmatpush1.xpose.msra.mxu0 0.0
    %1841 = vmatprep.subr.mxu0 0.0
    %1842 = vmatpush1.xpose.msra.mxu0 0.0
    %1843 = vmatprep.subr.mxu0 0.0
    %1844 = vmatpush1.xpose.msra.mxu0 0.0
    %1845 = vmatprep.subr.mxu0 0.0
    %1846 = vmatpush1.xpose.msra.mxu0 0.0
    %1847 = vmatprep.subr.mxu0 0.0
    %1848 = vmatpush1.xpose.msra.mxu0 0.0
    %1849 = vmatprep.subr.mxu0 0.0
    %1850 = vmatpush1.xpose.msra.mxu0 0.0
    %1851 = vmatprep.subr.mxu0 0.0
    %1852 = vmatpush1.xpose.msra.mxu0 0.0
    %1853 = vmatprep.subr.mxu0 0.0
    %1854 = vmatpush1.xpose.msra.mxu0 0.0
    %1855 = vmatprep.subr.mxu0 0.0
    %1856 = vmatpush1.xpose.msra.mxu0 0.0
    %1857 = vmatprep.subr.mxu0 0.0
    %1858 = vmatpush1.xpose.msra.mxu0 0.0
    %1859 = vmatprep.subr.mxu0 0.0
    %1860 = vmatpush1.xpose.msra.mxu0 0.0
    %1861 = vmatprep.subr.mxu0 0.0
    %1862 = vmatpush1.xpose.msra.mxu0 0.0
    %1863 = vmatprep.subr.mxu0 0.0
    %1864 = vmatpush1.xpose.msra.mxu0 0.0
    %1865 = vmatprep.subr.mxu0 0.0
    %1866 = vmatpush1.xpose.msra.mxu0 0.0
    %1867 = vmatprep.subr.mxu0 0.0
    %1868 = vmatpush1.xpose.msra.mxu0 0.0
    %1869 = vmatprep.subr.mxu0 0.0
    %1870 = vmatpush1.xpose.msra.mxu0 0.0
    %1871 = vmatprep.subr.mxu0 0.0
    %1872 = vmatpush1.xpose.msra.mxu0 0.0
    %1873 = vmatprep.subr.mxu0 0.0
    %1874 = vmatpush1.xpose.msra.mxu0 0.0
    %1875 = vmatprep.subr.mxu0 0.0
    %1876 = vmatpush1.xpose.msra.mxu0 0.0
    %1877 = vmatprep.subr.mxu0 0.0
    %1878 = vmatpush1.xpose.msra.mxu0 0.0
    %1879 = vmatprep.subr.mxu0 0.0
    %1880 = vmatpush1.xpose.msra.mxu0 0.0
    %1881 = vmatprep.subr.mxu0 0.0
    %1882 = vmatpush1.xpose.msra.mxu0 0.0
    %1883 = vmatprep.subr.mxu0 0.0
    %1884 = vmatpush1.xpose.msra.mxu0 0.0
    %1885 = vmatprep.subr.mxu0 0.0
    %1886 = vmatpush1.xpose.msra.mxu0 0.0
    %1887 = vmatprep.subr.mxu0 0.0
    %1888 = vmatpush1.xpose.msra.mxu0 0.0
    %1889 = vmatprep.mubr.f32.mxu0 0.0
    %1890 = vmatmul.mubr.f32.gmra.mrb[0].mxu0 %v1762
    %v1891 = vpop.f32.mrb[0].mxu0
    %v1892 = vadd.f32 0.0, %v1891
    %v1893 = vpop.f32.mrb[0].mxu0
    %1894 = vmatprep.mubr.f32.mxu0 0.0
    %1895 = vmatmul.mubr.f32.gmra.mrb[0].mxu0 %v1764
    %v1896 = vpop.f32.mrb[0].mxu0
    %v1897 = vadd.f32 0.0, %v1896
    %v1898 = vpop.f32.mrb[0].mxu0
    %1899 = vmatprep.mubr.f32.mxu0 0.0
    %1900 = vmatmul.mubr.f32.gmra.mrb[0].mxu0 %v1766
    %v1901 = vpop.f32.mrb[0].mxu0
    %v1902 = vadd.f32 0.0, %v1901
    %v1903 = vpop.f32.mrb[0].mxu0
    %1904 = vmatprep.mubr.f32.mxu0 0.0
    %1905 = vmatmul.mubr.f32.gmra.mrb[0].mxu0 %v1768
    %v1906 = vpop.f32.mrb[0].mxu0
    %v1907 = vadd.f32 0.0, %v1906
    %v1908 = vpop.f32.mrb[0].mxu0
    %1909 = vmatprep.mubr.f32.mxu0 0.0
    %1910 = vmatmul.mubr.f32.gmra.mrb[0].mxu0 %v1770
    %v1911 = vpop.f32.mrb[0].mxu0
    %v1912 = vadd.f32 0.0, %v1911
    %v1913 = vpop.f32.mrb[0].mxu0
    %1914 = vmatprep.mubr.f32.mxu0 0.0
    %1915 = vmatmul.mubr.f32.gmra.mrb[0].mxu0 %v1772
    %v1916 = vpop.f32.mrb[0].mxu0
    %v1917 = vadd.f32 0.0, %v1916
    %v1918 = vpop.f32.mrb[0].mxu0
    %1919 = vmatprep.mubr.f32.mxu0 0.0
    %1920 = vmatmul.mubr.f32.gmra.mrb[0].mxu0 %v1774
    %v1921 = vpop.f32.mrb[0].mxu0
    %v1922 = vadd.f32 0.0, %v1921
    %v1923 = vpop.f32.mrb[0].mxu0
    %1924 = vmatprep.mubr.f32.mxu0 0.0
    %1925 = vmatmul.mubr.f32.gmra.mrb[0].mxu0 %v1776
    %v1926 = vpop.f32.mrb[0].mxu0
    %v1927 = vadd.f32 0.0, %v1926
    %v1928 = vpop.f32.mrb[0].mxu0
    %1929 = vmatprep.mubr.f32.mxu0 0.0
    %1930 = vmatmul.mubr.f32.gmra.mrb[0].mxu0 %v1778
    %v1931 = vpop.f32.mrb[0].mxu0
    %v1932 = vadd.f32 0.0, %v1931
    %v1933 = vpop.f32.mrb[0].mxu0
    %1934 = vmatprep.mubr.f32.mxu0 0.0
    %1935 = vmatmul.mubr.f32.gmra.mrb[0].mxu0 %v1780
    %v1936 = vpop.f32.mrb[0].mxu0
    %v1937 = vadd.f32 0.0, %v1936
    %v1938 = vpop.f32.mrb[0].mxu0
    %1939 = vmatprep.mubr.f32.mxu0 0.0
    %1940 = vmatmul.mubr.f32.gmra.mrb[0].mxu0 %v1782
    %v1941 = vpop.f32.mrb[0].mxu0
    %v1942 = vadd.f32 0.0, %v1941
    %v1943 = vpop.f32.mrb[0].mxu0
    %1944 = vmatprep.mubr.f32.mxu0 0.0
    %1945 = vmatmul.mubr.f32.gmra.mrb[0].mxu0 %v1784
    %v1946 = vpop.f32.mrb[0].mxu0
    %v1947 = vadd.f32 0.0, %v1946
    %v1948 = vpop.f32.mrb[0].mxu0
    %1949 = vmatprep.mubr.f32.mxu0 0.0
    %1950 = vmatmul.mubr.f32.gmra.mrb[0].mxu0 %v1786
    %v1951 = vpop.f32.mrb[0].mxu0
    %v1952 = vadd.f32 0.0, %v1951
    %v1953 = vpop.f32.mrb[0].mxu0
    %1954 = vmatprep.mubr.f32.mxu0 0.0
    %1955 = vmatmul.mubr.f32.gmra.mrb[0].mxu0 %v1788
    %v1956 = vpop.f32.mrb[0].mxu0
    %v1957 = vadd.f32 0.0, %v1956
    %v1958 = vpop.f32.mrb[0].mxu0
    %1959 = vmatprep.mubr.f32.mxu0 0.0
    %1960 = vmatmul.mubr.f32.gmra.mrb[0].mxu0 %v1790
    %v1961 = vpop.f32.mrb[0].mxu0
    %v1962 = vadd.f32 0.0, %v1961
    %v1963 = vpop.f32.mrb[0].mxu0
    %1964 = vmatprep.mubr.f32.mxu0 0.0
    %1965 = vmatmul.mubr.f32.gmra.mrb[0].mxu0 %v1792
    %v1966 = vpop.f32.mrb[0].mxu0
    %v1967 = vadd.f32 0.0, %v1966
    %v1968 = vpop.f32.mrb[0].mxu0
    %1969 = vdwg.mxu0
    %v1970 = vrcp.pop %v1794
    %v1971 = vrcp.pop %v1796
    %v1972 = vrcp.pop %v1798
    %v1973 = vrcp.pop %v1800
    %v1974 = vrcp.pop %v1802
    %v1975 = vrcp.pop %v1804
    %v1976 = vrcp.pop %v1806
    %v1977 = vrcp.pop %v1808
    %v1978 = vrcp.pop %v1810
    %v1979 = vrcp.pop %v1812
    %v1980 = vrcp.pop %v1814
    %v1981 = vrcp.pop %v1816
    %v1982 = vrcp.pop %v1818
    %v1983 = vrcp.pop %v1820
    %v1984 = vrcp.pop %v1822
    %v1985 = vrcp.pop %v1824
    %v1986 = vmul.f32 %v1892, %v1970
    %v1987 = vmul.f32 %v1897, %v1971
    %v1988 = vmul.f32 %v1902, %v1972
    %v1989 = vmul.f32 %v1907, %v1973
    %v1990 = vmul.f32 %v1912, %v1974
    %v1991 = vmul.f32 %v1917, %v1975
    %v1992 = vmul.f32 %v1922, %v1976
    %v1993 = vmul.f32 %v1927, %v1977
    %v1994 = vmul.f32 %v1932, %v1978
    %v1995 = vmul.f32 %v1937, %v1979
    %v1996 = vmul.f32 %v1942, %v1980
    %v1997 = vmul.f32 %v1947, %v1981
    %v1998 = vmul.f32 %v1952, %v1982
    %v1999 = vmul.f32 %v1957, %v1983
    %v2000 = vmul.f32 %v1962, %v1984
    %v2001 = vmul.f32 %v1967, %v1985
    %2002 = vset.pattern.permute.xlu0 8
    %2003 = vperm.xlu0 %2002, %v243
    %v2004 = vpop.permute.xlu0 %2003
    %2006 = vset.pattern.permute.xlu0 8
    %2007 = vperm.xlu0 %2006, %v248
    %v2008 = vpop.permute.xlu0 %2007
    %2010 = vset.pattern.permute.xlu0 8
    %2011 = vperm.xlu0 %2010, %v253
    %v2012 = vpop.permute.xlu0 %2011
    %2014 = vset.pattern.permute.xlu0 8
    %2015 = vperm.xlu0 %2014, %v258
    %v2016 = vpop.permute.xlu0 %2015
    %2018 = vset.pattern.permute.xlu0 8
    %2019 = vperm.xlu0 %2018, %v263
    %v2020 = vpop.permute.xlu0 %2019
    %2022 = vset.pattern.permute.xlu0 8
    %2023 = vperm.xlu0 %2022, %v268
    %v2024 = vpop.permute.xlu0 %2023
    %2026 = vset.pattern.permute.xlu0 8
    %2027 = vperm.xlu0 %2026, %v273
    %v2028 = vpop.permute.xlu0 %2027
    %2030 = vset.pattern.permute.xlu0 8
    %2031 = vperm.xlu0 %2030, %v278
    %v2032 = vpop.permute.xlu0 %2031
    %2034 = vset.pattern.permute.xlu0 8
    %2035 = vperm.xlu0 %2034, %v283
    %v2036 = vpop.permute.xlu0 %2035
    %2038 = vset.pattern.permute.xlu0 8
    %2039 = vperm.xlu0 %2038, %v288
    %v2040 = vpop.permute.xlu0 %2039
    %2042 = vset.pattern.permute.xlu0 8
    %2043 = vperm.xlu0 %2042, %v293
    %v2044 = vpop.permute.xlu0 %2043
    %2046 = vset.pattern.permute.xlu0 8
    %2047 = vperm.xlu0 %2046, %v298
    %v2048 = vpop.permute.xlu0 %2047
    %2050 = vset.pattern.permute.xlu0 8
    %2051 = vperm.xlu0 %2050, %v303
    %v2052 = vpop.permute.xlu0 %2051
    %2054 = vset.pattern.permute.xlu0 8
    %2055 = vperm.xlu0 %2054, %v308
    %v2056 = vpop.permute.xlu0 %2055
    %2058 = vset.pattern.permute.xlu0 8
    %2059 = vperm.xlu0 %2058, %v313
    %v2060 = vpop.permute.xlu0 %2059
    %2062 = vset.pattern.permute.xlu0 8
    %2063 = vperm.xlu0 %2062, %v318
    %v2064 = vpop.permute.xlu0 %2063
    %v2066 = vlaneseq
    %v2067 = vshrl.u32 %v2066, 7
    %v2068 = vsub.s32 0, %v2067
    %v2069 = vrot.slane %v414, %v2068
    %v2070 = vadd.f32 %v2004, %v2069
    %v2071 = vadd.f32 %v2008, %v2069
    %v2072 = vadd.f32 %v2012, %v2069
    %v2073 = vadd.f32 %v2016, %v2069
    %v2074 = vadd.f32 %v2020, %v2069
    %v2075 = vadd.f32 %v2024, %v2069
    %v2076 = vadd.f32 %v2028, %v2069
    %v2077 = vadd.f32 %v2032, %v2069
    %v2078 = vadd.f32 %v2036, %v2069
    %v2079 = vadd.f32 %v2040, %v2069
    %v2080 = vadd.f32 %v2044, %v2069
    %v2081 = vadd.f32 %v2048, %v2069
    %v2082 = vadd.f32 %v2052, %v2069
    %v2083 = vadd.f32 %v2056, %v2069
    %v2084 = vadd.f32 %v2060, %v2069
    %v2085 = vadd.f32 %v2064, %v2069
    %v2086 = vmul.f32 %v2070, 0.2
    %v2087 = vmul.f32 %v2071, 0.2
    %v2088 = vmul.f32 %v2072, 0.2
    %v2089 = vmul.f32 %v2073, 0.2
    %v2090 = vmul.f32 %v2074, 0.2
    %v2091 = vmul.f32 %v2075, 0.2
    %v2092 = vmul.f32 %v2076, 0.2
    %v2093 = vmul.f32 %v2077, 0.2
    %v2094 = vmul.f32 %v2078, 0.2
    %v2095 = vmul.f32 %v2079, 0.2
    %v2096 = vmul.f32 %v2080, 0.2
    %v2097 = vmul.f32 %v2081, 0.2
    %v2098 = vmul.f32 %v2082, 0.2
    %v2099 = vmul.f32 %v2083, 0.2
    %v2100 = vmul.f32 %v2084, 0.2
    %v2101 = vmul.f32 %v2085, 0.2
    %v2102 = vmax.f32 %v2070, %v2086
    %v2103 = vmax.f32 %v2071, %v2087
    %v2104 = vmax.f32 %v2072, %v2088
    %v2105 = vmax.f32 %v2073, %v2089
    %v2106 = vmax.f32 %v2074, %v2090
    %v2107 = vmax.f32 %v2075, %v2091
    %v2108 = vmax.f32 %v2076, %v2092
    %v2109 = vmax.f32 %v2077, %v2093
    %v2110 = vmax.f32 %v2078, %v2094
    %v2111 = vmax.f32 %v2079, %v2095
    %v2112 = vmax.f32 %v2080, %v2096
    %v2113 = vmax.f32 %v2081, %v2097
    %v2114 = vmax.f32 %v2082, %v2098
    %v2115 = vmax.f32 %v2083, %v2099
    %v2116 = vmax.f32 %v2084, %v2100
    %v2117 = vmax.f32 %v2085, %v2101
    %s2118 = sld [smem:[#allocation2 + $0x80]]
    %v2119 = vstv %s2118
    %v2120 = vmul.f32 %v2119, %v2102
    %v2121 = vmul.f32 %v2119, %v2103
    %v2122 = vmul.f32 %v2119, %v2104
    %v2123 = vmul.f32 %v2119, %v2105
    %v2124 = vmul.f32 %v2119, %v2106
    %v2125 = vmul.f32 %v2119, %v2107
    %v2126 = vmul.f32 %v2119, %v2108
    %v2127 = vmul.f32 %v2119, %v2109
    %v2128 = vmul.f32 %v2119, %v2110
    %v2129 = vmul.f32 %v2119, %v2111
    %v2130 = vmul.f32 %v2119, %v2112
    %v2131 = vmul.f32 %v2119, %v2113
    %v2132 = vmul.f32 %v2119, %v2114
    %v2133 = vmul.f32 %v2119, %v2115
    %v2134 = vmul.f32 %v2119, %v2116
    %v2135 = vmul.f32 %v2119, %v2117
    %2136 = vset.pattern.permute.xlu0 9
    %2137 = vperm.xlu0 %2136, %v243
    %v2138 = vpop.permute.xlu0 %2137
    %2140 = vset.pattern.permute.xlu0 9
    %2141 = vperm.xlu0 %2140, %v248
    %v2142 = vpop.permute.xlu0 %2141
    %2144 = vset.pattern.permute.xlu0 9
    %2145 = vperm.xlu0 %2144, %v253
    %v2146 = vpop.permute.xlu0 %2145
    %2148 = vset.pattern.permute.xlu0 9
    %2149 = vperm.xlu0 %2148, %v258
    %v2150 = vpop.permute.xlu0 %2149
    %2152 = vset.pattern.permute.xlu0 9
    %2153 = vperm.xlu0 %2152, %v263
    %v2154 = vpop.permute.xlu0 %2153
    %2156 = vset.pattern.permute.xlu0 9
    %2157 = vperm.xlu0 %2156, %v268
    %v2158 = vpop.permute.xlu0 %2157
    %2160 = vset.pattern.permute.xlu0 9
    %2161 = vperm.xlu0 %2160, %v273
    %v2162 = vpop.permute.xlu0 %2161
    %2164 = vset.pattern.permute.xlu0 9
    %2165 = vperm.xlu0 %2164, %v278
    %v2166 = vpop.permute.xlu0 %2165
    %2168 = vset.pattern.permute.xlu0 9
    %2169 = vperm.xlu0 %2168, %v283
    %v2170 = vpop.permute.xlu0 %2169
    %2172 = vset.pattern.permute.xlu0 9
    %2173 = vperm.xlu0 %2172, %v288
    %v2174 = vpop.permute.xlu0 %2173
    %2176 = vset.pattern.permute.xlu0 9
    %2177 = vperm.xlu0 %2176, %v293
    %v2178 = vpop.permute.xlu0 %2177
    %2180 = vset.pattern.permute.xlu0 9
    %2181 = vperm.xlu0 %2180, %v298
    %v2182 = vpop.permute.xlu0 %2181
    %2184 = vset.pattern.permute.xlu0 9
    %2185 = vperm.xlu0 %2184, %v303
    %v2186 = vpop.permute.xlu0 %2185
    %2188 = vset.pattern.permute.xlu0 9
    %2189 = vperm.xlu0 %2188, %v308
    %v2190 = vpop.permute.xlu0 %2189
    %2192 = vset.pattern.permute.xlu0 9
    %2193 = vperm.xlu0 %2192, %v313
    %v2194 = vpop.permute.xlu0 %2193
    %2196 = vset.pattern.permute.xlu0 9
    %2197 = vperm.xlu0 %2196, %v318
    %v2198 = vpop.permute.xlu0 %2197
    %v2200 = vlaneseq
    %v2201 = vshrl.u32 %v2200, 7
    %v2202 = vsub.s32 1, %v2201
    %v2203 = vrot.slane %v414, %v2202
    %v2204 = vadd.f32 %v2138, %v2203
    %v2205 = vadd.f32 %v2142, %v2203
    %v2206 = vadd.f32 %v2146, %v2203
    %v2207 = vadd.f32 %v2150, %v2203
    %v2208 = vadd.f32 %v2154, %v2203
    %v2209 = vadd.f32 %v2158, %v2203
    %v2210 = vadd.f32 %v2162, %v2203
    %v2211 = vadd.f32 %v2166, %v2203
    %v2212 = vadd.f32 %v2170, %v2203
    %v2213 = vadd.f32 %v2174, %v2203
    %v2214 = vadd.f32 %v2178, %v2203
    %v2215 = vadd.f32 %v2182, %v2203
    %v2216 = vadd.f32 %v2186, %v2203
    %v2217 = vadd.f32 %v2190, %v2203
    %v2218 = vadd.f32 %v2194, %v2203
    %v2219 = vadd.f32 %v2198, %v2203
    %v2220 = vmul.f32 %v2204, 0.2
    %v2221 = vmul.f32 %v2205, 0.2
    %v2222 = vmul.f32 %v2206, 0.2
    %v2223 = vmul.f32 %v2207, 0.2
    %v2224 = vmul.f32 %v2208, 0.2
    %v2225 = vmul.f32 %v2209, 0.2
    %v2226 = vmul.f32 %v2210, 0.2
    %v2227 = vmul.f32 %v2211, 0.2
    %v2228 = vmul.f32 %v2212, 0.2
    %v2229 = vmul.f32 %v2213, 0.2
    %v2230 = vmul.f32 %v2214, 0.2
    %v2231 = vmul.f32 %v2215, 0.2
    %v2232 = vmul.f32 %v2216, 0.2
    %v2233 = vmul.f32 %v2217, 0.2
    %v2234 = vmul.f32 %v2218, 0.2
    %v2235 = vmul.f32 %v2219, 0.2
    %v2236 = vmax.f32 %v2204, %v2220
    %v2237 = vmax.f32 %v2205, %v2221
    %v2238 = vmax.f32 %v2206, %v2222
    %v2239 = vmax.f32 %v2207, %v2223
    %v2240 = vmax.f32 %v2208, %v2224
    %v2241 = vmax.f32 %v2209, %v2225
    %v2242 = vmax.f32 %v2210, %v2226
    %v2243 = vmax.f32 %v2211, %v2227
    %v2244 = vmax.f32 %v2212, %v2228
    %v2245 = vmax.f32 %v2213, %v2229
    %v2246 = vmax.f32 %v2214, %v2230
    %v2247 = vmax.f32 %v2215, %v2231
    %v2248 = vmax.f32 %v2216, %v2232
    %v2249 = vmax.f32 %v2217, %v2233
    %v2250 = vmax.f32 %v2218, %v2234
    %v2251 = vmax.f32 %v2219, %v2235
    %s2252 = sld [smem:[#allocation2 + $0x81]]
    %v2253 = vstv %s2252
    %v2254 = vmul.f32 %v2253, %v2236
    %v2255 = vmul.f32 %v2253, %v2237
    %v2256 = vmul.f32 %v2253, %v2238
    %v2257 = vmul.f32 %v2253, %v2239
    %v2258 = vmul.f32 %v2253, %v2240
    %v2259 = vmul.f32 %v2253, %v2241
    %v2260 = vmul.f32 %v2253, %v2242
    %v2261 = vmul.f32 %v2253, %v2243
    %v2262 = vmul.f32 %v2253, %v2244
    %v2263 = vmul.f32 %v2253, %v2245
    %v2264 = vmul.f32 %v2253, %v2246
    %v2265 = vmul.f32 %v2253, %v2247
    %v2266 = vmul.f32 %v2253, %v2248
    %v2267 = vmul.f32 %v2253, %v2249
    %v2268 = vmul.f32 %v2253, %v2250
    %v2269 = vmul.f32 %v2253, %v2251
    %v2270 = vadd.f32 %v2120, %v2254
    %v2271 = vadd.f32 %v2121, %v2255
    %v2272 = vadd.f32 %v2122, %v2256
    %v2273 = vadd.f32 %v2123, %v2257
    %v2274 = vadd.f32 %v2124, %v2258
    %v2275 = vadd.f32 %v2125, %v2259
    %v2276 = vadd.f32 %v2126, %v2260
    %v2277 = vadd.f32 %v2127, %v2261
    %v2278 = vadd.f32 %v2128, %v2262
    %v2279 = vadd.f32 %v2129, %v2263
    %v2280 = vadd.f32 %v2130, %v2264
    %v2281 = vadd.f32 %v2131, %v2265
    %v2282 = vadd.f32 %v2132, %v2266
    %v2283 = vadd.f32 %v2133, %v2267
    %v2284 = vadd.f32 %v2134, %v2268
    %v2285 = vadd.f32 %v2135, %v2269
    %2286 = vset.pattern.permute.xlu0 10
    %2287 = vperm.xlu0 %2286, %v243
    %v2288 = vpop.permute.xlu0 %2287
    %2290 = vset.pattern.permute.xlu0 10
    %2291 = vperm.xlu0 %2290, %v248
    %v2292 = vpop.permute.xlu0 %2291
    %2294 = vset.pattern.permute.xlu0 10
    %2295 = vperm.xlu0 %2294, %v253
    %v2296 = vpop.permute.xlu0 %2295
    %2298 = vset.pattern.permute.xlu0 10
    %2299 = vperm.xlu0 %2298, %v258
    %v2300 = vpop.permute.xlu0 %2299
    %2302 = vset.pattern.permute.xlu0 10
    %2303 = vperm.xlu0 %2302, %v263
    %v2304 = vpop.permute.xlu0 %2303
    %2306 = vset.pattern.permute.xlu0 10
    %2307 = vperm.xlu0 %2306, %v268
    %v2308 = vpop.permute.xlu0 %2307
    %2310 = vset.pattern.permute.xlu0 10
    %2311 = vperm.xlu0 %2310, %v273
    %v2312 = vpop.permute.xlu0 %2311
    %2314 = vset.pattern.permute.xlu0 10
    %2315 = vperm.xlu0 %2314, %v278
    %v2316 = vpop.permute.xlu0 %2315
    %2318 = vset.pattern.permute.xlu0 10
    %2319 = vperm.xlu0 %2318, %v283
    %v2320 = vpop.permute.xlu0 %2319
    %2322 = vset.pattern.permute.xlu0 10
    %2323 = vperm.xlu0 %2322, %v288
    %v2324 = vpop.permute.xlu0 %2323
    %2326 = vset.pattern.permute.xlu0 10
    %2327 = vperm.xlu0 %2326, %v293
    %v2328 = vpop.permute.xlu0 %2327
    %2330 = vset.pattern.permute.xlu0 10
    %2331 = vperm.xlu0 %2330, %v298
    %v2332 = vpop.permute.xlu0 %2331
    %2334 = vset.pattern.permute.xlu0 10
    %2335 = vperm.xlu0 %2334, %v303
    %v2336 = vpop.permute.xlu0 %2335
    %2338 = vset.pattern.permute.xlu0 10
    %2339 = vperm.xlu0 %2338, %v308
    %v2340 = vpop.permute.xlu0 %2339
    %2342 = vset.pattern.permute.xlu0 10
    %2343 = vperm.xlu0 %2342, %v313
    %v2344 = vpop.permute.xlu0 %2343
    %2346 = vset.pattern.permute.xlu0 10
    %2347 = vperm.xlu0 %2346, %v318
    %v2348 = vpop.permute.xlu0 %2347
    %v2350 = vlaneseq
    %v2351 = vshrl.u32 %v2350, 7
    %v2352 = vsub.s32 2, %v2351
    %v2353 = vrot.slane %v414, %v2352
    %v2354 = vadd.f32 %v2288, %v2353
    %v2355 = vadd.f32 %v2292, %v2353
    %v2356 = vadd.f32 %v2296, %v2353
    %v2357 = vadd.f32 %v2300, %v2353
    %v2358 = vadd.f32 %v2304, %v2353
    %v2359 = vadd.f32 %v2308, %v2353
    %v2360 = vadd.f32 %v2312, %v2353
    %v2361 = vadd.f32 %v2316, %v2353
    %v2362 = vadd.f32 %v2320, %v2353
    %v2363 = vadd.f32 %v2324, %v2353
    %v2364 = vadd.f32 %v2328, %v2353
    %v2365 = vadd.f32 %v2332, %v2353
    %v2366 = vadd.f32 %v2336, %v2353
    %v2367 = vadd.f32 %v2340, %v2353
    %v2368 = vadd.f32 %v2344, %v2353
    %v2369 = vadd.f32 %v2348, %v2353
    %v2370 = vmul.f32 %v2354, 0.2
    %v2371 = vmul.f32 %v2355, 0.2
    %v2372 = vmul.f32 %v2356, 0.2
    %v2373 = vmul.f32 %v2357, 0.2
    %v2374 = vmul.f32 %v2358, 0.2
    %v2375 = vmul.f32 %v2359, 0.2
    %v2376 = vmul.f32 %v2360, 0.2
    %v2377 = vmul.f32 %v2361, 0.2
    %v2378 = vmul.f32 %v2362, 0.2
    %v2379 = vmul.f32 %v2363, 0.2
    %v2380 = vmul.f32 %v2364, 0.2
    %v2381 = vmul.f32 %v2365, 0.2
    %v2382 = vmul.f32 %v2366, 0.2
    %v2383 = vmul.f32 %v2367, 0.2
    %v2384 = vmul.f32 %v2368, 0.2
    %v2385 = vmul.f32 %v2369, 0.2
    %v2386 = vmax.f32 %v2354, %v2370
    %v2387 = vmax.f32 %v2355, %v2371
    %v2388 = vmax.f32 %v2356, %v2372
    %v2389 = vmax.f32 %v2357, %v2373
    %v2390 = vmax.f32 %v2358, %v2374
    %v2391 = vmax.f32 %v2359, %v2375
    %v2392 = vmax.f32 %v2360, %v2376
    %v2393 = vmax.f32 %v2361, %v2377
    %v2394 = vmax.f32 %v2362, %v2378
    %v2395 = vmax.f32 %v2363, %v2379
    %v2396 = vmax.f32 %v2364, %v2380
    %v2397 = vmax.f32 %v2365, %v2381
    %v2398 = vmax.f32 %v2366, %v2382
    %v2399 = vmax.f32 %v2367, %v2383
    %v2400 = vmax.f32 %v2368, %v2384
    %v2401 = vmax.f32 %v2369, %v2385
    %s2402 = sld [smem:[#allocation2 + $0x82]]
    %v2403 = vstv %s2402
    %v2404 = vmul.f32 %v2403, %v2386
    %v2405 = vmul.f32 %v2403, %v2387
    %v2406 = vmul.f32 %v2403, %v2388
    %v2407 = vmul.f32 %v2403, %v2389
    %v2408 = vmul.f32 %v2403, %v2390
    %v2409 = vmul.f32 %v2403, %v2391
    %v2410 = vmul.f32 %v2403, %v2392
    %v2411 = vmul.f32 %v2403, %v2393
    %v2412 = vmul.f32 %v2403, %v2394
    %v2413 = vmul.f32 %v2403, %v2395
    %v2414 = vmul.f32 %v2403, %v2396
    %v2415 = vmul.f32 %v2403, %v2397
    %v2416 = vmul.f32 %v2403, %v2398
    %v2417 = vmul.f32 %v2403, %v2399
    %v2418 = vmul.f32 %v2403, %v2400
    %v2419 = vmul.f32 %v2403, %v2401
    %v2420 = vadd.f32 %v2270, %v2404
    %v2421 = vadd.f32 %v2271, %v2405
    %v2422 = vadd.f32 %v2272, %v2406
    %v2423 = vadd.f32 %v2273, %v2407
    %v2424 = vadd.f32 %v2274, %v2408
    %v2425 = vadd.f32 %v2275, %v2409
    %v2426 = vadd.f32 %v2276, %v2410
    %v2427 = vadd.f32 %v2277, %v2411
    %v2428 = vadd.f32 %v2278, %v2412
    %v2429 = vadd.f32 %v2279, %v2413
    %v2430 = vadd.f32 %v2280, %v2414
    %v2431 = vadd.f32 %v2281, %v2415
    %v2432 = vadd.f32 %v2282, %v2416
    %v2433 = vadd.f32 %v2283, %v2417
    %v2434 = vadd.f32 %v2284, %v2418
    %v2435 = vadd.f32 %v2285, %v2419
    %2436 = vset.pattern.permute.xlu0 11
    %2437 = vperm.xlu0 %2436, %v243
    %v2438 = vpop.permute.xlu0 %2437
    %2440 = vset.pattern.permute.xlu0 11
    %2441 = vperm.xlu0 %2440, %v248
    %v2442 = vpop.permute.xlu0 %2441
    %2444 = vset.pattern.permute.xlu0 11
    %2445 = vperm.xlu0 %2444, %v253
    %v2446 = vpop.permute.xlu0 %2445
    %2448 = vset.pattern.permute.xlu0 11
    %2449 = vperm.xlu0 %2448, %v258
    %v2450 = vpop.permute.xlu0 %2449
    %2452 = vset.pattern.permute.xlu0 11
    %2453 = vperm.xlu0 %2452, %v263
    %v2454 = vpop.permute.xlu0 %2453
    %2456 = vset.pattern.permute.xlu0 11
    %2457 = vperm.xlu0 %2456, %v268
    %v2458 = vpop.permute.xlu0 %2457
    %2460 = vset.pattern.permute.xlu0 11
    %2461 = vperm.xlu0 %2460, %v273
    %v2462 = vpop.permute.xlu0 %2461
    %2464 = vset.pattern.permute.xlu0 11
    %2465 = vperm.xlu0 %2464, %v278
    %v2466 = vpop.permute.xlu0 %2465
    %2468 = vset.pattern.permute.xlu0 11
    %2469 = vperm.xlu0 %2468, %v283
    %v2470 = vpop.permute.xlu0 %2469
    %2472 = vset.pattern.permute.xlu0 11
    %2473 = vperm.xlu0 %2472, %v288
    %v2474 = vpop.permute.xlu0 %2473
    %2476 = vset.pattern.permute.xlu0 11
    %2477 = vperm.xlu0 %2476, %v293
    %v2478 = vpop.permute.xlu0 %2477
    %2480 = vset.pattern.permute.xlu0 11
    %2481 = vperm.xlu0 %2480, %v298
    %v2482 = vpop.permute.xlu0 %2481
    %2484 = vset.pattern.permute.xlu0 11
    %2485 = vperm.xlu0 %2484, %v303
    %v2486 = vpop.permute.xlu0 %2485
    %2488 = vset.pattern.permute.xlu0 11
    %2489 = vperm.xlu0 %2488, %v308
    %v2490 = vpop.permute.xlu0 %2489
    %2492 = vset.pattern.permute.xlu0 11
    %2493 = vperm.xlu0 %2492, %v313
    %v2494 = vpop.permute.xlu0 %2493
    %2496 = vset.pattern.permute.xlu0 11
    %2497 = vperm.xlu0 %2496, %v318
    %v2498 = vpop.permute.xlu0 %2497
    %v2500 = vlaneseq
    %v2501 = vshrl.u32 %v2500, 7
    %v2502 = vsub.s32 3, %v2501
    %v2503 = vrot.slane %v414, %v2502
    %v2504 = vadd.f32 %v2438, %v2503
    %v2505 = vadd.f32 %v2442, %v2503
    %v2506 = vadd.f32 %v2446, %v2503
    %v2507 = vadd.f32 %v2450, %v2503
    %v2508 = vadd.f32 %v2454, %v2503
    %v2509 = vadd.f32 %v2458, %v2503
    %v2510 = vadd.f32 %v2462, %v2503
    %v2511 = vadd.f32 %v2466, %v2503
    %v2512 = vadd.f32 %v2470, %v2503
    %v2513 = vadd.f32 %v2474, %v2503
    %v2514 = vadd.f32 %v2478, %v2503
    %v2515 = vadd.f32 %v2482, %v2503
    %v2516 = vadd.f32 %v2486, %v2503
    %v2517 = vadd.f32 %v2490, %v2503
    %v2518 = vadd.f32 %v2494, %v2503
    %v2519 = vadd.f32 %v2498, %v2503
    %v2520 = vmul.f32 %v2504, 0.2
    %v2521 = vmul.f32 %v2505, 0.2
    %v2522 = vmul.f32 %v2506, 0.2
    %v2523 = vmul.f32 %v2507, 0.2
    %v2524 = vmul.f32 %v2508, 0.2
    %v2525 = vmul.f32 %v2509, 0.2
    %v2526 = vmul.f32 %v2510, 0.2
    %v2527 = vmul.f32 %v2511, 0.2
    %v2528 = vmul.f32 %v2512, 0.2
    %v2529 = vmul.f32 %v2513, 0.2
    %v2530 = vmul.f32 %v2514, 0.2
    %v2531 = vmul.f32 %v2515, 0.2
    %v2532 = vmul.f32 %v2516, 0.2
    %v2533 = vmul.f32 %v2517, 0.2
    %v2534 = vmul.f32 %v2518, 0.2
    %v2535 = vmul.f32 %v2519, 0.2
    %v2536 = vmax.f32 %v2504, %v2520
    %v2537 = vmax.f32 %v2505, %v2521
    %v2538 = vmax.f32 %v2506, %v2522
    %v2539 = vmax.f32 %v2507, %v2523
    %v2540 = vmax.f32 %v2508, %v2524
    %v2541 = vmax.f32 %v2509, %v2525
    %v2542 = vmax.f32 %v2510, %v2526
    %v2543 = vmax.f32 %v2511, %v2527
    %v2544 = vmax.f32 %v2512, %v2528
    %v2545 = vmax.f32 %v2513, %v2529
    %v2546 = vmax.f32 %v2514, %v2530
    %v2547 = vmax.f32 %v2515, %v2531
    %v2548 = vmax.f32 %v2516, %v2532
    %v2549 = vmax.f32 %v2517, %v2533
    %v2550 = vmax.f32 %v2518, %v2534
    %v2551 = vmax.f32 %v2519, %v2535
    %s2552 = sld [smem:[#allocation2 + $0x83]]
    %v2553 = vstv %s2552
    %v2554 = vmul.f32 %v2553, %v2536
    %v2555 = vmul.f32 %v2553, %v2537
    %v2556 = vmul.f32 %v2553, %v2538
    %v2557 = vmul.f32 %v2553, %v2539
    %v2558 = vmul.f32 %v2553, %v2540
    %v2559 = vmul.f32 %v2553, %v2541
    %v2560 = vmul.f32 %v2553, %v2542
    %v2561 = vmul.f32 %v2553, %v2543
    %v2562 = vmul.f32 %v2553, %v2544
    %v2563 = vmul.f32 %v2553, %v2545
    %v2564 = vmul.f32 %v2553, %v2546
    %v2565 = vmul.f32 %v2553, %v2547
    %v2566 = vmul.f32 %v2553, %v2548
    %v2567 = vmul.f32 %v2553, %v2549
    %v2568 = vmul.f32 %v2553, %v2550
    %v2569 = vmul.f32 %v2553, %v2551
    %v2570 = vadd.f32 %v2420, %v2554
    %v2571 = vadd.f32 %v2421, %v2555
    %v2572 = vadd.f32 %v2422, %v2556
    %v2573 = vadd.f32 %v2423, %v2557
    %v2574 = vadd.f32 %v2424, %v2558
    %v2575 = vadd.f32 %v2425, %v2559
    %v2576 = vadd.f32 %v2426, %v2560
    %v2577 = vadd.f32 %v2427, %v2561
    %v2578 = vadd.f32 %v2428, %v2562
    %v2579 = vadd.f32 %v2429, %v2563
    %v2580 = vadd.f32 %v2430, %v2564
    %v2581 = vadd.f32 %v2431, %v2565
    %v2582 = vadd.f32 %v2432, %v2566
    %v2583 = vadd.f32 %v2433, %v2567
    %v2584 = vadd.f32 %v2434, %v2568
    %v2585 = vadd.f32 %v2435, %v2569
    %2586 = vset.pattern.permute.xlu0 12
    %2587 = vperm.xlu0 %2586, %v243
    %v2588 = vpop.permute.xlu0 %2587
    %2590 = vset.pattern.permute.xlu0 12
    %2591 = vperm.xlu0 %2590, %v248
    %v2592 = vpop.permute.xlu0 %2591
    %2594 = vset.pattern.permute.xlu0 12
    %2595 = vperm.xlu0 %2594, %v253
    %v2596 = vpop.permute.xlu0 %2595
    %2598 = vset.pattern.permute.xlu0 12
    %2599 = vperm.xlu0 %2598, %v258
    %v2600 = vpop.permute.xlu0 %2599
    %2602 = vset.pattern.permute.xlu0 12
    %2603 = vperm.xlu0 %2602, %v263
    %v2604 = vpop.permute.xlu0 %2603
    %2606 = vset.pattern.permute.xlu0 12
    %2607 = vperm.xlu0 %2606, %v268
    %v2608 = vpop.permute.xlu0 %2607
    %2610 = vset.pattern.permute.xlu0 12
    %2611 = vperm.xlu0 %2610, %v273
    %v2612 = vpop.permute.xlu0 %2611
    %2614 = vset.pattern.permute.xlu0 12
    %2615 = vperm.xlu0 %2614, %v278
    %v2616 = vpop.permute.xlu0 %2615
    %2618 = vset.pattern.permute.xlu0 12
    %2619 = vperm.xlu0 %2618, %v283
    %v2620 = vpop.permute.xlu0 %2619
    %2622 = vset.pattern.permute.xlu0 12
    %2623 = vperm.xlu0 %2622, %v288
    %v2624 = vpop.permute.xlu0 %2623
    %2626 = vset.pattern.permute.xlu0 12
    %2627 = vperm.xlu0 %2626, %v293
    %v2628 = vpop.permute.xlu0 %2627
    %2630 = vset.pattern.permute.xlu0 12
    %2631 = vperm.xlu0 %2630, %v298
    %v2632 = vpop.permute.xlu0 %2631
    %2634 = vset.pattern.permute.xlu0 12
    %2635 = vperm.xlu0 %2634, %v303
    %v2636 = vpop.permute.xlu0 %2635
    %2638 = vset.pattern.permute.xlu0 12
    %2639 = vperm.xlu0 %2638, %v308
    %v2640 = vpop.permute.xlu0 %2639
    %2642 = vset.pattern.permute.xlu0 12
    %2643 = vperm.xlu0 %2642, %v313
    %v2644 = vpop.permute.xlu0 %2643
    %2646 = vset.pattern.permute.xlu0 12
    %2647 = vperm.xlu0 %2646, %v318
    %v2648 = vpop.permute.xlu0 %2647
    %v2650 = vlaneseq
    %v2651 = vshrl.u32 %v2650, 7
    %v2652 = vsub.s32 4, %v2651
    %v2653 = vrot.slane %v414, %v2652
    %v2654 = vadd.f32 %v2588, %v2653
    %v2655 = vadd.f32 %v2592, %v2653
    %v2656 = vadd.f32 %v2596, %v2653
    %v2657 = vadd.f32 %v2600, %v2653
    %v2658 = vadd.f32 %v2604, %v2653
    %v2659 = vadd.f32 %v2608, %v2653
    %v2660 = vadd.f32 %v2612, %v2653
    %v2661 = vadd.f32 %v2616, %v2653
    %v2662 = vadd.f32 %v2620, %v2653
    %v2663 = vadd.f32 %v2624, %v2653
    %v2664 = vadd.f32 %v2628, %v2653
    %v2665 = vadd.f32 %v2632, %v2653
    %v2666 = vadd.f32 %v2636, %v2653
    %v2667 = vadd.f32 %v2640, %v2653
    %v2668 = vadd.f32 %v2644, %v2653
    %v2669 = vadd.f32 %v2648, %v2653
    %v2670 = vmul.f32 %v2654, 0.2
    %v2671 = vmul.f32 %v2655, 0.2
    %v2672 = vmul.f32 %v2656, 0.2
    %v2673 = vmul.f32 %v2657, 0.2
    %v2674 = vmul.f32 %v2658, 0.2
    %v2675 = vmul.f32 %v2659, 0.2
    %v2676 = vmul.f32 %v2660, 0.2
    %v2677 = vmul.f32 %v2661, 0.2
    %v2678 = vmul.f32 %v2662, 0.2
    %v2679 = vmul.f32 %v2663, 0.2
    %v2680 = vmul.f32 %v2664, 0.2
    %v2681 = vmul.f32 %v2665, 0.2
    %v2682 = vmul.f32 %v2666, 0.2
    %v2683 = vmul.f32 %v2667, 0.2
    %v2684 = vmul.f32 %v2668, 0.2
    %v2685 = vmul.f32 %v2669, 0.2
    %v2686 = vmax.f32 %v2654, %v2670
    %v2687 = vmax.f32 %v2655, %v2671
    %v2688 = vmax.f32 %v2656, %v2672
    %v2689 = vmax.f32 %v2657, %v2673
    %v2690 = vmax.f32 %v2658, %v2674
    %v2691 = vmax.f32 %v2659, %v2675
    %v2692 = vmax.f32 %v2660, %v2676
    %v2693 = vmax.f32 %v2661, %v2677
    %v2694 = vmax.f32 %v2662, %v2678
    %v2695 = vmax.f32 %v2663, %v2679
    %v2696 = vmax.f32 %v2664, %v2680
    %v2697 = vmax.f32 %v2665, %v2681
    %v2698 = vmax.f32 %v2666, %v2682
    %v2699 = vmax.f32 %v2667, %v2683
    %v2700 = vmax.f32 %v2668, %v2684
    %v2701 = vmax.f32 %v2669, %v2685
    %s2702 = sld [smem:[#allocation2 + $0x84]]
    %v2703 = vstv %s2702
    %v2704 = vmul.f32 %v2703, %v2686
    %v2705 = vmul.f32 %v2703, %v2687
    %v2706 = vmul.f32 %v2703, %v2688
    %v2707 = vmul.f32 %v2703, %v2689
    %v2708 = vmul.f32 %v2703, %v2690
    %v2709 = vmul.f32 %v2703, %v2691
    %v2710 = vmul.f32 %v2703, %v2692
    %v2711 = vmul.f32 %v2703, %v2693
    %v2712 = vmul.f32 %v2703, %v2694
    %v2713 = vmul.f32 %v2703, %v2695
    %v2714 = vmul.f32 %v2703, %v2696
    %v2715 = vmul.f32 %v2703, %v2697
    %v2716 = vmul.f32 %v2703, %v2698
    %v2717 = vmul.f32 %v2703, %v2699
    %v2718 = vmul.f32 %v2703, %v2700
    %v2719 = vmul.f32 %v2703, %v2701
    %v2720 = vadd.f32 %v2570, %v2704
    %v2721 = vadd.f32 %v2571, %v2705
    %v2722 = vadd.f32 %v2572, %v2706
    %v2723 = vadd.f32 %v2573, %v2707
    %v2724 = vadd.f32 %v2574, %v2708
    %v2725 = vadd.f32 %v2575, %v2709
    %v2726 = vadd.f32 %v2576, %v2710
    %v2727 = vadd.f32 %v2577, %v2711
    %v2728 = vadd.f32 %v2578, %v2712
    %v2729 = vadd.f32 %v2579, %v2713
    %v2730 = vadd.f32 %v2580, %v2714
    %v2731 = vadd.f32 %v2581, %v2715
    %v2732 = vadd.f32 %v2582, %v2716
    %v2733 = vadd.f32 %v2583, %v2717
    %v2734 = vadd.f32 %v2584, %v2718
    %v2735 = vadd.f32 %v2585, %v2719
    %2736 = vset.pattern.permute.xlu0 13
    %2737 = vperm.xlu0 %2736, %v243
    %v2738 = vpop.permute.xlu0 %2737
    %2740 = vset.pattern.permute.xlu0 13
    %2741 = vperm.xlu0 %2740, %v248
    %v2742 = vpop.permute.xlu0 %2741
    %2744 = vset.pattern.permute.xlu0 13
    %2745 = vperm.xlu0 %2744, %v253
    %v2746 = vpop.permute.xlu0 %2745
    %2748 = vset.pattern.permute.xlu0 13
    %2749 = vperm.xlu0 %2748, %v258
    %v2750 = vpop.permute.xlu0 %2749
    %2752 = vset.pattern.permute.xlu0 13
    %2753 = vperm.xlu0 %2752, %v263
    %v2754 = vpop.permute.xlu0 %2753
    %2756 = vset.pattern.permute.xlu0 13
    %2757 = vperm.xlu0 %2756, %v268
    %v2758 = vpop.permute.xlu0 %2757
    %2760 = vset.pattern.permute.xlu0 13
    %2761 = vperm.xlu0 %2760, %v273
    %v2762 = vpop.permute.xlu0 %2761
    %2764 = vset.pattern.permute.xlu0 13
    %2765 = vperm.xlu0 %2764, %v278
    %v2766 = vpop.permute.xlu0 %2765
    %2768 = vset.pattern.permute.xlu0 13
    %2769 = vperm.xlu0 %2768, %v283
    %v2770 = vpop.permute.xlu0 %2769
    %2772 = vset.pattern.permute.xlu0 13
    %2773 = vperm.xlu0 %2772, %v288
    %v2774 = vpop.permute.xlu0 %2773
    %2776 = vset.pattern.permute.xlu0 13
    %2777 = vperm.xlu0 %2776, %v293
    %v2778 = vpop.permute.xlu0 %2777
    %2780 = vset.pattern.permute.xlu0 13
    %2781 = vperm.xlu0 %2780, %v298
    %v2782 = vpop.permute.xlu0 %2781
    %2784 = vset.pattern.permute.xlu0 13
    %2785 = vperm.xlu0 %2784, %v303
    %v2786 = vpop.permute.xlu0 %2785
    %2788 = vset.pattern.permute.xlu0 13
    %2789 = vperm.xlu0 %2788, %v308
    %v2790 = vpop.permute.xlu0 %2789
    %2792 = vset.pattern.permute.xlu0 13
    %2793 = vperm.xlu0 %2792, %v313
    %v2794 = vpop.permute.xlu0 %2793
    %2796 = vset.pattern.permute.xlu0 13
    %2797 = vperm.xlu0 %2796, %v318
    %v2798 = vpop.permute.xlu0 %2797
    %v2800 = vlaneseq
    %v2801 = vshrl.u32 %v2800, 7
    %v2802 = vsub.s32 5, %v2801
    %v2803 = vrot.slane %v414, %v2802
    %v2804 = vadd.f32 %v2738, %v2803
    %v2805 = vadd.f32 %v2742, %v2803
    %v2806 = vadd.f32 %v2746, %v2803
    %v2807 = vadd.f32 %v2750, %v2803
    %v2808 = vadd.f32 %v2754, %v2803
    %v2809 = vadd.f32 %v2758, %v2803
    %v2810 = vadd.f32 %v2762, %v2803
    %v2811 = vadd.f32 %v2766, %v2803
    %v2812 = vadd.f32 %v2770, %v2803
    %v2813 = vadd.f32 %v2774, %v2803
    %v2814 = vadd.f32 %v2778, %v2803
    %v2815 = vadd.f32 %v2782, %v2803
    %v2816 = vadd.f32 %v2786, %v2803
    %v2817 = vadd.f32 %v2790, %v2803
    %v2818 = vadd.f32 %v2794, %v2803
    %v2819 = vadd.f32 %v2798, %v2803
    %v2820 = vmul.f32 %v2804, 0.2
    %v2821 = vmul.f32 %v2805, 0.2
    %v2822 = vmul.f32 %v2806, 0.2
    %v2823 = vmul.f32 %v2807, 0.2
    %v2824 = vmul.f32 %v2808, 0.2
    %v2825 = vmul.f32 %v2809, 0.2
    %v2826 = vmul.f32 %v2810, 0.2
    %v2827 = vmul.f32 %v2811, 0.2
    %v2828 = vmul.f32 %v2812, 0.2
    %v2829 = vmul.f32 %v2813, 0.2
    %v2830 = vmul.f32 %v2814, 0.2
    %v2831 = vmul.f32 %v2815, 0.2
    %v2832 = vmul.f32 %v2816, 0.2
    %v2833 = vmul.f32 %v2817, 0.2
    %v2834 = vmul.f32 %v2818, 0.2
    %v2835 = vmul.f32 %v2819, 0.2
    %v2836 = vmax.f32 %v2804, %v2820
    %v2837 = vmax.f32 %v2805, %v2821
    %v2838 = vmax.f32 %v2806, %v2822
    %v2839 = vmax.f32 %v2807, %v2823
    %v2840 = vmax.f32 %v2808, %v2824
    %v2841 = vmax.f32 %v2809, %v2825
    %v2842 = vmax.f32 %v2810, %v2826
    %v2843 = vmax.f32 %v2811, %v2827
    %v2844 = vmax.f32 %v2812, %v2828
    %v2845 = vmax.f32 %v2813, %v2829
    %v2846 = vmax.f32 %v2814, %v2830
    %v2847 = vmax.f32 %v2815, %v2831
    %v2848 = vmax.f32 %v2816, %v2832
    %v2849 = vmax.f32 %v2817, %v2833
    %v2850 = vmax.f32 %v2818, %v2834
    %v2851 = vmax.f32 %v2819, %v2835
    %s2852 = sld [smem:[#allocation2 + $0x85]]
    %v2853 = vstv %s2852
    %v2854 = vmul.f32 %v2853, %v2836
    %v2855 = vmul.f32 %v2853, %v2837
    %v2856 = vmul.f32 %v2853, %v2838
    %v2857 = vmul.f32 %v2853, %v2839
    %v2858 = vmul.f32 %v2853, %v2840
    %v2859 = vmul.f32 %v2853, %v2841
    %v2860 = vmul.f32 %v2853, %v2842
    %v2861 = vmul.f32 %v2853, %v2843
    %v2862 = vmul.f32 %v2853, %v2844
    %v2863 = vmul.f32 %v2853, %v2845
    %v2864 = vmul.f32 %v2853, %v2846
    %v2865 = vmul.f32 %v2853, %v2847
    %v2866 = vmul.f32 %v2853, %v2848
    %v2867 = vmul.f32 %v2853, %v2849
    %v2868 = vmul.f32 %v2853, %v2850
    %v2869 = vmul.f32 %v2853, %v2851
    %v2870 = vadd.f32 %v2720, %v2854
    %v2871 = vadd.f32 %v2721, %v2855
    %v2872 = vadd.f32 %v2722, %v2856
    %v2873 = vadd.f32 %v2723, %v2857
    %v2874 = vadd.f32 %v2724, %v2858
    %v2875 = vadd.f32 %v2725, %v2859
    %v2876 = vadd.f32 %v2726, %v2860
    %v2877 = vadd.f32 %v2727, %v2861
    %v2878 = vadd.f32 %v2728, %v2862
    %v2879 = vadd.f32 %v2729, %v2863
    %v2880 = vadd.f32 %v2730, %v2864
    %v2881 = vadd.f32 %v2731, %v2865
    %v2882 = vadd.f32 %v2732, %v2866
    %v2883 = vadd.f32 %v2733, %v2867
    %v2884 = vadd.f32 %v2734, %v2868
    %v2885 = vadd.f32 %v2735, %v2869
    %2886 = vset.pattern.permute.xlu0 14
    %2887 = vperm.xlu0 %2886, %v243
    %v2888 = vpop.permute.xlu0 %2887
    %2890 = vset.pattern.permute.xlu0 14
    %2891 = vperm.xlu0 %2890, %v248
    %v2892 = vpop.permute.xlu0 %2891
    %2894 = vset.pattern.permute.xlu0 14
    %2895 = vperm.xlu0 %2894, %v253
    %v2896 = vpop.permute.xlu0 %2895
    %2898 = vset.pattern.permute.xlu0 14
    %2899 = vperm.xlu0 %2898, %v258
    %v2900 = vpop.permute.xlu0 %2899
    %2902 = vset.pattern.permute.xlu0 14
    %2903 = vperm.xlu0 %2902, %v263
    %v2904 = vpop.permute.xlu0 %2903
    %2906 = vset.pattern.permute.xlu0 14
    %2907 = vperm.xlu0 %2906, %v268
    %v2908 = vpop.permute.xlu0 %2907
    %2910 = vset.pattern.permute.xlu0 14
    %2911 = vperm.xlu0 %2910, %v273
    %v2912 = vpop.permute.xlu0 %2911
    %2914 = vset.pattern.permute.xlu0 14
    %2915 = vperm.xlu0 %2914, %v278
    %v2916 = vpop.permute.xlu0 %2915
    %2918 = vset.pattern.permute.xlu0 14
    %2919 = vperm.xlu0 %2918, %v283
    %v2920 = vpop.permute.xlu0 %2919
    %2922 = vset.pattern.permute.xlu0 14
    %2923 = vperm.xlu0 %2922, %v288
    %v2924 = vpop.permute.xlu0 %2923
    %2926 = vset.pattern.permute.xlu0 14
    %2927 = vperm.xlu0 %2926, %v293
    %v2928 = vpop.permute.xlu0 %2927
    %2930 = vset.pattern.permute.xlu0 14
    %2931 = vperm.xlu0 %2930, %v298
    %v2932 = vpop.permute.xlu0 %2931
    %2934 = vset.pattern.permute.xlu0 14
    %2935 = vperm.xlu0 %2934, %v303
    %v2936 = vpop.permute.xlu0 %2935
    %2938 = vset.pattern.permute.xlu0 14
    %2939 = vperm.xlu0 %2938, %v308
    %v2940 = vpop.permute.xlu0 %2939
    %2942 = vset.pattern.permute.xlu0 14
    %2943 = vperm.xlu0 %2942, %v313
    %v2944 = vpop.permute.xlu0 %2943
    %2946 = vset.pattern.permute.xlu0 14
    %2947 = vperm.xlu0 %2946, %v318
    %v2948 = vpop.permute.xlu0 %2947
    %v2950 = vlaneseq
    %v2951 = vshrl.u32 %v2950, 7
    %v2952 = vsub.s32 6, %v2951
    %v2953 = vrot.slane %v414, %v2952
    %v2954 = vadd.f32 %v2888, %v2953
    %v2955 = vadd.f32 %v2892, %v2953
    %v2956 = vadd.f32 %v2896, %v2953
    %v2957 = vadd.f32 %v2900, %v2953
    %v2958 = vadd.f32 %v2904, %v2953
    %v2959 = vadd.f32 %v2908, %v2953
    %v2960 = vadd.f32 %v2912, %v2953
    %v2961 = vadd.f32 %v2916, %v2953
    %v2962 = vadd.f32 %v2920, %v2953
    %v2963 = vadd.f32 %v2924, %v2953
    %v2964 = vadd.f32 %v2928, %v2953
    %v2965 = vadd.f32 %v2932, %v2953
    %v2966 = vadd.f32 %v2936, %v2953
    %v2967 = vadd.f32 %v2940, %v2953
    %v2968 = vadd.f32 %v2944, %v2953
    %v2969 = vadd.f32 %v2948, %v2953
    %v2970 = vmul.f32 %v2954, 0.2
    %v2971 = vmul.f32 %v2955, 0.2
    %v2972 = vmul.f32 %v2956, 0.2
    %v2973 = vmul.f32 %v2957, 0.2
    %v2974 = vmul.f32 %v2958, 0.2
    %v2975 = vmul.f32 %v2959, 0.2
    %v2976 = vmul.f32 %v2960, 0.2
    %v2977 = vmul.f32 %v2961, 0.2
    %v2978 = vmul.f32 %v2962, 0.2
    %v2979 = vmul.f32 %v2963, 0.2
    %v2980 = vmul.f32 %v2964, 0.2
    %v2981 = vmul.f32 %v2965, 0.2
    %v2982 = vmul.f32 %v2966, 0.2
    %v2983 = vmul.f32 %v2967, 0.2
    %v2984 = vmul.f32 %v2968, 0.2
    %v2985 = vmul.f32 %v2969, 0.2
    %v2986 = vmax.f32 %v2954, %v2970
    %v2987 = vmax.f32 %v2955, %v2971
    %v2988 = vmax.f32 %v2956, %v2972
    %v2989 = vmax.f32 %v2957, %v2973
    %v2990 = vmax.f32 %v2958, %v2974
    %v2991 = vmax.f32 %v2959, %v2975
    %v2992 = vmax.f32 %v2960, %v2976
    %v2993 = vmax.f32 %v2961, %v2977
    %v2994 = vmax.f32 %v2962, %v2978
    %v2995 = vmax.f32 %v2963, %v2979
    %v2996 = vmax.f32 %v2964, %v2980
    %v2997 = vmax.f32 %v2965, %v2981
    %v2998 = vmax.f32 %v2966, %v2982
    %v2999 = vmax.f32 %v2967, %v2983
    %v3000 = vmax.f32 %v2968, %v2984
    %v3001 = vmax.f32 %v2969, %v2985
    %s3002 = sld [smem:[#allocation2 + $0x86]]
    %v3003 = vstv %s3002
    %v3004 = vmul.f32 %v3003, %v2986
    %v3005 = vmul.f32 %v3003, %v2987
    %v3006 = vmul.f32 %v3003, %v2988
    %v3007 = vmul.f32 %v3003, %v2989
    %v3008 = vmul.f32 %v3003, %v2990
    %v3009 = vmul.f32 %v3003, %v2991
    %v3010 = vmul.f32 %v3003, %v2992
    %v3011 = vmul.f32 %v3003, %v2993
    %v3012 = vmul.f32 %v3003, %v2994
    %v3013 = vmul.f32 %v3003, %v2995
    %v3014 = vmul.f32 %v3003, %v2996
    %v3015 = vmul.f32 %v3003, %v2997
    %v3016 = vmul.f32 %v3003, %v2998
    %v3017 = vmul.f32 %v3003, %v2999
    %v3018 = vmul.f32 %v3003, %v3000
    %v3019 = vmul.f32 %v3003, %v3001
    %v3020 = vadd.f32 %v2870, %v3004
    %v3021 = vadd.f32 %v2871, %v3005
    %v3022 = vadd.f32 %v2872, %v3006
    %v3023 = vadd.f32 %v2873, %v3007
    %v3024 = vadd.f32 %v2874, %v3008
    %v3025 = vadd.f32 %v2875, %v3009
    %v3026 = vadd.f32 %v2876, %v3010
    %v3027 = vadd.f32 %v2877, %v3011
    %v3028 = vadd.f32 %v2878, %v3012
    %v3029 = vadd.f32 %v2879, %v3013
    %v3030 = vadd.f32 %v2880, %v3014
    %v3031 = vadd.f32 %v2881, %v3015
    %v3032 = vadd.f32 %v2882, %v3016
    %v3033 = vadd.f32 %v2883, %v3017
    %v3034 = vadd.f32 %v2884, %v3018
    %v3035 = vadd.f32 %v2885, %v3019
    %3036 = vset.pattern.permute.xlu0 15
    %3037 = vperm.xlu0 %3036, %v243
    %v3038 = vpop.permute.xlu0 %3037
    %3040 = vset.pattern.permute.xlu0 15
    %3041 = vperm.xlu0 %3040, %v248
    %v3042 = vpop.permute.xlu0 %3041
    %3044 = vset.pattern.permute.xlu0 15
    %3045 = vperm.xlu0 %3044, %v253
    %v3046 = vpop.permute.xlu0 %3045
    %3048 = vset.pattern.permute.xlu0 15
    %3049 = vperm.xlu0 %3048, %v258
    %v3050 = vpop.permute.xlu0 %3049
    %3052 = vset.pattern.permute.xlu0 15
    %3053 = vperm.xlu0 %3052, %v263
    %v3054 = vpop.permute.xlu0 %3053
    %3056 = vset.pattern.permute.xlu0 15
    %3057 = vperm.xlu0 %3056, %v268
    %v3058 = vpop.permute.xlu0 %3057
    %3060 = vset.pattern.permute.xlu0 15
    %3061 = vperm.xlu0 %3060, %v273
    %v3062 = vpop.permute.xlu0 %3061
    %3064 = vset.pattern.permute.xlu0 15
    %3065 = vperm.xlu0 %3064, %v278
    %v3066 = vpop.permute.xlu0 %3065
    %3068 = vset.pattern.permute.xlu0 15
    %3069 = vperm.xlu0 %3068, %v283
    %v3070 = vpop.permute.xlu0 %3069
    %3072 = vset.pattern.permute.xlu0 15
    %3073 = vperm.xlu0 %3072, %v288
    %v3074 = vpop.permute.xlu0 %3073
    %3076 = vset.pattern.permute.xlu0 15
    %3077 = vperm.xlu0 %3076, %v293
    %v3078 = vpop.permute.xlu0 %3077
    %3080 = vset.pattern.permute.xlu0 15
    %3081 = vperm.xlu0 %3080, %v298
    %v3082 = vpop.permute.xlu0 %3081
    %3084 = vset.pattern.permute.xlu0 15
    %3085 = vperm.xlu0 %3084, %v303
    %v3086 = vpop.permute.xlu0 %3085
    %3088 = vset.pattern.permute.xlu0 15
    %3089 = vperm.xlu0 %3088, %v308
    %v3090 = vpop.permute.xlu0 %3089
    %3092 = vset.pattern.permute.xlu0 15
    %3093 = vperm.xlu0 %3092, %v313
    %v3094 = vpop.permute.xlu0 %3093
    %3096 = vset.pattern.permute.xlu0 15
    %3097 = vperm.xlu0 %3096, %v318
    %v3098 = vpop.permute.xlu0 %3097
    %v3100 = vlaneseq
    %v3101 = vshrl.u32 %v3100, 7
    %v3102 = vsub.s32 7, %v3101
    %v3103 = vrot.slane %v414, %v3102
    %v3104 = vadd.f32 %v3038, %v3103
    %v3105 = vadd.f32 %v3042, %v3103
    %v3106 = vadd.f32 %v3046, %v3103
    %v3107 = vadd.f32 %v3050, %v3103
    %v3108 = vadd.f32 %v3054, %v3103
    %v3109 = vadd.f32 %v3058, %v3103
    %v3110 = vadd.f32 %v3062, %v3103
    %v3111 = vadd.f32 %v3066, %v3103
    %v3112 = vadd.f32 %v3070, %v3103
    %v3113 = vadd.f32 %v3074, %v3103
    %v3114 = vadd.f32 %v3078, %v3103
    %v3115 = vadd.f32 %v3082, %v3103
    %v3116 = vadd.f32 %v3086, %v3103
    %v3117 = vadd.f32 %v3090, %v3103
    %v3118 = vadd.f32 %v3094, %v3103
    %v3119 = vadd.f32 %v3098, %v3103
    %v3120 = vmul.f32 %v3104, 0.2
    %v3121 = vmul.f32 %v3105, 0.2
    %v3122 = vmul.f32 %v3106, 0.2
    %v3123 = vmul.f32 %v3107, 0.2
    %v3124 = vmul.f32 %v3108, 0.2
    %v3125 = vmul.f32 %v3109, 0.2
    %v3126 = vmul.f32 %v3110, 0.2
    %v3127 = vmul.f32 %v3111, 0.2
    %v3128 = vmul.f32 %v3112, 0.2
    %v3129 = vmul.f32 %v3113, 0.2
    %v3130 = vmul.f32 %v3114, 0.2
    %v3131 = vmul.f32 %v3115, 0.2
    %v3132 = vmul.f32 %v3116, 0.2
    %v3133 = vmul.f32 %v3117, 0.2
    %v3134 = vmul.f32 %v3118, 0.2
    %v3135 = vmul.f32 %v3119, 0.2
    %v3136 = vmax.f32 %v3104, %v3120
    %v3137 = vmax.f32 %v3105, %v3121
    %v3138 = vmax.f32 %v3106, %v3122
    %v3139 = vmax.f32 %v3107, %v3123
    %v3140 = vmax.f32 %v3108, %v3124
    %v3141 = vmax.f32 %v3109, %v3125
    %v3142 = vmax.f32 %v3110, %v3126
    %v3143 = vmax.f32 %v3111, %v3127
    %v3144 = vmax.f32 %v3112, %v3128
    %v3145 = vmax.f32 %v3113, %v3129
    %v3146 = vmax.f32 %v3114, %v3130
    %v3147 = vmax.f32 %v3115, %v3131
    %v3148 = vmax.f32 %v3116, %v3132
    %v3149 = vmax.f32 %v3117, %v3133
    %v3150 = vmax.f32 %v3118, %v3134
    %v3151 = vmax.f32 %v3119, %v3135
    %s3152 = sld [smem:[#allocation2 + $0x87]]
    %v3153 = vstv %s3152
    %v3154 = vmul.f32 %v3153, %v3136
    %v3155 = vmul.f32 %v3153, %v3137
    %v3156 = vmul.f32 %v3153, %v3138
    %v3157 = vmul.f32 %v3153, %v3139
    %v3158 = vmul.f32 %v3153, %v3140
    %v3159 = vmul.f32 %v3153, %v3141
    %v3160 = vmul.f32 %v3153, %v3142
    %v3161 = vmul.f32 %v3153, %v3143
    %v3162 = vmul.f32 %v3153, %v3144
    %v3163 = vmul.f32 %v3153, %v3145
    %v3164 = vmul.f32 %v3153, %v3146
    %v3165 = vmul.f32 %v3153, %v3147
    %v3166 = vmul.f32 %v3153, %v3148
    %v3167 = vmul.f32 %v3153, %v3149
    %v3168 = vmul.f32 %v3153, %v3150
    %v3169 = vmul.f32 %v3153, %v3151
    %v3170 = vadd.f32 %v3020, %v3154
    %v3171 = vadd.f32 %v3021, %v3155
    %v3172 = vadd.f32 %v3022, %v3156
    %v3173 = vadd.f32 %v3023, %v3157
    %v3174 = vadd.f32 %v3024, %v3158
    %v3175 = vadd.f32 %v3025, %v3159
    %v3176 = vadd.f32 %v3026, %v3160
    %v3177 = vadd.f32 %v3027, %v3161
    %v3178 = vadd.f32 %v3028, %v3162
    %v3179 = vadd.f32 %v3029, %v3163
    %v3180 = vadd.f32 %v3030, %v3164
    %v3181 = vadd.f32 %v3031, %v3165
    %v3182 = vadd.f32 %v3032, %v3166
    %v3183 = vadd.f32 %v3033, %v3167
    %v3184 = vadd.f32 %v3034, %v3168
    %v3185 = vadd.f32 %v3035, %v3169
    %v3186 = vsel %vm1681, %v3170, -1e+30
    %v3187 = vsel %vm1682, %v3171, -1e+30
    %v3188 = vsel %vm1683, %v3172, -1e+30
    %v3189 = vsel %vm1684, %v3173, -1e+30
    %v3190 = vsel %vm1685, %v3174, -1e+30
    %v3191 = vsel %vm1686, %v3175, -1e+30
    %v3192 = vsel %vm1687, %v3176, -1e+30
    %v3193 = vsel %vm1688, %v3177, -1e+30
    %v3194 = vsel %vm1689, %v3178, -1e+30
    %v3195 = vsel %vm1690, %v3179, -1e+30
    %v3196 = vsel %vm1691, %v3180, -1e+30
    %v3197 = vsel %vm1692, %v3181, -1e+30
    %v3198 = vsel %vm1693, %v3182, -1e+30
    %v3199 = vsel %vm1694, %v3183, -1e+30
    %v3200 = vsel %vm1695, %v3184, -1e+30
    %v3201 = vsel %vm1696, %v3185, -1e+30
    %3202 = vmax.xlane.f32.xlu0 %v3186
    %v3203 = vpop.xlane.xlu0 %3202
    %3204 = vmax.xlane.f32.xlu0 %v3187
    %v3205 = vpop.xlane.xlu0 %3204
    %3206 = vmax.xlane.f32.xlu0 %v3188
    %v3207 = vpop.xlane.xlu0 %3206
    %3208 = vmax.xlane.f32.xlu0 %v3189
    %v3209 = vpop.xlane.xlu0 %3208
    %3210 = vmax.xlane.f32.xlu0 %v3190
    %v3211 = vpop.xlane.xlu0 %3210
    %3212 = vmax.xlane.f32.xlu0 %v3191
    %v3213 = vpop.xlane.xlu0 %3212
    %3214 = vmax.xlane.f32.xlu0 %v3192
    %v3215 = vpop.xlane.xlu0 %3214
    %3216 = vmax.xlane.f32.xlu0 %v3193
    %v3217 = vpop.xlane.xlu0 %3216
    %3218 = vmax.xlane.f32.xlu0 %v3194
    %v3219 = vpop.xlane.xlu0 %3218
    %3220 = vmax.xlane.f32.xlu0 %v3195
    %v3221 = vpop.xlane.xlu0 %3220
    %3222 = vmax.xlane.f32.xlu0 %v3196
    %v3223 = vpop.xlane.xlu0 %3222
    %3224 = vmax.xlane.f32.xlu0 %v3197
    %v3225 = vpop.xlane.xlu0 %3224
    %3226 = vmax.xlane.f32.xlu0 %v3198
    %v3227 = vpop.xlane.xlu0 %3226
    %3228 = vmax.xlane.f32.xlu0 %v3199
    %v3229 = vpop.xlane.xlu0 %3228
    %3230 = vmax.xlane.f32.xlu0 %v3200
    %v3231 = vpop.xlane.xlu0 %3230
    %3232 = vmax.xlane.f32.xlu0 %v3201
    %v3233 = vpop.xlane.xlu0 %3232
    %v3234 = vsub.f32 %v3186, %v3203
    %v3235 = vsub.f32 %v3187, %v3205
    %v3236 = vsub.f32 %v3188, %v3207
    %v3237 = vsub.f32 %v3189, %v3209
    %v3238 = vsub.f32 %v3190, %v3211
    %v3239 = vsub.f32 %v3191, %v3213
    %v3240 = vsub.f32 %v3192, %v3215
    %v3241 = vsub.f32 %v3193, %v3217
    %v3242 = vsub.f32 %v3194, %v3219
    %v3243 = vsub.f32 %v3195, %v3221
    %v3244 = vsub.f32 %v3196, %v3223
    %v3245 = vsub.f32 %v3197, %v3225
    %v3246 = vsub.f32 %v3198, %v3227
    %v3247 = vsub.f32 %v3199, %v3229
    %v3248 = vsub.f32 %v3200, %v3231
    %v3249 = vsub.f32 %v3201, %v3233
    %v3250 = vmul.f32 %v3234, 1.442695
    %v3251 = vpow.pop %v3250
    %v3252 = vmul.f32 %v3235, 1.442695
    %v3253 = vpow.pop %v3252
    %v3254 = vmul.f32 %v3236, 1.442695
    %v3255 = vpow.pop %v3254
    %v3256 = vmul.f32 %v3237, 1.442695
    %v3257 = vpow.pop %v3256
    %v3258 = vmul.f32 %v3238, 1.442695
    %v3259 = vpow.pop %v3258
    %v3260 = vmul.f32 %v3239, 1.442695
    %v3261 = vpow.pop %v3260
    %v3262 = vmul.f32 %v3240, 1.442695
    %v3263 = vpow.pop %v3262
    %v3264 = vmul.f32 %v3241, 1.442695
    %v3265 = vpow.pop %v3264
    %v3266 = vmul.f32 %v3242, 1.442695
    %v3267 = vpow.pop %v3266
    %v3268 = vmul.f32 %v3243, 1.442695
    %v3269 = vpow.pop %v3268
    %v3270 = vmul.f32 %v3244, 1.442695
    %v3271 = vpow.pop %v3270
    %v3272 = vmul.f32 %v3245, 1.442695
    %v3273 = vpow.pop %v3272
    %v3274 = vmul.f32 %v3246, 1.442695
    %v3275 = vpow.pop %v3274
    %v3276 = vmul.f32 %v3247, 1.442695
    %v3277 = vpow.pop %v3276
    %v3278 = vmul.f32 %v3248, 1.442695
    %v3279 = vpow.pop %v3278
    %v3280 = vmul.f32 %v3249, 1.442695
    %v3281 = vpow.pop %v3280
    %3282 = vadd.xlane.f32.xlu0 %v3251
    %v3283 = vpop.xlane.xlu0 %3282
    %3284 = vadd.xlane.f32.xlu0 %v3253
    %v3285 = vpop.xlane.xlu0 %3284
    %3286 = vadd.xlane.f32.xlu0 %v3255
    %v3287 = vpop.xlane.xlu0 %3286
    %3288 = vadd.xlane.f32.xlu0 %v3257
    %v3289 = vpop.xlane.xlu0 %3288
    %3290 = vadd.xlane.f32.xlu0 %v3259
    %v3291 = vpop.xlane.xlu0 %3290
    %3292 = vadd.xlane.f32.xlu0 %v3261
    %v3293 = vpop.xlane.xlu0 %3292
    %3294 = vadd.xlane.f32.xlu0 %v3263
    %v3295 = vpop.xlane.xlu0 %3294
    %3296 = vadd.xlane.f32.xlu0 %v3265
    %v3297 = vpop.xlane.xlu0 %3296
    %3298 = vadd.xlane.f32.xlu0 %v3267
    %v3299 = vpop.xlane.xlu0 %3298
    %3300 = vadd.xlane.f32.xlu0 %v3269
    %v3301 = vpop.xlane.xlu0 %3300
    %3302 = vadd.xlane.f32.xlu0 %v3271
    %v3303 = vpop.xlane.xlu0 %3302
    %3304 = vadd.xlane.f32.xlu0 %v3273
    %v3305 = vpop.xlane.xlu0 %3304
    %3306 = vadd.xlane.f32.xlu0 %v3275
    %v3307 = vpop.xlane.xlu0 %3306
    %3308 = vadd.xlane.f32.xlu0 %v3277
    %v3309 = vpop.xlane.xlu0 %3308
    %3310 = vadd.xlane.f32.xlu0 %v3279
    %v3311 = vpop.xlane.xlu0 %3310
    %3312 = vadd.xlane.f32.xlu0 %v3281
    %v3313 = vpop.xlane.xlu0 %3312
    %3314 = vmatprep.subr.mxu0 0.0
    %3315 = vmatpush1.xpose.msra.mxu0 %v414
    %3316 = vmatprep.subr.mxu0 0.0
    %3317 = vmatpush1.xpose.msra.mxu0 0.0
    %3318 = vmatprep.subr.mxu0 0.0
    %3319 = vmatpush1.xpose.msra.mxu0 0.0
    %3320 = vmatprep.subr.mxu0 0.0
    %3321 = vmatpush1.xpose.msra.mxu0 0.0
    %3322 = vmatprep.subr.mxu0 0.0
    %3323 = vmatpush1.xpose.msra.mxu0 0.0
    %3324 = vmatprep.subr.mxu0 0.0
    %3325 = vmatpush1.xpose.msra.mxu0 0.0
    %3326 = vmatprep.subr.mxu0 0.0
    %3327 = vmatpush1.xpose.msra.mxu0 0.0
    %3328 = vmatprep.subr.mxu0 0.0
    %3329 = vmatpush1.xpose.msra.mxu0 0.0
    %3330 = vmatprep.subr.mxu0 0.0
    %3331 = vmatpush1.xpose.msra.mxu0 0.0
    %3332 = vmatprep.subr.mxu0 0.0
    %3333 = vmatpush1.xpose.msra.mxu0 0.0
    %3334 = vmatprep.subr.mxu0 0.0
    %3335 = vmatpush1.xpose.msra.mxu0 0.0
    %3336 = vmatprep.subr.mxu0 0.0
    %3337 = vmatpush1.xpose.msra.mxu0 0.0
    %3338 = vmatprep.subr.mxu0 0.0
    %3339 = vmatpush1.xpose.msra.mxu0 0.0
    %3340 = vmatprep.subr.mxu0 0.0
    %3341 = vmatpush1.xpose.msra.mxu0 0.0
    %3342 = vmatprep.subr.mxu0 0.0
    %3343 = vmatpush1.xpose.msra.mxu0 0.0
    %3344 = vmatprep.subr.mxu0 0.0
    %3345 = vmatpush1.xpose.msra.mxu0 0.0
    %3346 = vmatprep.subr.mxu0 0.0
    %3347 = vmatpush1.xpose.msra.mxu0 0.0
    %3348 = vmatprep.subr.mxu0 0.0
    %3349 = vmatpush1.xpose.msra.mxu0 0.0
    %3350 = vmatprep.subr.mxu0 0.0
    %3351 = vmatpush1.xpose.msra.mxu0 0.0
    %3352 = vmatprep.subr.mxu0 0.0
    %3353 = vmatpush1.xpose.msra.mxu0 0.0
    %3354 = vmatprep.subr.mxu0 0.0
    %3355 = vmatpush1.xpose.msra.mxu0 0.0
    %3356 = vmatprep.subr.mxu0 0.0
    %3357 = vmatpush1.xpose.msra.mxu0 0.0
    %3358 = vmatprep.subr.mxu0 0.0
    %3359 = vmatpush1.xpose.msra.mxu0 0.0
    %3360 = vmatprep.subr.mxu0 0.0
    %3361 = vmatpush1.xpose.msra.mxu0 0.0
    %3362 = vmatprep.subr.mxu0 0.0
    %3363 = vmatpush1.xpose.msra.mxu0 0.0
    %3364 = vmatprep.subr.mxu0 0.0
    %3365 = vmatpush1.xpose.msra.mxu0 0.0
    %3366 = vmatprep.subr.mxu0 0.0
    %3367 = vmatpush1.xpose.msra.mxu0 0.0
    %3368 = vmatprep.subr.mxu0 0.0
    %3369 = vmatpush1.xpose.msra.mxu0 0.0
    %3370 = vmatprep.subr.mxu0 0.0
    %3371 = vmatpush1.xpose.msra.mxu0 0.0
    %3372 = vmatprep.subr.mxu0 0.0
    %3373 = vmatpush1.xpose.msra.mxu0 0.0
    %3374 = vmatprep.subr.mxu0 0.0
    %3375 = vmatpush1.xpose.msra.mxu0 0.0
    %3376 = vmatprep.subr.mxu0 0.0
    %3377 = vmatpush1.xpose.msra.mxu0 0.0
    %3378 = vmatprep.mubr.f32.mxu0 0.0
    %3379 = vmatmul.mubr.f32.gmra.mrb[0].mxu0 %v3251
    %v3380 = vpop.f32.mrb[0].mxu0
    %v3381 = vadd.f32 0.0, %v3380
    %v3382 = vpop.f32.mrb[0].mxu0
    %3383 = vmatprep.mubr.f32.mxu0 0.0
    %3384 = vmatmul.mubr.f32.gmra.mrb[0].mxu0 %v3253
    %v3385 = vpop.f32.mrb[0].mxu0
    %v3386 = vadd.f32 0.0, %v3385
    %v3387 = vpop.f32.mrb[0].mxu0
    %3388 = vmatprep.mubr.f32.mxu0 0.0
    %3389 = vmatmul.mubr.f32.gmra.mrb[0].mxu0 %v3255
    %v3390 = vpop.f32.mrb[0].mxu0
    %v3391 = vadd.f32 0.0, %v3390
    %v3392 = vpop.f32.mrb[0].mxu0
    %3393 = vmatprep.mubr.f32.mxu0 0.0
    %3394 = vmatmul.mubr.f32.gmra.mrb[0].mxu0 %v3257
    %v3395 = vpop.f32.mrb[0].mxu0
    %v3396 = vadd.f32 0.0, %v3395
    %v3397 = vpop.f32.mrb[0].mxu0
    %3398 = vmatprep.mubr.f32.mxu0 0.0
    %3399 = vmatmul.mubr.f32.gmra.mrb[0].mxu0 %v3259
    %v3400 = vpop.f32.mrb[0].mxu0
    %v3401 = vadd.f32 0.0, %v3400
    %v3402 = vpop.f32.mrb[0].mxu0
    %3403 = vmatprep.mubr.f32.mxu0 0.0
    %3404 = vmatmul.mubr.f32.gmra.mrb[0].mxu0 %v3261
    %v3405 = vpop.f32.mrb[0].mxu0
    %v3406 = vadd.f32 0.0, %v3405
    %v3407 = vpop.f32.mrb[0].mxu0
    %3408 = vmatprep.mubr.f32.mxu0 0.0
    %3409 = vmatmul.mubr.f32.gmra.mrb[0].mxu0 %v3263
    %v3410 = vpop.f32.mrb[0].mxu0
    %v3411 = vadd.f32 0.0, %v3410
    %v3412 = vpop.f32.mrb[0].mxu0
    %3413 = vmatprep.mubr.f32.mxu0 0.0
    %3414 = vmatmul.mubr.f32.gmra.mrb[0].mxu0 %v3265
    %v3415 = vpop.f32.mrb[0].mxu0
    %v3416 = vadd.f32 0.0, %v3415
    %v3417 = vpop.f32.mrb[0].mxu0
    %3418 = vmatprep.mubr.f32.mxu0 0.0
    %3419 = vmatmul.mubr.f32.gmra.mrb[0].mxu0 %v3267
    %v3420 = vpop.f32.mrb[0].mxu0
    %v3421 = vadd.f32 0.0, %v3420
    %v3422 = vpop.f32.mrb[0].mxu0
    %3423 = vmatprep.mubr.f32.mxu0 0.0
    %3424 = vmatmul.mubr.f32.gmra.mrb[0].mxu0 %v3269
    %v3425 = vpop.f32.mrb[0].mxu0
    %v3426 = vadd.f32 0.0, %v3425
    %v3427 = vpop.f32.mrb[0].mxu0
    %3428 = vmatprep.mubr.f32.mxu0 0.0
    %3429 = vmatmul.mubr.f32.gmra.mrb[0].mxu0 %v3271
    %v3430 = vpop.f32.mrb[0].mxu0
    %v3431 = vadd.f32 0.0, %v3430
    %v3432 = vpop.f32.mrb[0].mxu0
    %3433 = vmatprep.mubr.f32.mxu0 0.0
    %3434 = vmatmul.mubr.f32.gmra.mrb[0].mxu0 %v3273
    %v3435 = vpop.f32.mrb[0].mxu0
    %v3436 = vadd.f32 0.0, %v3435
    %v3437 = vpop.f32.mrb[0].mxu0
    %3438 = vmatprep.mubr.f32.mxu0 0.0
    %3439 = vmatmul.mubr.f32.gmra.mrb[0].mxu0 %v3275
    %v3440 = vpop.f32.mrb[0].mxu0
    %v3441 = vadd.f32 0.0, %v3440
    %v3442 = vpop.f32.mrb[0].mxu0
    %3443 = vmatprep.mubr.f32.mxu0 0.0
    %3444 = vmatmul.mubr.f32.gmra.mrb[0].mxu0 %v3277
    %v3445 = vpop.f32.mrb[0].mxu0
    %v3446 = vadd.f32 0.0, %v3445
    %v3447 = vpop.f32.mrb[0].mxu0
    %3448 = vmatprep.mubr.f32.mxu0 0.0
    %3449 = vmatmul.mubr.f32.gmra.mrb[0].mxu0 %v3279
    %v3450 = vpop.f32.mrb[0].mxu0
    %v3451 = vadd.f32 0.0, %v3450
    %v3452 = vpop.f32.mrb[0].mxu0
    %3453 = vmatprep.mubr.f32.mxu0 0.0
    %3454 = vmatmul.mubr.f32.gmra.mrb[0].mxu0 %v3281
    %v3455 = vpop.f32.mrb[0].mxu0
    %v3456 = vadd.f32 0.0, %v3455
    %v3457 = vpop.f32.mrb[0].mxu0
    %3458 = vdwg.mxu0
    %v3459 = vrcp.pop %v3283
    %v3460 = vrcp.pop %v3285
    %v3461 = vrcp.pop %v3287
    %v3462 = vrcp.pop %v3289
    %v3463 = vrcp.pop %v3291
    %v3464 = vrcp.pop %v3293
    %v3465 = vrcp.pop %v3295
    %v3466 = vrcp.pop %v3297
    %v3467 = vrcp.pop %v3299
    %v3468 = vrcp.pop %v3301
    %v3469 = vrcp.pop %v3303
    %v3470 = vrcp.pop %v3305
    %v3471 = vrcp.pop %v3307
    %v3472 = vrcp.pop %v3309
    %v3473 = vrcp.pop %v3311
    %v3474 = vrcp.pop %v3313
    %v3475 = vmul.f32 %v3381, %v3459
    %v3476 = vmul.f32 %v3386, %v3460
    %v3477 = vmul.f32 %v3391, %v3461
    %v3478 = vmul.f32 %v3396, %v3462
    %v3479 = vmul.f32 %v3401, %v3463
    %v3480 = vmul.f32 %v3406, %v3464
    %v3481 = vmul.f32 %v3411, %v3465
    %v3482 = vmul.f32 %v3416, %v3466
    %v3483 = vmul.f32 %v3421, %v3467
    %v3484 = vmul.f32 %v3426, %v3468
    %v3485 = vmul.f32 %v3431, %v3469
    %v3486 = vmul.f32 %v3436, %v3470
    %v3487 = vmul.f32 %v3441, %v3471
    %v3488 = vmul.f32 %v3446, %v3472
    %v3489 = vmul.f32 %v3451, %v3473
    %v3490 = vmul.f32 %v3456, %v3474
    %3507 = vrot.lane.b32.xlu0 %v3475, 8
    %v3508 = vpop.permute.xlu0 %3507
    %3509 = vrot.lane.b32.xlu0 %v3476, 8
    %v3510 = vpop.permute.xlu0 %3509
    %3511 = vrot.lane.b32.xlu0 %v3477, 8
    %v3512 = vpop.permute.xlu0 %3511
    %3513 = vrot.lane.b32.xlu0 %v3478, 8
    %v3514 = vpop.permute.xlu0 %3513
    %3515 = vrot.lane.b32.xlu0 %v3479, 8
    %v3516 = vpop.permute.xlu0 %3515
    %3517 = vrot.lane.b32.xlu0 %v3480, 8
    %v3518 = vpop.permute.xlu0 %3517
    %3519 = vrot.lane.b32.xlu0 %v3481, 8
    %v3520 = vpop.permute.xlu0 %3519
    %3521 = vrot.lane.b32.xlu0 %v3482, 8
    %v3522 = vpop.permute.xlu0 %3521
    %3523 = vrot.lane.b32.xlu0 %v3483, 8
    %v3524 = vpop.permute.xlu0 %3523
    %3525 = vrot.lane.b32.xlu0 %v3484, 8
    %v3526 = vpop.permute.xlu0 %3525
    %3527 = vrot.lane.b32.xlu0 %v3485, 8
    %v3528 = vpop.permute.xlu0 %3527
    %3529 = vrot.lane.b32.xlu0 %v3486, 8
    %v3530 = vpop.permute.xlu0 %3529
    %3531 = vrot.lane.b32.xlu0 %v3487, 8
    %v3532 = vpop.permute.xlu0 %3531
    %3533 = vrot.lane.b32.xlu0 %v3488, 8
    %v3534 = vpop.permute.xlu0 %3533
    %3535 = vrot.lane.b32.xlu0 %v3489, 8
    %v3536 = vpop.permute.xlu0 %3535
    %3537 = vrot.lane.b32.xlu0 %v3490, 8
    %v3538 = vpop.permute.xlu0 %3537
    %v3555 = vsel %vm127, %v1986, %v3508
    %v3556 = vsel %vm127, %v1987, %v3510
    %v3557 = vsel %vm127, %v1988, %v3512
    %v3558 = vsel %vm127, %v1989, %v3514
    %v3559 = vsel %vm127, %v1990, %v3516
    %v3560 = vsel %vm127, %v1991, %v3518
    %v3561 = vsel %vm127, %v1992, %v3520
    %v3562 = vsel %vm127, %v1993, %v3522
    %v3563 = vsel %vm127, %v1994, %v3524
    %v3564 = vsel %vm127, %v1995, %v3526
    %v3565 = vsel %vm127, %v1996, %v3528
    %v3566 = vsel %vm127, %v1997, %v3530
    %v3567 = vsel %vm127, %v1998, %v3532
    %v3568 = vsel %vm127, %v1999, %v3534
    %v3569 = vsel %vm127, %v2000, %v3536
    %v3570 = vsel %vm127, %v2001, %v3538
    %v3571 = vld [vmem:[%s10] sm:$0x1]
    %v3573 = vlaneseq
    %v3574 = vshrl.u32 %v3573, 7
    %v3575 = vsub.s32 0, %v3574
    %v3576 = vrot.slane %v3571, %v3575
    %v3578 = vadd.f32 %v3555, %v3576
    %v3579 = vadd.f32 %v3556, %v3576
    %v3580 = vadd.f32 %v3557, %v3576
    %v3581 = vadd.f32 %v3558, %v3576
    %v3582 = vadd.f32 %v3559, %v3576
    %v3583 = vadd.f32 %v3560, %v3576
    %v3584 = vadd.f32 %v3561, %v3576
    %v3585 = vadd.f32 %v3562, %v3576
    %v3586 = vadd.f32 %v3563, %v3576
    %v3587 = vadd.f32 %v3564, %v3576
    %v3588 = vadd.f32 %v3565, %v3576
    %v3589 = vadd.f32 %v3566, %v3576
    %v3590 = vadd.f32 %v3567, %v3576
    %v3591 = vadd.f32 %v3568, %v3576
    %v3592 = vadd.f32 %v3569, %v3576
    %v3593 = vadd.f32 %v3570, %v3576
    %v3594 = vld [vmem:[%s12] sm:$0xff]
    %v3595 = vld [vmem:[%s12 + $0x8] sm:$0xff]
    %v3596 = vld [vmem:[%s12 + $0x10] sm:$0xff]
    %v3597 = vld [vmem:[%s12 + $0x18] sm:$0xff]
    %v3598 = vld [vmem:[%s12 + $0x20] sm:$0xff]
    %v3599 = vld [vmem:[%s12 + $0x28] sm:$0xff]
    %v3600 = vld [vmem:[%s12 + $0x30] sm:$0xff]
    %v3601 = vld [vmem:[%s12 + $0x38] sm:$0xff]
    %v3602 = vld [vmem:[%s12 + $0x40] sm:$0xff]
    %v3603 = vld [vmem:[%s12 + $0x48] sm:$0xff]
    %v3604 = vld [vmem:[%s12 + $0x50] sm:$0xff]
    %v3605 = vld [vmem:[%s12 + $0x58] sm:$0xff]
    %v3606 = vld [vmem:[%s12 + $0x60] sm:$0xff]
    %v3607 = vld [vmem:[%s12 + $0x68] sm:$0xff]
    %v3608 = vld [vmem:[%s12 + $0x70] sm:$0xff]
    %v3609 = vld [vmem:[%s12 + $0x78] sm:$0xff]
    %v3610 = vld [vmem:[%s14] sm:$0xff]
    %v3611 = vld [vmem:[%s15] sm:$0x1]
    %v3613 = vlaneseq
    %v3614 = vshrl.u32 %v3613, 7
    %v3615 = vsub.s32 0, %v3614
    %v3616 = vrot.slane %v3611, %v3615
    %v3619 = vsel %vm127, %v3594, 0
    %v3622 = vsel %vm127, %v3595, 0
    %v3625 = vsel %vm127, %v3596, 0
    %v3628 = vsel %vm127, %v3597, 0
    %v3631 = vsel %vm127, %v3598, 0
    %v3634 = vsel %vm127, %v3599, 0
    %v3637 = vsel %vm127, %v3600, 0
    %v3640 = vsel %vm127, %v3601, 0
    %v3643 = vsel %vm127, %v3602, 0
    %v3646 = vsel %vm127, %v3603, 0
    %v3649 = vsel %vm127, %v3604, 0
    %v3652 = vsel %vm127, %v3605, 0
    %v3655 = vsel %vm127, %v3606, 0
    %v3658 = vsel %vm127, %v3607, 0
    %v3661 = vsel %vm127, %v3608, 0
    %v3664 = vsel %vm127, %v3609, 0
    %3666 = vmatprep.subr.mxu0 0.0
    %3667 = vmatpush1.msra.mxu0 %v3610
    %3668 = vmatprep.subr.mxu0 0.0
    %3669 = vmatpush1.msra.mxu0 0.0
    %3670 = vmatprep.subr.mxu0 0.0
    %3671 = vmatpush1.msra.mxu0 0.0
    %3672 = vmatprep.subr.mxu0 0.0
    %3673 = vmatpush1.msra.mxu0 0.0
    %3674 = vmatprep.subr.mxu0 0.0
    %3675 = vmatpush1.msra.mxu0 0.0
    %3676 = vmatprep.subr.mxu0 0.0
    %3677 = vmatpush1.msra.mxu0 0.0
    %3678 = vmatprep.subr.mxu0 0.0
    %3679 = vmatpush1.msra.mxu0 0.0
    %3680 = vmatprep.subr.mxu0 0.0
    %3681 = vmatpush1.msra.mxu0 0.0
    %3682 = vmatprep.subr.mxu0 0.0
    %3683 = vmatpush1.msra.mxu0 0.0
    %3684 = vmatprep.subr.mxu0 0.0
    %3685 = vmatpush1.msra.mxu0 0.0
    %3686 = vmatprep.subr.mxu0 0.0
    %3687 = vmatpush1.msra.mxu0 0.0
    %3688 = vmatprep.subr.mxu0 0.0
    %3689 = vmatpush1.msra.mxu0 0.0
    %3690 = vmatprep.subr.mxu0 0.0
    %3691 = vmatpush1.msra.mxu0 0.0
    %3692 = vmatprep.subr.mxu0 0.0
    %3693 = vmatpush1.msra.mxu0 0.0
    %3694 = vmatprep.subr.mxu0 0.0
    %3695 = vmatpush1.msra.mxu0 0.0
    %3696 = vmatprep.subr.mxu0 0.0
    %3697 = vmatpush1.msra.mxu0 0.0
    %3698 = vmatprep.subr.mxu0 0.0
    %3699 = vmatpush1.msra.mxu0 0.0
    %3700 = vmatprep.subr.mxu0 0.0
    %3701 = vmatpush1.msra.mxu0 0.0
    %3702 = vmatprep.subr.mxu0 0.0
    %3703 = vmatpush1.msra.mxu0 0.0
    %3704 = vmatprep.subr.mxu0 0.0
    %3705 = vmatpush1.msra.mxu0 0.0
    %3706 = vmatprep.subr.mxu0 0.0
    %3707 = vmatpush1.msra.mxu0 0.0
    %3708 = vmatprep.subr.mxu0 0.0
    %3709 = vmatpush1.msra.mxu0 0.0
    %3710 = vmatprep.subr.mxu0 0.0
    %3711 = vmatpush1.msra.mxu0 0.0
    %3712 = vmatprep.subr.mxu0 0.0
    %3713 = vmatpush1.msra.mxu0 0.0
    %3714 = vmatprep.subr.mxu0 0.0
    %3715 = vmatpush1.msra.mxu0 0.0
    %3716 = vmatprep.subr.mxu0 0.0
    %3717 = vmatpush1.msra.mxu0 0.0
    %3718 = vmatprep.subr.mxu0 0.0
    %3719 = vmatpush1.msra.mxu0 0.0
    %3720 = vmatprep.subr.mxu0 0.0
    %3721 = vmatpush1.msra.mxu0 0.0
    %3722 = vmatprep.subr.mxu0 0.0
    %3723 = vmatpush1.msra.mxu0 0.0
    %3724 = vmatprep.subr.mxu0 0.0
    %3725 = vmatpush1.msra.mxu0 0.0
    %3726 = vmatprep.subr.mxu0 0.0
    %3727 = vmatpush1.msra.mxu0 0.0
    %3728 = vmatprep.subr.mxu0 0.0
    %3729 = vmatpush1.msra.mxu0 0.0
    %3730 = vmatprep.mubr.f32.mxu0 0.0
    %3731 = vmatmul.mubr.f32.gmra.mrb[0].mxu0 %v3619
    %v3732 = vpop.f32.mrb[0].mxu0
    %v3733 = vadd.f32 %v3616, %v3732
    %v3734 = vpop.f32.mrb[0].mxu0
    %3735 = vmatprep.mubr.f32.mxu0 0.0
    %3736 = vmatmul.mubr.f32.gmra.mrb[0].mxu0 %v3622
    %v3737 = vpop.f32.mrb[0].mxu0
    %v3738 = vadd.f32 %v3616, %v3737
    %v3739 = vpop.f32.mrb[0].mxu0
    %3740 = vmatprep.mubr.f32.mxu0 0.0
    %3741 = vmatmul.mubr.f32.gmra.mrb[0].mxu0 %v3625
    %v3742 = vpop.f32.mrb[0].mxu0
    %v3743 = vadd.f32 %v3616, %v3742
    %v3744 = vpop.f32.mrb[0].mxu0
    %3745 = vmatprep.mubr.f32.mxu0 0.0
    %3746 = vmatmul.mubr.f32.gmra.mrb[0].mxu0 %v3628
    %v3747 = vpop.f32.mrb[0].mxu0
    %v3748 = vadd.f32 %v3616, %v3747
    %v3749 = vpop.f32.mrb[0].mxu0
    %3750 = vmatprep.mubr.f32.mxu0 0.0
    %3751 = vmatmul.mubr.f32.gmra.mrb[0].mxu0 %v3631
    %v3752 = vpop.f32.mrb[0].mxu0
    %v3753 = vadd.f32 %v3616, %v3752
    %v3754 = vpop.f32.mrb[0].mxu0
    %3755 = vmatprep.mubr.f32.mxu0 0.0
    %3756 = vmatmul.mubr.f32.gmra.mrb[0].mxu0 %v3634
    %v3757 = vpop.f32.mrb[0].mxu0
    %v3758 = vadd.f32 %v3616, %v3757
    %v3759 = vpop.f32.mrb[0].mxu0
    %3760 = vmatprep.mubr.f32.mxu0 0.0
    %3761 = vmatmul.mubr.f32.gmra.mrb[0].mxu0 %v3637
    %v3762 = vpop.f32.mrb[0].mxu0
    %v3763 = vadd.f32 %v3616, %v3762
    %v3764 = vpop.f32.mrb[0].mxu0
    %3765 = vmatprep.mubr.f32.mxu0 0.0
    %3766 = vmatmul.mubr.f32.gmra.mrb[0].mxu0 %v3640
    %v3767 = vpop.f32.mrb[0].mxu0
    %v3768 = vadd.f32 %v3616, %v3767
    %v3769 = vpop.f32.mrb[0].mxu0
    %3770 = vmatprep.mubr.f32.mxu0 0.0
    %3771 = vmatmul.mubr.f32.gmra.mrb[0].mxu0 %v3643
    %v3772 = vpop.f32.mrb[0].mxu0
    %v3773 = vadd.f32 %v3616, %v3772
    %v3774 = vpop.f32.mrb[0].mxu0
    %3775 = vmatprep.mubr.f32.mxu0 0.0
    %3776 = vmatmul.mubr.f32.gmra.mrb[0].mxu0 %v3646
    %v3777 = vpop.f32.mrb[0].mxu0
    %v3778 = vadd.f32 %v3616, %v3777
    %v3779 = vpop.f32.mrb[0].mxu0
    %3780 = vmatprep.mubr.f32.mxu0 0.0
    %3781 = vmatmul.mubr.f32.gmra.mrb[0].mxu0 %v3649
    %v3782 = vpop.f32.mrb[0].mxu0
    %v3783 = vadd.f32 %v3616, %v3782
    %v3784 = vpop.f32.mrb[0].mxu0
    %3785 = vmatprep.mubr.f32.mxu0 0.0
    %3786 = vmatmul.mubr.f32.gmra.mrb[0].mxu0 %v3652
    %v3787 = vpop.f32.mrb[0].mxu0
    %v3788 = vadd.f32 %v3616, %v3787
    %v3789 = vpop.f32.mrb[0].mxu0
    %3790 = vmatprep.mubr.f32.mxu0 0.0
    %3791 = vmatmul.mubr.f32.gmra.mrb[0].mxu0 %v3655
    %v3792 = vpop.f32.mrb[0].mxu0
    %v3793 = vadd.f32 %v3616, %v3792
    %v3794 = vpop.f32.mrb[0].mxu0
    %3795 = vmatprep.mubr.f32.mxu0 0.0
    %3796 = vmatmul.mubr.f32.gmra.mrb[0].mxu0 %v3658
    %v3797 = vpop.f32.mrb[0].mxu0
    %v3798 = vadd.f32 %v3616, %v3797
    %v3799 = vpop.f32.mrb[0].mxu0
    %3800 = vmatprep.mubr.f32.mxu0 0.0
    %3801 = vmatmul.mubr.f32.gmra.mrb[0].mxu0 %v3661
    %v3802 = vpop.f32.mrb[0].mxu0
    %v3803 = vadd.f32 %v3616, %v3802
    %v3804 = vpop.f32.mrb[0].mxu0
    %3805 = vmatprep.mubr.f32.mxu0 0.0
    %3806 = vmatmul.mubr.f32.gmra.mrb[0].mxu0 %v3664
    %v3807 = vpop.f32.mrb[0].mxu0
    %v3808 = vadd.f32 %v3616, %v3807
    %v3809 = vpop.f32.mrb[0].mxu0
    %3810 = vdwg.mxu0
    %v3811 = vld [vmem:[%s16] sm:$0xff]
    %v3812 = vld [vmem:[%s16 + $0x8] sm:$0xff]
    %v3813 = vld [vmem:[%s13] sm:$0xff]
    %v3814 = vld [vmem:[%s17] sm:$0xff]
    %v3815 = vld [vmem:[%s17 + $0x8] sm:$0xff]
    %3817 = vset.pattern.permute.xlu0 0
    %3818 = vperm.xlu0 %3817, %v3814
    %v3819 = vpop.permute.xlu0 %3818
    %3822 = vset.pattern.permute.xlu0 0
    %3823 = vperm.xlu0 %3822, %v3815
    %v3824 = vpop.permute.xlu0 %3823
    %v3827 = vsel %vm127, %v3811, 0
    %v3830 = vsel %vm127, %v3812, 0
    %3832 = vmatprep.subr.mxu0 0.0
    %3833 = vmatpush1.msra.mxu0 %v3813
    %3834 = vmatprep.subr.mxu0 0.0
    %3835 = vmatpush1.msra.mxu0 0.0
    %3836 = vmatprep.subr.mxu0 0.0
    %3837 = vmatpush1.msra.mxu0 0.0
    %3838 = vmatprep.subr.mxu0 0.0
    %3839 = vmatpush1.msra.mxu0 0.0
    %3840 = vmatprep.subr.mxu0 0.0
    %3841 = vmatpush1.msra.mxu0 0.0
    %3842 = vmatprep.subr.mxu0 0.0
    %3843 = vmatpush1.msra.mxu0 0.0
    %3844 = vmatprep.subr.mxu0 0.0
    %3845 = vmatpush1.msra.mxu0 0.0
    %3846 = vmatprep.subr.mxu0 0.0
    %3847 = vmatpush1.msra.mxu0 0.0
    %3848 = vmatprep.subr.mxu0 0.0
    %3849 = vmatpush1.msra.mxu0 0.0
    %3850 = vmatprep.subr.mxu0 0.0
    %3851 = vmatpush1.msra.mxu0 0.0
    %3852 = vmatprep.subr.mxu0 0.0
    %3853 = vmatpush1.msra.mxu0 0.0
    %3854 = vmatprep.subr.mxu0 0.0
    %3855 = vmatpush1.msra.mxu0 0.0
    %3856 = vmatprep.subr.mxu0 0.0
    %3857 = vmatpush1.msra.mxu0 0.0
    %3858 = vmatprep.subr.mxu0 0.0
    %3859 = vmatpush1.msra.mxu0 0.0
    %3860 = vmatprep.subr.mxu0 0.0
    %3861 = vmatpush1.msra.mxu0 0.0
    %3862 = vmatprep.subr.mxu0 0.0
    %3863 = vmatpush1.msra.mxu0 0.0
    %3864 = vmatprep.subr.mxu0 0.0
    %3865 = vmatpush1.msra.mxu0 0.0
    %3866 = vmatprep.subr.mxu0 0.0
    %3867 = vmatpush1.msra.mxu0 0.0
    %3868 = vmatprep.subr.mxu0 0.0
    %3869 = vmatpush1.msra.mxu0 0.0
    %3870 = vmatprep.subr.mxu0 0.0
    %3871 = vmatpush1.msra.mxu0 0.0
    %3872 = vmatprep.subr.mxu0 0.0
    %3873 = vmatpush1.msra.mxu0 0.0
    %3874 = vmatprep.subr.mxu0 0.0
    %3875 = vmatpush1.msra.mxu0 0.0
    %3876 = vmatprep.subr.mxu0 0.0
    %3877 = vmatpush1.msra.mxu0 0.0
    %3878 = vmatprep.subr.mxu0 0.0
    %3879 = vmatpush1.msra.mxu0 0.0
    %3880 = vmatprep.subr.mxu0 0.0
    %3881 = vmatpush1.msra.mxu0 0.0
    %3882 = vmatprep.subr.mxu0 0.0
    %3883 = vmatpush1.msra.mxu0 0.0
    %3884 = vmatprep.subr.mxu0 0.0
    %3885 = vmatpush1.msra.mxu0 0.0
    %3886 = vmatprep.subr.mxu0 0.0
    %3887 = vmatpush1.msra.mxu0 0.0
    %3888 = vmatprep.subr.mxu0 0.0
    %3889 = vmatpush1.msra.mxu0 0.0
    %3890 = vmatprep.subr.mxu0 0.0
    %3891 = vmatpush1.msra.mxu0 0.0
    %3892 = vmatprep.subr.mxu0 0.0
    %3893 = vmatpush1.msra.mxu0 0.0
    %3894 = vmatprep.subr.mxu0 0.0
    %3895 = vmatpush1.msra.mxu0 0.0
    %3896 = vmatprep.mubr.f32.mxu0 0.0
    %3897 = vmatmul.mubr.f32.gmra.mrb[0].mxu0 %v3827
    %v3898 = vpop.f32.mrb[0].mxu0
    %v3899 = vadd.f32 %v3819, %v3898
    %v3900 = vpop.f32.mrb[0].mxu0
    %3901 = vmatprep.mubr.f32.mxu0 0.0
    %3902 = vmatmul.mubr.f32.gmra.mrb[0].mxu0 %v3830
    %v3903 = vpop.f32.mrb[0].mxu0
    %v3904 = vadd.f32 %v3824, %v3903
    %v3905 = vpop.f32.mrb[0].mxu0
    %3906 = vdwg.mxu0
    %v3907 = vld [vmem:[%s11] sm:$0xf]
    %v3908 = vld [vmem:[%s11 + $0x4] sm:$0xf]
    %v3909 = vld [vmem:[%s11 + $0x8] sm:$0xf]
    %v3910 = vld [vmem:[%s11 + $0xc] sm:$0xf]
    %v3911 = vld [vmem:[%s11 + $0x10] sm:$0xf]
    %v3912 = vld [vmem:[%s11 + $0x14] sm:$0xf]
    %v3913 = vld [vmem:[%s11 + $0x18] sm:$0xf]
    %v3914 = vld [vmem:[%s11 + $0x1c] sm:$0xf]
    %v3915 = vld [vmem:[%s11 + $0x20] sm:$0xf]
    %v3916 = vld [vmem:[%s11 + $0x24] sm:$0xf]
    %v3917 = vld [vmem:[%s11 + $0x28] sm:$0xf]
    %v3918 = vld [vmem:[%s11 + $0x2c] sm:$0xf]
    %v3919 = vld [vmem:[%s11 + $0x30] sm:$0xf]
    %v3920 = vld [vmem:[%s11 + $0x34] sm:$0xf]
    %v3921 = vld [vmem:[%s11 + $0x38] sm:$0xf]
    %v3922 = vld [vmem:[%s11 + $0x3c] sm:$0xf]
    %vm3923 = vcmp.gt.bf16.partialorder %v3907, 0
    %vm3924 = vcmp.gt.bf16.partialorder %v3908, 0
    %vm3925 = vcmp.gt.bf16.partialorder %v3909, 0
    %vm3926 = vcmp.gt.bf16.partialorder %v3910, 0
    %vm3927 = vcmp.gt.bf16.partialorder %v3911, 0
    %vm3928 = vcmp.gt.bf16.partialorder %v3912, 0
    %vm3929 = vcmp.gt.bf16.partialorder %v3913, 0
    %vm3930 = vcmp.gt.bf16.partialorder %v3914, 0
    %vm3931 = vcmp.gt.bf16.partialorder %v3915, 0
    %vm3932 = vcmp.gt.bf16.partialorder %v3916, 0
    %vm3933 = vcmp.gt.bf16.partialorder %v3917, 0
    %vm3934 = vcmp.gt.bf16.partialorder %v3918, 0
    %vm3935 = vcmp.gt.bf16.partialorder %v3919, 0
    %vm3936 = vcmp.gt.bf16.partialorder %v3920, 0
    %vm3937 = vcmp.gt.bf16.partialorder %v3921, 0
    %vm3938 = vcmp.gt.bf16.partialorder %v3922, 0
    %3940 = vset.pattern.permute.xlu0 0
    %3941 = vperm.xlu0 %3940, %v3733
    %v3942 = vpop.permute.xlu0 %3941
    %3945 = vset.pattern.permute.xlu0 0
    %3946 = vperm.xlu0 %3945, %v3738
    %v3947 = vpop.permute.xlu0 %3946
    %3950 = vset.pattern.permute.xlu0 0
    %3951 = vperm.xlu0 %3950, %v3743
    %v3952 = vpop.permute.xlu0 %3951
    %3955 = vset.pattern.permute.xlu0 0
    %3956 = vperm.xlu0 %3955, %v3748
    %v3957 = vpop.permute.xlu0 %3956
    %3960 = vset.pattern.permute.xlu0 0
    %3961 = vperm.xlu0 %3960, %v3753
    %v3962 = vpop.permute.xlu0 %3961
    %3965 = vset.pattern.permute.xlu0 0
    %3966 = vperm.xlu0 %3965, %v3758
    %v3967 = vpop.permute.xlu0 %3966
    %3970 = vset.pattern.permute.xlu0 0
    %3971 = vperm.xlu0 %3970, %v3763
    %v3972 = vpop.permute.xlu0 %3971
    %3975 = vset.pattern.permute.xlu0 0
    %3976 = vperm.xlu0 %3975, %v3768
    %v3977 = vpop.permute.xlu0 %3976
    %3980 = vset.pattern.permute.xlu0 0
    %3981 = vperm.xlu0 %3980, %v3773
    %v3982 = vpop.permute.xlu0 %3981
    %3985 = vset.pattern.permute.xlu0 0
    %3986 = vperm.xlu0 %3985, %v3778
    %v3987 = vpop.permute.xlu0 %3986
    %3990 = vset.pattern.permute.xlu0 0
    %3991 = vperm.xlu0 %3990, %v3783
    %v3992 = vpop.permute.xlu0 %3991
    %3995 = vset.pattern.permute.xlu0 0
    %3996 = vperm.xlu0 %3995, %v3788
    %v3997 = vpop.permute.xlu0 %3996
    %4000 = vset.pattern.permute.xlu0 0
    %4001 = vperm.xlu0 %4000, %v3793
    %v4002 = vpop.permute.xlu0 %4001
    %4005 = vset.pattern.permute.xlu0 0
    %4006 = vperm.xlu0 %4005, %v3798
    %v4007 = vpop.permute.xlu0 %4006
    %4010 = vset.pattern.permute.xlu0 0
    %4011 = vperm.xlu0 %4010, %v3803
    %v4012 = vpop.permute.xlu0 %4011
    %4015 = vset.pattern.permute.xlu0 0
    %4016 = vperm.xlu0 %4015, %v3808
    %v4017 = vpop.permute.xlu0 %4016
    %v4019 = vlaneseq
    %v4020 = vshrl.u32 %v4019, 7
    %v4021 = vsub.s32 0, %v4020
    %v4022 = vrot.slane %v3899, %v4021
    %v4023 = vadd.f32 %v3942, %v4022
    %v4024 = vadd.f32 %v3947, %v4022
    %v4025 = vadd.f32 %v3952, %v4022
    %v4026 = vadd.f32 %v3957, %v4022
    %v4027 = vadd.f32 %v3962, %v4022
    %v4028 = vadd.f32 %v3967, %v4022
    %v4029 = vadd.f32 %v3972, %v4022
    %v4030 = vadd.f32 %v3977, %v4022
    %v4031 = vadd.f32 %v3982, %v4022
    %v4032 = vadd.f32 %v3987, %v4022
    %v4033 = vadd.f32 %v3992, %v4022
    %v4034 = vadd.f32 %v3997, %v4022
    %v4035 = vadd.f32 %v4002, %v4022
    %v4036 = vadd.f32 %v4007, %v4022
    %v4037 = vadd.f32 %v4012, %v4022
    %v4038 = vadd.f32 %v4017, %v4022
    %v4039 = vmul.f32 %v4023, 0.2
    %v4040 = vmul.f32 %v4024, 0.2
    %v4041 = vmul.f32 %v4025, 0.2
    %v4042 = vmul.f32 %v4026, 0.2
    %v4043 = vmul.f32 %v4027, 0.2
    %v4044 = vmul.f32 %v4028, 0.2
    %v4045 = vmul.f32 %v4029, 0.2
    %v4046 = vmul.f32 %v4030, 0.2
    %v4047 = vmul.f32 %v4031, 0.2
    %v4048 = vmul.f32 %v4032, 0.2
    %v4049 = vmul.f32 %v4033, 0.2
    %v4050 = vmul.f32 %v4034, 0.2
    %v4051 = vmul.f32 %v4035, 0.2
    %v4052 = vmul.f32 %v4036, 0.2
    %v4053 = vmul.f32 %v4037, 0.2
    %v4054 = vmul.f32 %v4038, 0.2
    %v4055 = vmax.f32 %v4023, %v4039
    %v4056 = vmax.f32 %v4024, %v4040
    %v4057 = vmax.f32 %v4025, %v4041
    %v4058 = vmax.f32 %v4026, %v4042
    %v4059 = vmax.f32 %v4027, %v4043
    %v4060 = vmax.f32 %v4028, %v4044
    %v4061 = vmax.f32 %v4029, %v4045
    %v4062 = vmax.f32 %v4030, %v4046
    %v4063 = vmax.f32 %v4031, %v4047
    %v4064 = vmax.f32 %v4032, %v4048
    %v4065 = vmax.f32 %v4033, %v4049
    %v4066 = vmax.f32 %v4034, %v4050
    %v4067 = vmax.f32 %v4035, %v4051
    %v4068 = vmax.f32 %v4036, %v4052
    %v4069 = vmax.f32 %v4037, %v4053
    %v4070 = vmax.f32 %v4038, %v4054
    %s4071 = sld [smem:[#allocation4]]
    %v4072 = vstv %s4071
    %v4073 = vmul.f32 %v4072, %v4055
    %v4074 = vmul.f32 %v4072, %v4056
    %v4075 = vmul.f32 %v4072, %v4057
    %v4076 = vmul.f32 %v4072, %v4058
    %v4077 = vmul.f32 %v4072, %v4059
    %v4078 = vmul.f32 %v4072, %v4060
    %v4079 = vmul.f32 %v4072, %v4061
    %v4080 = vmul.f32 %v4072, %v4062
    %v4081 = vmul.f32 %v4072, %v4063
    %v4082 = vmul.f32 %v4072, %v4064
    %v4083 = vmul.f32 %v4072, %v4065
    %v4084 = vmul.f32 %v4072, %v4066
    %v4085 = vmul.f32 %v4072, %v4067
    %v4086 = vmul.f32 %v4072, %v4068
    %v4087 = vmul.f32 %v4072, %v4069
    %v4088 = vmul.f32 %v4072, %v4070
    %4089 = vset.pattern.permute.xlu0 1
    %4090 = vperm.xlu0 %4089, %v3733
    %v4091 = vpop.permute.xlu0 %4090
    %4093 = vset.pattern.permute.xlu0 1
    %4094 = vperm.xlu0 %4093, %v3738
    %v4095 = vpop.permute.xlu0 %4094
    %4097 = vset.pattern.permute.xlu0 1
    %4098 = vperm.xlu0 %4097, %v3743
    %v4099 = vpop.permute.xlu0 %4098
    %4101 = vset.pattern.permute.xlu0 1
    %4102 = vperm.xlu0 %4101, %v3748
    %v4103 = vpop.permute.xlu0 %4102
    %4105 = vset.pattern.permute.xlu0 1
    %4106 = vperm.xlu0 %4105, %v3753
    %v4107 = vpop.permute.xlu0 %4106
    %4109 = vset.pattern.permute.xlu0 1
    %4110 = vperm.xlu0 %4109, %v3758
    %v4111 = vpop.permute.xlu0 %4110
    %4113 = vset.pattern.permute.xlu0 1
    %4114 = vperm.xlu0 %4113, %v3763
    %v4115 = vpop.permute.xlu0 %4114
    %4117 = vset.pattern.permute.xlu0 1
    %4118 = vperm.xlu0 %4117, %v3768
    %v4119 = vpop.permute.xlu0 %4118
    %4121 = vset.pattern.permute.xlu0 1
    %4122 = vperm.xlu0 %4121, %v3773
    %v4123 = vpop.permute.xlu0 %4122
    %4125 = vset.pattern.permute.xlu0 1
    %4126 = vperm.xlu0 %4125, %v3778
    %v4127 = vpop.permute.xlu0 %4126
    %4129 = vset.pattern.permute.xlu0 1
    %4130 = vperm.xlu0 %4129, %v3783
    %v4131 = vpop.permute.xlu0 %4130
    %4133 = vset.pattern.permute.xlu0 1
    %4134 = vperm.xlu0 %4133, %v3788
    %v4135 = vpop.permute.xlu0 %4134
    %4137 = vset.pattern.permute.xlu0 1
    %4138 = vperm.xlu0 %4137, %v3793
    %v4139 = vpop.permute.xlu0 %4138
    %4141 = vset.pattern.permute.xlu0 1
    %4142 = vperm.xlu0 %4141, %v3798
    %v4143 = vpop.permute.xlu0 %4142
    %4145 = vset.pattern.permute.xlu0 1
    %4146 = vperm.xlu0 %4145, %v3803
    %v4147 = vpop.permute.xlu0 %4146
    %4149 = vset.pattern.permute.xlu0 1
    %4150 = vperm.xlu0 %4149, %v3808
    %v4151 = vpop.permute.xlu0 %4150
    %v4153 = vlaneseq
    %v4154 = vshrl.u32 %v4153, 7
    %v4155 = vsub.s32 1, %v4154
    %v4156 = vrot.slane %v3899, %v4155
    %v4157 = vadd.f32 %v4091, %v4156
    %v4158 = vadd.f32 %v4095, %v4156
    %v4159 = vadd.f32 %v4099, %v4156
    %v4160 = vadd.f32 %v4103, %v4156
    %v4161 = vadd.f32 %v4107, %v4156
    %v4162 = vadd.f32 %v4111, %v4156
    %v4163 = vadd.f32 %v4115, %v4156
    %v4164 = vadd.f32 %v4119, %v4156
    %v4165 = vadd.f32 %v4123, %v4156
    %v4166 = vadd.f32 %v4127, %v4156
    %v4167 = vadd.f32 %v4131, %v4156
    %v4168 = vadd.f32 %v4135, %v4156
    %v4169 = vadd.f32 %v4139, %v4156
    %v4170 = vadd.f32 %v4143, %v4156
    %v4171 = vadd.f32 %v4147, %v4156
    %v4172 = vadd.f32 %v4151, %v4156
    %v4173 = vmul.f32 %v4157, 0.2
    %v4174 = vmul.f32 %v4158, 0.2
    %v4175 = vmul.f32 %v4159, 0.2
    %v4176 = vmul.f32 %v4160, 0.2
    %v4177 = vmul.f32 %v4161, 0.2
    %v4178 = vmul.f32 %v4162, 0.2
    %v4179 = vmul.f32 %v4163, 0.2
    %v4180 = vmul.f32 %v4164, 0.2
    %v4181 = vmul.f32 %v4165, 0.2
    %v4182 = vmul.f32 %v4166, 0.2
    %v4183 = vmul.f32 %v4167, 0.2
    %v4184 = vmul.f32 %v4168, 0.2
    %v4185 = vmul.f32 %v4169, 0.2
    %v4186 = vmul.f32 %v4170, 0.2
    %v4187 = vmul.f32 %v4171, 0.2
    %v4188 = vmul.f32 %v4172, 0.2
    %v4189 = vmax.f32 %v4157, %v4173
    %v4190 = vmax.f32 %v4158, %v4174
    %v4191 = vmax.f32 %v4159, %v4175
    %v4192 = vmax.f32 %v4160, %v4176
    %v4193 = vmax.f32 %v4161, %v4177
    %v4194 = vmax.f32 %v4162, %v4178
    %v4195 = vmax.f32 %v4163, %v4179
    %v4196 = vmax.f32 %v4164, %v4180
    %v4197 = vmax.f32 %v4165, %v4181
    %v4198 = vmax.f32 %v4166, %v4182
    %v4199 = vmax.f32 %v4167, %v4183
    %v4200 = vmax.f32 %v4168, %v4184
    %v4201 = vmax.f32 %v4169, %v4185
    %v4202 = vmax.f32 %v4170, %v4186
    %v4203 = vmax.f32 %v4171, %v4187
    %v4204 = vmax.f32 %v4172, %v4188
    %s4205 = sld [smem:[#allocation4 + $0x1]]
    %v4206 = vstv %s4205
    %v4207 = vmul.f32 %v4206, %v4189
    %v4208 = vmul.f32 %v4206, %v4190
    %v4209 = vmul.f32 %v4206, %v4191
    %v4210 = vmul.f32 %v4206, %v4192
    %v4211 = vmul.f32 %v4206, %v4193
    %v4212 = vmul.f32 %v4206, %v4194
    %v4213 = vmul.f32 %v4206, %v4195
    %v4214 = vmul.f32 %v4206, %v4196
    %v4215 = vmul.f32 %v4206, %v4197
    %v4216 = vmul.f32 %v4206, %v4198
    %v4217 = vmul.f32 %v4206, %v4199
    %v4218 = vmul.f32 %v4206, %v4200
    %v4219 = vmul.f32 %v4206, %v4201
    %v4220 = vmul.f32 %v4206, %v4202
    %v4221 = vmul.f32 %v4206, %v4203
    %v4222 = vmul.f32 %v4206, %v4204
    %v4223 = vadd.f32 %v4073, %v4207
    %v4224 = vadd.f32 %v4074, %v4208
    %v4225 = vadd.f32 %v4075, %v4209
    %v4226 = vadd.f32 %v4076, %v4210
    %v4227 = vadd.f32 %v4077, %v4211
    %v4228 = vadd.f32 %v4078, %v4212
    %v4229 = vadd.f32 %v4079, %v4213
    %v4230 = vadd.f32 %v4080, %v4214
    %v4231 = vadd.f32 %v4081, %v4215
    %v4232 = vadd.f32 %v4082, %v4216
    %v4233 = vadd.f32 %v4083, %v4217
    %v4234 = vadd.f32 %v4084, %v4218
    %v4235 = vadd.f32 %v4085, %v4219
    %v4236 = vadd.f32 %v4086, %v4220
    %v4237 = vadd.f32 %v4087, %v4221
    %v4238 = vadd.f32 %v4088, %v4222
    %4239 = vset.pattern.permute.xlu0 2
    %4240 = vperm.xlu0 %4239, %v3733
    %v4241 = vpop.permute.xlu0 %4240
    %4243 = vset.pattern.permute.xlu0 2
    %4244 = vperm.xlu0 %4243, %v3738
    %v4245 = vpop.permute.xlu0 %4244
    %4247 = vset.pattern.permute.xlu0 2
    %4248 = vperm.xlu0 %4247, %v3743
    %v4249 = vpop.permute.xlu0 %4248
    %4251 = vset.pattern.permute.xlu0 2
    %4252 = vperm.xlu0 %4251, %v3748
    %v4253 = vpop.permute.xlu0 %4252
    %4255 = vset.pattern.permute.xlu0 2
    %4256 = vperm.xlu0 %4255, %v3753
    %v4257 = vpop.permute.xlu0 %4256
    %4259 = vset.pattern.permute.xlu0 2
    %4260 = vperm.xlu0 %4259, %v3758
    %v4261 = vpop.permute.xlu0 %4260
    %4263 = vset.pattern.permute.xlu0 2
    %4264 = vperm.xlu0 %4263, %v3763
    %v4265 = vpop.permute.xlu0 %4264
    %4267 = vset.pattern.permute.xlu0 2
    %4268 = vperm.xlu0 %4267, %v3768
    %v4269 = vpop.permute.xlu0 %4268
    %4271 = vset.pattern.permute.xlu0 2
    %4272 = vperm.xlu0 %4271, %v3773
    %v4273 = vpop.permute.xlu0 %4272
    %4275 = vset.pattern.permute.xlu0 2
    %4276 = vperm.xlu0 %4275, %v3778
    %v4277 = vpop.permute.xlu0 %4276
    %4279 = vset.pattern.permute.xlu0 2
    %4280 = vperm.xlu0 %4279, %v3783
    %v4281 = vpop.permute.xlu0 %4280
    %4283 = vset.pattern.permute.xlu0 2
    %4284 = vperm.xlu0 %4283, %v3788
    %v4285 = vpop.permute.xlu0 %4284
    %4287 = vset.pattern.permute.xlu0 2
    %4288 = vperm.xlu0 %4287, %v3793
    %v4289 = vpop.permute.xlu0 %4288
    %4291 = vset.pattern.permute.xlu0 2
    %4292 = vperm.xlu0 %4291, %v3798
    %v4293 = vpop.permute.xlu0 %4292
    %4295 = vset.pattern.permute.xlu0 2
    %4296 = vperm.xlu0 %4295, %v3803
    %v4297 = vpop.permute.xlu0 %4296
    %4299 = vset.pattern.permute.xlu0 2
    %4300 = vperm.xlu0 %4299, %v3808
    %v4301 = vpop.permute.xlu0 %4300
    %v4303 = vlaneseq
    %v4304 = vshrl.u32 %v4303, 7
    %v4305 = vsub.s32 2, %v4304
    %v4306 = vrot.slane %v3899, %v4305
    %v4307 = vadd.f32 %v4241, %v4306
    %v4308 = vadd.f32 %v4245, %v4306
    %v4309 = vadd.f32 %v4249, %v4306
    %v4310 = vadd.f32 %v4253, %v4306
    %v4311 = vadd.f32 %v4257, %v4306
    %v4312 = vadd.f32 %v4261, %v4306
    %v4313 = vadd.f32 %v4265, %v4306
    %v4314 = vadd.f32 %v4269, %v4306
    %v4315 = vadd.f32 %v4273, %v4306
    %v4316 = vadd.f32 %v4277, %v4306
    %v4317 = vadd.f32 %v4281, %v4306
    %v4318 = vadd.f32 %v4285, %v4306
    %v4319 = vadd.f32 %v4289, %v4306
    %v4320 = vadd.f32 %v4293, %v4306
    %v4321 = vadd.f32 %v4297, %v4306
    %v4322 = vadd.f32 %v4301, %v4306
    %v4323 = vmul.f32 %v4307, 0.2
    %v4324 = vmul.f32 %v4308, 0.2
    %v4325 = vmul.f32 %v4309, 0.2
    %v4326 = vmul.f32 %v4310, 0.2
    %v4327 = vmul.f32 %v4311, 0.2
    %v4328 = vmul.f32 %v4312, 0.2
    %v4329 = vmul.f32 %v4313, 0.2
    %v4330 = vmul.f32 %v4314, 0.2
    %v4331 = vmul.f32 %v4315, 0.2
    %v4332 = vmul.f32 %v4316, 0.2
    %v4333 = vmul.f32 %v4317, 0.2
    %v4334 = vmul.f32 %v4318, 0.2
    %v4335 = vmul.f32 %v4319, 0.2
    %v4336 = vmul.f32 %v4320, 0.2
    %v4337 = vmul.f32 %v4321, 0.2
    %v4338 = vmul.f32 %v4322, 0.2
    %v4339 = vmax.f32 %v4307, %v4323
    %v4340 = vmax.f32 %v4308, %v4324
    %v4341 = vmax.f32 %v4309, %v4325
    %v4342 = vmax.f32 %v4310, %v4326
    %v4343 = vmax.f32 %v4311, %v4327
    %v4344 = vmax.f32 %v4312, %v4328
    %v4345 = vmax.f32 %v4313, %v4329
    %v4346 = vmax.f32 %v4314, %v4330
    %v4347 = vmax.f32 %v4315, %v4331
    %v4348 = vmax.f32 %v4316, %v4332
    %v4349 = vmax.f32 %v4317, %v4333
    %v4350 = vmax.f32 %v4318, %v4334
    %v4351 = vmax.f32 %v4319, %v4335
    %v4352 = vmax.f32 %v4320, %v4336
    %v4353 = vmax.f32 %v4321, %v4337
    %v4354 = vmax.f32 %v4322, %v4338
    %s4355 = sld [smem:[#allocation4 + $0x2]]
    %v4356 = vstv %s4355
    %v4357 = vmul.f32 %v4356, %v4339
    %v4358 = vmul.f32 %v4356, %v4340
    %v4359 = vmul.f32 %v4356, %v4341
    %v4360 = vmul.f32 %v4356, %v4342
    %v4361 = vmul.f32 %v4356, %v4343
    %v4362 = vmul.f32 %v4356, %v4344
    %v4363 = vmul.f32 %v4356, %v4345
    %v4364 = vmul.f32 %v4356, %v4346
    %v4365 = vmul.f32 %v4356, %v4347
    %v4366 = vmul.f32 %v4356, %v4348
    %v4367 = vmul.f32 %v4356, %v4349
    %v4368 = vmul.f32 %v4356, %v4350
    %v4369 = vmul.f32 %v4356, %v4351
    %v4370 = vmul.f32 %v4356, %v4352
    %v4371 = vmul.f32 %v4356, %v4353
    %v4372 = vmul.f32 %v4356, %v4354
    %v4373 = vadd.f32 %v4223, %v4357
    %v4374 = vadd.f32 %v4224, %v4358
    %v4375 = vadd.f32 %v4225, %v4359
    %v4376 = vadd.f32 %v4226, %v4360
    %v4377 = vadd.f32 %v4227, %v4361
    %v4378 = vadd.f32 %v4228, %v4362
    %v4379 = vadd.f32 %v4229, %v4363
    %v4380 = vadd.f32 %v4230, %v4364
    %v4381 = vadd.f32 %v4231, %v4365
    %v4382 = vadd.f32 %v4232, %v4366
    %v4383 = vadd.f32 %v4233, %v4367
    %v4384 = vadd.f32 %v4234, %v4368
    %v4385 = vadd.f32 %v4235, %v4369
    %v4386 = vadd.f32 %v4236, %v4370
    %v4387 = vadd.f32 %v4237, %v4371
    %v4388 = vadd.f32 %v4238, %v4372
    %4389 = vset.pattern.permute.xlu0 3
    %4390 = vperm.xlu0 %4389, %v3733
    %v4391 = vpop.permute.xlu0 %4390
    %4393 = vset.pattern.permute.xlu0 3
    %4394 = vperm.xlu0 %4393, %v3738
    %v4395 = vpop.permute.xlu0 %4394
    %4397 = vset.pattern.permute.xlu0 3
    %4398 = vperm.xlu0 %4397, %v3743
    %v4399 = vpop.permute.xlu0 %4398
    %4401 = vset.pattern.permute.xlu0 3
    %4402 = vperm.xlu0 %4401, %v3748
    %v4403 = vpop.permute.xlu0 %4402
    %4405 = vset.pattern.permute.xlu0 3
    %4406 = vperm.xlu0 %4405, %v3753
    %v4407 = vpop.permute.xlu0 %4406
    %4409 = vset.pattern.permute.xlu0 3
    %4410 = vperm.xlu0 %4409, %v3758
    %v4411 = vpop.permute.xlu0 %4410
    %4413 = vset.pattern.permute.xlu0 3
    %4414 = vperm.xlu0 %4413, %v3763
    %v4415 = vpop.permute.xlu0 %4414
    %4417 = vset.pattern.permute.xlu0 3
    %4418 = vperm.xlu0 %4417, %v3768
    %v4419 = vpop.permute.xlu0 %4418
    %4421 = vset.pattern.permute.xlu0 3
    %4422 = vperm.xlu0 %4421, %v3773
    %v4423 = vpop.permute.xlu0 %4422
    %4425 = vset.pattern.permute.xlu0 3
    %4426 = vperm.xlu0 %4425, %v3778
    %v4427 = vpop.permute.xlu0 %4426
    %4429 = vset.pattern.permute.xlu0 3
    %4430 = vperm.xlu0 %4429, %v3783
    %v4431 = vpop.permute.xlu0 %4430
    %4433 = vset.pattern.permute.xlu0 3
    %4434 = vperm.xlu0 %4433, %v3788
    %v4435 = vpop.permute.xlu0 %4434
    %4437 = vset.pattern.permute.xlu0 3
    %4438 = vperm.xlu0 %4437, %v3793
    %v4439 = vpop.permute.xlu0 %4438
    %4441 = vset.pattern.permute.xlu0 3
    %4442 = vperm.xlu0 %4441, %v3798
    %v4443 = vpop.permute.xlu0 %4442
    %4445 = vset.pattern.permute.xlu0 3
    %4446 = vperm.xlu0 %4445, %v3803
    %v4447 = vpop.permute.xlu0 %4446
    %4449 = vset.pattern.permute.xlu0 3
    %4450 = vperm.xlu0 %4449, %v3808
    %v4451 = vpop.permute.xlu0 %4450
    %v4453 = vlaneseq
    %v4454 = vshrl.u32 %v4453, 7
    %v4455 = vsub.s32 3, %v4454
    %v4456 = vrot.slane %v3899, %v4455
    %v4457 = vadd.f32 %v4391, %v4456
    %v4458 = vadd.f32 %v4395, %v4456
    %v4459 = vadd.f32 %v4399, %v4456
    %v4460 = vadd.f32 %v4403, %v4456
    %v4461 = vadd.f32 %v4407, %v4456
    %v4462 = vadd.f32 %v4411, %v4456
    %v4463 = vadd.f32 %v4415, %v4456
    %v4464 = vadd.f32 %v4419, %v4456
    %v4465 = vadd.f32 %v4423, %v4456
    %v4466 = vadd.f32 %v4427, %v4456
    %v4467 = vadd.f32 %v4431, %v4456
    %v4468 = vadd.f32 %v4435, %v4456
    %v4469 = vadd.f32 %v4439, %v4456
    %v4470 = vadd.f32 %v4443, %v4456
    %v4471 = vadd.f32 %v4447, %v4456
    %v4472 = vadd.f32 %v4451, %v4456
    %v4473 = vmul.f32 %v4457, 0.2
    %v4474 = vmul.f32 %v4458, 0.2
    %v4475 = vmul.f32 %v4459, 0.2
    %v4476 = vmul.f32 %v4460, 0.2
    %v4477 = vmul.f32 %v4461, 0.2
    %v4478 = vmul.f32 %v4462, 0.2
    %v4479 = vmul.f32 %v4463, 0.2
    %v4480 = vmul.f32 %v4464, 0.2
    %v4481 = vmul.f32 %v4465, 0.2
    %v4482 = vmul.f32 %v4466, 0.2
    %v4483 = vmul.f32 %v4467, 0.2
    %v4484 = vmul.f32 %v4468, 0.2
    %v4485 = vmul.f32 %v4469, 0.2
    %v4486 = vmul.f32 %v4470, 0.2
    %v4487 = vmul.f32 %v4471, 0.2
    %v4488 = vmul.f32 %v4472, 0.2
    %v4489 = vmax.f32 %v4457, %v4473
    %v4490 = vmax.f32 %v4458, %v4474
    %v4491 = vmax.f32 %v4459, %v4475
    %v4492 = vmax.f32 %v4460, %v4476
    %v4493 = vmax.f32 %v4461, %v4477
    %v4494 = vmax.f32 %v4462, %v4478
    %v4495 = vmax.f32 %v4463, %v4479
    %v4496 = vmax.f32 %v4464, %v4480
    %v4497 = vmax.f32 %v4465, %v4481
    %v4498 = vmax.f32 %v4466, %v4482
    %v4499 = vmax.f32 %v4467, %v4483
    %v4500 = vmax.f32 %v4468, %v4484
    %v4501 = vmax.f32 %v4469, %v4485
    %v4502 = vmax.f32 %v4470, %v4486
    %v4503 = vmax.f32 %v4471, %v4487
    %v4504 = vmax.f32 %v4472, %v4488
    %s4505 = sld [smem:[#allocation4 + $0x3]]
    %v4506 = vstv %s4505
    %v4507 = vmul.f32 %v4506, %v4489
    %v4508 = vmul.f32 %v4506, %v4490
    %v4509 = vmul.f32 %v4506, %v4491
    %v4510 = vmul.f32 %v4506, %v4492
    %v4511 = vmul.f32 %v4506, %v4493
    %v4512 = vmul.f32 %v4506, %v4494
    %v4513 = vmul.f32 %v4506, %v4495
    %v4514 = vmul.f32 %v4506, %v4496
    %v4515 = vmul.f32 %v4506, %v4497
    %v4516 = vmul.f32 %v4506, %v4498
    %v4517 = vmul.f32 %v4506, %v4499
    %v4518 = vmul.f32 %v4506, %v4500
    %v4519 = vmul.f32 %v4506, %v4501
    %v4520 = vmul.f32 %v4506, %v4502
    %v4521 = vmul.f32 %v4506, %v4503
    %v4522 = vmul.f32 %v4506, %v4504
    %v4523 = vadd.f32 %v4373, %v4507
    %v4524 = vadd.f32 %v4374, %v4508
    %v4525 = vadd.f32 %v4375, %v4509
    %v4526 = vadd.f32 %v4376, %v4510
    %v4527 = vadd.f32 %v4377, %v4511
    %v4528 = vadd.f32 %v4378, %v4512
    %v4529 = vadd.f32 %v4379, %v4513
    %v4530 = vadd.f32 %v4380, %v4514
    %v4531 = vadd.f32 %v4381, %v4515
    %v4532 = vadd.f32 %v4382, %v4516
    %v4533 = vadd.f32 %v4383, %v4517
    %v4534 = vadd.f32 %v4384, %v4518
    %v4535 = vadd.f32 %v4385, %v4519
    %v4536 = vadd.f32 %v4386, %v4520
    %v4537 = vadd.f32 %v4387, %v4521
    %v4538 = vadd.f32 %v4388, %v4522
    %4539 = vset.pattern.permute.xlu0 4
    %4540 = vperm.xlu0 %4539, %v3733
    %v4541 = vpop.permute.xlu0 %4540
    %4543 = vset.pattern.permute.xlu0 4
    %4544 = vperm.xlu0 %4543, %v3738
    %v4545 = vpop.permute.xlu0 %4544
    %4547 = vset.pattern.permute.xlu0 4
    %4548 = vperm.xlu0 %4547, %v3743
    %v4549 = vpop.permute.xlu0 %4548
    %4551 = vset.pattern.permute.xlu0 4
    %4552 = vperm.xlu0 %4551, %v3748
    %v4553 = vpop.permute.xlu0 %4552
    %4555 = vset.pattern.permute.xlu0 4
    %4556 = vperm.xlu0 %4555, %v3753
    %v4557 = vpop.permute.xlu0 %4556
    %4559 = vset.pattern.permute.xlu0 4
    %4560 = vperm.xlu0 %4559, %v3758
    %v4561 = vpop.permute.xlu0 %4560
    %4563 = vset.pattern.permute.xlu0 4
    %4564 = vperm.xlu0 %4563, %v3763
    %v4565 = vpop.permute.xlu0 %4564
    %4567 = vset.pattern.permute.xlu0 4
    %4568 = vperm.xlu0 %4567, %v3768
    %v4569 = vpop.permute.xlu0 %4568
    %4571 = vset.pattern.permute.xlu0 4
    %4572 = vperm.xlu0 %4571, %v3773
    %v4573 = vpop.permute.xlu0 %4572
    %4575 = vset.pattern.permute.xlu0 4
    %4576 = vperm.xlu0 %4575, %v3778
    %v4577 = vpop.permute.xlu0 %4576
    %4579 = vset.pattern.permute.xlu0 4
    %4580 = vperm.xlu0 %4579, %v3783
    %v4581 = vpop.permute.xlu0 %4580
    %4583 = vset.pattern.permute.xlu0 4
    %4584 = vperm.xlu0 %4583, %v3788
    %v4585 = vpop.permute.xlu0 %4584
    %4587 = vset.pattern.permute.xlu0 4
    %4588 = vperm.xlu0 %4587, %v3793
    %v4589 = vpop.permute.xlu0 %4588
    %4591 = vset.pattern.permute.xlu0 4
    %4592 = vperm.xlu0 %4591, %v3798
    %v4593 = vpop.permute.xlu0 %4592
    %4595 = vset.pattern.permute.xlu0 4
    %4596 = vperm.xlu0 %4595, %v3803
    %v4597 = vpop.permute.xlu0 %4596
    %4599 = vset.pattern.permute.xlu0 4
    %4600 = vperm.xlu0 %4599, %v3808
    %v4601 = vpop.permute.xlu0 %4600
    %v4603 = vlaneseq
    %v4604 = vshrl.u32 %v4603, 7
    %v4605 = vsub.s32 4, %v4604
    %v4606 = vrot.slane %v3899, %v4605
    %v4607 = vadd.f32 %v4541, %v4606
    %v4608 = vadd.f32 %v4545, %v4606
    %v4609 = vadd.f32 %v4549, %v4606
    %v4610 = vadd.f32 %v4553, %v4606
    %v4611 = vadd.f32 %v4557, %v4606
    %v4612 = vadd.f32 %v4561, %v4606
    %v4613 = vadd.f32 %v4565, %v4606
    %v4614 = vadd.f32 %v4569, %v4606
    %v4615 = vadd.f32 %v4573, %v4606
    %v4616 = vadd.f32 %v4577, %v4606
    %v4617 = vadd.f32 %v4581, %v4606
    %v4618 = vadd.f32 %v4585, %v4606
    %v4619 = vadd.f32 %v4589, %v4606
    %v4620 = vadd.f32 %v4593, %v4606
    %v4621 = vadd.f32 %v4597, %v4606
    %v4622 = vadd.f32 %v4601, %v4606
    %v4623 = vmul.f32 %v4607, 0.2
    %v4624 = vmul.f32 %v4608, 0.2
    %v4625 = vmul.f32 %v4609, 0.2
    %v4626 = vmul.f32 %v4610, 0.2
    %v4627 = vmul.f32 %v4611, 0.2
    %v4628 = vmul.f32 %v4612, 0.2
    %v4629 = vmul.f32 %v4613, 0.2
    %v4630 = vmul.f32 %v4614, 0.2
    %v4631 = vmul.f32 %v4615, 0.2
    %v4632 = vmul.f32 %v4616, 0.2
    %v4633 = vmul.f32 %v4617, 0.2
    %v4634 = vmul.f32 %v4618, 0.2
    %v4635 = vmul.f32 %v4619, 0.2
    %v4636 = vmul.f32 %v4620, 0.2
    %v4637 = vmul.f32 %v4621, 0.2
    %v4638 = vmul.f32 %v4622, 0.2
    %v4639 = vmax.f32 %v4607, %v4623
    %v4640 = vmax.f32 %v4608, %v4624
    %v4641 = vmax.f32 %v4609, %v4625
    %v4642 = vmax.f32 %v4610, %v4626
    %v4643 = vmax.f32 %v4611, %v4627
    %v4644 = vmax.f32 %v4612, %v4628
    %v4645 = vmax.f32 %v4613, %v4629
    %v4646 = vmax.f32 %v4614, %v4630
    %v4647 = vmax.f32 %v4615, %v4631
    %v4648 = vmax.f32 %v4616, %v4632
    %v4649 = vmax.f32 %v4617, %v4633
    %v4650 = vmax.f32 %v4618, %v4634
    %v4651 = vmax.f32 %v4619, %v4635
    %v4652 = vmax.f32 %v4620, %v4636
    %v4653 = vmax.f32 %v4621, %v4637
    %v4654 = vmax.f32 %v4622, %v4638
    %s4655 = sld [smem:[#allocation4 + $0x4]]
    %v4656 = vstv %s4655
    %v4657 = vmul.f32 %v4656, %v4639
    %v4658 = vmul.f32 %v4656, %v4640
    %v4659 = vmul.f32 %v4656, %v4641
    %v4660 = vmul.f32 %v4656, %v4642
    %v4661 = vmul.f32 %v4656, %v4643
    %v4662 = vmul.f32 %v4656, %v4644
    %v4663 = vmul.f32 %v4656, %v4645
    %v4664 = vmul.f32 %v4656, %v4646
    %v4665 = vmul.f32 %v4656, %v4647
    %v4666 = vmul.f32 %v4656, %v4648
    %v4667 = vmul.f32 %v4656, %v4649
    %v4668 = vmul.f32 %v4656, %v4650
    %v4669 = vmul.f32 %v4656, %v4651
    %v4670 = vmul.f32 %v4656, %v4652
    %v4671 = vmul.f32 %v4656, %v4653
    %v4672 = vmul.f32 %v4656, %v4654
    %v4673 = vadd.f32 %v4523, %v4657
    %v4674 = vadd.f32 %v4524, %v4658
    %v4675 = vadd.f32 %v4525, %v4659
    %v4676 = vadd.f32 %v4526, %v4660
    %v4677 = vadd.f32 %v4527, %v4661
    %v4678 = vadd.f32 %v4528, %v4662
    %v4679 = vadd.f32 %v4529, %v4663
    %v4680 = vadd.f32 %v4530, %v4664
    %v4681 = vadd.f32 %v4531, %v4665
    %v4682 = vadd.f32 %v4532, %v4666
    %v4683 = vadd.f32 %v4533, %v4667
    %v4684 = vadd.f32 %v4534, %v4668
    %v4685 = vadd.f32 %v4535, %v4669
    %v4686 = vadd.f32 %v4536, %v4670
    %v4687 = vadd.f32 %v4537, %v4671
    %v4688 = vadd.f32 %v4538, %v4672
    %4689 = vset.pattern.permute.xlu0 5
    %4690 = vperm.xlu0 %4689, %v3733
    %v4691 = vpop.permute.xlu0 %4690
    %4693 = vset.pattern.permute.xlu0 5
    %4694 = vperm.xlu0 %4693, %v3738
    %v4695 = vpop.permute.xlu0 %4694
    %4697 = vset.pattern.permute.xlu0 5
    %4698 = vperm.xlu0 %4697, %v3743
    %v4699 = vpop.permute.xlu0 %4698
    %4701 = vset.pattern.permute.xlu0 5
    %4702 = vperm.xlu0 %4701, %v3748
    %v4703 = vpop.permute.xlu0 %4702
    %4705 = vset.pattern.permute.xlu0 5
    %4706 = vperm.xlu0 %4705, %v3753
    %v4707 = vpop.permute.xlu0 %4706
    %4709 = vset.pattern.permute.xlu0 5
    %4710 = vperm.xlu0 %4709, %v3758
    %v4711 = vpop.permute.xlu0 %4710
    %4713 = vset.pattern.permute.xlu0 5
    %4714 = vperm.xlu0 %4713, %v3763
    %v4715 = vpop.permute.xlu0 %4714
    %4717 = vset.pattern.permute.xlu0 5
    %4718 = vperm.xlu0 %4717, %v3768
    %v4719 = vpop.permute.xlu0 %4718
    %4721 = vset.pattern.permute.xlu0 5
    %4722 = vperm.xlu0 %4721, %v3773
    %v4723 = vpop.permute.xlu0 %4722
    %4725 = vset.pattern.permute.xlu0 5
    %4726 = vperm.xlu0 %4725, %v3778
    %v4727 = vpop.permute.xlu0 %4726
    %4729 = vset.pattern.permute.xlu0 5
    %4730 = vperm.xlu0 %4729, %v3783
    %v4731 = vpop.permute.xlu0 %4730
    %4733 = vset.pattern.permute.xlu0 5
    %4734 = vperm.xlu0 %4733, %v3788
    %v4735 = vpop.permute.xlu0 %4734
    %4737 = vset.pattern.permute.xlu0 5
    %4738 = vperm.xlu0 %4737, %v3793
    %v4739 = vpop.permute.xlu0 %4738
    %4741 = vset.pattern.permute.xlu0 5
    %4742 = vperm.xlu0 %4741, %v3798
    %v4743 = vpop.permute.xlu0 %4742
    %4745 = vset.pattern.permute.xlu0 5
    %4746 = vperm.xlu0 %4745, %v3803
    %v4747 = vpop.permute.xlu0 %4746
    %4749 = vset.pattern.permute.xlu0 5
    %4750 = vperm.xlu0 %4749, %v3808
    %v4751 = vpop.permute.xlu0 %4750
    %v4753 = vlaneseq
    %v4754 = vshrl.u32 %v4753, 7
    %v4755 = vsub.s32 5, %v4754
    %v4756 = vrot.slane %v3899, %v4755
    %v4757 = vadd.f32 %v4691, %v4756
    %v4758 = vadd.f32 %v4695, %v4756
    %v4759 = vadd.f32 %v4699, %v4756
    %v4760 = vadd.f32 %v4703, %v4756
    %v4761 = vadd.f32 %v4707, %v4756
    %v4762 = vadd.f32 %v4711, %v4756
    %v4763 = vadd.f32 %v4715, %v4756
    %v4764 = vadd.f32 %v4719, %v4756
    %v4765 = vadd.f32 %v4723, %v4756
    %v4766 = vadd.f32 %v4727, %v4756
    %v4767 = vadd.f32 %v4731, %v4756
    %v4768 = vadd.f32 %v4735, %v4756
    %v4769 = vadd.f32 %v4739, %v4756
    %v4770 = vadd.f32 %v4743, %v4756
    %v4771 = vadd.f32 %v4747, %v4756
    %v4772 = vadd.f32 %v4751, %v4756
    %v4773 = vmul.f32 %v4757, 0.2
    %v4774 = vmul.f32 %v4758, 0.2
    %v4775 = vmul.f32 %v4759, 0.2
    %v4776 = vmul.f32 %v4760, 0.2
    %v4777 = vmul.f32 %v4761, 0.2
    %v4778 = vmul.f32 %v4762, 0.2
    %v4779 = vmul.f32 %v4763, 0.2
    %v4780 = vmul.f32 %v4764, 0.2
    %v4781 = vmul.f32 %v4765, 0.2
    %v4782 = vmul.f32 %v4766, 0.2
    %v4783 = vmul.f32 %v4767, 0.2
    %v4784 = vmul.f32 %v4768, 0.2
    %v4785 = vmul.f32 %v4769, 0.2
    %v4786 = vmul.f32 %v4770, 0.2
    %v4787 = vmul.f32 %v4771, 0.2
    %v4788 = vmul.f32 %v4772, 0.2
    %v4789 = vmax.f32 %v4757, %v4773
    %v4790 = vmax.f32 %v4758, %v4774
    %v4791 = vmax.f32 %v4759, %v4775
    %v4792 = vmax.f32 %v4760, %v4776
    %v4793 = vmax.f32 %v4761, %v4777
    %v4794 = vmax.f32 %v4762, %v4778
    %v4795 = vmax.f32 %v4763, %v4779
    %v4796 = vmax.f32 %v4764, %v4780
    %v4797 = vmax.f32 %v4765, %v4781
    %v4798 = vmax.f32 %v4766, %v4782
    %v4799 = vmax.f32 %v4767, %v4783
    %v4800 = vmax.f32 %v4768, %v4784
    %v4801 = vmax.f32 %v4769, %v4785
    %v4802 = vmax.f32 %v4770, %v4786
    %v4803 = vmax.f32 %v4771, %v4787
    %v4804 = vmax.f32 %v4772, %v4788
    %s4805 = sld [smem:[#allocation4 + $0x5]]
    %v4806 = vstv %s4805
    %v4807 = vmul.f32 %v4806, %v4789
    %v4808 = vmul.f32 %v4806, %v4790
    %v4809 = vmul.f32 %v4806, %v4791
    %v4810 = vmul.f32 %v4806, %v4792
    %v4811 = vmul.f32 %v4806, %v4793
    %v4812 = vmul.f32 %v4806, %v4794
    %v4813 = vmul.f32 %v4806, %v4795
    %v4814 = vmul.f32 %v4806, %v4796
    %v4815 = vmul.f32 %v4806, %v4797
    %v4816 = vmul.f32 %v4806, %v4798
    %v4817 = vmul.f32 %v4806, %v4799
    %v4818 = vmul.f32 %v4806, %v4800
    %v4819 = vmul.f32 %v4806, %v4801
    %v4820 = vmul.f32 %v4806, %v4802
    %v4821 = vmul.f32 %v4806, %v4803
    %v4822 = vmul.f32 %v4806, %v4804
    %v4823 = vadd.f32 %v4673, %v4807
    %v4824 = vadd.f32 %v4674, %v4808
    %v4825 = vadd.f32 %v4675, %v4809
    %v4826 = vadd.f32 %v4676, %v4810
    %v4827 = vadd.f32 %v4677, %v4811
    %v4828 = vadd.f32 %v4678, %v4812
    %v4829 = vadd.f32 %v4679, %v4813
    %v4830 = vadd.f32 %v4680, %v4814
    %v4831 = vadd.f32 %v4681, %v4815
    %v4832 = vadd.f32 %v4682, %v4816
    %v4833 = vadd.f32 %v4683, %v4817
    %v4834 = vadd.f32 %v4684, %v4818
    %v4835 = vadd.f32 %v4685, %v4819
    %v4836 = vadd.f32 %v4686, %v4820
    %v4837 = vadd.f32 %v4687, %v4821
    %v4838 = vadd.f32 %v4688, %v4822
    %4839 = vset.pattern.permute.xlu0 6
    %4840 = vperm.xlu0 %4839, %v3733
    %v4841 = vpop.permute.xlu0 %4840
    %4843 = vset.pattern.permute.xlu0 6
    %4844 = vperm.xlu0 %4843, %v3738
    %v4845 = vpop.permute.xlu0 %4844
    %4847 = vset.pattern.permute.xlu0 6
    %4848 = vperm.xlu0 %4847, %v3743
    %v4849 = vpop.permute.xlu0 %4848
    %4851 = vset.pattern.permute.xlu0 6
    %4852 = vperm.xlu0 %4851, %v3748
    %v4853 = vpop.permute.xlu0 %4852
    %4855 = vset.pattern.permute.xlu0 6
    %4856 = vperm.xlu0 %4855, %v3753
    %v4857 = vpop.permute.xlu0 %4856
    %4859 = vset.pattern.permute.xlu0 6
    %4860 = vperm.xlu0 %4859, %v3758
    %v4861 = vpop.permute.xlu0 %4860
    %4863 = vset.pattern.permute.xlu0 6
    %4864 = vperm.xlu0 %4863, %v3763
    %v4865 = vpop.permute.xlu0 %4864
    %4867 = vset.pattern.permute.xlu0 6
    %4868 = vperm.xlu0 %4867, %v3768
    %v4869 = vpop.permute.xlu0 %4868
    %4871 = vset.pattern.permute.xlu0 6
    %4872 = vperm.xlu0 %4871, %v3773
    %v4873 = vpop.permute.xlu0 %4872
    %4875 = vset.pattern.permute.xlu0 6
    %4876 = vperm.xlu0 %4875, %v3778
    %v4877 = vpop.permute.xlu0 %4876
    %4879 = vset.pattern.permute.xlu0 6
    %4880 = vperm.xlu0 %4879, %v3783
    %v4881 = vpop.permute.xlu0 %4880
    %4883 = vset.pattern.permute.xlu0 6
    %4884 = vperm.xlu0 %4883, %v3788
    %v4885 = vpop.permute.xlu0 %4884
    %4887 = vset.pattern.permute.xlu0 6
    %4888 = vperm.xlu0 %4887, %v3793
    %v4889 = vpop.permute.xlu0 %4888
    %4891 = vset.pattern.permute.xlu0 6
    %4892 = vperm.xlu0 %4891, %v3798
    %v4893 = vpop.permute.xlu0 %4892
    %4895 = vset.pattern.permute.xlu0 6
    %4896 = vperm.xlu0 %4895, %v3803
    %v4897 = vpop.permute.xlu0 %4896
    %4899 = vset.pattern.permute.xlu0 6
    %4900 = vperm.xlu0 %4899, %v3808
    %v4901 = vpop.permute.xlu0 %4900
    %v4903 = vlaneseq
    %v4904 = vshrl.u32 %v4903, 7
    %v4905 = vsub.s32 6, %v4904
    %v4906 = vrot.slane %v3899, %v4905
    %v4907 = vadd.f32 %v4841, %v4906
    %v4908 = vadd.f32 %v4845, %v4906
    %v4909 = vadd.f32 %v4849, %v4906
    %v4910 = vadd.f32 %v4853, %v4906
    %v4911 = vadd.f32 %v4857, %v4906
    %v4912 = vadd.f32 %v4861, %v4906
    %v4913 = vadd.f32 %v4865, %v4906
    %v4914 = vadd.f32 %v4869, %v4906
    %v4915 = vadd.f32 %v4873, %v4906
    %v4916 = vadd.f32 %v4877, %v4906
    %v4917 = vadd.f32 %v4881, %v4906
    %v4918 = vadd.f32 %v4885, %v4906
    %v4919 = vadd.f32 %v4889, %v4906
    %v4920 = vadd.f32 %v4893, %v4906
    %v4921 = vadd.f32 %v4897, %v4906
    %v4922 = vadd.f32 %v4901, %v4906
    %v4923 = vmul.f32 %v4907, 0.2
    %v4924 = vmul.f32 %v4908, 0.2
    %v4925 = vmul.f32 %v4909, 0.2
    %v4926 = vmul.f32 %v4910, 0.2
    %v4927 = vmul.f32 %v4911, 0.2
    %v4928 = vmul.f32 %v4912, 0.2
    %v4929 = vmul.f32 %v4913, 0.2
    %v4930 = vmul.f32 %v4914, 0.2
    %v4931 = vmul.f32 %v4915, 0.2
    %v4932 = vmul.f32 %v4916, 0.2
    %v4933 = vmul.f32 %v4917, 0.2
    %v4934 = vmul.f32 %v4918, 0.2
    %v4935 = vmul.f32 %v4919, 0.2
    %v4936 = vmul.f32 %v4920, 0.2
    %v4937 = vmul.f32 %v4921, 0.2
    %v4938 = vmul.f32 %v4922, 0.2
    %v4939 = vmax.f32 %v4907, %v4923
    %v4940 = vmax.f32 %v4908, %v4924
    %v4941 = vmax.f32 %v4909, %v4925
    %v4942 = vmax.f32 %v4910, %v4926
    %v4943 = vmax.f32 %v4911, %v4927
    %v4944 = vmax.f32 %v4912, %v4928
    %v4945 = vmax.f32 %v4913, %v4929
    %v4946 = vmax.f32 %v4914, %v4930
    %v4947 = vmax.f32 %v4915, %v4931
    %v4948 = vmax.f32 %v4916, %v4932
    %v4949 = vmax.f32 %v4917, %v4933
    %v4950 = vmax.f32 %v4918, %v4934
    %v4951 = vmax.f32 %v4919, %v4935
    %v4952 = vmax.f32 %v4920, %v4936
    %v4953 = vmax.f32 %v4921, %v4937
    %v4954 = vmax.f32 %v4922, %v4938
    %s4955 = sld [smem:[#allocation4 + $0x6]]
    %v4956 = vstv %s4955
    %v4957 = vmul.f32 %v4956, %v4939
    %v4958 = vmul.f32 %v4956, %v4940
    %v4959 = vmul.f32 %v4956, %v4941
    %v4960 = vmul.f32 %v4956, %v4942
    %v4961 = vmul.f32 %v4956, %v4943
    %v4962 = vmul.f32 %v4956, %v4944
    %v4963 = vmul.f32 %v4956, %v4945
    %v4964 = vmul.f32 %v4956, %v4946
    %v4965 = vmul.f32 %v4956, %v4947
    %v4966 = vmul.f32 %v4956, %v4948
    %v4967 = vmul.f32 %v4956, %v4949
    %v4968 = vmul.f32 %v4956, %v4950
    %v4969 = vmul.f32 %v4956, %v4951
    %v4970 = vmul.f32 %v4956, %v4952
    %v4971 = vmul.f32 %v4956, %v4953
    %v4972 = vmul.f32 %v4956, %v4954
    %v4973 = vadd.f32 %v4823, %v4957
    %v4974 = vadd.f32 %v4824, %v4958
    %v4975 = vadd.f32 %v4825, %v4959
    %v4976 = vadd.f32 %v4826, %v4960
    %v4977 = vadd.f32 %v4827, %v4961
    %v4978 = vadd.f32 %v4828, %v4962
    %v4979 = vadd.f32 %v4829, %v4963
    %v4980 = vadd.f32 %v4830, %v4964
    %v4981 = vadd.f32 %v4831, %v4965
    %v4982 = vadd.f32 %v4832, %v4966
    %v4983 = vadd.f32 %v4833, %v4967
    %v4984 = vadd.f32 %v4834, %v4968
    %v4985 = vadd.f32 %v4835, %v4969
    %v4986 = vadd.f32 %v4836, %v4970
    %v4987 = vadd.f32 %v4837, %v4971
    %v4988 = vadd.f32 %v4838, %v4972
    %4989 = vset.pattern.permute.xlu0 7
    %4990 = vperm.xlu0 %4989, %v3733
    %v4991 = vpop.permute.xlu0 %4990
    %4993 = vset.pattern.permute.xlu0 7
    %4994 = vperm.xlu0 %4993, %v3738
    %v4995 = vpop.permute.xlu0 %4994
    %4997 = vset.pattern.permute.xlu0 7
    %4998 = vperm.xlu0 %4997, %v3743
    %v4999 = vpop.permute.xlu0 %4998
    %5001 = vset.pattern.permute.xlu0 7
    %5002 = vperm.xlu0 %5001, %v3748
    %v5003 = vpop.permute.xlu0 %5002
    %5005 = vset.pattern.permute.xlu0 7
    %5006 = vperm.xlu0 %5005, %v3753
    %v5007 = vpop.permute.xlu0 %5006
    %5009 = vset.pattern.permute.xlu0 7
    %5010 = vperm.xlu0 %5009, %v3758
    %v5011 = vpop.permute.xlu0 %5010
    %5013 = vset.pattern.permute.xlu0 7
    %5014 = vperm.xlu0 %5013, %v3763
    %v5015 = vpop.permute.xlu0 %5014
    %5017 = vset.pattern.permute.xlu0 7
    %5018 = vperm.xlu0 %5017, %v3768
    %v5019 = vpop.permute.xlu0 %5018
    %5021 = vset.pattern.permute.xlu0 7
    %5022 = vperm.xlu0 %5021, %v3773
    %v5023 = vpop.permute.xlu0 %5022
    %5025 = vset.pattern.permute.xlu0 7
    %5026 = vperm.xlu0 %5025, %v3778
    %v5027 = vpop.permute.xlu0 %5026
    %5029 = vset.pattern.permute.xlu0 7
    %5030 = vperm.xlu0 %5029, %v3783
    %v5031 = vpop.permute.xlu0 %5030
    %5033 = vset.pattern.permute.xlu0 7
    %5034 = vperm.xlu0 %5033, %v3788
    %v5035 = vpop.permute.xlu0 %5034
    %5037 = vset.pattern.permute.xlu0 7
    %5038 = vperm.xlu0 %5037, %v3793
    %v5039 = vpop.permute.xlu0 %5038
    %5041 = vset.pattern.permute.xlu0 7
    %5042 = vperm.xlu0 %5041, %v3798
    %v5043 = vpop.permute.xlu0 %5042
    %5045 = vset.pattern.permute.xlu0 7
    %5046 = vperm.xlu0 %5045, %v3803
    %v5047 = vpop.permute.xlu0 %5046
    %5049 = vset.pattern.permute.xlu0 7
    %5050 = vperm.xlu0 %5049, %v3808
    %v5051 = vpop.permute.xlu0 %5050
    %v5053 = vlaneseq
    %v5054 = vshrl.u32 %v5053, 7
    %v5055 = vsub.s32 7, %v5054
    %v5056 = vrot.slane %v3899, %v5055
    %v5057 = vadd.f32 %v4991, %v5056
    %v5058 = vadd.f32 %v4995, %v5056
    %v5059 = vadd.f32 %v4999, %v5056
    %v5060 = vadd.f32 %v5003, %v5056
    %v5061 = vadd.f32 %v5007, %v5056
    %v5062 = vadd.f32 %v5011, %v5056
    %v5063 = vadd.f32 %v5015, %v5056
    %v5064 = vadd.f32 %v5019, %v5056
    %v5065 = vadd.f32 %v5023, %v5056
    %v5066 = vadd.f32 %v5027, %v5056
    %v5067 = vadd.f32 %v5031, %v5056
    %v5068 = vadd.f32 %v5035, %v5056
    %v5069 = vadd.f32 %v5039, %v5056
    %v5070 = vadd.f32 %v5043, %v5056
    %v5071 = vadd.f32 %v5047, %v5056
    %v5072 = vadd.f32 %v5051, %v5056
    %v5073 = vmul.f32 %v5057, 0.2
    %v5074 = vmul.f32 %v5058, 0.2
    %v5075 = vmul.f32 %v5059, 0.2
    %v5076 = vmul.f32 %v5060, 0.2
    %v5077 = vmul.f32 %v5061, 0.2
    %v5078 = vmul.f32 %v5062, 0.2
    %v5079 = vmul.f32 %v5063, 0.2
    %v5080 = vmul.f32 %v5064, 0.2
    %v5081 = vmul.f32 %v5065, 0.2
    %v5082 = vmul.f32 %v5066, 0.2
    %v5083 = vmul.f32 %v5067, 0.2
    %v5084 = vmul.f32 %v5068, 0.2
    %v5085 = vmul.f32 %v5069, 0.2
    %v5086 = vmul.f32 %v5070, 0.2
    %v5087 = vmul.f32 %v5071, 0.2
    %v5088 = vmul.f32 %v5072, 0.2
    %v5089 = vmax.f32 %v5057, %v5073
    %v5090 = vmax.f32 %v5058, %v5074
    %v5091 = vmax.f32 %v5059, %v5075
    %v5092 = vmax.f32 %v5060, %v5076
    %v5093 = vmax.f32 %v5061, %v5077
    %v5094 = vmax.f32 %v5062, %v5078
    %v5095 = vmax.f32 %v5063, %v5079
    %v5096 = vmax.f32 %v5064, %v5080
    %v5097 = vmax.f32 %v5065, %v5081
    %v5098 = vmax.f32 %v5066, %v5082
    %v5099 = vmax.f32 %v5067, %v5083
    %v5100 = vmax.f32 %v5068, %v5084
    %v5101 = vmax.f32 %v5069, %v5085
    %v5102 = vmax.f32 %v5070, %v5086
    %v5103 = vmax.f32 %v5071, %v5087
    %v5104 = vmax.f32 %v5072, %v5088
    %s5105 = sld [smem:[#allocation4 + $0x7]]
    %v5106 = vstv %s5105
    %v5107 = vmul.f32 %v5106, %v5089
    %v5108 = vmul.f32 %v5106, %v5090
    %v5109 = vmul.f32 %v5106, %v5091
    %v5110 = vmul.f32 %v5106, %v5092
    %v5111 = vmul.f32 %v5106, %v5093
    %v5112 = vmul.f32 %v5106, %v5094
    %v5113 = vmul.f32 %v5106, %v5095
    %v5114 = vmul.f32 %v5106, %v5096
    %v5115 = vmul.f32 %v5106, %v5097
    %v5116 = vmul.f32 %v5106, %v5098
    %v5117 = vmul.f32 %v5106, %v5099
    %v5118 = vmul.f32 %v5106, %v5100
    %v5119 = vmul.f32 %v5106, %v5101
    %v5120 = vmul.f32 %v5106, %v5102
    %v5121 = vmul.f32 %v5106, %v5103
    %v5122 = vmul.f32 %v5106, %v5104
    %v5123 = vadd.f32 %v4973, %v5107
    %v5124 = vadd.f32 %v4974, %v5108
    %v5125 = vadd.f32 %v4975, %v5109
    %v5126 = vadd.f32 %v4976, %v5110
    %v5127 = vadd.f32 %v4977, %v5111
    %v5128 = vadd.f32 %v4978, %v5112
    %v5129 = vadd.f32 %v4979, %v5113
    %v5130 = vadd.f32 %v4980, %v5114
    %v5131 = vadd.f32 %v4981, %v5115
    %v5132 = vadd.f32 %v4982, %v5116
    %v5133 = vadd.f32 %v4983, %v5117
    %v5134 = vadd.f32 %v4984, %v5118
    %v5135 = vadd.f32 %v4985, %v5119
    %v5136 = vadd.f32 %v4986, %v5120
    %v5137 = vadd.f32 %v4987, %v5121
    %v5138 = vadd.f32 %v4988, %v5122
    %v5139 = vsel %vm3923, 65537, 0
    %v5140 = vsel %vm3924, 65537, 0
    %v5141 = vsel %vm3925, 65537, 0
    %v5142 = vsel %vm3926, 65537, 0
    %v5143 = vsel %vm3927, 65537, 0
    %v5144 = vsel %vm3928, 65537, 0
    %v5145 = vsel %vm3929, 65537, 0
    %v5146 = vsel %vm3930, 65537, 0
    %v5147 = vsel %vm3931, 65537, 0
    %v5148 = vsel %vm3932, 65537, 0
    %v5149 = vsel %vm3933, 65537, 0
    %v5150 = vsel %vm3934, 65537, 0
    %v5151 = vsel %vm3935, 65537, 0
    %v5152 = vsel %vm3936, 65537, 0
    %v5153 = vsel %vm3937, 65537, 0
    %v5154 = vsel %vm3938, 65537, 0
    %v5155 = vunpack.c.l.b16 %v5139
    %v5156 = vunpack.c.l.b16 %v5140
    %v5157 = vunpack.c.l.b16 %v5141
    %v5158 = vunpack.c.l.b16 %v5142
    %v5159 = vunpack.c.l.b16 %v5143
    %v5160 = vunpack.c.l.b16 %v5144
    %v5161 = vunpack.c.l.b16 %v5145
    %v5162 = vunpack.c.l.b16 %v5146
    %v5163 = vunpack.c.l.b16 %v5147
    %v5164 = vunpack.c.l.b16 %v5148
    %v5165 = vunpack.c.l.b16 %v5149
    %v5166 = vunpack.c.l.b16 %v5150
    %v5167 = vunpack.c.l.b16 %v5151
    %v5168 = vunpack.c.l.b16 %v5152
    %v5169 = vunpack.c.l.b16 %v5153
    %v5170 = vunpack.c.l.b16 %v5154
    %vm5171 = vcmp.ne.s32.totalorder %v5155, 0
    %vm5172 = vcmp.ne.s32.totalorder %v5156, 0
    %vm5173 = vcmp.ne.s32.totalorder %v5157, 0
    %vm5174 = vcmp.ne.s32.totalorder %v5158, 0
    %vm5175 = vcmp.ne.s32.totalorder %v5159, 0
    %vm5176 = vcmp.ne.s32.totalorder %v5160, 0
    %vm5177 = vcmp.ne.s32.totalorder %v5161, 0
    %vm5178 = vcmp.ne.s32.totalorder %v5162, 0
    %vm5179 = vcmp.ne.s32.totalorder %v5163, 0
    %vm5180 = vcmp.ne.s32.totalorder %v5164, 0
    %vm5181 = vcmp.ne.s32.totalorder %v5165, 0
    %vm5182 = vcmp.ne.s32.totalorder %v5166, 0
    %vm5183 = vcmp.ne.s32.totalorder %v5167, 0
    %vm5184 = vcmp.ne.s32.totalorder %v5168, 0
    %vm5185 = vcmp.ne.s32.totalorder %v5169, 0
    %vm5186 = vcmp.ne.s32.totalorder %v5170, 0
    %v5187 = vsel %vm5171, %v5123, -1e+30
    %v5188 = vsel %vm5172, %v5124, -1e+30
    %v5189 = vsel %vm5173, %v5125, -1e+30
    %v5190 = vsel %vm5174, %v5126, -1e+30
    %v5191 = vsel %vm5175, %v5127, -1e+30
    %v5192 = vsel %vm5176, %v5128, -1e+30
    %v5193 = vsel %vm5177, %v5129, -1e+30
    %v5194 = vsel %vm5178, %v5130, -1e+30
    %v5195 = vsel %vm5179, %v5131, -1e+30
    %v5196 = vsel %vm5180, %v5132, -1e+30
    %v5197 = vsel %vm5181, %v5133, -1e+30
    %v5198 = vsel %vm5182, %v5134, -1e+30
    %v5199 = vsel %vm5183, %v5135, -1e+30
    %v5200 = vsel %vm5184, %v5136, -1e+30
    %v5201 = vsel %vm5185, %v5137, -1e+30
    %v5202 = vsel %vm5186, %v5138, -1e+30
    %5203 = vmax.xlane.f32.xlu0 %v5187
    %v5204 = vpop.xlane.xlu0 %5203
    %5205 = vmax.xlane.f32.xlu0 %v5188
    %v5206 = vpop.xlane.xlu0 %5205
    %5207 = vmax.xlane.f32.xlu0 %v5189
    %v5208 = vpop.xlane.xlu0 %5207
    %5209 = vmax.xlane.f32.xlu0 %v5190
    %v5210 = vpop.xlane.xlu0 %5209
    %5211 = vmax.xlane.f32.xlu0 %v5191
    %v5212 = vpop.xlane.xlu0 %5211
    %5213 = vmax.xlane.f32.xlu0 %v5192
    %v5214 = vpop.xlane.xlu0 %5213
    %5215 = vmax.xlane.f32.xlu0 %v5193
    %v5216 = vpop.xlane.xlu0 %5215
    %5217 = vmax.xlane.f32.xlu0 %v5194
    %v5218 = vpop.xlane.xlu0 %5217
    %5219 = vmax.xlane.f32.xlu0 %v5195
    %v5220 = vpop.xlane.xlu0 %5219
    %5221 = vmax.xlane.f32.xlu0 %v5196
    %v5222 = vpop.xlane.xlu0 %5221
    %5223 = vmax.xlane.f32.xlu0 %v5197
    %v5224 = vpop.xlane.xlu0 %5223
    %5225 = vmax.xlane.f32.xlu0 %v5198
    %v5226 = vpop.xlane.xlu0 %5225
    %5227 = vmax.xlane.f32.xlu0 %v5199
    %v5228 = vpop.xlane.xlu0 %5227
    %5229 = vmax.xlane.f32.xlu0 %v5200
    %v5230 = vpop.xlane.xlu0 %5229
    %5231 = vmax.xlane.f32.xlu0 %v5201
    %v5232 = vpop.xlane.xlu0 %5231
    %5233 = vmax.xlane.f32.xlu0 %v5202
    %v5234 = vpop.xlane.xlu0 %5233
    %v5235 = vsub.f32 %v5187, %v5204
    %v5236 = vsub.f32 %v5188, %v5206
    %v5237 = vsub.f32 %v5189, %v5208
    %v5238 = vsub.f32 %v5190, %v5210
    %v5239 = vsub.f32 %v5191, %v5212
    %v5240 = vsub.f32 %v5192, %v5214
    %v5241 = vsub.f32 %v5193, %v5216
    %v5242 = vsub.f32 %v5194, %v5218
    %v5243 = vsub.f32 %v5195, %v5220
    %v5244 = vsub.f32 %v5196, %v5222
    %v5245 = vsub.f32 %v5197, %v5224
    %v5246 = vsub.f32 %v5198, %v5226
    %v5247 = vsub.f32 %v5199, %v5228
    %v5248 = vsub.f32 %v5200, %v5230
    %v5249 = vsub.f32 %v5201, %v5232
    %v5250 = vsub.f32 %v5202, %v5234
    %v5251 = vmul.f32 %v5235, 1.442695
    %v5252 = vpow.pop %v5251
    %v5253 = vmul.f32 %v5236, 1.442695
    %v5254 = vpow.pop %v5253
    %v5255 = vmul.f32 %v5237, 1.442695
    %v5256 = vpow.pop %v5255
    %v5257 = vmul.f32 %v5238, 1.442695
    %v5258 = vpow.pop %v5257
    %v5259 = vmul.f32 %v5239, 1.442695
    %v5260 = vpow.pop %v5259
    %v5261 = vmul.f32 %v5240, 1.442695
    %v5262 = vpow.pop %v5261
    %v5263 = vmul.f32 %v5241, 1.442695
    %v5264 = vpow.pop %v5263
    %v5265 = vmul.f32 %v5242, 1.442695
    %v5266 = vpow.pop %v5265
    %v5267 = vmul.f32 %v5243, 1.442695
    %v5268 = vpow.pop %v5267
    %v5269 = vmul.f32 %v5244, 1.442695
    %v5270 = vpow.pop %v5269
    %v5271 = vmul.f32 %v5245, 1.442695
    %v5272 = vpow.pop %v5271
    %v5273 = vmul.f32 %v5246, 1.442695
    %v5274 = vpow.pop %v5273
    %v5275 = vmul.f32 %v5247, 1.442695
    %v5276 = vpow.pop %v5275
    %v5277 = vmul.f32 %v5248, 1.442695
    %v5278 = vpow.pop %v5277
    %v5279 = vmul.f32 %v5249, 1.442695
    %v5280 = vpow.pop %v5279
    %v5281 = vmul.f32 %v5250, 1.442695
    %v5282 = vpow.pop %v5281
    %5283 = vadd.xlane.f32.xlu0 %v5252
    %v5284 = vpop.xlane.xlu0 %5283
    %5285 = vadd.xlane.f32.xlu0 %v5254
    %v5286 = vpop.xlane.xlu0 %5285
    %5287 = vadd.xlane.f32.xlu0 %v5256
    %v5288 = vpop.xlane.xlu0 %5287
    %5289 = vadd.xlane.f32.xlu0 %v5258
    %v5290 = vpop.xlane.xlu0 %5289
    %5291 = vadd.xlane.f32.xlu0 %v5260
    %v5292 = vpop.xlane.xlu0 %5291
    %5293 = vadd.xlane.f32.xlu0 %v5262
    %v5294 = vpop.xlane.xlu0 %5293
    %5295 = vadd.xlane.f32.xlu0 %v5264
    %v5296 = vpop.xlane.xlu0 %5295
    %5297 = vadd.xlane.f32.xlu0 %v5266
    %v5298 = vpop.xlane.xlu0 %5297
    %5299 = vadd.xlane.f32.xlu0 %v5268
    %v5300 = vpop.xlane.xlu0 %5299
    %5301 = vadd.xlane.f32.xlu0 %v5270
    %v5302 = vpop.xlane.xlu0 %5301
    %5303 = vadd.xlane.f32.xlu0 %v5272
    %v5304 = vpop.xlane.xlu0 %5303
    %5305 = vadd.xlane.f32.xlu0 %v5274
    %v5306 = vpop.xlane.xlu0 %5305
    %5307 = vadd.xlane.f32.xlu0 %v5276
    %v5308 = vpop.xlane.xlu0 %5307
    %5309 = vadd.xlane.f32.xlu0 %v5278
    %v5310 = vpop.xlane.xlu0 %5309
    %5311 = vadd.xlane.f32.xlu0 %v5280
    %v5312 = vpop.xlane.xlu0 %5311
    %5313 = vadd.xlane.f32.xlu0 %v5282
    %v5314 = vpop.xlane.xlu0 %5313
    %5315 = vmatprep.subr.mxu0 0.0
    %5316 = vmatpush1.xpose.msra.mxu0 %v3899
    %5317 = vmatprep.subr.mxu0 0.0
    %5318 = vmatpush1.xpose.msra.mxu0 0.0
    %5319 = vmatprep.subr.mxu0 0.0
    %5320 = vmatpush1.xpose.msra.mxu0 0.0
    %5321 = vmatprep.subr.mxu0 0.0
    %5322 = vmatpush1.xpose.msra.mxu0 0.0
    %5323 = vmatprep.subr.mxu0 0.0
    %5324 = vmatpush1.xpose.msra.mxu0 0.0
    %5325 = vmatprep.subr.mxu0 0.0
    %5326 = vmatpush1.xpose.msra.mxu0 0.0
    %5327 = vmatprep.subr.mxu0 0.0
    %5328 = vmatpush1.xpose.msra.mxu0 0.0
    %5329 = vmatprep.subr.mxu0 0.0
    %5330 = vmatpush1.xpose.msra.mxu0 0.0
    %5331 = vmatprep.subr.mxu0 0.0
    %5332 = vmatpush1.xpose.msra.mxu0 0.0
    %5333 = vmatprep.subr.mxu0 0.0
    %5334 = vmatpush1.xpose.msra.mxu0 0.0
    %5335 = vmatprep.subr.mxu0 0.0
    %5336 = vmatpush1.xpose.msra.mxu0 0.0
    %5337 = vmatprep.subr.mxu0 0.0
    %5338 = vmatpush1.xpose.msra.mxu0 0.0
    %5339 = vmatprep.subr.mxu0 0.0
    %5340 = vmatpush1.xpose.msra.mxu0 0.0
    %5341 = vmatprep.subr.mxu0 0.0
    %5342 = vmatpush1.xpose.msra.mxu0 0.0
    %5343 = vmatprep.subr.mxu0 0.0
    %5344 = vmatpush1.xpose.msra.mxu0 0.0
    %5345 = vmatprep.subr.mxu0 0.0
    %5346 = vmatpush1.xpose.msra.mxu0 0.0
    %5347 = vmatprep.subr.mxu0 0.0
    %5348 = vmatpush1.xpose.msra.mxu0 0.0
    %5349 = vmatprep.subr.mxu0 0.0
    %5350 = vmatpush1.xpose.msra.mxu0 0.0
    %5351 = vmatprep.subr.mxu0 0.0
    %5352 = vmatpush1.xpose.msra.mxu0 0.0
    %5353 = vmatprep.subr.mxu0 0.0
    %5354 = vmatpush1.xpose.msra.mxu0 0.0
    %5355 = vmatprep.subr.mxu0 0.0
    %5356 = vmatpush1.xpose.msra.mxu0 0.0
    %5357 = vmatprep.subr.mxu0 0.0
    %5358 = vmatpush1.xpose.msra.mxu0 0.0
    %5359 = vmatprep.subr.mxu0 0.0
    %5360 = vmatpush1.xpose.msra.mxu0 0.0
    %5361 = vmatprep.subr.mxu0 0.0
    %5362 = vmatpush1.xpose.msra.mxu0 0.0
    %5363 = vmatprep.subr.mxu0 0.0
    %5364 = vmatpush1.xpose.msra.mxu0 0.0
    %5365 = vmatprep.subr.mxu0 0.0
    %5366 = vmatpush1.xpose.msra.mxu0 0.0
    %5367 = vmatprep.subr.mxu0 0.0
    %5368 = vmatpush1.xpose.msra.mxu0 0.0
    %5369 = vmatprep.subr.mxu0 0.0
    %5370 = vmatpush1.xpose.msra.mxu0 0.0
    %5371 = vmatprep.subr.mxu0 0.0
    %5372 = vmatpush1.xpose.msra.mxu0 0.0
    %5373 = vmatprep.subr.mxu0 0.0
    %5374 = vmatpush1.xpose.msra.mxu0 0.0
    %5375 = vmatprep.subr.mxu0 0.0
    %5376 = vmatpush1.xpose.msra.mxu0 0.0
    %5377 = vmatprep.subr.mxu0 0.0
    %5378 = vmatpush1.xpose.msra.mxu0 0.0
    %5379 = vmatprep.mubr.f32.mxu0 0.0
    %5380 = vmatmul.mubr.f32.gmra.mrb[0].mxu0 %v5252
    %v5381 = vpop.f32.mrb[0].mxu0
    %v5382 = vadd.f32 0.0, %v5381
    %v5383 = vpop.f32.mrb[0].mxu0
    %5384 = vmatprep.mubr.f32.mxu0 0.0
    %5385 = vmatmul.mubr.f32.gmra.mrb[0].mxu0 %v5254
    %v5386 = vpop.f32.mrb[0].mxu0
    %v5387 = vadd.f32 0.0, %v5386
    %v5388 = vpop.f32.mrb[0].mxu0
    %5389 = vmatprep.mubr.f32.mxu0 0.0
    %5390 = vmatmul.mubr.f32.gmra.mrb[0].mxu0 %v5256
    %v5391 = vpop.f32.mrb[0].mxu0
    %v5392 = vadd.f32 0.0, %v5391
    %v5393 = vpop.f32.mrb[0].mxu0
    %5394 = vmatprep.mubr.f32.mxu0 0.0
    %5395 = vmatmul.mubr.f32.gmra.mrb[0].mxu0 %v5258
    %v5396 = vpop.f32.mrb[0].mxu0
    %v5397 = vadd.f32 0.0, %v5396
    %v5398 = vpop.f32.mrb[0].mxu0
    %5399 = vmatprep.mubr.f32.mxu0 0.0
    %5400 = vmatmul.mubr.f32.gmra.mrb[0].mxu0 %v5260
    %v5401 = vpop.f32.mrb[0].mxu0
    %v5402 = vadd.f32 0.0, %v5401
    %v5403 = vpop.f32.mrb[0].mxu0
    %5404 = vmatprep.mubr.f32.mxu0 0.0
    %5405 = vmatmul.mubr.f32.gmra.mrb[0].mxu0 %v5262
    %v5406 = vpop.f32.mrb[0].mxu0
    %v5407 = vadd.f32 0.0, %v5406
    %v5408 = vpop.f32.mrb[0].mxu0
    %5409 = vmatprep.mubr.f32.mxu0 0.0
    %5410 = vmatmul.mubr.f32.gmra.mrb[0].mxu0 %v5264
    %v5411 = vpop.f32.mrb[0].mxu0
    %v5412 = vadd.f32 0.0, %v5411
    %v5413 = vpop.f32.mrb[0].mxu0
    %5414 = vmatprep.mubr.f32.mxu0 0.0
    %5415 = vmatmul.mubr.f32.gmra.mrb[0].mxu0 %v5266
    %v5416 = vpop.f32.mrb[0].mxu0
    %v5417 = vadd.f32 0.0, %v5416
    %v5418 = vpop.f32.mrb[0].mxu0
    %5419 = vmatprep.mubr.f32.mxu0 0.0
    %5420 = vmatmul.mubr.f32.gmra.mrb[0].mxu0 %v5268
    %v5421 = vpop.f32.mrb[0].mxu0
    %v5422 = vadd.f32 0.0, %v5421
    %v5423 = vpop.f32.mrb[0].mxu0
    %5424 = vmatprep.mubr.f32.mxu0 0.0
    %5425 = vmatmul.mubr.f32.gmra.mrb[0].mxu0 %v5270
    %v5426 = vpop.f32.mrb[0].mxu0
    %v5427 = vadd.f32 0.0, %v5426
    %v5428 = vpop.f32.mrb[0].mxu0
    %5429 = vmatprep.mubr.f32.mxu0 0.0
    %5430 = vmatmul.mubr.f32.gmra.mrb[0].mxu0 %v5272
    %v5431 = vpop.f32.mrb[0].mxu0
    %v5432 = vadd.f32 0.0, %v5431
    %v5433 = vpop.f32.mrb[0].mxu0
    %5434 = vmatprep.mubr.f32.mxu0 0.0
    %5435 = vmatmul.mubr.f32.gmra.mrb[0].mxu0 %v5274
    %v5436 = vpop.f32.mrb[0].mxu0
    %v5437 = vadd.f32 0.0, %v5436
    %v5438 = vpop.f32.mrb[0].mxu0
    %5439 = vmatprep.mubr.f32.mxu0 0.0
    %5440 = vmatmul.mubr.f32.gmra.mrb[0].mxu0 %v5276
    %v5441 = vpop.f32.mrb[0].mxu0
    %v5442 = vadd.f32 0.0, %v5441
    %v5443 = vpop.f32.mrb[0].mxu0
    %5444 = vmatprep.mubr.f32.mxu0 0.0
    %5445 = vmatmul.mubr.f32.gmra.mrb[0].mxu0 %v5278
    %v5446 = vpop.f32.mrb[0].mxu0
    %v5447 = vadd.f32 0.0, %v5446
    %v5448 = vpop.f32.mrb[0].mxu0
    %5449 = vmatprep.mubr.f32.mxu0 0.0
    %5450 = vmatmul.mubr.f32.gmra.mrb[0].mxu0 %v5280
    %v5451 = vpop.f32.mrb[0].mxu0
    %v5452 = vadd.f32 0.0, %v5451
    %v5453 = vpop.f32.mrb[0].mxu0
    %5454 = vmatprep.mubr.f32.mxu0 0.0
    %5455 = vmatmul.mubr.f32.gmra.mrb[0].mxu0 %v5282
    %v5456 = vpop.f32.mrb[0].mxu0
    %v5457 = vadd.f32 0.0, %v5456
    %v5458 = vpop.f32.mrb[0].mxu0
    %5459 = vdwg.mxu0
    %v5460 = vrcp.pop %v5284
    %v5461 = vrcp.pop %v5286
    %v5462 = vrcp.pop %v5288
    %v5463 = vrcp.pop %v5290
    %v5464 = vrcp.pop %v5292
    %v5465 = vrcp.pop %v5294
    %v5466 = vrcp.pop %v5296
    %v5467 = vrcp.pop %v5298
    %v5468 = vrcp.pop %v5300
    %v5469 = vrcp.pop %v5302
    %v5470 = vrcp.pop %v5304
    %v5471 = vrcp.pop %v5306
    %v5472 = vrcp.pop %v5308
    %v5473 = vrcp.pop %v5310
    %v5474 = vrcp.pop %v5312
    %v5475 = vrcp.pop %v5314
    %v5476 = vmul.f32 %v5382, %v5460
    %v5477 = vmul.f32 %v5387, %v5461
    %v5478 = vmul.f32 %v5392, %v5462
    %v5479 = vmul.f32 %v5397, %v5463
    %v5480 = vmul.f32 %v5402, %v5464
    %v5481 = vmul.f32 %v5407, %v5465
    %v5482 = vmul.f32 %v5412, %v5466
    %v5483 = vmul.f32 %v5417, %v5467
    %v5484 = vmul.f32 %v5422, %v5468
    %v5485 = vmul.f32 %v5427, %v5469
    %v5486 = vmul.f32 %v5432, %v5470
    %v5487 = vmul.f32 %v5437, %v5471
    %v5488 = vmul.f32 %v5442, %v5472
    %v5489 = vmul.f32 %v5447, %v5473
    %v5490 = vmul.f32 %v5452, %v5474
    %v5491 = vmul.f32 %v5457, %v5475
    %5492 = vset.pattern.permute.xlu0 8
    %5493 = vperm.xlu0 %5492, %v3733
    %v5494 = vpop.permute.xlu0 %5493
    %5496 = vset.pattern.permute.xlu0 8
    %5497 = vperm.xlu0 %5496, %v3738
    %v5498 = vpop.permute.xlu0 %5497
    %5500 = vset.pattern.permute.xlu0 8
    %5501 = vperm.xlu0 %5500, %v3743
    %v5502 = vpop.permute.xlu0 %5501
    %5504 = vset.pattern.permute.xlu0 8
    %5505 = vperm.xlu0 %5504, %v3748
    %v5506 = vpop.permute.xlu0 %5505
    %5508 = vset.pattern.permute.xlu0 8
    %5509 = vperm.xlu0 %5508, %v3753
    %v5510 = vpop.permute.xlu0 %5509
    %5512 = vset.pattern.permute.xlu0 8
    %5513 = vperm.xlu0 %5512, %v3758
    %v5514 = vpop.permute.xlu0 %5513
    %5516 = vset.pattern.permute.xlu0 8
    %5517 = vperm.xlu0 %5516, %v3763
    %v5518 = vpop.permute.xlu0 %5517
    %5520 = vset.pattern.permute.xlu0 8
    %5521 = vperm.xlu0 %5520, %v3768
    %v5522 = vpop.permute.xlu0 %5521
    %5524 = vset.pattern.permute.xlu0 8
    %5525 = vperm.xlu0 %5524, %v3773
    %v5526 = vpop.permute.xlu0 %5525
    %5528 = vset.pattern.permute.xlu0 8
    %5529 = vperm.xlu0 %5528, %v3778
    %v5530 = vpop.permute.xlu0 %5529
    %5532 = vset.pattern.permute.xlu0 8
    %5533 = vperm.xlu0 %5532, %v3783
    %v5534 = vpop.permute.xlu0 %5533
    %5536 = vset.pattern.permute.xlu0 8
    %5537 = vperm.xlu0 %5536, %v3788
    %v5538 = vpop.permute.xlu0 %5537
    %5540 = vset.pattern.permute.xlu0 8
    %5541 = vperm.xlu0 %5540, %v3793
    %v5542 = vpop.permute.xlu0 %5541
    %5544 = vset.pattern.permute.xlu0 8
    %5545 = vperm.xlu0 %5544, %v3798
    %v5546 = vpop.permute.xlu0 %5545
    %5548 = vset.pattern.permute.xlu0 8
    %5549 = vperm.xlu0 %5548, %v3803
    %v5550 = vpop.permute.xlu0 %5549
    %5552 = vset.pattern.permute.xlu0 8
    %5553 = vperm.xlu0 %5552, %v3808
    %v5554 = vpop.permute.xlu0 %5553
    %v5556 = vlaneseq
    %v5557 = vshrl.u32 %v5556, 7
    %v5558 = vsub.s32 0, %v5557
    %v5559 = vrot.slane %v3904, %v5558
    %v5560 = vadd.f32 %v5494, %v5559
    %v5561 = vadd.f32 %v5498, %v5559
    %v5562 = vadd.f32 %v5502, %v5559
    %v5563 = vadd.f32 %v5506, %v5559
    %v5564 = vadd.f32 %v5510, %v5559
    %v5565 = vadd.f32 %v5514, %v5559
    %v5566 = vadd.f32 %v5518, %v5559
    %v5567 = vadd.f32 %v5522, %v5559
    %v5568 = vadd.f32 %v5526, %v5559
    %v5569 = vadd.f32 %v5530, %v5559
    %v5570 = vadd.f32 %v5534, %v5559
    %v5571 = vadd.f32 %v5538, %v5559
    %v5572 = vadd.f32 %v5542, %v5559
    %v5573 = vadd.f32 %v5546, %v5559
    %v5574 = vadd.f32 %v5550, %v5559
    %v5575 = vadd.f32 %v5554, %v5559
    %v5576 = vmul.f32 %v5560, 0.2
    %v5577 = vmul.f32 %v5561, 0.2
    %v5578 = vmul.f32 %v5562, 0.2
    %v5579 = vmul.f32 %v5563, 0.2
    %v5580 = vmul.f32 %v5564, 0.2
    %v5581 = vmul.f32 %v5565, 0.2
    %v5582 = vmul.f32 %v5566, 0.2
    %v5583 = vmul.f32 %v5567, 0.2
    %v5584 = vmul.f32 %v5568, 0.2
    %v5585 = vmul.f32 %v5569, 0.2
    %v5586 = vmul.f32 %v5570, 0.2
    %v5587 = vmul.f32 %v5571, 0.2
    %v5588 = vmul.f32 %v5572, 0.2
    %v5589 = vmul.f32 %v5573, 0.2
    %v5590 = vmul.f32 %v5574, 0.2
    %v5591 = vmul.f32 %v5575, 0.2
    %v5592 = vmax.f32 %v5560, %v5576
    %v5593 = vmax.f32 %v5561, %v5577
    %v5594 = vmax.f32 %v5562, %v5578
    %v5595 = vmax.f32 %v5563, %v5579
    %v5596 = vmax.f32 %v5564, %v5580
    %v5597 = vmax.f32 %v5565, %v5581
    %v5598 = vmax.f32 %v5566, %v5582
    %v5599 = vmax.f32 %v5567, %v5583
    %v5600 = vmax.f32 %v5568, %v5584
    %v5601 = vmax.f32 %v5569, %v5585
    %v5602 = vmax.f32 %v5570, %v5586
    %v5603 = vmax.f32 %v5571, %v5587
    %v5604 = vmax.f32 %v5572, %v5588
    %v5605 = vmax.f32 %v5573, %v5589
    %v5606 = vmax.f32 %v5574, %v5590
    %v5607 = vmax.f32 %v5575, %v5591
    %s5608 = sld [smem:[#allocation4 + $0x80]]
    %v5609 = vstv %s5608
    %v5610 = vmul.f32 %v5609, %v5592
    %v5611 = vmul.f32 %v5609, %v5593
    %v5612 = vmul.f32 %v5609, %v5594
    %v5613 = vmul.f32 %v5609, %v5595
    %v5614 = vmul.f32 %v5609, %v5596
    %v5615 = vmul.f32 %v5609, %v5597
    %v5616 = vmul.f32 %v5609, %v5598
    %v5617 = vmul.f32 %v5609, %v5599
    %v5618 = vmul.f32 %v5609, %v5600
    %v5619 = vmul.f32 %v5609, %v5601
    %v5620 = vmul.f32 %v5609, %v5602
    %v5621 = vmul.f32 %v5609, %v5603
    %v5622 = vmul.f32 %v5609, %v5604
    %v5623 = vmul.f32 %v5609, %v5605
    %v5624 = vmul.f32 %v5609, %v5606
    %v5625 = vmul.f32 %v5609, %v5607
    %5626 = vset.pattern.permute.xlu0 9
    %5627 = vperm.xlu0 %5626, %v3733
    %v5628 = vpop.permute.xlu0 %5627
    %5630 = vset.pattern.permute.xlu0 9
    %5631 = vperm.xlu0 %5630, %v3738
    %v5632 = vpop.permute.xlu0 %5631
    %5634 = vset.pattern.permute.xlu0 9
    %5635 = vperm.xlu0 %5634, %v3743
    %v5636 = vpop.permute.xlu0 %5635
    %5638 = vset.pattern.permute.xlu0 9
    %5639 = vperm.xlu0 %5638, %v3748
    %v5640 = vpop.permute.xlu0 %5639
    %5642 = vset.pattern.permute.xlu0 9
    %5643 = vperm.xlu0 %5642, %v3753
    %v5644 = vpop.permute.xlu0 %5643
    %5646 = vset.pattern.permute.xlu0 9
    %5647 = vperm.xlu0 %5646, %v3758
    %v5648 = vpop.permute.xlu0 %5647
    %5650 = vset.pattern.permute.xlu0 9
    %5651 = vperm.xlu0 %5650, %v3763
    %v5652 = vpop.permute.xlu0 %5651
    %5654 = vset.pattern.permute.xlu0 9
    %5655 = vperm.xlu0 %5654, %v3768
    %v5656 = vpop.permute.xlu0 %5655
    %5658 = vset.pattern.permute.xlu0 9
    %5659 = vperm.xlu0 %5658, %v3773
    %v5660 = vpop.permute.xlu0 %5659
    %5662 = vset.pattern.permute.xlu0 9
    %5663 = vperm.xlu0 %5662, %v3778
    %v5664 = vpop.permute.xlu0 %5663
    %5666 = vset.pattern.permute.xlu0 9
    %5667 = vperm.xlu0 %5666, %v3783
    %v5668 = vpop.permute.xlu0 %5667
    %5670 = vset.pattern.permute.xlu0 9
    %5671 = vperm.xlu0 %5670, %v3788
    %v5672 = vpop.permute.xlu0 %5671
    %5674 = vset.pattern.permute.xlu0 9
    %5675 = vperm.xlu0 %5674, %v3793
    %v5676 = vpop.permute.xlu0 %5675
    %5678 = vset.pattern.permute.xlu0 9
    %5679 = vperm.xlu0 %5678, %v3798
    %v5680 = vpop.permute.xlu0 %5679
    %5682 = vset.pattern.permute.xlu0 9
    %5683 = vperm.xlu0 %5682, %v3803
    %v5684 = vpop.permute.xlu0 %5683
    %5686 = vset.pattern.permute.xlu0 9
    %5687 = vperm.xlu0 %5686, %v3808
    %v5688 = vpop.permute.xlu0 %5687
    %v5690 = vlaneseq
    %v5691 = vshrl.u32 %v5690, 7
    %v5692 = vsub.s32 1, %v5691
    %v5693 = vrot.slane %v3904, %v5692
    %v5694 = vadd.f32 %v5628, %v5693
    %v5695 = vadd.f32 %v5632, %v5693
    %v5696 = vadd.f32 %v5636, %v5693
    %v5697 = vadd.f32 %v5640, %v5693
    %v5698 = vadd.f32 %v5644, %v5693
    %v5699 = vadd.f32 %v5648, %v5693
    %v5700 = vadd.f32 %v5652, %v5693
    %v5701 = vadd.f32 %v5656, %v5693
    %v5702 = vadd.f32 %v5660, %v5693
    %v5703 = vadd.f32 %v5664, %v5693
    %v5704 = vadd.f32 %v5668, %v5693
    %v5705 = vadd.f32 %v5672, %v5693
    %v5706 = vadd.f32 %v5676, %v5693
    %v5707 = vadd.f32 %v5680, %v5693
    %v5708 = vadd.f32 %v5684, %v5693
    %v5709 = vadd.f32 %v5688, %v5693
    %v5710 = vmul.f32 %v5694, 0.2
    %v5711 = vmul.f32 %v5695, 0.2
    %v5712 = vmul.f32 %v5696, 0.2
    %v5713 = vmul.f32 %v5697, 0.2
    %v5714 = vmul.f32 %v5698, 0.2
    %v5715 = vmul.f32 %v5699, 0.2
    %v5716 = vmul.f32 %v5700, 0.2
    %v5717 = vmul.f32 %v5701, 0.2
    %v5718 = vmul.f32 %v5702, 0.2
    %v5719 = vmul.f32 %v5703, 0.2
    %v5720 = vmul.f32 %v5704, 0.2
    %v5721 = vmul.f32 %v5705, 0.2
    %v5722 = vmul.f32 %v5706, 0.2
    %v5723 = vmul.f32 %v5707, 0.2
    %v5724 = vmul.f32 %v5708, 0.2
    %v5725 = vmul.f32 %v5709, 0.2
    %v5726 = vmax.f32 %v5694, %v5710
    %v5727 = vmax.f32 %v5695, %v5711
    %v5728 = vmax.f32 %v5696, %v5712
    %v5729 = vmax.f32 %v5697, %v5713
    %v5730 = vmax.f32 %v5698, %v5714
    %v5731 = vmax.f32 %v5699, %v5715
    %v5732 = vmax.f32 %v5700, %v5716
    %v5733 = vmax.f32 %v5701, %v5717
    %v5734 = vmax.f32 %v5702, %v5718
    %v5735 = vmax.f32 %v5703, %v5719
    %v5736 = vmax.f32 %v5704, %v5720
    %v5737 = vmax.f32 %v5705, %v5721
    %v5738 = vmax.f32 %v5706, %v5722
    %v5739 = vmax.f32 %v5707, %v5723
    %v5740 = vmax.f32 %v5708, %v5724
    %v5741 = vmax.f32 %v5709, %v5725
    %s5742 = sld [smem:[#allocation4 + $0x81]]
    %v5743 = vstv %s5742
    %v5744 = vmul.f32 %v5743, %v5726
    %v5745 = vmul.f32 %v5743, %v5727
    %v5746 = vmul.f32 %v5743, %v5728
    %v5747 = vmul.f32 %v5743, %v5729
    %v5748 = vmul.f32 %v5743, %v5730
    %v5749 = vmul.f32 %v5743, %v5731
    %v5750 = vmul.f32 %v5743, %v5732
    %v5751 = vmul.f32 %v5743, %v5733
    %v5752 = vmul.f32 %v5743, %v5734
    %v5753 = vmul.f32 %v5743, %v5735
    %v5754 = vmul.f32 %v5743, %v5736
    %v5755 = vmul.f32 %v5743, %v5737
    %v5756 = vmul.f32 %v5743, %v5738
    %v5757 = vmul.f32 %v5743, %v5739
    %v5758 = vmul.f32 %v5743, %v5740
    %v5759 = vmul.f32 %v5743, %v5741
    %v5760 = vadd.f32 %v5610, %v5744
    %v5761 = vadd.f32 %v5611, %v5745
    %v5762 = vadd.f32 %v5612, %v5746
    %v5763 = vadd.f32 %v5613, %v5747
    %v5764 = vadd.f32 %v5614, %v5748
    %v5765 = vadd.f32 %v5615, %v5749
    %v5766 = vadd.f32 %v5616, %v5750
    %v5767 = vadd.f32 %v5617, %v5751
    %v5768 = vadd.f32 %v5618, %v5752
    %v5769 = vadd.f32 %v5619, %v5753
    %v5770 = vadd.f32 %v5620, %v5754
    %v5771 = vadd.f32 %v5621, %v5755
    %v5772 = vadd.f32 %v5622, %v5756
    %v5773 = vadd.f32 %v5623, %v5757
    %v5774 = vadd.f32 %v5624, %v5758
    %v5775 = vadd.f32 %v5625, %v5759
    %5776 = vset.pattern.permute.xlu0 10
    %5777 = vperm.xlu0 %5776, %v3733
    %v5778 = vpop.permute.xlu0 %5777
    %5780 = vset.pattern.permute.xlu0 10
    %5781 = vperm.xlu0 %5780, %v3738
    %v5782 = vpop.permute.xlu0 %5781
    %5784 = vset.pattern.permute.xlu0 10
    %5785 = vperm.xlu0 %5784, %v3743
    %v5786 = vpop.permute.xlu0 %5785
    %5788 = vset.pattern.permute.xlu0 10
    %5789 = vperm.xlu0 %5788, %v3748
    %v5790 = vpop.permute.xlu0 %5789
    %5792 = vset.pattern.permute.xlu0 10
    %5793 = vperm.xlu0 %5792, %v3753
    %v5794 = vpop.permute.xlu0 %5793
    %5796 = vset.pattern.permute.xlu0 10
    %5797 = vperm.xlu0 %5796, %v3758
    %v5798 = vpop.permute.xlu0 %5797
    %5800 = vset.pattern.permute.xlu0 10
    %5801 = vperm.xlu0 %5800, %v3763
    %v5802 = vpop.permute.xlu0 %5801
    %5804 = vset.pattern.permute.xlu0 10
    %5805 = vperm.xlu0 %5804, %v3768
    %v5806 = vpop.permute.xlu0 %5805
    %5808 = vset.pattern.permute.xlu0 10
    %5809 = vperm.xlu0 %5808, %v3773
    %v5810 = vpop.permute.xlu0 %5809
    %5812 = vset.pattern.permute.xlu0 10
    %5813 = vperm.xlu0 %5812, %v3778
    %v5814 = vpop.permute.xlu0 %5813
    %5816 = vset.pattern.permute.xlu0 10
    %5817 = vperm.xlu0 %5816, %v3783
    %v5818 = vpop.permute.xlu0 %5817
    %5820 = vset.pattern.permute.xlu0 10
    %5821 = vperm.xlu0 %5820, %v3788
    %v5822 = vpop.permute.xlu0 %5821
    %5824 = vset.pattern.permute.xlu0 10
    %5825 = vperm.xlu0 %5824, %v3793
    %v5826 = vpop.permute.xlu0 %5825
    %5828 = vset.pattern.permute.xlu0 10
    %5829 = vperm.xlu0 %5828, %v3798
    %v5830 = vpop.permute.xlu0 %5829
    %5832 = vset.pattern.permute.xlu0 10
    %5833 = vperm.xlu0 %5832, %v3803
    %v5834 = vpop.permute.xlu0 %5833
    %5836 = vset.pattern.permute.xlu0 10
    %5837 = vperm.xlu0 %5836, %v3808
    %v5838 = vpop.permute.xlu0 %5837
    %v5840 = vlaneseq
    %v5841 = vshrl.u32 %v5840, 7
    %v5842 = vsub.s32 2, %v5841
    %v5843 = vrot.slane %v3904, %v5842
    %v5844 = vadd.f32 %v5778, %v5843
    %v5845 = vadd.f32 %v5782, %v5843
    %v5846 = vadd.f32 %v5786, %v5843
    %v5847 = vadd.f32 %v5790, %v5843
    %v5848 = vadd.f32 %v5794, %v5843
    %v5849 = vadd.f32 %v5798, %v5843
    %v5850 = vadd.f32 %v5802, %v5843
    %v5851 = vadd.f32 %v5806, %v5843
    %v5852 = vadd.f32 %v5810, %v5843
    %v5853 = vadd.f32 %v5814, %v5843
    %v5854 = vadd.f32 %v5818, %v5843
    %v5855 = vadd.f32 %v5822, %v5843
    %v5856 = vadd.f32 %v5826, %v5843
    %v5857 = vadd.f32 %v5830, %v5843
    %v5858 = vadd.f32 %v5834, %v5843
    %v5859 = vadd.f32 %v5838, %v5843
    %v5860 = vmul.f32 %v5844, 0.2
    %v5861 = vmul.f32 %v5845, 0.2
    %v5862 = vmul.f32 %v5846, 0.2
    %v5863 = vmul.f32 %v5847, 0.2
    %v5864 = vmul.f32 %v5848, 0.2
    %v5865 = vmul.f32 %v5849, 0.2
    %v5866 = vmul.f32 %v5850, 0.2
    %v5867 = vmul.f32 %v5851, 0.2
    %v5868 = vmul.f32 %v5852, 0.2
    %v5869 = vmul.f32 %v5853, 0.2
    %v5870 = vmul.f32 %v5854, 0.2
    %v5871 = vmul.f32 %v5855, 0.2
    %v5872 = vmul.f32 %v5856, 0.2
    %v5873 = vmul.f32 %v5857, 0.2
    %v5874 = vmul.f32 %v5858, 0.2
    %v5875 = vmul.f32 %v5859, 0.2
    %v5876 = vmax.f32 %v5844, %v5860
    %v5877 = vmax.f32 %v5845, %v5861
    %v5878 = vmax.f32 %v5846, %v5862
    %v5879 = vmax.f32 %v5847, %v5863
    %v5880 = vmax.f32 %v5848, %v5864
    %v5881 = vmax.f32 %v5849, %v5865
    %v5882 = vmax.f32 %v5850, %v5866
    %v5883 = vmax.f32 %v5851, %v5867
    %v5884 = vmax.f32 %v5852, %v5868
    %v5885 = vmax.f32 %v5853, %v5869
    %v5886 = vmax.f32 %v5854, %v5870
    %v5887 = vmax.f32 %v5855, %v5871
    %v5888 = vmax.f32 %v5856, %v5872
    %v5889 = vmax.f32 %v5857, %v5873
    %v5890 = vmax.f32 %v5858, %v5874
    %v5891 = vmax.f32 %v5859, %v5875
    %s5892 = sld [smem:[#allocation4 + $0x82]]
    %v5893 = vstv %s5892
    %v5894 = vmul.f32 %v5893, %v5876
    %v5895 = vmul.f32 %v5893, %v5877
    %v5896 = vmul.f32 %v5893, %v5878
    %v5897 = vmul.f32 %v5893, %v5879
    %v5898 = vmul.f32 %v5893, %v5880
    %v5899 = vmul.f32 %v5893, %v5881
    %v5900 = vmul.f32 %v5893, %v5882
    %v5901 = vmul.f32 %v5893, %v5883
    %v5902 = vmul.f32 %v5893, %v5884
    %v5903 = vmul.f32 %v5893, %v5885
    %v5904 = vmul.f32 %v5893, %v5886
    %v5905 = vmul.f32 %v5893, %v5887
    %v5906 = vmul.f32 %v5893, %v5888
    %v5907 = vmul.f32 %v5893, %v5889
    %v5908 = vmul.f32 %v5893, %v5890
    %v5909 = vmul.f32 %v5893, %v5891
    %v5910 = vadd.f32 %v5760, %v5894
    %v5911 = vadd.f32 %v5761, %v5895
    %v5912 = vadd.f32 %v5762, %v5896
    %v5913 = vadd.f32 %v5763, %v5897
    %v5914 = vadd.f32 %v5764, %v5898
    %v5915 = vadd.f32 %v5765, %v5899
    %v5916 = vadd.f32 %v5766, %v5900
    %v5917 = vadd.f32 %v5767, %v5901
    %v5918 = vadd.f32 %v5768, %v5902
    %v5919 = vadd.f32 %v5769, %v5903
    %v5920 = vadd.f32 %v5770, %v5904
    %v5921 = vadd.f32 %v5771, %v5905
    %v5922 = vadd.f32 %v5772, %v5906
    %v5923 = vadd.f32 %v5773, %v5907
    %v5924 = vadd.f32 %v5774, %v5908
    %v5925 = vadd.f32 %v5775, %v5909
    %5926 = vset.pattern.permute.xlu0 11
    %5927 = vperm.xlu0 %5926, %v3733
    %v5928 = vpop.permute.xlu0 %5927
    %5930 = vset.pattern.permute.xlu0 11
    %5931 = vperm.xlu0 %5930, %v3738
    %v5932 = vpop.permute.xlu0 %5931
    %5934 = vset.pattern.permute.xlu0 11
    %5935 = vperm.xlu0 %5934, %v3743
    %v5936 = vpop.permute.xlu0 %5935
    %5938 = vset.pattern.permute.xlu0 11
    %5939 = vperm.xlu0 %5938, %v3748
    %v5940 = vpop.permute.xlu0 %5939
    %5942 = vset.pattern.permute.xlu0 11
    %5943 = vperm.xlu0 %5942, %v3753
    %v5944 = vpop.permute.xlu0 %5943
    %5946 = vset.pattern.permute.xlu0 11
    %5947 = vperm.xlu0 %5946, %v3758
    %v5948 = vpop.permute.xlu0 %5947
    %5950 = vset.pattern.permute.xlu0 11
    %5951 = vperm.xlu0 %5950, %v3763
    %v5952 = vpop.permute.xlu0 %5951
    %5954 = vset.pattern.permute.xlu0 11
    %5955 = vperm.xlu0 %5954, %v3768
    %v5956 = vpop.permute.xlu0 %5955
    %5958 = vset.pattern.permute.xlu0 11
    %5959 = vperm.xlu0 %5958, %v3773
    %v5960 = vpop.permute.xlu0 %5959
    %5962 = vset.pattern.permute.xlu0 11
    %5963 = vperm.xlu0 %5962, %v3778
    %v5964 = vpop.permute.xlu0 %5963
    %5966 = vset.pattern.permute.xlu0 11
    %5967 = vperm.xlu0 %5966, %v3783
    %v5968 = vpop.permute.xlu0 %5967
    %5970 = vset.pattern.permute.xlu0 11
    %5971 = vperm.xlu0 %5970, %v3788
    %v5972 = vpop.permute.xlu0 %5971
    %5974 = vset.pattern.permute.xlu0 11
    %5975 = vperm.xlu0 %5974, %v3793
    %v5976 = vpop.permute.xlu0 %5975
    %5978 = vset.pattern.permute.xlu0 11
    %5979 = vperm.xlu0 %5978, %v3798
    %v5980 = vpop.permute.xlu0 %5979
    %5982 = vset.pattern.permute.xlu0 11
    %5983 = vperm.xlu0 %5982, %v3803
    %v5984 = vpop.permute.xlu0 %5983
    %5986 = vset.pattern.permute.xlu0 11
    %5987 = vperm.xlu0 %5986, %v3808
    %v5988 = vpop.permute.xlu0 %5987
    %v5990 = vlaneseq
    %v5991 = vshrl.u32 %v5990, 7
    %v5992 = vsub.s32 3, %v5991
    %v5993 = vrot.slane %v3904, %v5992
    %v5994 = vadd.f32 %v5928, %v5993
    %v5995 = vadd.f32 %v5932, %v5993
    %v5996 = vadd.f32 %v5936, %v5993
    %v5997 = vadd.f32 %v5940, %v5993
    %v5998 = vadd.f32 %v5944, %v5993
    %v5999 = vadd.f32 %v5948, %v5993
    %v6000 = vadd.f32 %v5952, %v5993
    %v6001 = vadd.f32 %v5956, %v5993
    %v6002 = vadd.f32 %v5960, %v5993
    %v6003 = vadd.f32 %v5964, %v5993
    %v6004 = vadd.f32 %v5968, %v5993
    %v6005 = vadd.f32 %v5972, %v5993
    %v6006 = vadd.f32 %v5976, %v5993
    %v6007 = vadd.f32 %v5980, %v5993
    %v6008 = vadd.f32 %v5984, %v5993
    %v6009 = vadd.f32 %v5988, %v5993
    %v6010 = vmul.f32 %v5994, 0.2
    %v6011 = vmul.f32 %v5995, 0.2
    %v6012 = vmul.f32 %v5996, 0.2
    %v6013 = vmul.f32 %v5997, 0.2
    %v6014 = vmul.f32 %v5998, 0.2
    %v6015 = vmul.f32 %v5999, 0.2
    %v6016 = vmul.f32 %v6000, 0.2
    %v6017 = vmul.f32 %v6001, 0.2
    %v6018 = vmul.f32 %v6002, 0.2
    %v6019 = vmul.f32 %v6003, 0.2
    %v6020 = vmul.f32 %v6004, 0.2
    %v6021 = vmul.f32 %v6005, 0.2
    %v6022 = vmul.f32 %v6006, 0.2
    %v6023 = vmul.f32 %v6007, 0.2
    %v6024 = vmul.f32 %v6008, 0.2
    %v6025 = vmul.f32 %v6009, 0.2
    %v6026 = vmax.f32 %v5994, %v6010
    %v6027 = vmax.f32 %v5995, %v6011
    %v6028 = vmax.f32 %v5996, %v6012
    %v6029 = vmax.f32 %v5997, %v6013
    %v6030 = vmax.f32 %v5998, %v6014
    %v6031 = vmax.f32 %v5999, %v6015
    %v6032 = vmax.f32 %v6000, %v6016
    %v6033 = vmax.f32 %v6001, %v6017
    %v6034 = vmax.f32 %v6002, %v6018
    %v6035 = vmax.f32 %v6003, %v6019
    %v6036 = vmax.f32 %v6004, %v6020
    %v6037 = vmax.f32 %v6005, %v6021
    %v6038 = vmax.f32 %v6006, %v6022
    %v6039 = vmax.f32 %v6007, %v6023
    %v6040 = vmax.f32 %v6008, %v6024
    %v6041 = vmax.f32 %v6009, %v6025
    %s6042 = sld [smem:[#allocation4 + $0x83]]
    %v6043 = vstv %s6042
    %v6044 = vmul.f32 %v6043, %v6026
    %v6045 = vmul.f32 %v6043, %v6027
    %v6046 = vmul.f32 %v6043, %v6028
    %v6047 = vmul.f32 %v6043, %v6029
    %v6048 = vmul.f32 %v6043, %v6030
    %v6049 = vmul.f32 %v6043, %v6031
    %v6050 = vmul.f32 %v6043, %v6032
    %v6051 = vmul.f32 %v6043, %v6033
    %v6052 = vmul.f32 %v6043, %v6034
    %v6053 = vmul.f32 %v6043, %v6035
    %v6054 = vmul.f32 %v6043, %v6036
    %v6055 = vmul.f32 %v6043, %v6037
    %v6056 = vmul.f32 %v6043, %v6038
    %v6057 = vmul.f32 %v6043, %v6039
    %v6058 = vmul.f32 %v6043, %v6040
    %v6059 = vmul.f32 %v6043, %v6041
    %v6060 = vadd.f32 %v5910, %v6044
    %v6061 = vadd.f32 %v5911, %v6045
    %v6062 = vadd.f32 %v5912, %v6046
    %v6063 = vadd.f32 %v5913, %v6047
    %v6064 = vadd.f32 %v5914, %v6048
    %v6065 = vadd.f32 %v5915, %v6049
    %v6066 = vadd.f32 %v5916, %v6050
    %v6067 = vadd.f32 %v5917, %v6051
    %v6068 = vadd.f32 %v5918, %v6052
    %v6069 = vadd.f32 %v5919, %v6053
    %v6070 = vadd.f32 %v5920, %v6054
    %v6071 = vadd.f32 %v5921, %v6055
    %v6072 = vadd.f32 %v5922, %v6056
    %v6073 = vadd.f32 %v5923, %v6057
    %v6074 = vadd.f32 %v5924, %v6058
    %v6075 = vadd.f32 %v5925, %v6059
    %6076 = vset.pattern.permute.xlu0 12
    %6077 = vperm.xlu0 %6076, %v3733
    %v6078 = vpop.permute.xlu0 %6077
    %6080 = vset.pattern.permute.xlu0 12
    %6081 = vperm.xlu0 %6080, %v3738
    %v6082 = vpop.permute.xlu0 %6081
    %6084 = vset.pattern.permute.xlu0 12
    %6085 = vperm.xlu0 %6084, %v3743
    %v6086 = vpop.permute.xlu0 %6085
    %6088 = vset.pattern.permute.xlu0 12
    %6089 = vperm.xlu0 %6088, %v3748
    %v6090 = vpop.permute.xlu0 %6089
    %6092 = vset.pattern.permute.xlu0 12
    %6093 = vperm.xlu0 %6092, %v3753
    %v6094 = vpop.permute.xlu0 %6093
    %6096 = vset.pattern.permute.xlu0 12
    %6097 = vperm.xlu0 %6096, %v3758
    %v6098 = vpop.permute.xlu0 %6097
    %6100 = vset.pattern.permute.xlu0 12
    %6101 = vperm.xlu0 %6100, %v3763
    %v6102 = vpop.permute.xlu0 %6101
    %6104 = vset.pattern.permute.xlu0 12
    %6105 = vperm.xlu0 %6104, %v3768
    %v6106 = vpop.permute.xlu0 %6105
    %6108 = vset.pattern.permute.xlu0 12
    %6109 = vperm.xlu0 %6108, %v3773
    %v6110 = vpop.permute.xlu0 %6109
    %6112 = vset.pattern.permute.xlu0 12
    %6113 = vperm.xlu0 %6112, %v3778
    %v6114 = vpop.permute.xlu0 %6113
    %6116 = vset.pattern.permute.xlu0 12
    %6117 = vperm.xlu0 %6116, %v3783
    %v6118 = vpop.permute.xlu0 %6117
    %6120 = vset.pattern.permute.xlu0 12
    %6121 = vperm.xlu0 %6120, %v3788
    %v6122 = vpop.permute.xlu0 %6121
    %6124 = vset.pattern.permute.xlu0 12
    %6125 = vperm.xlu0 %6124, %v3793
    %v6126 = vpop.permute.xlu0 %6125
    %6128 = vset.pattern.permute.xlu0 12
    %6129 = vperm.xlu0 %6128, %v3798
    %v6130 = vpop.permute.xlu0 %6129
    %6132 = vset.pattern.permute.xlu0 12
    %6133 = vperm.xlu0 %6132, %v3803
    %v6134 = vpop.permute.xlu0 %6133
    %6136 = vset.pattern.permute.xlu0 12
    %6137 = vperm.xlu0 %6136, %v3808
    %v6138 = vpop.permute.xlu0 %6137
    %v6140 = vlaneseq
    %v6141 = vshrl.u32 %v6140, 7
    %v6142 = vsub.s32 4, %v6141
    %v6143 = vrot.slane %v3904, %v6142
    %v6144 = vadd.f32 %v6078, %v6143
    %v6145 = vadd.f32 %v6082, %v6143
    %v6146 = vadd.f32 %v6086, %v6143
    %v6147 = vadd.f32 %v6090, %v6143
    %v6148 = vadd.f32 %v6094, %v6143
    %v6149 = vadd.f32 %v6098, %v6143
    %v6150 = vadd.f32 %v6102, %v6143
    %v6151 = vadd.f32 %v6106, %v6143
    %v6152 = vadd.f32 %v6110, %v6143
    %v6153 = vadd.f32 %v6114, %v6143
    %v6154 = vadd.f32 %v6118, %v6143
    %v6155 = vadd.f32 %v6122, %v6143
    %v6156 = vadd.f32 %v6126, %v6143
    %v6157 = vadd.f32 %v6130, %v6143
    %v6158 = vadd.f32 %v6134, %v6143
    %v6159 = vadd.f32 %v6138, %v6143
    %v6160 = vmul.f32 %v6144, 0.2
    %v6161 = vmul.f32 %v6145, 0.2
    %v6162 = vmul.f32 %v6146, 0.2
    %v6163 = vmul.f32 %v6147, 0.2
    %v6164 = vmul.f32 %v6148, 0.2
    %v6165 = vmul.f32 %v6149, 0.2
    %v6166 = vmul.f32 %v6150, 0.2
    %v6167 = vmul.f32 %v6151, 0.2
    %v6168 = vmul.f32 %v6152, 0.2
    %v6169 = vmul.f32 %v6153, 0.2
    %v6170 = vmul.f32 %v6154, 0.2
    %v6171 = vmul.f32 %v6155, 0.2
    %v6172 = vmul.f32 %v6156, 0.2
    %v6173 = vmul.f32 %v6157, 0.2
    %v6174 = vmul.f32 %v6158, 0.2
    %v6175 = vmul.f32 %v6159, 0.2
    %v6176 = vmax.f32 %v6144, %v6160
    %v6177 = vmax.f32 %v6145, %v6161
    %v6178 = vmax.f32 %v6146, %v6162
    %v6179 = vmax.f32 %v6147, %v6163
    %v6180 = vmax.f32 %v6148, %v6164
    %v6181 = vmax.f32 %v6149, %v6165
    %v6182 = vmax.f32 %v6150, %v6166
    %v6183 = vmax.f32 %v6151, %v6167
    %v6184 = vmax.f32 %v6152, %v6168
    %v6185 = vmax.f32 %v6153, %v6169
    %v6186 = vmax.f32 %v6154, %v6170
    %v6187 = vmax.f32 %v6155, %v6171
    %v6188 = vmax.f32 %v6156, %v6172
    %v6189 = vmax.f32 %v6157, %v6173
    %v6190 = vmax.f32 %v6158, %v6174
    %v6191 = vmax.f32 %v6159, %v6175
    %s6192 = sld [smem:[#allocation4 + $0x84]]
    %v6193 = vstv %s6192
    %v6194 = vmul.f32 %v6193, %v6176
    %v6195 = vmul.f32 %v6193, %v6177
    %v6196 = vmul.f32 %v6193, %v6178
    %v6197 = vmul.f32 %v6193, %v6179
    %v6198 = vmul.f32 %v6193, %v6180
    %v6199 = vmul.f32 %v6193, %v6181
    %v6200 = vmul.f32 %v6193, %v6182
    %v6201 = vmul.f32 %v6193, %v6183
    %v6202 = vmul.f32 %v6193, %v6184
    %v6203 = vmul.f32 %v6193, %v6185
    %v6204 = vmul.f32 %v6193, %v6186
    %v6205 = vmul.f32 %v6193, %v6187
    %v6206 = vmul.f32 %v6193, %v6188
    %v6207 = vmul.f32 %v6193, %v6189
    %v6208 = vmul.f32 %v6193, %v6190
    %v6209 = vmul.f32 %v6193, %v6191
    %v6210 = vadd.f32 %v6060, %v6194
    %v6211 = vadd.f32 %v6061, %v6195
    %v6212 = vadd.f32 %v6062, %v6196
    %v6213 = vadd.f32 %v6063, %v6197
    %v6214 = vadd.f32 %v6064, %v6198
    %v6215 = vadd.f32 %v6065, %v6199
    %v6216 = vadd.f32 %v6066, %v6200
    %v6217 = vadd.f32 %v6067, %v6201
    %v6218 = vadd.f32 %v6068, %v6202
    %v6219 = vadd.f32 %v6069, %v6203
    %v6220 = vadd.f32 %v6070, %v6204
    %v6221 = vadd.f32 %v6071, %v6205
    %v6222 = vadd.f32 %v6072, %v6206
    %v6223 = vadd.f32 %v6073, %v6207
    %v6224 = vadd.f32 %v6074, %v6208
    %v6225 = vadd.f32 %v6075, %v6209
    %6226 = vset.pattern.permute.xlu0 13
    %6227 = vperm.xlu0 %6226, %v3733
    %v6228 = vpop.permute.xlu0 %6227
    %6230 = vset.pattern.permute.xlu0 13
    %6231 = vperm.xlu0 %6230, %v3738
    %v6232 = vpop.permute.xlu0 %6231
    %6234 = vset.pattern.permute.xlu0 13
    %6235 = vperm.xlu0 %6234, %v3743
    %v6236 = vpop.permute.xlu0 %6235
    %6238 = vset.pattern.permute.xlu0 13
    %6239 = vperm.xlu0 %6238, %v3748
    %v6240 = vpop.permute.xlu0 %6239
    %6242 = vset.pattern.permute.xlu0 13
    %6243 = vperm.xlu0 %6242, %v3753
    %v6244 = vpop.permute.xlu0 %6243
    %6246 = vset.pattern.permute.xlu0 13
    %6247 = vperm.xlu0 %6246, %v3758
    %v6248 = vpop.permute.xlu0 %6247
    %6250 = vset.pattern.permute.xlu0 13
    %6251 = vperm.xlu0 %6250, %v3763
    %v6252 = vpop.permute.xlu0 %6251
    %6254 = vset.pattern.permute.xlu0 13
    %6255 = vperm.xlu0 %6254, %v3768
    %v6256 = vpop.permute.xlu0 %6255
    %6258 = vset.pattern.permute.xlu0 13
    %6259 = vperm.xlu0 %6258, %v3773
    %v6260 = vpop.permute.xlu0 %6259
    %6262 = vset.pattern.permute.xlu0 13
    %6263 = vperm.xlu0 %6262, %v3778
    %v6264 = vpop.permute.xlu0 %6263
    %6266 = vset.pattern.permute.xlu0 13
    %6267 = vperm.xlu0 %6266, %v3783
    %v6268 = vpop.permute.xlu0 %6267
    %6270 = vset.pattern.permute.xlu0 13
    %6271 = vperm.xlu0 %6270, %v3788
    %v6272 = vpop.permute.xlu0 %6271
    %6274 = vset.pattern.permute.xlu0 13
    %6275 = vperm.xlu0 %6274, %v3793
    %v6276 = vpop.permute.xlu0 %6275
    %6278 = vset.pattern.permute.xlu0 13
    %6279 = vperm.xlu0 %6278, %v3798
    %v6280 = vpop.permute.xlu0 %6279
    %6282 = vset.pattern.permute.xlu0 13
    %6283 = vperm.xlu0 %6282, %v3803
    %v6284 = vpop.permute.xlu0 %6283
    %6286 = vset.pattern.permute.xlu0 13
    %6287 = vperm.xlu0 %6286, %v3808
    %v6288 = vpop.permute.xlu0 %6287
    %v6290 = vlaneseq
    %v6291 = vshrl.u32 %v6290, 7
    %v6292 = vsub.s32 5, %v6291
    %v6293 = vrot.slane %v3904, %v6292
    %v6294 = vadd.f32 %v6228, %v6293
    %v6295 = vadd.f32 %v6232, %v6293
    %v6296 = vadd.f32 %v6236, %v6293
    %v6297 = vadd.f32 %v6240, %v6293
    %v6298 = vadd.f32 %v6244, %v6293
    %v6299 = vadd.f32 %v6248, %v6293
    %v6300 = vadd.f32 %v6252, %v6293
    %v6301 = vadd.f32 %v6256, %v6293
    %v6302 = vadd.f32 %v6260, %v6293
    %v6303 = vadd.f32 %v6264, %v6293
    %v6304 = vadd.f32 %v6268, %v6293
    %v6305 = vadd.f32 %v6272, %v6293
    %v6306 = vadd.f32 %v6276, %v6293
    %v6307 = vadd.f32 %v6280, %v6293
    %v6308 = vadd.f32 %v6284, %v6293
    %v6309 = vadd.f32 %v6288, %v6293
    %v6310 = vmul.f32 %v6294, 0.2
    %v6311 = vmul.f32 %v6295, 0.2
    %v6312 = vmul.f32 %v6296, 0.2
    %v6313 = vmul.f32 %v6297, 0.2
    %v6314 = vmul.f32 %v6298, 0.2
    %v6315 = vmul.f32 %v6299, 0.2
    %v6316 = vmul.f32 %v6300, 0.2
    %v6317 = vmul.f32 %v6301, 0.2
    %v6318 = vmul.f32 %v6302, 0.2
    %v6319 = vmul.f32 %v6303, 0.2
    %v6320 = vmul.f32 %v6304, 0.2
    %v6321 = vmul.f32 %v6305, 0.2
    %v6322 = vmul.f32 %v6306, 0.2
    %v6323 = vmul.f32 %v6307, 0.2
    %v6324 = vmul.f32 %v6308, 0.2
    %v6325 = vmul.f32 %v6309, 0.2
    %v6326 = vmax.f32 %v6294, %v6310
    %v6327 = vmax.f32 %v6295, %v6311
    %v6328 = vmax.f32 %v6296, %v6312
    %v6329 = vmax.f32 %v6297, %v6313
    %v6330 = vmax.f32 %v6298, %v6314
    %v6331 = vmax.f32 %v6299, %v6315
    %v6332 = vmax.f32 %v6300, %v6316
    %v6333 = vmax.f32 %v6301, %v6317
    %v6334 = vmax.f32 %v6302, %v6318
    %v6335 = vmax.f32 %v6303, %v6319
    %v6336 = vmax.f32 %v6304, %v6320
    %v6337 = vmax.f32 %v6305, %v6321
    %v6338 = vmax.f32 %v6306, %v6322
    %v6339 = vmax.f32 %v6307, %v6323
    %v6340 = vmax.f32 %v6308, %v6324
    %v6341 = vmax.f32 %v6309, %v6325
    %s6342 = sld [smem:[#allocation4 + $0x85]]
    %v6343 = vstv %s6342
    %v6344 = vmul.f32 %v6343, %v6326
    %v6345 = vmul.f32 %v6343, %v6327
    %v6346 = vmul.f32 %v6343, %v6328
    %v6347 = vmul.f32 %v6343, %v6329
    %v6348 = vmul.f32 %v6343, %v6330
    %v6349 = vmul.f32 %v6343, %v6331
    %v6350 = vmul.f32 %v6343, %v6332
    %v6351 = vmul.f32 %v6343, %v6333
    %v6352 = vmul.f32 %v6343, %v6334
    %v6353 = vmul.f32 %v6343, %v6335
    %v6354 = vmul.f32 %v6343, %v6336
    %v6355 = vmul.f32 %v6343, %v6337
    %v6356 = vmul.f32 %v6343, %v6338
    %v6357 = vmul.f32 %v6343, %v6339
    %v6358 = vmul.f32 %v6343, %v6340
    %v6359 = vmul.f32 %v6343, %v6341
    %v6360 = vadd.f32 %v6210, %v6344
    %v6361 = vadd.f32 %v6211, %v6345
    %v6362 = vadd.f32 %v6212, %v6346
    %v6363 = vadd.f32 %v6213, %v6347
    %v6364 = vadd.f32 %v6214, %v6348
    %v6365 = vadd.f32 %v6215, %v6349
    %v6366 = vadd.f32 %v6216, %v6350
    %v6367 = vadd.f32 %v6217, %v6351
    %v6368 = vadd.f32 %v6218, %v6352
    %v6369 = vadd.f32 %v6219, %v6353
    %v6370 = vadd.f32 %v6220, %v6354
    %v6371 = vadd.f32 %v6221, %v6355
    %v6372 = vadd.f32 %v6222, %v6356
    %v6373 = vadd.f32 %v6223, %v6357
    %v6374 = vadd.f32 %v6224, %v6358
    %v6375 = vadd.f32 %v6225, %v6359
    %6376 = vset.pattern.permute.xlu0 14
    %6377 = vperm.xlu0 %6376, %v3733
    %v6378 = vpop.permute.xlu0 %6377
    %6380 = vset.pattern.permute.xlu0 14
    %6381 = vperm.xlu0 %6380, %v3738
    %v6382 = vpop.permute.xlu0 %6381
    %6384 = vset.pattern.permute.xlu0 14
    %6385 = vperm.xlu0 %6384, %v3743
    %v6386 = vpop.permute.xlu0 %6385
    %6388 = vset.pattern.permute.xlu0 14
    %6389 = vperm.xlu0 %6388, %v3748
    %v6390 = vpop.permute.xlu0 %6389
    %6392 = vset.pattern.permute.xlu0 14
    %6393 = vperm.xlu0 %6392, %v3753
    %v6394 = vpop.permute.xlu0 %6393
    %6396 = vset.pattern.permute.xlu0 14
    %6397 = vperm.xlu0 %6396, %v3758
    %v6398 = vpop.permute.xlu0 %6397
    %6400 = vset.pattern.permute.xlu0 14
    %6401 = vperm.xlu0 %6400, %v3763
    %v6402 = vpop.permute.xlu0 %6401
    %6404 = vset.pattern.permute.xlu0 14
    %6405 = vperm.xlu0 %6404, %v3768
    %v6406 = vpop.permute.xlu0 %6405
    %6408 = vset.pattern.permute.xlu0 14
    %6409 = vperm.xlu0 %6408, %v3773
    %v6410 = vpop.permute.xlu0 %6409
    %6412 = vset.pattern.permute.xlu0 14
    %6413 = vperm.xlu0 %6412, %v3778
    %v6414 = vpop.permute.xlu0 %6413
    %6416 = vset.pattern.permute.xlu0 14
    %6417 = vperm.xlu0 %6416, %v3783
    %v6418 = vpop.permute.xlu0 %6417
    %6420 = vset.pattern.permute.xlu0 14
    %6421 = vperm.xlu0 %6420, %v3788
    %v6422 = vpop.permute.xlu0 %6421
    %6424 = vset.pattern.permute.xlu0 14
    %6425 = vperm.xlu0 %6424, %v3793
    %v6426 = vpop.permute.xlu0 %6425
    %6428 = vset.pattern.permute.xlu0 14
    %6429 = vperm.xlu0 %6428, %v3798
    %v6430 = vpop.permute.xlu0 %6429
    %6432 = vset.pattern.permute.xlu0 14
    %6433 = vperm.xlu0 %6432, %v3803
    %v6434 = vpop.permute.xlu0 %6433
    %6436 = vset.pattern.permute.xlu0 14
    %6437 = vperm.xlu0 %6436, %v3808
    %v6438 = vpop.permute.xlu0 %6437
    %v6440 = vlaneseq
    %v6441 = vshrl.u32 %v6440, 7
    %v6442 = vsub.s32 6, %v6441
    %v6443 = vrot.slane %v3904, %v6442
    %v6444 = vadd.f32 %v6378, %v6443
    %v6445 = vadd.f32 %v6382, %v6443
    %v6446 = vadd.f32 %v6386, %v6443
    %v6447 = vadd.f32 %v6390, %v6443
    %v6448 = vadd.f32 %v6394, %v6443
    %v6449 = vadd.f32 %v6398, %v6443
    %v6450 = vadd.f32 %v6402, %v6443
    %v6451 = vadd.f32 %v6406, %v6443
    %v6452 = vadd.f32 %v6410, %v6443
    %v6453 = vadd.f32 %v6414, %v6443
    %v6454 = vadd.f32 %v6418, %v6443
    %v6455 = vadd.f32 %v6422, %v6443
    %v6456 = vadd.f32 %v6426, %v6443
    %v6457 = vadd.f32 %v6430, %v6443
    %v6458 = vadd.f32 %v6434, %v6443
    %v6459 = vadd.f32 %v6438, %v6443
    %v6460 = vmul.f32 %v6444, 0.2
    %v6461 = vmul.f32 %v6445, 0.2
    %v6462 = vmul.f32 %v6446, 0.2
    %v6463 = vmul.f32 %v6447, 0.2
    %v6464 = vmul.f32 %v6448, 0.2
    %v6465 = vmul.f32 %v6449, 0.2
    %v6466 = vmul.f32 %v6450, 0.2
    %v6467 = vmul.f32 %v6451, 0.2
    %v6468 = vmul.f32 %v6452, 0.2
    %v6469 = vmul.f32 %v6453, 0.2
    %v6470 = vmul.f32 %v6454, 0.2
    %v6471 = vmul.f32 %v6455, 0.2
    %v6472 = vmul.f32 %v6456, 0.2
    %v6473 = vmul.f32 %v6457, 0.2
    %v6474 = vmul.f32 %v6458, 0.2
    %v6475 = vmul.f32 %v6459, 0.2
    %v6476 = vmax.f32 %v6444, %v6460
    %v6477 = vmax.f32 %v6445, %v6461
    %v6478 = vmax.f32 %v6446, %v6462
    %v6479 = vmax.f32 %v6447, %v6463
    %v6480 = vmax.f32 %v6448, %v6464
    %v6481 = vmax.f32 %v6449, %v6465
    %v6482 = vmax.f32 %v6450, %v6466
    %v6483 = vmax.f32 %v6451, %v6467
    %v6484 = vmax.f32 %v6452, %v6468
    %v6485 = vmax.f32 %v6453, %v6469
    %v6486 = vmax.f32 %v6454, %v6470
    %v6487 = vmax.f32 %v6455, %v6471
    %v6488 = vmax.f32 %v6456, %v6472
    %v6489 = vmax.f32 %v6457, %v6473
    %v6490 = vmax.f32 %v6458, %v6474
    %v6491 = vmax.f32 %v6459, %v6475
    %s6492 = sld [smem:[#allocation4 + $0x86]]
    %v6493 = vstv %s6492
    %v6494 = vmul.f32 %v6493, %v6476
    %v6495 = vmul.f32 %v6493, %v6477
    %v6496 = vmul.f32 %v6493, %v6478
    %v6497 = vmul.f32 %v6493, %v6479
    %v6498 = vmul.f32 %v6493, %v6480
    %v6499 = vmul.f32 %v6493, %v6481
    %v6500 = vmul.f32 %v6493, %v6482
    %v6501 = vmul.f32 %v6493, %v6483
    %v6502 = vmul.f32 %v6493, %v6484
    %v6503 = vmul.f32 %v6493, %v6485
    %v6504 = vmul.f32 %v6493, %v6486
    %v6505 = vmul.f32 %v6493, %v6487
    %v6506 = vmul.f32 %v6493, %v6488
    %v6507 = vmul.f32 %v6493, %v6489
    %v6508 = vmul.f32 %v6493, %v6490
    %v6509 = vmul.f32 %v6493, %v6491
    %v6510 = vadd.f32 %v6360, %v6494
    %v6511 = vadd.f32 %v6361, %v6495
    %v6512 = vadd.f32 %v6362, %v6496
    %v6513 = vadd.f32 %v6363, %v6497
    %v6514 = vadd.f32 %v6364, %v6498
    %v6515 = vadd.f32 %v6365, %v6499
    %v6516 = vadd.f32 %v6366, %v6500
    %v6517 = vadd.f32 %v6367, %v6501
    %v6518 = vadd.f32 %v6368, %v6502
    %v6519 = vadd.f32 %v6369, %v6503
    %v6520 = vadd.f32 %v6370, %v6504
    %v6521 = vadd.f32 %v6371, %v6505
    %v6522 = vadd.f32 %v6372, %v6506
    %v6523 = vadd.f32 %v6373, %v6507
    %v6524 = vadd.f32 %v6374, %v6508
    %v6525 = vadd.f32 %v6375, %v6509
    %6526 = vset.pattern.permute.xlu0 15
    %6527 = vperm.xlu0 %6526, %v3733
    %v6528 = vpop.permute.xlu0 %6527
    %6530 = vset.pattern.permute.xlu0 15
    %6531 = vperm.xlu0 %6530, %v3738
    %v6532 = vpop.permute.xlu0 %6531
    %6534 = vset.pattern.permute.xlu0 15
    %6535 = vperm.xlu0 %6534, %v3743
    %v6536 = vpop.permute.xlu0 %6535
    %6538 = vset.pattern.permute.xlu0 15
    %6539 = vperm.xlu0 %6538, %v3748
    %v6540 = vpop.permute.xlu0 %6539
    %6542 = vset.pattern.permute.xlu0 15
    %6543 = vperm.xlu0 %6542, %v3753
    %v6544 = vpop.permute.xlu0 %6543
    %6546 = vset.pattern.permute.xlu0 15
    %6547 = vperm.xlu0 %6546, %v3758
    %v6548 = vpop.permute.xlu0 %6547
    %6550 = vset.pattern.permute.xlu0 15
    %6551 = vperm.xlu0 %6550, %v3763
    %v6552 = vpop.permute.xlu0 %6551
    %6554 = vset.pattern.permute.xlu0 15
    %6555 = vperm.xlu0 %6554, %v3768
    %v6556 = vpop.permute.xlu0 %6555
    %6558 = vset.pattern.permute.xlu0 15
    %6559 = vperm.xlu0 %6558, %v3773
    %v6560 = vpop.permute.xlu0 %6559
    %6562 = vset.pattern.permute.xlu0 15
    %6563 = vperm.xlu0 %6562, %v3778
    %v6564 = vpop.permute.xlu0 %6563
    %6566 = vset.pattern.permute.xlu0 15
    %6567 = vperm.xlu0 %6566, %v3783
    %v6568 = vpop.permute.xlu0 %6567
    %6570 = vset.pattern.permute.xlu0 15
    %6571 = vperm.xlu0 %6570, %v3788
    %v6572 = vpop.permute.xlu0 %6571
    %6574 = vset.pattern.permute.xlu0 15
    %6575 = vperm.xlu0 %6574, %v3793
    %v6576 = vpop.permute.xlu0 %6575
    %6578 = vset.pattern.permute.xlu0 15
    %6579 = vperm.xlu0 %6578, %v3798
    %v6580 = vpop.permute.xlu0 %6579
    %6582 = vset.pattern.permute.xlu0 15
    %6583 = vperm.xlu0 %6582, %v3803
    %v6584 = vpop.permute.xlu0 %6583
    %6586 = vset.pattern.permute.xlu0 15
    %6587 = vperm.xlu0 %6586, %v3808
    %v6588 = vpop.permute.xlu0 %6587
    %v6590 = vlaneseq
    %v6591 = vshrl.u32 %v6590, 7
    %v6592 = vsub.s32 7, %v6591
    %v6593 = vrot.slane %v3904, %v6592
    %v6594 = vadd.f32 %v6528, %v6593
    %v6595 = vadd.f32 %v6532, %v6593
    %v6596 = vadd.f32 %v6536, %v6593
    %v6597 = vadd.f32 %v6540, %v6593
    %v6598 = vadd.f32 %v6544, %v6593
    %v6599 = vadd.f32 %v6548, %v6593
    %v6600 = vadd.f32 %v6552, %v6593
    %v6601 = vadd.f32 %v6556, %v6593
    %v6602 = vadd.f32 %v6560, %v6593
    %v6603 = vadd.f32 %v6564, %v6593
    %v6604 = vadd.f32 %v6568, %v6593
    %v6605 = vadd.f32 %v6572, %v6593
    %v6606 = vadd.f32 %v6576, %v6593
    %v6607 = vadd.f32 %v6580, %v6593
    %v6608 = vadd.f32 %v6584, %v6593
    %v6609 = vadd.f32 %v6588, %v6593
    %v6610 = vmul.f32 %v6594, 0.2
    %v6611 = vmul.f32 %v6595, 0.2
    %v6612 = vmul.f32 %v6596, 0.2
    %v6613 = vmul.f32 %v6597, 0.2
    %v6614 = vmul.f32 %v6598, 0.2
    %v6615 = vmul.f32 %v6599, 0.2
    %v6616 = vmul.f32 %v6600, 0.2
    %v6617 = vmul.f32 %v6601, 0.2
    %v6618 = vmul.f32 %v6602, 0.2
    %v6619 = vmul.f32 %v6603, 0.2
    %v6620 = vmul.f32 %v6604, 0.2
    %v6621 = vmul.f32 %v6605, 0.2
    %v6622 = vmul.f32 %v6606, 0.2
    %v6623 = vmul.f32 %v6607, 0.2
    %v6624 = vmul.f32 %v6608, 0.2
    %v6625 = vmul.f32 %v6609, 0.2
    %v6626 = vmax.f32 %v6594, %v6610
    %v6627 = vmax.f32 %v6595, %v6611
    %v6628 = vmax.f32 %v6596, %v6612
    %v6629 = vmax.f32 %v6597, %v6613
    %v6630 = vmax.f32 %v6598, %v6614
    %v6631 = vmax.f32 %v6599, %v6615
    %v6632 = vmax.f32 %v6600, %v6616
    %v6633 = vmax.f32 %v6601, %v6617
    %v6634 = vmax.f32 %v6602, %v6618
    %v6635 = vmax.f32 %v6603, %v6619
    %v6636 = vmax.f32 %v6604, %v6620
    %v6637 = vmax.f32 %v6605, %v6621
    %v6638 = vmax.f32 %v6606, %v6622
    %v6639 = vmax.f32 %v6607, %v6623
    %v6640 = vmax.f32 %v6608, %v6624
    %v6641 = vmax.f32 %v6609, %v6625
    %s6642 = sld [smem:[#allocation4 + $0x87]]
    %v6643 = vstv %s6642
    %v6644 = vmul.f32 %v6643, %v6626
    %v6645 = vmul.f32 %v6643, %v6627
    %v6646 = vmul.f32 %v6643, %v6628
    %v6647 = vmul.f32 %v6643, %v6629
    %v6648 = vmul.f32 %v6643, %v6630
    %v6649 = vmul.f32 %v6643, %v6631
    %v6650 = vmul.f32 %v6643, %v6632
    %v6651 = vmul.f32 %v6643, %v6633
    %v6652 = vmul.f32 %v6643, %v6634
    %v6653 = vmul.f32 %v6643, %v6635
    %v6654 = vmul.f32 %v6643, %v6636
    %v6655 = vmul.f32 %v6643, %v6637
    %v6656 = vmul.f32 %v6643, %v6638
    %v6657 = vmul.f32 %v6643, %v6639
    %v6658 = vmul.f32 %v6643, %v6640
    %v6659 = vmul.f32 %v6643, %v6641
    %v6660 = vadd.f32 %v6510, %v6644
    %v6661 = vadd.f32 %v6511, %v6645
    %v6662 = vadd.f32 %v6512, %v6646
    %v6663 = vadd.f32 %v6513, %v6647
    %v6664 = vadd.f32 %v6514, %v6648
    %v6665 = vadd.f32 %v6515, %v6649
    %v6666 = vadd.f32 %v6516, %v6650
    %v6667 = vadd.f32 %v6517, %v6651
    %v6668 = vadd.f32 %v6518, %v6652
    %v6669 = vadd.f32 %v6519, %v6653
    %v6670 = vadd.f32 %v6520, %v6654
    %v6671 = vadd.f32 %v6521, %v6655
    %v6672 = vadd.f32 %v6522, %v6656
    %v6673 = vadd.f32 %v6523, %v6657
    %v6674 = vadd.f32 %v6524, %v6658
    %v6675 = vadd.f32 %v6525, %v6659
    %v6676 = vsel %vm5171, %v6660, -1e+30
    %v6677 = vsel %vm5172, %v6661, -1e+30
    %v6678 = vsel %vm5173, %v6662, -1e+30
    %v6679 = vsel %vm5174, %v6663, -1e+30
    %v6680 = vsel %vm5175, %v6664, -1e+30
    %v6681 = vsel %vm5176, %v6665, -1e+30
    %v6682 = vsel %vm5177, %v6666, -1e+30
    %v6683 = vsel %vm5178, %v6667, -1e+30
    %v6684 = vsel %vm5179, %v6668, -1e+30
    %v6685 = vsel %vm5180, %v6669, -1e+30
    %v6686 = vsel %vm5181, %v6670, -1e+30
    %v6687 = vsel %vm5182, %v6671, -1e+30
    %v6688 = vsel %vm5183, %v6672, -1e+30
    %v6689 = vsel %vm5184, %v6673, -1e+30
    %v6690 = vsel %vm5185, %v6674, -1e+30
    %v6691 = vsel %vm5186, %v6675, -1e+30
    %6692 = vmax.xlane.f32.xlu0 %v6676
    %v6693 = vpop.xlane.xlu0 %6692
    %6694 = vmax.xlane.f32.xlu0 %v6677
    %v6695 = vpop.xlane.xlu0 %6694
    %6696 = vmax.xlane.f32.xlu0 %v6678
    %v6697 = vpop.xlane.xlu0 %6696
    %6698 = vmax.xlane.f32.xlu0 %v6679
    %v6699 = vpop.xlane.xlu0 %6698
    %6700 = vmax.xlane.f32.xlu0 %v6680
    %v6701 = vpop.xlane.xlu0 %6700
    %6702 = vmax.xlane.f32.xlu0 %v6681
    %v6703 = vpop.xlane.xlu0 %6702
    %6704 = vmax.xlane.f32.xlu0 %v6682
    %v6705 = vpop.xlane.xlu0 %6704
    %6706 = vmax.xlane.f32.xlu0 %v6683
    %v6707 = vpop.xlane.xlu0 %6706
    %6708 = vmax.xlane.f32.xlu0 %v6684
    %v6709 = vpop.xlane.xlu0 %6708
    %6710 = vmax.xlane.f32.xlu0 %v6685
    %v6711 = vpop.xlane.xlu0 %6710
    %6712 = vmax.xlane.f32.xlu0 %v6686
    %v6713 = vpop.xlane.xlu0 %6712
    %6714 = vmax.xlane.f32.xlu0 %v6687
    %v6715 = vpop.xlane.xlu0 %6714
    %6716 = vmax.xlane.f32.xlu0 %v6688
    %v6717 = vpop.xlane.xlu0 %6716
    %6718 = vmax.xlane.f32.xlu0 %v6689
    %v6719 = vpop.xlane.xlu0 %6718
    %6720 = vmax.xlane.f32.xlu0 %v6690
    %v6721 = vpop.xlane.xlu0 %6720
    %6722 = vmax.xlane.f32.xlu0 %v6691
    %v6723 = vpop.xlane.xlu0 %6722
    %v6724 = vsub.f32 %v6676, %v6693
    %v6725 = vsub.f32 %v6677, %v6695
    %v6726 = vsub.f32 %v6678, %v6697
    %v6727 = vsub.f32 %v6679, %v6699
    %v6728 = vsub.f32 %v6680, %v6701
    %v6729 = vsub.f32 %v6681, %v6703
    %v6730 = vsub.f32 %v6682, %v6705
    %v6731 = vsub.f32 %v6683, %v6707
    %v6732 = vsub.f32 %v6684, %v6709
    %v6733 = vsub.f32 %v6685, %v6711
    %v6734 = vsub.f32 %v6686, %v6713
    %v6735 = vsub.f32 %v6687, %v6715
    %v6736 = vsub.f32 %v6688, %v6717
    %v6737 = vsub.f32 %v6689, %v6719
    %v6738 = vsub.f32 %v6690, %v6721
    %v6739 = vsub.f32 %v6691, %v6723
    %v6740 = vmul.f32 %v6724, 1.442695
    %v6741 = vpow.pop %v6740
    %v6742 = vmul.f32 %v6725, 1.442695
    %v6743 = vpow.pop %v6742
    %v6744 = vmul.f32 %v6726, 1.442695
    %v6745 = vpow.pop %v6744
    %v6746 = vmul.f32 %v6727, 1.442695
    %v6747 = vpow.pop %v6746
    %v6748 = vmul.f32 %v6728, 1.442695
    %v6749 = vpow.pop %v6748
    %v6750 = vmul.f32 %v6729, 1.442695
    %v6751 = vpow.pop %v6750
    %v6752 = vmul.f32 %v6730, 1.442695
    %v6753 = vpow.pop %v6752
    %v6754 = vmul.f32 %v6731, 1.442695
    %v6755 = vpow.pop %v6754
    %v6756 = vmul.f32 %v6732, 1.442695
    %v6757 = vpow.pop %v6756
    %v6758 = vmul.f32 %v6733, 1.442695
    %v6759 = vpow.pop %v6758
    %v6760 = vmul.f32 %v6734, 1.442695
    %v6761 = vpow.pop %v6760
    %v6762 = vmul.f32 %v6735, 1.442695
    %v6763 = vpow.pop %v6762
    %v6764 = vmul.f32 %v6736, 1.442695
    %v6765 = vpow.pop %v6764
    %v6766 = vmul.f32 %v6737, 1.442695
    %v6767 = vpow.pop %v6766
    %v6768 = vmul.f32 %v6738, 1.442695
    %v6769 = vpow.pop %v6768
    %v6770 = vmul.f32 %v6739, 1.442695
    %v6771 = vpow.pop %v6770
    %6772 = vadd.xlane.f32.xlu0 %v6741
    %v6773 = vpop.xlane.xlu0 %6772
    %6774 = vadd.xlane.f32.xlu0 %v6743
    %v6775 = vpop.xlane.xlu0 %6774
    %6776 = vadd.xlane.f32.xlu0 %v6745
    %v6777 = vpop.xlane.xlu0 %6776
    %6778 = vadd.xlane.f32.xlu0 %v6747
    %v6779 = vpop.xlane.xlu0 %6778
    %6780 = vadd.xlane.f32.xlu0 %v6749
    %v6781 = vpop.xlane.xlu0 %6780
    %6782 = vadd.xlane.f32.xlu0 %v6751
    %v6783 = vpop.xlane.xlu0 %6782
    %6784 = vadd.xlane.f32.xlu0 %v6753
    %v6785 = vpop.xlane.xlu0 %6784
    %6786 = vadd.xlane.f32.xlu0 %v6755
    %v6787 = vpop.xlane.xlu0 %6786
    %6788 = vadd.xlane.f32.xlu0 %v6757
    %v6789 = vpop.xlane.xlu0 %6788
    %6790 = vadd.xlane.f32.xlu0 %v6759
    %v6791 = vpop.xlane.xlu0 %6790
    %6792 = vadd.xlane.f32.xlu0 %v6761
    %v6793 = vpop.xlane.xlu0 %6792
    %6794 = vadd.xlane.f32.xlu0 %v6763
    %v6795 = vpop.xlane.xlu0 %6794
    %6796 = vadd.xlane.f32.xlu0 %v6765
    %v6797 = vpop.xlane.xlu0 %6796
    %6798 = vadd.xlane.f32.xlu0 %v6767
    %v6799 = vpop.xlane.xlu0 %6798
    %6800 = vadd.xlane.f32.xlu0 %v6769
    %v6801 = vpop.xlane.xlu0 %6800
    %6802 = vadd.xlane.f32.xlu0 %v6771
    %v6803 = vpop.xlane.xlu0 %6802
    %6804 = vmatprep.subr.mxu0 0.0
    %6805 = vmatpush1.xpose.msra.mxu0 %v3904
    %6806 = vmatprep.subr.mxu0 0.0
    %6807 = vmatpush1.xpose.msra.mxu0 0.0
    %6808 = vmatprep.subr.mxu0 0.0
    %6809 = vmatpush1.xpose.msra.mxu0 0.0
    %6810 = vmatprep.subr.mxu0 0.0
    %6811 = vmatpush1.xpose.msra.mxu0 0.0
    %6812 = vmatprep.subr.mxu0 0.0
    %6813 = vmatpush1.xpose.msra.mxu0 0.0
    %6814 = vmatprep.subr.mxu0 0.0
    %6815 = vmatpush1.xpose.msra.mxu0 0.0
    %6816 = vmatprep.subr.mxu0 0.0
    %6817 = vmatpush1.xpose.msra.mxu0 0.0
    %6818 = vmatprep.subr.mxu0 0.0
    %6819 = vmatpush1.xpose.msra.mxu0 0.0
    %6820 = vmatprep.subr.mxu0 0.0
    %6821 = vmatpush1.xpose.msra.mxu0 0.0
    %6822 = vmatprep.subr.mxu0 0.0
    %6823 = vmatpush1.xpose.msra.mxu0 0.0
    %6824 = vmatprep.subr.mxu0 0.0
    %6825 = vmatpush1.xpose.msra.mxu0 0.0
    %6826 = vmatprep.subr.mxu0 0.0
    %6827 = vmatpush1.xpose.msra.mxu0 0.0
    %6828 = vmatprep.subr.mxu0 0.0
    %6829 = vmatpush1.xpose.msra.mxu0 0.0
    %6830 = vmatprep.subr.mxu0 0.0
    %6831 = vmatpush1.xpose.msra.mxu0 0.0
    %6832 = vmatprep.subr.mxu0 0.0
    %6833 = vmatpush1.xpose.msra.mxu0 0.0
    %6834 = vmatprep.subr.mxu0 0.0
    %6835 = vmatpush1.xpose.msra.mxu0 0.0
    %6836 = vmatprep.subr.mxu0 0.0
    %6837 = vmatpush1.xpose.msra.mxu0 0.0
    %6838 = vmatprep.subr.mxu0 0.0
    %6839 = vmatpush1.xpose.msra.mxu0 0.0
    %6840 = vmatprep.subr.mxu0 0.0
    %6841 = vmatpush1.xpose.msra.mxu0 0.0
    %6842 = vmatprep.subr.mxu0 0.0
    %6843 = vmatpush1.xpose.msra.mxu0 0.0
    %6844 = vmatprep.subr.mxu0 0.0
    %6845 = vmatpush1.xpose.msra.mxu0 0.0
    %6846 = vmatprep.subr.mxu0 0.0
    %6847 = vmatpush1.xpose.msra.mxu0 0.0
    %6848 = vmatprep.subr.mxu0 0.0
    %6849 = vmatpush1.xpose.msra.mxu0 0.0
    %6850 = vmatprep.subr.mxu0 0.0
    %6851 = vmatpush1.xpose.msra.mxu0 0.0
    %6852 = vmatprep.subr.mxu0 0.0
    %6853 = vmatpush1.xpose.msra.mxu0 0.0
    %6854 = vmatprep.subr.mxu0 0.0
    %6855 = vmatpush1.xpose.msra.mxu0 0.0
    %6856 = vmatprep.subr.mxu0 0.0
    %6857 = vmatpush1.xpose.msra.mxu0 0.0
    %6858 = vmatprep.subr.mxu0 0.0
    %6859 = vmatpush1.xpose.msra.mxu0 0.0
    %6860 = vmatprep.subr.mxu0 0.0
    %6861 = vmatpush1.xpose.msra.mxu0 0.0
    %6862 = vmatprep.subr.mxu0 0.0
    %6863 = vmatpush1.xpose.msra.mxu0 0.0
    %6864 = vmatprep.subr.mxu0 0.0
    %6865 = vmatpush1.xpose.msra.mxu0 0.0
    %6866 = vmatprep.subr.mxu0 0.0
    %6867 = vmatpush1.xpose.msra.mxu0 0.0
    %6868 = vmatprep.mubr.f32.mxu0 0.0
    %6869 = vmatmul.mubr.f32.gmra.mrb[0].mxu0 %v6741
    %v6870 = vpop.f32.mrb[0].mxu0
    %v6871 = vadd.f32 0.0, %v6870
    %v6872 = vpop.f32.mrb[0].mxu0
    %6873 = vmatprep.mubr.f32.mxu0 0.0
    %6874 = vmatmul.mubr.f32.gmra.mrb[0].mxu0 %v6743
    %v6875 = vpop.f32.mrb[0].mxu0
    %v6876 = vadd.f32 0.0, %v6875
    %v6877 = vpop.f32.mrb[0].mxu0
    %6878 = vmatprep.mubr.f32.mxu0 0.0
    %6879 = vmatmul.mubr.f32.gmra.mrb[0].mxu0 %v6745
    %v6880 = vpop.f32.mrb[0].mxu0
    %v6881 = vadd.f32 0.0, %v6880
    %v6882 = vpop.f32.mrb[0].mxu0
    %6883 = vmatprep.mubr.f32.mxu0 0.0
    %6884 = vmatmul.mubr.f32.gmra.mrb[0].mxu0 %v6747
    %v6885 = vpop.f32.mrb[0].mxu0
    %v6886 = vadd.f32 0.0, %v6885
    %v6887 = vpop.f32.mrb[0].mxu0
    %6888 = vmatprep.mubr.f32.mxu0 0.0
    %6889 = vmatmul.mubr.f32.gmra.mrb[0].mxu0 %v6749
    %v6890 = vpop.f32.mrb[0].mxu0
    %v6891 = vadd.f32 0.0, %v6890
    %v6892 = vpop.f32.mrb[0].mxu0
    %6893 = vmatprep.mubr.f32.mxu0 0.0
    %6894 = vmatmul.mubr.f32.gmra.mrb[0].mxu0 %v6751
    %v6895 = vpop.f32.mrb[0].mxu0
    %v6896 = vadd.f32 0.0, %v6895
    %v6897 = vpop.f32.mrb[0].mxu0
    %6898 = vmatprep.mubr.f32.mxu0 0.0
    %6899 = vmatmul.mubr.f32.gmra.mrb[0].mxu0 %v6753
    %v6900 = vpop.f32.mrb[0].mxu0
    %v6901 = vadd.f32 0.0, %v6900
    %v6902 = vpop.f32.mrb[0].mxu0
    %6903 = vmatprep.mubr.f32.mxu0 0.0
    %6904 = vmatmul.mubr.f32.gmra.mrb[0].mxu0 %v6755
    %v6905 = vpop.f32.mrb[0].mxu0
    %v6906 = vadd.f32 0.0, %v6905
    %v6907 = vpop.f32.mrb[0].mxu0
    %6908 = vmatprep.mubr.f32.mxu0 0.0
    %6909 = vmatmul.mubr.f32.gmra.mrb[0].mxu0 %v6757
    %v6910 = vpop.f32.mrb[0].mxu0
    %v6911 = vadd.f32 0.0, %v6910
    %v6912 = vpop.f32.mrb[0].mxu0
    %6913 = vmatprep.mubr.f32.mxu0 0.0
    %6914 = vmatmul.mubr.f32.gmra.mrb[0].mxu0 %v6759
    %v6915 = vpop.f32.mrb[0].mxu0
    %v6916 = vadd.f32 0.0, %v6915
    %v6917 = vpop.f32.mrb[0].mxu0
    %6918 = vmatprep.mubr.f32.mxu0 0.0
    %6919 = vmatmul.mubr.f32.gmra.mrb[0].mxu0 %v6761
    %v6920 = vpop.f32.mrb[0].mxu0
    %v6921 = vadd.f32 0.0, %v6920
    %v6922 = vpop.f32.mrb[0].mxu0
    %6923 = vmatprep.mubr.f32.mxu0 0.0
    %6924 = vmatmul.mubr.f32.gmra.mrb[0].mxu0 %v6763
    %v6925 = vpop.f32.mrb[0].mxu0
    %v6926 = vadd.f32 0.0, %v6925
    %v6927 = vpop.f32.mrb[0].mxu0
    %6928 = vmatprep.mubr.f32.mxu0 0.0
    %6929 = vmatmul.mubr.f32.gmra.mrb[0].mxu0 %v6765
    %v6930 = vpop.f32.mrb[0].mxu0
    %v6931 = vadd.f32 0.0, %v6930
    %v6932 = vpop.f32.mrb[0].mxu0
    %6933 = vmatprep.mubr.f32.mxu0 0.0
    %6934 = vmatmul.mubr.f32.gmra.mrb[0].mxu0 %v6767
    %v6935 = vpop.f32.mrb[0].mxu0
    %v6936 = vadd.f32 0.0, %v6935
    %v6937 = vpop.f32.mrb[0].mxu0
    %6938 = vmatprep.mubr.f32.mxu0 0.0
    %6939 = vmatmul.mubr.f32.gmra.mrb[0].mxu0 %v6769
    %v6940 = vpop.f32.mrb[0].mxu0
    %v6941 = vadd.f32 0.0, %v6940
    %v6942 = vpop.f32.mrb[0].mxu0
    %6943 = vmatprep.mubr.f32.mxu0 0.0
    %6944 = vmatmul.mubr.f32.gmra.mrb[0].mxu0 %v6771
    %v6945 = vpop.f32.mrb[0].mxu0
    %v6946 = vadd.f32 0.0, %v6945
    %v6947 = vpop.f32.mrb[0].mxu0
    %6948 = vdwg.mxu0
    %v6949 = vrcp.pop %v6773
    %v6950 = vrcp.pop %v6775
    %v6951 = vrcp.pop %v6777
    %v6952 = vrcp.pop %v6779
    %v6953 = vrcp.pop %v6781
    %v6954 = vrcp.pop %v6783
    %v6955 = vrcp.pop %v6785
    %v6956 = vrcp.pop %v6787
    %v6957 = vrcp.pop %v6789
    %v6958 = vrcp.pop %v6791
    %v6959 = vrcp.pop %v6793
    %v6960 = vrcp.pop %v6795
    %v6961 = vrcp.pop %v6797
    %v6962 = vrcp.pop %v6799
    %v6963 = vrcp.pop %v6801
    %v6964 = vrcp.pop %v6803
    %v6965 = vmul.f32 %v6871, %v6949
    %v6966 = vmul.f32 %v6876, %v6950
    %v6967 = vmul.f32 %v6881, %v6951
    %v6968 = vmul.f32 %v6886, %v6952
    %v6969 = vmul.f32 %v6891, %v6953
    %v6970 = vmul.f32 %v6896, %v6954
    %v6971 = vmul.f32 %v6901, %v6955
    %v6972 = vmul.f32 %v6906, %v6956
    %v6973 = vmul.f32 %v6911, %v6957
    %v6974 = vmul.f32 %v6916, %v6958
    %v6975 = vmul.f32 %v6921, %v6959
    %v6976 = vmul.f32 %v6926, %v6960
    %v6977 = vmul.f32 %v6931, %v6961
    %v6978 = vmul.f32 %v6936, %v6962
    %v6979 = vmul.f32 %v6941, %v6963
    %v6980 = vmul.f32 %v6946, %v6964
    %6997 = vrot.lane.b32.xlu0 %v6965, 8
    %v6998 = vpop.permute.xlu0 %6997
    %6999 = vrot.lane.b32.xlu0 %v6966, 8
    %v7000 = vpop.permute.xlu0 %6999
    %7001 = vrot.lane.b32.xlu0 %v6967, 8
    %v7002 = vpop.permute.xlu0 %7001
    %7003 = vrot.lane.b32.xlu0 %v6968, 8
    %v7004 = vpop.permute.xlu0 %7003
    %7005 = vrot.lane.b32.xlu0 %v6969, 8
    %v7006 = vpop.permute.xlu0 %7005
    %7007 = vrot.lane.b32.xlu0 %v6970, 8
    %v7008 = vpop.permute.xlu0 %7007
    %7009 = vrot.lane.b32.xlu0 %v6971, 8
    %v7010 = vpop.permute.xlu0 %7009
    %7011 = vrot.lane.b32.xlu0 %v6972, 8
    %v7012 = vpop.permute.xlu0 %7011
    %7013 = vrot.lane.b32.xlu0 %v6973, 8
    %v7014 = vpop.permute.xlu0 %7013
    %7015 = vrot.lane.b32.xlu0 %v6974, 8
    %v7016 = vpop.permute.xlu0 %7015
    %7017 = vrot.lane.b32.xlu0 %v6975, 8
    %v7018 = vpop.permute.xlu0 %7017
    %7019 = vrot.lane.b32.xlu0 %v6976, 8
    %v7020 = vpop.permute.xlu0 %7019
    %7021 = vrot.lane.b32.xlu0 %v6977, 8
    %v7022 = vpop.permute.xlu0 %7021
    %7023 = vrot.lane.b32.xlu0 %v6978, 8
    %v7024 = vpop.permute.xlu0 %7023
    %7025 = vrot.lane.b32.xlu0 %v6979, 8
    %v7026 = vpop.permute.xlu0 %7025
    %7027 = vrot.lane.b32.xlu0 %v6980, 8
    %v7028 = vpop.permute.xlu0 %7027
    %v7045 = vsel %vm127, %v5476, %v6998
    %v7046 = vsel %vm127, %v5477, %v7000
    %v7047 = vsel %vm127, %v5478, %v7002
    %v7048 = vsel %vm127, %v5479, %v7004
    %v7049 = vsel %vm127, %v5480, %v7006
    %v7050 = vsel %vm127, %v5481, %v7008
    %v7051 = vsel %vm127, %v5482, %v7010
    %v7052 = vsel %vm127, %v5483, %v7012
    %v7053 = vsel %vm127, %v5484, %v7014
    %v7054 = vsel %vm127, %v5485, %v7016
    %v7055 = vsel %vm127, %v5486, %v7018
    %v7056 = vsel %vm127, %v5487, %v7020
    %v7057 = vsel %vm127, %v5488, %v7022
    %v7058 = vsel %vm127, %v5489, %v7024
    %v7059 = vsel %vm127, %v5490, %v7026
    %v7060 = vsel %vm127, %v5491, %v7028
    %v7061 = vld [vmem:[%s18] sm:$0x1]
    %v7063 = vlaneseq
    %v7064 = vshrl.u32 %v7063, 7
    %v7065 = vsub.s32 0, %v7064
    %v7066 = vrot.slane %v7061, %v7065
    %v7068 = vadd.f32 %v7045, %v7066
    %v7069 = vadd.f32 %v7046, %v7066
    %v7070 = vadd.f32 %v7047, %v7066
    %v7071 = vadd.f32 %v7048, %v7066
    %v7072 = vadd.f32 %v7049, %v7066
    %v7073 = vadd.f32 %v7050, %v7066
    %v7074 = vadd.f32 %v7051, %v7066
    %v7075 = vadd.f32 %v7052, %v7066
    %v7076 = vadd.f32 %v7053, %v7066
    %v7077 = vadd.f32 %v7054, %v7066
    %v7078 = vadd.f32 %v7055, %v7066
    %v7079 = vadd.f32 %v7056, %v7066
    %v7080 = vadd.f32 %v7057, %v7066
    %v7081 = vadd.f32 %v7058, %v7066
    %v7082 = vadd.f32 %v7059, %v7066
    %v7083 = vadd.f32 %v7060, %v7066
    %vm7084 = vcmp.gt.f32.partialorder %v3578, 0.0
    %vm7085 = vcmp.gt.f32.partialorder %v3579, 0.0
    %vm7086 = vcmp.gt.f32.partialorder %v3580, 0.0
    %vm7087 = vcmp.gt.f32.partialorder %v3581, 0.0
    %vm7088 = vcmp.gt.f32.partialorder %v3582, 0.0
    %vm7089 = vcmp.gt.f32.partialorder %v3583, 0.0
    %vm7090 = vcmp.gt.f32.partialorder %v3584, 0.0
    %vm7091 = vcmp.gt.f32.partialorder %v3585, 0.0
    %vm7092 = vcmp.gt.f32.partialorder %v3586, 0.0
    %vm7093 = vcmp.gt.f32.partialorder %v3587, 0.0
    %vm7094 = vcmp.gt.f32.partialorder %v3588, 0.0
    %vm7095 = vcmp.gt.f32.partialorder %v3589, 0.0
    %vm7096 = vcmp.gt.f32.partialorder %v3590, 0.0
    %vm7097 = vcmp.gt.f32.partialorder %v3591, 0.0
    %vm7098 = vcmp.gt.f32.partialorder %v3592, 0.0
    %vm7099 = vcmp.gt.f32.partialorder %v3593, 0.0
    %v7100 = vmin.f32 %v3578, 0.0
    %v7101 = vmin.f32 %v3579, 0.0
    %v7102 = vmin.f32 %v3580, 0.0
    %v7103 = vmin.f32 %v3581, 0.0
    %v7104 = vmin.f32 %v3582, 0.0
    %v7105 = vmin.f32 %v3583, 0.0
    %v7106 = vmin.f32 %v3584, 0.0
    %v7107 = vmin.f32 %v3585, 0.0
    %v7108 = vmin.f32 %v3586, 0.0
    %v7109 = vmin.f32 %v3587, 0.0
    %v7110 = vmin.f32 %v3588, 0.0
    %v7111 = vmin.f32 %v3589, 0.0
    %v7112 = vmin.f32 %v3590, 0.0
    %v7113 = vmin.f32 %v3591, 0.0
    %v7114 = vmin.f32 %v3592, 0.0
    %v7115 = vmin.f32 %v3593, 0.0
    %v7116 = vmul.f32 %v7100, 1.442695
    %v7117 = vpow.pop %v7116
    %v7118 = vmul.f32 %v7101, 1.442695
    %v7119 = vpow.pop %v7118
    %v7120 = vmul.f32 %v7102, 1.442695
    %v7121 = vpow.pop %v7120
    %v7122 = vmul.f32 %v7103, 1.442695
    %v7123 = vpow.pop %v7122
    %v7124 = vmul.f32 %v7104, 1.442695
    %v7125 = vpow.pop %v7124
    %v7126 = vmul.f32 %v7105, 1.442695
    %v7127 = vpow.pop %v7126
    %v7128 = vmul.f32 %v7106, 1.442695
    %v7129 = vpow.pop %v7128
    %v7130 = vmul.f32 %v7107, 1.442695
    %v7131 = vpow.pop %v7130
    %v7132 = vmul.f32 %v7108, 1.442695
    %v7133 = vpow.pop %v7132
    %v7134 = vmul.f32 %v7109, 1.442695
    %v7135 = vpow.pop %v7134
    %v7136 = vmul.f32 %v7110, 1.442695
    %v7137 = vpow.pop %v7136
    %v7138 = vmul.f32 %v7111, 1.442695
    %v7139 = vpow.pop %v7138
    %v7140 = vmul.f32 %v7112, 1.442695
    %v7141 = vpow.pop %v7140
    %v7142 = vmul.f32 %v7113, 1.442695
    %v7143 = vpow.pop %v7142
    %v7144 = vmul.f32 %v7114, 1.442695
    %v7145 = vpow.pop %v7144
    %v7146 = vmul.f32 %v7115, 1.442695
    %v7147 = vpow.pop %v7146
    %v7148 = vsub.f32 %v7117, 1.0
    %v7149 = vsub.f32 %v7119, 1.0
    %v7150 = vsub.f32 %v7121, 1.0
    %v7151 = vsub.f32 %v7123, 1.0
    %v7152 = vsub.f32 %v7125, 1.0
    %v7153 = vsub.f32 %v7127, 1.0
    %v7154 = vsub.f32 %v7129, 1.0
    %v7155 = vsub.f32 %v7131, 1.0
    %v7156 = vsub.f32 %v7133, 1.0
    %v7157 = vsub.f32 %v7135, 1.0
    %v7158 = vsub.f32 %v7137, 1.0
    %v7159 = vsub.f32 %v7139, 1.0
    %v7160 = vsub.f32 %v7141, 1.0
    %v7161 = vsub.f32 %v7143, 1.0
    %v7162 = vsub.f32 %v7145, 1.0
    %v7163 = vsub.f32 %v7147, 1.0
    %v7164 = vsel %vm7084, %v3578, %v7148
    %v7165 = vsel %vm7085, %v3579, %v7149
    %v7166 = vsel %vm7086, %v3580, %v7150
    %v7167 = vsel %vm7087, %v3581, %v7151
    %v7168 = vsel %vm7088, %v3582, %v7152
    %v7169 = vsel %vm7089, %v3583, %v7153
    %v7170 = vsel %vm7090, %v3584, %v7154
    %v7171 = vsel %vm7091, %v3585, %v7155
    %v7172 = vsel %vm7092, %v3586, %v7156
    %v7173 = vsel %vm7093, %v3587, %v7157
    %v7174 = vsel %vm7094, %v3588, %v7158
    %v7175 = vsel %vm7095, %v3589, %v7159
    %v7176 = vsel %vm7096, %v3590, %v7160
    %v7177 = vsel %vm7097, %v3591, %v7161
    %v7178 = vsel %vm7098, %v3592, %v7162
    %v7179 = vsel %vm7099, %v3593, %v7163
    %vm7180 = vcmp.gt.f32.partialorder %v7068, 0.0
    %vm7181 = vcmp.gt.f32.partialorder %v7069, 0.0
    %vm7182 = vcmp.gt.f32.partialorder %v7070, 0.0
    %vm7183 = vcmp.gt.f32.partialorder %v7071, 0.0
    %vm7184 = vcmp.gt.f32.partialorder %v7072, 0.0
    %vm7185 = vcmp.gt.f32.partialorder %v7073, 0.0
    %vm7186 = vcmp.gt.f32.partialorder %v7074, 0.0
    %vm7187 = vcmp.gt.f32.partialorder %v7075, 0.0
    %vm7188 = vcmp.gt.f32.partialorder %v7076, 0.0
    %vm7189 = vcmp.gt.f32.partialorder %v7077, 0.0
    %vm7190 = vcmp.gt.f32.partialorder %v7078, 0.0
    %vm7191 = vcmp.gt.f32.partialorder %v7079, 0.0
    %vm7192 = vcmp.gt.f32.partialorder %v7080, 0.0
    %vm7193 = vcmp.gt.f32.partialorder %v7081, 0.0
    %vm7194 = vcmp.gt.f32.partialorder %v7082, 0.0
    %vm7195 = vcmp.gt.f32.partialorder %v7083, 0.0
    %v7196 = vmin.f32 %v7068, 0.0
    %v7197 = vmin.f32 %v7069, 0.0
    %v7198 = vmin.f32 %v7070, 0.0
    %v7199 = vmin.f32 %v7071, 0.0
    %v7200 = vmin.f32 %v7072, 0.0
    %v7201 = vmin.f32 %v7073, 0.0
    %v7202 = vmin.f32 %v7074, 0.0
    %v7203 = vmin.f32 %v7075, 0.0
    %v7204 = vmin.f32 %v7076, 0.0
    %v7205 = vmin.f32 %v7077, 0.0
    %v7206 = vmin.f32 %v7078, 0.0
    %v7207 = vmin.f32 %v7079, 0.0
    %v7208 = vmin.f32 %v7080, 0.0
    %v7209 = vmin.f32 %v7081, 0.0
    %v7210 = vmin.f32 %v7082, 0.0
    %v7211 = vmin.f32 %v7083, 0.0
    %v7212 = vmul.f32 %v7196, 1.442695
    %v7213 = vpow.pop %v7212
    %v7214 = vmul.f32 %v7197, 1.442695
    %v7215 = vpow.pop %v7214
    %v7216 = vmul.f32 %v7198, 1.442695
    %v7217 = vpow.pop %v7216
    %v7218 = vmul.f32 %v7199, 1.442695
    %v7219 = vpow.pop %v7218
    %v7220 = vmul.f32 %v7200, 1.442695
    %v7221 = vpow.pop %v7220
    %v7222 = vmul.f32 %v7201, 1.442695
    %v7223 = vpow.pop %v7222
    %v7224 = vmul.f32 %v7202, 1.442695
    %v7225 = vpow.pop %v7224
    %v7226 = vmul.f32 %v7203, 1.442695
    %v7227 = vpow.pop %v7226
    %v7228 = vmul.f32 %v7204, 1.442695
    %v7229 = vpow.pop %v7228
    %v7230 = vmul.f32 %v7205, 1.442695
    %v7231 = vpow.pop %v7230
    %v7232 = vmul.f32 %v7206, 1.442695
    %v7233 = vpow.pop %v7232
    %v7234 = vmul.f32 %v7207, 1.442695
    %v7235 = vpow.pop %v7234
    %v7236 = vmul.f32 %v7208, 1.442695
    %v7237 = vpow.pop %v7236
    %v7238 = vmul.f32 %v7209, 1.442695
    %v7239 = vpow.pop %v7238
    %v7240 = vmul.f32 %v7210, 1.442695
    %v7241 = vpow.pop %v7240
    %v7242 = vmul.f32 %v7211, 1.442695
    %v7243 = vpow.pop %v7242
    %v7244 = vsub.f32 %v7213, 1.0
    %v7245 = vsub.f32 %v7215, 1.0
    %v7246 = vsub.f32 %v7217, 1.0
    %v7247 = vsub.f32 %v7219, 1.0
    %v7248 = vsub.f32 %v7221, 1.0
    %v7249 = vsub.f32 %v7223, 1.0
    %v7250 = vsub.f32 %v7225, 1.0
    %v7251 = vsub.f32 %v7227, 1.0
    %v7252 = vsub.f32 %v7229, 1.0
    %v7253 = vsub.f32 %v7231, 1.0
    %v7254 = vsub.f32 %v7233, 1.0
    %v7255 = vsub.f32 %v7235, 1.0
    %v7256 = vsub.f32 %v7237, 1.0
    %v7257 = vsub.f32 %v7239, 1.0
    %v7258 = vsub.f32 %v7241, 1.0
    %v7259 = vsub.f32 %v7243, 1.0
    %v7260 = vsel %vm7180, %v7068, %v7244
    %v7261 = vsel %vm7181, %v7069, %v7245
    %v7262 = vsel %vm7182, %v7070, %v7246
    %v7263 = vsel %vm7183, %v7071, %v7247
    %v7264 = vsel %vm7184, %v7072, %v7248
    %v7265 = vsel %vm7185, %v7073, %v7249
    %v7266 = vsel %vm7186, %v7074, %v7250
    %v7267 = vsel %vm7187, %v7075, %v7251
    %v7268 = vsel %vm7188, %v7076, %v7252
    %v7269 = vsel %vm7189, %v7077, %v7253
    %v7270 = vsel %vm7190, %v7078, %v7254
    %v7271 = vsel %vm7191, %v7079, %v7255
    %v7272 = vsel %vm7192, %v7080, %v7256
    %v7273 = vsel %vm7193, %v7081, %v7257
    %v7274 = vsel %vm7194, %v7082, %v7258
    %v7275 = vsel %vm7195, %v7083, %v7259
    %s7276 = sld [smem:[#allocation6]]
    %s7277 = sld [smem:[#allocation6 + $0x1]]
    %v7278 = vstv %s7276
    %v7279 = vmul.f32 %v7278, %v7164
    %v7280 = vmul.f32 %v7278, %v7165
    %v7281 = vmul.f32 %v7278, %v7166
    %v7282 = vmul.f32 %v7278, %v7167
    %v7283 = vmul.f32 %v7278, %v7168
    %v7284 = vmul.f32 %v7278, %v7169
    %v7285 = vmul.f32 %v7278, %v7170
    %v7286 = vmul.f32 %v7278, %v7171
    %v7287 = vmul.f32 %v7278, %v7172
    %v7288 = vmul.f32 %v7278, %v7173
    %v7289 = vmul.f32 %v7278, %v7174
    %v7290 = vmul.f32 %v7278, %v7175
    %v7291 = vmul.f32 %v7278, %v7176
    %v7292 = vmul.f32 %v7278, %v7177
    %v7293 = vmul.f32 %v7278, %v7178
    %v7294 = vmul.f32 %v7278, %v7179
    %v7295 = vstv %s7277
    %v7296 = vmul.f32 %v7295, %v7260
    %v7297 = vmul.f32 %v7295, %v7261
    %v7298 = vmul.f32 %v7295, %v7262
    %v7299 = vmul.f32 %v7295, %v7263
    %v7300 = vmul.f32 %v7295, %v7264
    %v7301 = vmul.f32 %v7295, %v7265
    %v7302 = vmul.f32 %v7295, %v7266
    %v7303 = vmul.f32 %v7295, %v7267
    %v7304 = vmul.f32 %v7295, %v7268
    %v7305 = vmul.f32 %v7295, %v7269
    %v7306 = vmul.f32 %v7295, %v7270
    %v7307 = vmul.f32 %v7295, %v7271
    %v7308 = vmul.f32 %v7295, %v7272
    %v7309 = vmul.f32 %v7295, %v7273
    %v7310 = vmul.f32 %v7295, %v7274
    %v7311 = vmul.f32 %v7295, %v7275
    %v7312 = vadd.f32 %v7279, %v7296
    %v7313 = vadd.f32 %v7280, %v7297
    %v7314 = vadd.f32 %v7281, %v7298
    %v7315 = vadd.f32 %v7282, %v7299
    %v7316 = vadd.f32 %v7283, %v7300
    %v7317 = vadd.f32 %v7284, %v7301
    %v7318 = vadd.f32 %v7285, %v7302
    %v7319 = vadd.f32 %v7286, %v7303
    %v7320 = vadd.f32 %v7287, %v7304
    %v7321 = vadd.f32 %v7288, %v7305
    %v7322 = vadd.f32 %v7289, %v7306
    %v7323 = vadd.f32 %v7290, %v7307
    %v7324 = vadd.f32 %v7291, %v7308
    %v7325 = vadd.f32 %v7292, %v7309
    %v7326 = vadd.f32 %v7293, %v7310
    %v7327 = vadd.f32 %v7294, %v7311
    %vm7328 = vcmask 130048
    %7329 = vst.msk [vmem:[%s19] sm:$0xff] %vm7328, %v7312
    %7330 = vst.msk [vmem:[%s19 + $0x8] sm:$0xff] %vm7328, %v7313
    %7331 = vst.msk [vmem:[%s19 + $0x10] sm:$0xff] %vm7328, %v7314
    %7332 = vst.msk [vmem:[%s19 + $0x18] sm:$0xff] %vm7328, %v7315
    %7333 = vst.msk [vmem:[%s19 + $0x20] sm:$0xff] %vm7328, %v7316
    %7334 = vst.msk [vmem:[%s19 + $0x28] sm:$0xff] %vm7328, %v7317
    %7335 = vst.msk [vmem:[%s19 + $0x30] sm:$0xff] %vm7328, %v7318
    %7336 = vst.msk [vmem:[%s19 + $0x38] sm:$0xff] %vm7328, %v7319
    %7337 = vst.msk [vmem:[%s19 + $0x40] sm:$0xff] %vm7328, %v7320
    %7338 = vst.msk [vmem:[%s19 + $0x48] sm:$0xff] %vm7328, %v7321
    %7339 = vst.msk [vmem:[%s19 + $0x50] sm:$0xff] %vm7328, %v7322
    %7340 = vst.msk [vmem:[%s19 + $0x58] sm:$0xff] %vm7328, %v7323
    %7341 = vst.msk [vmem:[%s19 + $0x60] sm:$0xff] %vm7328, %v7324
    %7342 = vst.msk [vmem:[%s19 + $0x68] sm:$0xff] %vm7328, %v7325
    %7343 = vst.msk [vmem:[%s19 + $0x70] sm:$0xff] %vm7328, %v7326
    %7344 = vst.msk [vmem:[%s19 + $0x78] sm:$0xff] %vm7328, %v7327
    %v7345 = vmul.f32 %v7278, %v7260
    %v7346 = vmul.f32 %v7278, %v7261
    %v7347 = vmul.f32 %v7278, %v7262
    %v7348 = vmul.f32 %v7278, %v7263
    %v7349 = vmul.f32 %v7278, %v7264
    %v7350 = vmul.f32 %v7278, %v7265
    %v7351 = vmul.f32 %v7278, %v7266
    %v7352 = vmul.f32 %v7278, %v7267
    %v7353 = vmul.f32 %v7278, %v7268
    %v7354 = vmul.f32 %v7278, %v7269
    %v7355 = vmul.f32 %v7278, %v7270
    %v7356 = vmul.f32 %v7278, %v7271
    %v7357 = vmul.f32 %v7278, %v7272
    %v7358 = vmul.f32 %v7278, %v7273
    %v7359 = vmul.f32 %v7278, %v7274
    %v7360 = vmul.f32 %v7278, %v7275
    %v7361 = vmul.f32 %v7295, %v7164
    %v7362 = vmul.f32 %v7295, %v7165
    %v7363 = vmul.f32 %v7295, %v7166
    %v7364 = vmul.f32 %v7295, %v7167
    %v7365 = vmul.f32 %v7295, %v7168
    %v7366 = vmul.f32 %v7295, %v7169
    %v7367 = vmul.f32 %v7295, %v7170
    %v7368 = vmul.f32 %v7295, %v7171
    %v7369 = vmul.f32 %v7295, %v7172
    %v7370 = vmul.f32 %v7295, %v7173
    %v7371 = vmul.f32 %v7295, %v7174
    %v7372 = vmul.f32 %v7295, %v7175
    %v7373 = vmul.f32 %v7295, %v7176
    %v7374 = vmul.f32 %v7295, %v7177
    %v7375 = vmul.f32 %v7295, %v7178
    %v7376 = vmul.f32 %v7295, %v7179
    %v7377 = vadd.f32 %v7345, %v7361
    %v7378 = vadd.f32 %v7346, %v7362
    %v7379 = vadd.f32 %v7347, %v7363
    %v7380 = vadd.f32 %v7348, %v7364
    %v7381 = vadd.f32 %v7349, %v7365
    %v7382 = vadd.f32 %v7350, %v7366
    %v7383 = vadd.f32 %v7351, %v7367
    %v7384 = vadd.f32 %v7352, %v7368
    %v7385 = vadd.f32 %v7353, %v7369
    %v7386 = vadd.f32 %v7354, %v7370
    %v7387 = vadd.f32 %v7355, %v7371
    %v7388 = vadd.f32 %v7356, %v7372
    %v7389 = vadd.f32 %v7357, %v7373
    %v7390 = vadd.f32 %v7358, %v7374
    %v7391 = vadd.f32 %v7359, %v7375
    %v7392 = vadd.f32 %v7360, %v7376
    %7393 = vst.msk [vmem:[%s20] sm:$0xff] %vm7328, %v7377
    %7394 = vst.msk [vmem:[%s20 + $0x8] sm:$0xff] %vm7328, %v7378
    %7395 = vst.msk [vmem:[%s20 + $0x10] sm:$0xff] %vm7328, %v7379
    %7396 = vst.msk [vmem:[%s20 + $0x18] sm:$0xff] %vm7328, %v7380
    %7397 = vst.msk [vmem:[%s20 + $0x20] sm:$0xff] %vm7328, %v7381
    %7398 = vst.msk [vmem:[%s20 + $0x28] sm:$0xff] %vm7328, %v7382
    %7399 = vst.msk [vmem:[%s20 + $0x30] sm:$0xff] %vm7328, %v7383
    %7400 = vst.msk [vmem:[%s20 + $0x38] sm:$0xff] %vm7328, %v7384
    %7401 = vst.msk [vmem:[%s20 + $0x40] sm:$0xff] %vm7328, %v7385
    %7402 = vst.msk [vmem:[%s20 + $0x48] sm:$0xff] %vm7328, %v7386
    %7403 = vst.msk [vmem:[%s20 + $0x50] sm:$0xff] %vm7328, %v7387
    %7404 = vst.msk [vmem:[%s20 + $0x58] sm:$0xff] %vm7328, %v7388
    %7405 = vst.msk [vmem:[%s20 + $0x60] sm:$0xff] %vm7328, %v7389
    %7406 = vst.msk [vmem:[%s20 + $0x68] sm:$0xff] %vm7328, %v7390
    %7407 = vst.msk [vmem:[%s20 + $0x70] sm:$0xff] %vm7328, %v7391
    %7408 = vst.msk [vmem:[%s20 + $0x78] sm:$0xff] %vm7328, %v7392
    // Predicated region
    $region90: #{tpu_custom_call.1} parent=1 // pred_check
      _
    $region91: #{tpu_custom_call.1} parent=1 // pred_check_branch
      %7410 = sbr.rel (0) target = $region93
    $region92: #{tpu_custom_call.1} parent=1 // pred_region
      _
    $region93: #{tpu_custom_call.1} parent=1 // pred_fallthru
      _
    // Predicated region
    $region94: #{tpu_custom_call.1} parent=1 // pred_check
      _
    $region95: #{tpu_custom_call.1} parent=1 // pred_check_branch
      %7412 = sbr.rel (0) target = $region97
    $region96: #{tpu_custom_call.1} parent=1 // pred_region
      _
    $region97: #{tpu_custom_call.1} parent=1 // pred_fallthru
      _
    // Predicated region
    $region98: #{tpu_custom_call.1} parent=1 // pred_check
      _
    $region99: #{tpu_custom_call.1} parent=1 // pred_check_branch
      %7414 = sbr.rel (0) target = $region101
    $region100: #{tpu_custom_call.1} parent=1 // pred_region
      _
    $region101: #{tpu_custom_call.1} parent=1 // pred_fallthru
      _
    // Predicated region
    $region102: #{tpu_custom_call.1} parent=1 // pred_check
      _
    $region103: #{tpu_custom_call.1} parent=1 // pred_check_branch
      %7416 = sbr.rel (0) target = $region105
    $region104: #{tpu_custom_call.1} parent=1 // pred_region
      _
    $region105: #{tpu_custom_call.1} parent=1 // pred_fallthru
      _
    %7417 = vsyncpa [#allocation3], 1
    %7418 = vsyncpa [#allocation5], 1

</llo_original>
